<compile_context>
chip_gen: v7x
topology: tpu7x:2x2x1
jax: 0.10.0
libtpu: 0.0.40
codegen_flags: <defaults>
</compile_context>

<pallas_src>
import math

import jax
import jax.numpy as jnp
from jax import lax
from jax.experimental import pallas as pl
from jax.experimental.pallas import tpu as pltpu

BN_EPS = 1e-5
LEAKY_SLOPE = 0.2


def resblock2d(x, params):
    """ResBlock2D forward (resolution=None, in_ch == out_ch).

    x: [N, C, H, W] float32.  Returns [N, C, H, W] float32.
    """
    N, C, H, W = x.shape
    CP = ((C + 7) // 8) * 8                  # channels padded to sublane multiple
    if CP == C:                              # mask rides along as dummy channel row C
        CP += 8
    Hp = H + 2
    WP = W + 2
    while (N * Hp * WP) % 128:               # make the final slab lane-dense
        WP += 1
    P = N * Hp * WP                          # flattened padded spatial size
    G1 = WP + 1                              # max |tap offset| of a 3x3 conv
    G0 = 2 * G1
    F1 = P + 2 * G1                          # frame width after conv1
    F0 = P + 2 * G0                          # input frame width
    offs = [(dy - 1) * WP + (dx - 1) for dy in range(3) for dx in range(3)]
    inv_count = 1.0 / float(N * H * W)       # BN element count per channel

    f32 = jnp.float32

    # ---------------- host-side packing (pure layout plumbing) ----------------
    x_sp = jnp.pad(x.astype(f32), ((0, 0), (0, 0), (1, 1), (1, WP - W - 1)))
    mask = jnp.pad(jnp.ones((N, 1, H, W), f32),
                   ((0, 0), (0, 0), (1, 1), (1, WP - W - 1)))
    zfill = jnp.zeros((N, CP - C - 1, Hp, WP), f32)
    slab = jnp.concatenate([x_sp, mask, zfill], axis=1)            # [N, CP, Hp, WP]
    slab = jnp.transpose(slab, (1, 0, 2, 3)).reshape(CP, P)
    slab = jnp.pad(slab, ((0, 0), (G0, G0)))                       # [CP, F0]

    def pack_w(w):
        taps = []
        for dy in range(3):
            for dx in range(3):
                t = jnp.zeros((CP, CP), f32).at[:C, :C].set(w[:, :, dy, dx])
                taps.append(t)                                     # [CP_out, CP_in]
        return jnp.concatenate(taps, axis=0)                       # [9*CP, CP]

    w_pack = jnp.concatenate([pack_w(params["w1"]), pack_w(params["w2"])], axis=0)

    def pack_vec(v):
        return jnp.zeros((CP,), f32).at[:C].set(v.astype(f32))

    bn_pack = jnp.stack([pack_vec(params["g1"]), pack_vec(params["be1"]),
                         pack_vec(params["g2"]), pack_vec(params["be2"])],
                        axis=1)                                    # [CP, 4]

    # --------------------------------- kernel ---------------------------------
    def kernel(xm_ref, w_ref, bn_ref, o_ref, a1_ref):
        def conv(slice_fn, layer):
            acc = None
            for t, o in enumerate(offs):
                r = (layer * 9 + t) * CP
                w_tap = w_ref[r:r + CP, :]                         # [CP_out, CP_in]
                d = jnp.dot(w_tap, slice_fn(o),
                            preferred_element_type=jnp.float32)
                acc = d if acc is None else acc + d
            return acc

        def bn_lrelu(c, m, col):
            # training-mode BN folded into one FMA; one-pass biased variance
            cm = c * m
            s1 = jnp.sum(cm, axis=1, keepdims=True)
            s2 = jnp.sum(cm * c, axis=1, keepdims=True)
            mean = s1 * inv_count
            var = s2 * inv_count - mean * mean
            scale = bn_ref[:, col:col + 1] * lax.rsqrt(var + BN_EPS)
            shift = bn_ref[:, col + 1:col + 2] - mean * scale
            h = c * scale + shift
            return jnp.where(h > 0, h, LEAKY_SLOPE * h)

        m1 = xm_ref[C:C + 1, G1:G1 + F1]                           # [1, F1]
        m2 = xm_ref[C:C + 1, G0:G0 + P]                            # [1, P]

        # conv1 -> BN1 -> LeakyReLU (mask restores zero padding for conv2)
        c1 = conv(lambda o: xm_ref[:, G1 + o:G1 + o + F1], 0)      # [CP, F1]
        a1_ref[...] = bn_lrelu(c1, m1, 0) * m1

        # conv2 -> BN2 -> LeakyReLU
        c2 = conv(lambda o: a1_ref[:, G1 + o:G1 + o + P], 1)       # [CP, P]
        r2 = bn_lrelu(c2, m2, 2)

        # identity residual + lane/sublane-dense store
        o_ref[...] = (r2 + xm_ref[:, G0:G0 + P]).astype(o_ref.dtype)

    vmem = pl.BlockSpec(memory_space=pltpu.MemorySpace.VMEM)
    out_flat = pl.pallas_call(
        kernel,
        out_shape=jax.ShapeDtypeStruct((CP, P), jnp.float32),
        in_specs=[vmem, vmem, vmem],
        out_specs=vmem,
        scratch_shapes=[pltpu.VMEM((CP, F1), jnp.float32)],
    )(slab, w_pack, bn_pack)

    # ------------------------- host-side unpacking ---------------------------
    out = out_flat[:C].reshape(C, N, Hp, WP)[:, :, 1:H + 1, 1:W + 1]
    return jnp.transpose(out, (1, 0, 2, 3))                        # [N, C, H, W]


# ------------------------ pure-JAX reference (sanity) ------------------------
def _reference(x, p):
    def conv3x3(a, w, b):
        y = lax.conv_general_dilated(a, w, window_strides=(1, 1),
                                     padding=((1, 1), (1, 1)),
                                     dimension_numbers=("NCHW", "OIHW", "NCHW"))
        return y + b.reshape(1, -1, 1, 1)

    def bn_train(a, g, be):
        mu = jnp.mean(a, axis=(0, 2, 3), keepdims=True)
        var = jnp.mean((a - mu) ** 2, axis=(0, 2, 3), keepdims=True)
        return (a - mu) / jnp.sqrt(var + BN_EPS) * g.reshape(1, -1, 1, 1) \
            + be.reshape(1, -1, 1, 1)

    lrelu = lambda t: jnp.where(t > 0, t, LEAKY_SLOPE * t)
    res = lrelu(bn_train(conv3x3(x, p["w1"], p["b1"]), p["g1"], p["be1"]))
    res = lrelu(bn_train(conv3x3(res, p["w2"], p["b2"]), p["g2"], p["be2"]))
    return res + x


def init_params(key, c):
    ks = jax.random.split(key, 8)
    bound = 1.0 / math.sqrt(c * 9)
    u = lambda k, shape: jax.random.uniform(k, shape, jnp.float32, -bound, bound)
    return dict(
        w1=u(ks[0], (c, c, 3, 3)), b1=u(ks[1], (c,)),
        w2=u(ks[2], (c, c, 3, 3)), b2=u(ks[3], (c,)),
        g1=1.0 + 0.1 * jax.random.normal(ks[4], (c,), jnp.float32),
        be1=0.1 * jax.random.normal(ks[5], (c,), jnp.float32),
        g2=1.0 + 0.1 * jax.random.normal(ks[6], (c,), jnp.float32),
        be2=0.1 * jax.random.normal(ks[7], (c,), jnp.float32),
    )


if __name__ == "__main__":
    key = jax.random.PRNGKey(0)
    kx, kp = jax.random.split(key)

    N, C, H, W = 2, 4, 16, 16
    x = jax.random.normal(kx, (N, C, H, W), dtype=jnp.float32)
    params = init_params(kp, C)

    out = resblock2d(x, params)
    out = jax.block_until_ready(out)

    ref = _reference(x, params)
    assert out.shape == (N, C, H, W)
    err = float(jnp.max(jnp.abs(out - ref)))
    assert jnp.allclose(out, ref, atol=1e-3, rtol=1e-3), f"max abs err {err}"

    print("KERNEL_OK")
</pallas_src>

<mosaic_0001>
module attributes {stable_mosaic.version = 11 : i64} {
  func.func @kernel(%arg0: memref<8x1284xf32, #tpu.memory_space<vmem>>, %arg1: memref<144x8xf32, #tpu.memory_space<vmem>>, %arg2: memref<8x4xf32, #tpu.memory_space<vmem>>, %arg3: memref<8x1152xf32, #tpu.memory_space<vmem>>, %arg4: memref<8x1218xf32, #tpu.memory_space<vmem>>) attributes {dimension_semantics = [], scalar_prefetch = 0 : i64, scratch_operands = 1 : i64, tpu.core_type = #tpu.core_type<tc>} {
    %c4 = arith.constant 4 : index
    %c33 = arith.constant 33 : index
    %0 = vector.load %arg0[%c4, %c33] : memref<8x1284xf32, #tpu.memory_space<vmem>>, vector<1x1218xf32>
    %c4_0 = arith.constant 4 : index
    %c66 = arith.constant 66 : index
    %1 = vector.load %arg0[%c4_0, %c66] : memref<8x1284xf32, #tpu.memory_space<vmem>>, vector<1x1152xf32>
    %c0 = arith.constant 0 : index
    %c0_1 = arith.constant 0 : index
    %2 = vector.load %arg1[%c0, %c0_1] : memref<144x8xf32, #tpu.memory_space<vmem>>, vector<8x8xf32>
    %c0_2 = arith.constant 0 : index
    %c0_3 = arith.constant 0 : index
    %3 = vector.load %arg0[%c0_2, %c0_3] : memref<8x1284xf32, #tpu.memory_space<vmem>>, vector<8x1218xf32>
    %cst = arith.constant dense<0.000000e+00> : vector<8x1218xf32>
    %4 = tpu.matmul %2, %3, %cst {dimension_numbers = #tpu.dot_dimension_numbers<[1], [0], [0], [1], [0, 0, 1, 1], [], []>} : vector<8x8xf32>, vector<8x1218xf32>, vector<8x1218xf32> -> vector<8x1218xf32>
    %c8 = arith.constant 8 : index
    %c0_4 = arith.constant 0 : index
    %5 = vector.load %arg1[%c8, %c0_4] : memref<144x8xf32, #tpu.memory_space<vmem>>, vector<8x8xf32>
    %c0_5 = arith.constant 0 : index
    %c1 = arith.constant 1 : index
    %6 = vector.load %arg0[%c0_5, %c1] : memref<8x1284xf32, #tpu.memory_space<vmem>>, vector<8x1218xf32>
    %cst_6 = arith.constant dense<0.000000e+00> : vector<8x1218xf32>
    %7 = tpu.matmul %5, %6, %cst_6 {dimension_numbers = #tpu.dot_dimension_numbers<[1], [0], [0], [1], [0, 0, 1, 1], [], []>} : vector<8x8xf32>, vector<8x1218xf32>, vector<8x1218xf32> -> vector<8x1218xf32>
    %8 = arith.addf %4, %7 : vector<8x1218xf32>
    %c16 = arith.constant 16 : index
    %c0_7 = arith.constant 0 : index
    %9 = vector.load %arg1[%c16, %c0_7] : memref<144x8xf32, #tpu.memory_space<vmem>>, vector<8x8xf32>
    %c0_8 = arith.constant 0 : index
    %c2 = arith.constant 2 : index
    %10 = vector.load %arg0[%c0_8, %c2] : memref<8x1284xf32, #tpu.memory_space<vmem>>, vector<8x1218xf32>
    %cst_9 = arith.constant dense<0.000000e+00> : vector<8x1218xf32>
    %11 = tpu.matmul %9, %10, %cst_9 {dimension_numbers = #tpu.dot_dimension_numbers<[1], [0], [0], [1], [0, 0, 1, 1], [], []>} : vector<8x8xf32>, vector<8x1218xf32>, vector<8x1218xf32> -> vector<8x1218xf32>
    %12 = arith.addf %8, %11 : vector<8x1218xf32>
    %c24 = arith.constant 24 : index
    %c0_10 = arith.constant 0 : index
    %13 = vector.load %arg1[%c24, %c0_10] : memref<144x8xf32, #tpu.memory_space<vmem>>, vector<8x8xf32>
    %c0_11 = arith.constant 0 : index
    %c32 = arith.constant 32 : index
    %14 = vector.load %arg0[%c0_11, %c32] : memref<8x1284xf32, #tpu.memory_space<vmem>>, vector<8x1218xf32>
    %cst_12 = arith.constant dense<0.000000e+00> : vector<8x1218xf32>
    %15 = tpu.matmul %13, %14, %cst_12 {dimension_numbers = #tpu.dot_dimension_numbers<[1], [0], [0], [1], [0, 0, 1, 1], [], []>} : vector<8x8xf32>, vector<8x1218xf32>, vector<8x1218xf32> -> vector<8x1218xf32>
    %16 = arith.addf %12, %15 : vector<8x1218xf32>
    %c32_13 = arith.constant 32 : index
    %c0_14 = arith.constant 0 : index
    %17 = vector.load %arg1[%c32_13, %c0_14] : memref<144x8xf32, #tpu.memory_space<vmem>>, vector<8x8xf32>
    %c0_15 = arith.constant 0 : index
    %c33_16 = arith.constant 33 : index
    %18 = vector.load %arg0[%c0_15, %c33_16] : memref<8x1284xf32, #tpu.memory_space<vmem>>, vector<8x1218xf32>
    %cst_17 = arith.constant dense<0.000000e+00> : vector<8x1218xf32>
    %19 = tpu.matmul %17, %18, %cst_17 {dimension_numbers = #tpu.dot_dimension_numbers<[1], [0], [0], [1], [0, 0, 1, 1], [], []>} : vector<8x8xf32>, vector<8x1218xf32>, vector<8x1218xf32> -> vector<8x1218xf32>
    %20 = arith.addf %16, %19 : vector<8x1218xf32>
    %c40 = arith.constant 40 : index
    %c0_18 = arith.constant 0 : index
    %21 = vector.load %arg1[%c40, %c0_18] : memref<144x8xf32, #tpu.memory_space<vmem>>, vector<8x8xf32>
    %c0_19 = arith.constant 0 : index
    %c34 = arith.constant 34 : index
    %22 = vector.load %arg0[%c0_19, %c34] : memref<8x1284xf32, #tpu.memory_space<vmem>>, vector<8x1218xf32>
    %cst_20 = arith.constant dense<0.000000e+00> : vector<8x1218xf32>
    %23 = tpu.matmul %21, %22, %cst_20 {dimension_numbers = #tpu.dot_dimension_numbers<[1], [0], [0], [1], [0, 0, 1, 1], [], []>} : vector<8x8xf32>, vector<8x1218xf32>, vector<8x1218xf32> -> vector<8x1218xf32>
    %24 = arith.addf %20, %23 : vector<8x1218xf32>
    %c48 = arith.constant 48 : index
    %c0_21 = arith.constant 0 : index
    %25 = vector.load %arg1[%c48, %c0_21] : memref<144x8xf32, #tpu.memory_space<vmem>>, vector<8x8xf32>
    %c0_22 = arith.constant 0 : index
    %c64 = arith.constant 64 : index
    %26 = vector.load %arg0[%c0_22, %c64] : memref<8x1284xf32, #tpu.memory_space<vmem>>, vector<8x1218xf32>
    %cst_23 = arith.constant dense<0.000000e+00> : vector<8x1218xf32>
    %27 = tpu.matmul %25, %26, %cst_23 {dimension_numbers = #tpu.dot_dimension_numbers<[1], [0], [0], [1], [0, 0, 1, 1], [], []>} : vector<8x8xf32>, vector<8x1218xf32>, vector<8x1218xf32> -> vector<8x1218xf32>
    %28 = arith.addf %24, %27 : vector<8x1218xf32>
    %c56 = arith.constant 56 : index
    %c0_24 = arith.constant 0 : index
    %29 = vector.load %arg1[%c56, %c0_24] : memref<144x8xf32, #tpu.memory_space<vmem>>, vector<8x8xf32>
    %c0_25 = arith.constant 0 : index
    %c65 = arith.constant 65 : index
    %30 = vector.load %arg0[%c0_25, %c65] : memref<8x1284xf32, #tpu.memory_space<vmem>>, vector<8x1218xf32>
    %cst_26 = arith.constant dense<0.000000e+00> : vector<8x1218xf32>
    %31 = tpu.matmul %29, %30, %cst_26 {dimension_numbers = #tpu.dot_dimension_numbers<[1], [0], [0], [1], [0, 0, 1, 1], [], []>} : vector<8x8xf32>, vector<8x1218xf32>, vector<8x1218xf32> -> vector<8x1218xf32>
    %32 = arith.addf %28, %31 : vector<8x1218xf32>
    %c64_27 = arith.constant 64 : index
    %c0_28 = arith.constant 0 : index
    %33 = vector.load %arg1[%c64_27, %c0_28] : memref<144x8xf32, #tpu.memory_space<vmem>>, vector<8x8xf32>
    %c0_29 = arith.constant 0 : index
    %c66_30 = arith.constant 66 : index
    %34 = vector.load %arg0[%c0_29, %c66_30] : memref<8x1284xf32, #tpu.memory_space<vmem>>, vector<8x1218xf32>
    %cst_31 = arith.constant dense<0.000000e+00> : vector<8x1218xf32>
    %35 = tpu.matmul %33, %34, %cst_31 {dimension_numbers = #tpu.dot_dimension_numbers<[1], [0], [0], [1], [0, 0, 1, 1], [], []>} : vector<8x8xf32>, vector<8x1218xf32>, vector<8x1218xf32> -> vector<8x1218xf32>
    %36 = arith.addf %32, %35 : vector<8x1218xf32>
    %37 = vector.broadcast %0 : vector<1x1218xf32> to vector<8x1218xf32>
    %38 = arith.mulf %36, %37 : vector<8x1218xf32>
    %cst_32 = arith.constant dense<0.000000e+00> : vector<8xf32>
    %39 = vector.multi_reduction <add>, %38, %cst_32 [1] : vector<8x1218xf32> to vector<8xf32>
    %40 = vector.shape_cast %39 : vector<8xf32> to vector<8x1xf32>
    %41 = arith.mulf %38, %36 : vector<8x1218xf32>
    %cst_33 = arith.constant dense<0.000000e+00> : vector<8xf32>
    %42 = vector.multi_reduction <add>, %41, %cst_33 [1] : vector<8x1218xf32> to vector<8xf32>
    %43 = vector.shape_cast %42 : vector<8xf32> to vector<8x1xf32>
    %cst_34 = arith.constant 0.001953125 : f32
    %44 = vector.broadcast %cst_34 : f32 to vector<8x1xf32>
    %45 = arith.mulf %40, %44 : vector<8x1xf32>
    %cst_35 = arith.constant 0.001953125 : f32
    %46 = vector.broadcast %cst_35 : f32 to vector<8x1xf32>
    %47 = arith.mulf %43, %46 : vector<8x1xf32>
    %48 = arith.mulf %45, %45 : vector<8x1xf32>
    %49 = arith.subf %47, %48 : vector<8x1xf32>
    %c0_36 = arith.constant 0 : index
    %c0_37 = arith.constant 0 : index
    %50 = vector.load %arg2[%c0_36, %c0_37] : memref<8x4xf32, #tpu.memory_space<vmem>>, vector<8x1xf32>
    %cst_38 = arith.constant 9.99999974E-6 : f32
    %51 = vector.broadcast %cst_38 : f32 to vector<8x1xf32>
    %52 = arith.addf %49, %51 : vector<8x1xf32>
    %53 = math.rsqrt %52 : vector<8x1xf32>
    %54 = arith.mulf %50, %53 : vector<8x1xf32>
    %c0_39 = arith.constant 0 : index
    %c1_40 = arith.constant 1 : index
    %55 = vector.load %arg2[%c0_39, %c1_40] : memref<8x4xf32, #tpu.memory_space<vmem>>, vector<8x1xf32>
    %56 = arith.mulf %45, %54 : vector<8x1xf32>
    %57 = arith.subf %55, %56 : vector<8x1xf32>
    %58 = vector.broadcast %54 : vector<8x1xf32> to vector<8x1218xf32>
    %59 = arith.mulf %36, %58 : vector<8x1218xf32>
    %60 = vector.broadcast %57 : vector<8x1xf32> to vector<8x1218xf32>
    %61 = arith.addf %59, %60 : vector<8x1218xf32>
    %cst_41 = arith.constant 0.000000e+00 : f32
    %62 = vector.broadcast %cst_41 : f32 to vector<8x1218xf32>
    %63 = arith.cmpf ogt, %61, %62 : vector<8x1218xf32>
    %cst_42 = arith.constant 2.000000e-01 : f32
    %64 = vector.broadcast %cst_42 : f32 to vector<8x1218xf32>
    %65 = arith.mulf %64, %61 : vector<8x1218xf32>
    %66 = arith.select %63, %61, %65 : vector<8x1218xi1>, vector<8x1218xf32>
    %67 = vector.broadcast %0 : vector<1x1218xf32> to vector<8x1218xf32>
    %68 = arith.mulf %66, %67 : vector<8x1218xf32>
    %c0_43 = arith.constant 0 : index
    %c0_44 = arith.constant 0 : index
    %69 = vector.load %arg4[%c0_43, %c0_44] : memref<8x1218xf32, #tpu.memory_space<vmem>>, vector<8x1218xf32>
    tpu.vector_store %arg4[%c0_43, %c0_44], %68 {strides = array<i32>} : memref<8x1218xf32, #tpu.memory_space<vmem>>, vector<8x1218xf32>,
    %c72 = arith.constant 72 : index
    %c0_45 = arith.constant 0 : index
    %70 = vector.load %arg1[%c72, %c0_45] : memref<144x8xf32, #tpu.memory_space<vmem>>, vector<8x8xf32>
    %c0_46 = arith.constant 0 : index
    %c0_47 = arith.constant 0 : index
    %71 = vector.load %arg4[%c0_46, %c0_47] : memref<8x1218xf32, #tpu.memory_space<vmem>>, vector<8x1152xf32>
    %cst_48 = arith.constant dense<0.000000e+00> : vector<8x1152xf32>
    %72 = tpu.matmul %70, %71, %cst_48 {dimension_numbers = #tpu.dot_dimension_numbers<[1], [0], [0], [1], [0, 0, 1, 1], [], []>} : vector<8x8xf32>, vector<8x1152xf32>, vector<8x1152xf32> -> vector<8x1152xf32>
    %c80 = arith.constant 80 : index
    %c0_49 = arith.constant 0 : index
    %73 = vector.load %arg1[%c80, %c0_49] : memref<144x8xf32, #tpu.memory_space<vmem>>, vector<8x8xf32>
    %c0_50 = arith.constant 0 : index
    %c1_51 = arith.constant 1 : index
    %74 = vector.load %arg4[%c0_50, %c1_51] : memref<8x1218xf32, #tpu.memory_space<vmem>>, vector<8x1152xf32>
    %cst_52 = arith.constant dense<0.000000e+00> : vector<8x1152xf32>
    %75 = tpu.matmul %73, %74, %cst_52 {dimension_numbers = #tpu.dot_dimension_numbers<[1], [0], [0], [1], [0, 0, 1, 1], [], []>} : vector<8x8xf32>, vector<8x1152xf32>, vector<8x1152xf32> -> vector<8x1152xf32>
    %76 = arith.addf %72, %75 : vector<8x1152xf32>
    %c88 = arith.constant 88 : index
    %c0_53 = arith.constant 0 : index
    %77 = vector.load %arg1[%c88, %c0_53] : memref<144x8xf32, #tpu.memory_space<vmem>>, vector<8x8xf32>
    %c0_54 = arith.constant 0 : index
    %c2_55 = arith.constant 2 : index
    %78 = vector.load %arg4[%c0_54, %c2_55] : memref<8x1218xf32, #tpu.memory_space<vmem>>, vector<8x1152xf32>
    %cst_56 = arith.constant dense<0.000000e+00> : vector<8x1152xf32>
    %79 = tpu.matmul %77, %78, %cst_56 {dimension_numbers = #tpu.dot_dimension_numbers<[1], [0], [0], [1], [0, 0, 1, 1], [], []>} : vector<8x8xf32>, vector<8x1152xf32>, vector<8x1152xf32> -> vector<8x1152xf32>
    %80 = arith.addf %76, %79 : vector<8x1152xf32>
    %c96 = arith.constant 96 : index
    %c0_57 = arith.constant 0 : index
    %81 = vector.load %arg1[%c96, %c0_57] : memref<144x8xf32, #tpu.memory_space<vmem>>, vector<8x8xf32>
    %c0_58 = arith.constant 0 : index
    %c32_59 = arith.constant 32 : index
    %82 = vector.load %arg4[%c0_58, %c32_59] : memref<8x1218xf32, #tpu.memory_space<vmem>>, vector<8x1152xf32>
    %cst_60 = arith.constant dense<0.000000e+00> : vector<8x1152xf32>
    %83 = tpu.matmul %81, %82, %cst_60 {dimension_numbers = #tpu.dot_dimension_numbers<[1], [0], [0], [1], [0, 0, 1, 1], [], []>} : vector<8x8xf32>, vector<8x1152xf32>, vector<8x1152xf32> -> vector<8x1152xf32>
    %84 = arith.addf %80, %83 : vector<8x1152xf32>
    %c104 = arith.constant 104 : index
    %c0_61 = arith.constant 0 : index
    %85 = vector.load %arg1[%c104, %c0_61] : memref<144x8xf32, #tpu.memory_space<vmem>>, vector<8x8xf32>
    %c0_62 = arith.constant 0 : index
    %c33_63 = arith.constant 33 : index
    %86 = vector.load %arg4[%c0_62, %c33_63] : memref<8x1218xf32, #tpu.memory_space<vmem>>, vector<8x1152xf32>
    %cst_64 = arith.constant dense<0.000000e+00> : vector<8x1152xf32>
    %87 = tpu.matmul %85, %86, %cst_64 {dimension_numbers = #tpu.dot_dimension_numbers<[1], [0], [0], [1], [0, 0, 1, 1], [], []>} : vector<8x8xf32>, vector<8x1152xf32>, vector<8x1152xf32> -> vector<8x1152xf32>
    %88 = arith.addf %84, %87 : vector<8x1152xf32>
    %c112 = arith.constant 112 : index
    %c0_65 = arith.constant 0 : index
    %89 = vector.load %arg1[%c112, %c0_65] : memref<144x8xf32, #tpu.memory_space<vmem>>, vector<8x8xf32>
    %c0_66 = arith.constant 0 : index
    %c34_67 = arith.constant 34 : index
    %90 = vector.load %arg4[%c0_66, %c34_67] : memref<8x1218xf32, #tpu.memory_space<vmem>>, vector<8x1152xf32>
    %cst_68 = arith.constant dense<0.000000e+00> : vector<8x1152xf32>
    %91 = tpu.matmul %89, %90, %cst_68 {dimension_numbers = #tpu.dot_dimension_numbers<[1], [0], [0], [1], [0, 0, 1, 1], [], []>} : vector<8x8xf32>, vector<8x1152xf32>, vector<8x1152xf32> -> vector<8x1152xf32>
    %92 = arith.addf %88, %91 : vector<8x1152xf32>
    %c120 = arith.constant 120 : index
    %c0_69 = arith.constant 0 : index
    %93 = vector.load %arg1[%c120, %c0_69] : memref<144x8xf32, #tpu.memory_space<vmem>>, vector<8x8xf32>
    %c0_70 = arith.constant 0 : index
    %c64_71 = arith.constant 64 : index
    %94 = vector.load %arg4[%c0_70, %c64_71] : memref<8x1218xf32, #tpu.memory_space<vmem>>, vector<8x1152xf32>
    %cst_72 = arith.constant dense<0.000000e+00> : vector<8x1152xf32>
    %95 = tpu.matmul %93, %94, %cst_72 {dimension_numbers = #tpu.dot_dimension_numbers<[1], [0], [0], [1], [0, 0, 1, 1], [], []>} : vector<8x8xf32>, vector<8x1152xf32>, vector<8x1152xf32> -> vector<8x1152xf32>
    %96 = arith.addf %92, %95 : vector<8x1152xf32>
    %c128 = arith.constant 128 : index
    %c0_73 = arith.constant 0 : index
    %97 = vector.load %arg1[%c128, %c0_73] : memref<144x8xf32, #tpu.memory_space<vmem>>, vector<8x8xf32>
    %c0_74 = arith.constant 0 : index
    %c65_75 = arith.constant 65 : index
    %98 = vector.load %arg4[%c0_74, %c65_75] : memref<8x1218xf32, #tpu.memory_space<vmem>>, vector<8x1152xf32>
    %cst_76 = arith.constant dense<0.000000e+00> : vector<8x1152xf32>
    %99 = tpu.matmul %97, %98, %cst_76 {dimension_numbers = #tpu.dot_dimension_numbers<[1], [0], [0], [1], [0, 0, 1, 1], [], []>} : vector<8x8xf32>, vector<8x1152xf32>, vector<8x1152xf32> -> vector<8x1152xf32>
    %100 = arith.addf %96, %99 : vector<8x1152xf32>
    %c136 = arith.constant 136 : index
    %c0_77 = arith.constant 0 : index
    %101 = vector.load %arg1[%c136, %c0_77] : memref<144x8xf32, #tpu.memory_space<vmem>>, vector<8x8xf32>
    %c0_78 = arith.constant 0 : index
    %c66_79 = arith.constant 66 : index
    %102 = vector.load %arg4[%c0_78, %c66_79] : memref<8x1218xf32, #tpu.memory_space<vmem>>, vector<8x1152xf32>
    %cst_80 = arith.constant dense<0.000000e+00> : vector<8x1152xf32>
    %103 = tpu.matmul %101, %102, %cst_80 {dimension_numbers = #tpu.dot_dimension_numbers<[1], [0], [0], [1], [0, 0, 1, 1], [], []>} : vector<8x8xf32>, vector<8x1152xf32>, vector<8x1152xf32> -> vector<8x1152xf32>
    %104 = arith.addf %100, %103 : vector<8x1152xf32>
    %105 = vector.broadcast %1 : vector<1x1152xf32> to vector<8x1152xf32>
    %106 = arith.mulf %104, %105 : vector<8x1152xf32>
    %cst_81 = arith.constant dense<0.000000e+00> : vector<8xf32>
    %107 = vector.multi_reduction <add>, %106, %cst_81 [1] : vector<8x1152xf32> to vector<8xf32>
    %108 = vector.shape_cast %107 : vector<8xf32> to vector<8x1xf32>
    %109 = arith.mulf %106, %104 : vector<8x1152xf32>
    %cst_82 = arith.constant dense<0.000000e+00> : vector<8xf32>
    %110 = vector.multi_reduction <add>, %109, %cst_82 [1] : vector<8x1152xf32> to vector<8xf32>
    %111 = vector.shape_cast %110 : vector<8xf32> to vector<8x1xf32>
    %cst_83 = arith.constant 0.001953125 : f32
    %112 = vector.broadcast %cst_83 : f32 to vector<8x1xf32>
    %113 = arith.mulf %108, %112 : vector<8x1xf32>
    %cst_84 = arith.constant 0.001953125 : f32
    %114 = vector.broadcast %cst_84 : f32 to vector<8x1xf32>
    %115 = arith.mulf %111, %114 : vector<8x1xf32>
    %116 = arith.mulf %113, %113 : vector<8x1xf32>
    %117 = arith.subf %115, %116 : vector<8x1xf32>
    %c0_85 = arith.constant 0 : index
    %c2_86 = arith.constant 2 : index
    %118 = vector.load %arg2[%c0_85, %c2_86] : memref<8x4xf32, #tpu.memory_space<vmem>>, vector<8x1xf32>
    %cst_87 = arith.constant 9.99999974E-6 : f32
    %119 = vector.broadcast %cst_87 : f32 to vector<8x1xf32>
    %120 = arith.addf %117, %119 : vector<8x1xf32>
    %121 = math.rsqrt %120 : vector<8x1xf32>
    %122 = arith.mulf %118, %121 : vector<8x1xf32>
    %c0_88 = arith.constant 0 : index
    %c3 = arith.constant 3 : index
    %123 = vector.load %arg2[%c0_88, %c3] : memref<8x4xf32, #tpu.memory_space<vmem>>, vector<8x1xf32>
    %124 = arith.mulf %113, %122 : vector<8x1xf32>
    %125 = arith.subf %123, %124 : vector<8x1xf32>
    %126 = vector.broadcast %122 : vector<8x1xf32> to vector<8x1152xf32>
    %127 = arith.mulf %104, %126 : vector<8x1152xf32>
    %128 = vector.broadcast %125 : vector<8x1xf32> to vector<8x1152xf32>
    %129 = arith.addf %127, %128 : vector<8x1152xf32>
    %cst_89 = arith.constant 0.000000e+00 : f32
    %130 = vector.broadcast %cst_89 : f32 to vector<8x1152xf32>
    %131 = arith.cmpf ogt, %129, %130 : vector<8x1152xf32>
    %cst_90 = arith.constant 2.000000e-01 : f32
    %132 = vector.broadcast %cst_90 : f32 to vector<8x1152xf32>
    %133 = arith.mulf %132, %129 : vector<8x1152xf32>
    %134 = arith.select %131, %129, %133 : vector<8x1152xi1>, vector<8x1152xf32>
    %c0_91 = arith.constant 0 : index
    %c66_92 = arith.constant 66 : index
    %135 = vector.load %arg0[%c0_91, %c66_92] : memref<8x1284xf32, #tpu.memory_space<vmem>>, vector<8x1152xf32>
    %136 = arith.addf %134, %135 : vector<8x1152xf32>
    %c0_93 = arith.constant 0 : index
    %c0_94 = arith.constant 0 : index
    %137 = vector.load %arg3[%c0_93, %c0_94] : memref<8x1152xf32, #tpu.memory_space<vmem>>, vector<8x1152xf32>
    tpu.vector_store %arg3[%c0_93, %c0_94], %136 {strides = array<i32>} : memref<8x1152xf32, #tpu.memory_space<vmem>>, vector<8x1152xf32>,
    return
  }
}

</mosaic_0001>

<llo_original>
// kernel: tpu_custom_call.1
$region0: #{tpu_custom_call.1}
  #allocation0 [shape = 'u32[]', space=smem, size = 0x4, offset = 0x4, fixed_abs, tag = 'smem constant byte address 0x4 - core index']
  #allocation1 [shape = 'u32[144,128]{1,0:T(1,128)}', space=vmem, size = 0x12000, scoped, tag = 'internal scratch']
  #allocation2 [shape = 'f32[8,1218]{1,0:T(8,128)}', space=vmem, size = 0xa000, scoped, tag = 'scratch operand']
  %s0 = inlined_call_operand.vmem [shape: f32[8,1284], index: 0, kind: input, shape index: {}]
  %s1 = inlined_call_operand.vmem [shape: f32[144,8], index: 1, kind: input, shape index: {}]
  %s2 = inlined_call_operand.vmem [shape: f32[8,4], index: 2, kind: input, shape index: {}]
  %s3 = inlined_call_operand.hbm [shape: f32[8,1152], index: 3, kind: output, shape index: {}]
  %s4 = sld [smem:[#allocation0]]
  $region22: #{tpu_custom_call.1} parent=0
    _
  %s6 = ssub.s32 1, %s4
  %s7 = scalar_select 0, %s6, %s4
  $region1: #{tpu_custom_call.1} parent=0
    #allocation3 [shape = 'u8[36864]{0}', space=vmem, size = 0x9000, scoped, tag = 'output window, operand 0, single buffered']
    #allocation4 [shape = 's32[1]{0}', space=sflag, size = 0x4, scoped, tag = 'scoped memory for tpu_custom_call.1']
    %8 = vsyncpa [#allocation4], 0
    // Predicated region
    $region2: #{tpu_custom_call.1} parent=1 // pred_check
      _
    $region3: #{tpu_custom_call.1} parent=1 // pred_check_branch
      %10 = sbr.rel (0) target = $region5
    $region4: #{tpu_custom_call.1} parent=1 // pred_region
      _
    $region5: #{tpu_custom_call.1} parent=1 // pred_fallthru
      _
    // Predicated region
    $region6: #{tpu_custom_call.1} parent=1 // pred_check
      _
    $region7: #{tpu_custom_call.1} parent=1 // pred_check_branch
      %12 = sbr.rel (0) target = $region9
    $region8: #{tpu_custom_call.1} parent=1 // pred_region
      _
    $region9: #{tpu_custom_call.1} parent=1 // pred_fallthru
      _
    // Predicated region
    $region10: #{tpu_custom_call.1} parent=1 // pred_check
      _
    $region11: #{tpu_custom_call.1} parent=1 // pred_check_branch
      %14 = sbr.rel (0) target = $region13
    $region12: #{tpu_custom_call.1} parent=1 // pred_region
      _
    $region13: #{tpu_custom_call.1} parent=1 // pred_fallthru
      _
    %s15 = scalar_lea.vmem %s0, 4
    %v16 = vld [vmem:[%s15] ss:$8 sm:$0xf]
    %v17 = vld [vmem:[%s15] ss:$8 sm:$0xf0]
    %v18 = vor.u32 %v16, %v17
    %s19 = scalar_lea.vmem %s0, 68
    %v20 = vld [vmem:[%s19] ss:$8 sm:$0x3]
    %v21 = vld [vmem:[%s1] sm:$0xff]
    %v22 = vld [vmem:[%s0] sm:$0xff]
    %v23 = vld [vmem:[%s0 + $0x8] sm:$0xff]
    %v24 = vld [vmem:[%s0 + $0x10] sm:$0xff]
    %v25 = vld [vmem:[%s0 + $0x18] sm:$0xff]
    %v26 = vld [vmem:[%s0 + $0x20] sm:$0xff]
    %v27 = vld [vmem:[%s0 + $0x28] sm:$0xff]
    %v28 = vld [vmem:[%s0 + $0x30] sm:$0xff]
    %v29 = vld [vmem:[%s0 + $0x38] sm:$0xff]
    %v30 = vld [vmem:[%s0 + $0x40] sm:$0xff]
    %v31 = vld [vmem:[%s0 + $0x48] sm:$0xff]
    %v32 = vld [vmem:[%s1 + $0x8] sm:$0xff]
    %43 = vrot.lane.b32.xlu0 %v22, 127
    %v44 = vpop.permute.xlu0 %43
    %45 = vrot.lane.b32.xlu0 %v23, 127
    %v46 = vpop.permute.xlu0 %45
    %47 = vrot.lane.b32.xlu0 %v24, 127
    %v48 = vpop.permute.xlu0 %47
    %49 = vrot.lane.b32.xlu0 %v25, 127
    %v50 = vpop.permute.xlu0 %49
    %51 = vrot.lane.b32.xlu0 %v26, 127
    %v52 = vpop.permute.xlu0 %51
    %53 = vrot.lane.b32.xlu0 %v27, 127
    %v54 = vpop.permute.xlu0 %53
    %55 = vrot.lane.b32.xlu0 %v28, 127
    %v56 = vpop.permute.xlu0 %55
    %57 = vrot.lane.b32.xlu0 %v29, 127
    %v58 = vpop.permute.xlu0 %57
    %59 = vrot.lane.b32.xlu0 %v30, 127
    %v60 = vpop.permute.xlu0 %59
    %61 = vrot.lane.b32.xlu0 %v31, 127
    %v62 = vpop.permute.xlu0 %61
    %vm63 = vcmask 1039360
    %v64 = vsel %vm63, %v44, %v46
    %v65 = vsel %vm63, %v46, %v48
    %v66 = vsel %vm63, %v48, %v50
    %v67 = vsel %vm63, %v50, %v52
    %v68 = vsel %vm63, %v52, %v54
    %v69 = vsel %vm63, %v54, %v56
    %v70 = vsel %vm63, %v56, %v58
    %v71 = vsel %vm63, %v58, %v60
    %v72 = vsel %vm63, %v60, %v62
    %vm83 = vcmask 64512
    %v85 = vsel %vm83, %v32, 0
    %87 = vmatprep.subr.mxu0 %v65
    %88 = vmatpush1.msra.mxu0 %v64
    %89 = vmatprep.subr.mxu0 0.0
    %90 = vmatpush1.msra.mxu0 0.0
    %91 = vmatprep.subr.mxu0 0.0
    %92 = vmatpush1.msra.mxu0 0.0
    %93 = vmatprep.subr.mxu0 0.0
    %94 = vmatpush1.msra.mxu0 0.0
    %95 = vmatprep.subr.mxu0 0.0
    %96 = vmatpush1.msra.mxu0 0.0
    %97 = vmatprep.subr.mxu0 0.0
    %98 = vmatpush1.msra.mxu0 0.0
    %99 = vmatprep.subr.mxu0 0.0
    %100 = vmatpush1.msra.mxu0 0.0
    %101 = vmatprep.subr.mxu0 0.0
    %102 = vmatpush1.msra.mxu0 0.0
    %103 = vmatprep.subr.mxu0 0.0
    %104 = vmatpush1.msra.mxu0 0.0
    %105 = vmatprep.subr.mxu0 0.0
    %106 = vmatpush1.msra.mxu0 0.0
    %107 = vmatprep.subr.mxu0 0.0
    %108 = vmatpush1.msra.mxu0 0.0
    %109 = vmatprep.subr.mxu0 0.0
    %110 = vmatpush1.msra.mxu0 0.0
    %111 = vmatprep.subr.mxu0 0.0
    %112 = vmatpush1.msra.mxu0 0.0
    %113 = vmatprep.subr.mxu0 0.0
    %114 = vmatpush1.msra.mxu0 0.0
    %115 = vmatprep.subr.mxu0 0.0
    %116 = vmatpush1.msra.mxu0 0.0
    %117 = vmatprep.subr.mxu0 0.0
    %118 = vmatpush1.msra.mxu0 0.0
    %119 = vmatprep.subr.mxu0 0.0
    %120 = vmatpush1.msra.mxu0 0.0
    %121 = vmatprep.subr.mxu0 0.0
    %122 = vmatpush1.msra.mxu0 0.0
    %123 = vmatprep.subr.mxu0 0.0
    %124 = vmatpush1.msra.mxu0 0.0
    %125 = vmatprep.subr.mxu0 0.0
    %126 = vmatpush1.msra.mxu0 0.0
    %127 = vmatprep.subr.mxu0 0.0
    %128 = vmatpush1.msra.mxu0 0.0
    %129 = vmatprep.subr.mxu0 0.0
    %130 = vmatpush1.msra.mxu0 0.0
    %131 = vmatprep.subr.mxu0 0.0
    %132 = vmatpush1.msra.mxu0 0.0
    %133 = vmatprep.subr.mxu0 0.0
    %134 = vmatpush1.msra.mxu0 0.0
    %135 = vmatprep.subr.mxu0 0.0
    %136 = vmatpush1.msra.mxu0 0.0
    %137 = vmatprep.subr.mxu0 0.0
    %138 = vmatpush1.msra.mxu0 0.0
    %139 = vmatprep.subr.mxu0 0.0
    %140 = vmatpush1.msra.mxu0 0.0
    %141 = vmatprep.subr.mxu0 0.0
    %142 = vmatpush1.msra.mxu0 0.0
    %143 = vmatprep.subr.mxu0 0.0
    %144 = vmatpush1.msra.mxu0 0.0
    %145 = vmatprep.subr.mxu0 0.0
    %146 = vmatpush1.msra.mxu0 0.0
    %147 = vmatprep.subr.mxu0 0.0
    %148 = vmatpush1.msra.mxu0 0.0
    %149 = vmatprep.subr.mxu0 0.0
    %150 = vmatpush1.msra.mxu0 0.0
    %151 = vmatprep.mubr.f32.mxu0 0.0
    %152 = vmatmul.mubr.f32.gmra.mrb[0].mxu0 %v85
    %v153 = vpop.f32.mrb[0].mxu0
    %v154 = vadd.f32 0.0, %v153
    %v155 = vpop.f32.mrb[0].mxu0
    %v156 = vadd.f32 0.0, %v155
    %157 = vdwg.mxu0
    %158 = vmatprep.subr.mxu0 %v67
    %159 = vmatpush1.msra.mxu0 %v66
    %160 = vmatprep.subr.mxu0 0.0
    %161 = vmatpush1.msra.mxu0 0.0
    %162 = vmatprep.subr.mxu0 0.0
    %163 = vmatpush1.msra.mxu0 0.0
    %164 = vmatprep.subr.mxu0 0.0
    %165 = vmatpush1.msra.mxu0 0.0
    %166 = vmatprep.subr.mxu0 0.0
    %167 = vmatpush1.msra.mxu0 0.0
    %168 = vmatprep.subr.mxu0 0.0
    %169 = vmatpush1.msra.mxu0 0.0
    %170 = vmatprep.subr.mxu0 0.0
    %171 = vmatpush1.msra.mxu0 0.0
    %172 = vmatprep.subr.mxu0 0.0
    %173 = vmatpush1.msra.mxu0 0.0
    %174 = vmatprep.subr.mxu0 0.0
    %175 = vmatpush1.msra.mxu0 0.0
    %176 = vmatprep.subr.mxu0 0.0
    %177 = vmatpush1.msra.mxu0 0.0
    %178 = vmatprep.subr.mxu0 0.0
    %179 = vmatpush1.msra.mxu0 0.0
    %180 = vmatprep.subr.mxu0 0.0
    %181 = vmatpush1.msra.mxu0 0.0
    %182 = vmatprep.subr.mxu0 0.0
    %183 = vmatpush1.msra.mxu0 0.0
    %184 = vmatprep.subr.mxu0 0.0
    %185 = vmatpush1.msra.mxu0 0.0
    %186 = vmatprep.subr.mxu0 0.0
    %187 = vmatpush1.msra.mxu0 0.0
    %188 = vmatprep.subr.mxu0 0.0
    %189 = vmatpush1.msra.mxu0 0.0
    %190 = vmatprep.subr.mxu0 0.0
    %191 = vmatpush1.msra.mxu0 0.0
    %192 = vmatprep.subr.mxu0 0.0
    %193 = vmatpush1.msra.mxu0 0.0
    %194 = vmatprep.subr.mxu0 0.0
    %195 = vmatpush1.msra.mxu0 0.0
    %196 = vmatprep.subr.mxu0 0.0
    %197 = vmatpush1.msra.mxu0 0.0
    %198 = vmatprep.subr.mxu0 0.0
    %199 = vmatpush1.msra.mxu0 0.0
    %200 = vmatprep.subr.mxu0 0.0
    %201 = vmatpush1.msra.mxu0 0.0
    %202 = vmatprep.subr.mxu0 0.0
    %203 = vmatpush1.msra.mxu0 0.0
    %204 = vmatprep.subr.mxu0 0.0
    %205 = vmatpush1.msra.mxu0 0.0
    %206 = vmatprep.subr.mxu0 0.0
    %207 = vmatpush1.msra.mxu0 0.0
    %208 = vmatprep.subr.mxu0 0.0
    %209 = vmatpush1.msra.mxu0 0.0
    %210 = vmatprep.subr.mxu0 0.0
    %211 = vmatpush1.msra.mxu0 0.0
    %212 = vmatprep.subr.mxu0 0.0
    %213 = vmatpush1.msra.mxu0 0.0
    %214 = vmatprep.subr.mxu0 0.0
    %215 = vmatpush1.msra.mxu0 0.0
    %216 = vmatprep.subr.mxu0 0.0
    %217 = vmatpush1.msra.mxu0 0.0
    %218 = vmatprep.subr.mxu0 0.0
    %219 = vmatpush1.msra.mxu0 0.0
    %220 = vmatprep.subr.mxu0 0.0
    %221 = vmatpush1.msra.mxu0 0.0
    %222 = vmatprep.mubr.f32.mxu0 0.0
    %223 = vmatmul.mubr.f32.gmra.mrb[0].mxu0 %v85
    %v224 = vpop.f32.mrb[0].mxu0
    %v225 = vadd.f32 0.0, %v224
    %v226 = vpop.f32.mrb[0].mxu0
    %v227 = vadd.f32 0.0, %v226
    %228 = vdwg.mxu0
    %229 = vmatprep.subr.mxu0 %v69
    %230 = vmatpush1.msra.mxu0 %v68
    %231 = vmatprep.subr.mxu0 0.0
    %232 = vmatpush1.msra.mxu0 0.0
    %233 = vmatprep.subr.mxu0 0.0
    %234 = vmatpush1.msra.mxu0 0.0
    %235 = vmatprep.subr.mxu0 0.0
    %236 = vmatpush1.msra.mxu0 0.0
    %237 = vmatprep.subr.mxu0 0.0
    %238 = vmatpush1.msra.mxu0 0.0
    %239 = vmatprep.subr.mxu0 0.0
    %240 = vmatpush1.msra.mxu0 0.0
    %241 = vmatprep.subr.mxu0 0.0
    %242 = vmatpush1.msra.mxu0 0.0
    %243 = vmatprep.subr.mxu0 0.0
    %244 = vmatpush1.msra.mxu0 0.0
    %245 = vmatprep.subr.mxu0 0.0
    %246 = vmatpush1.msra.mxu0 0.0
    %247 = vmatprep.subr.mxu0 0.0
    %248 = vmatpush1.msra.mxu0 0.0
    %249 = vmatprep.subr.mxu0 0.0
    %250 = vmatpush1.msra.mxu0 0.0
    %251 = vmatprep.subr.mxu0 0.0
    %252 = vmatpush1.msra.mxu0 0.0
    %253 = vmatprep.subr.mxu0 0.0
    %254 = vmatpush1.msra.mxu0 0.0
    %255 = vmatprep.subr.mxu0 0.0
    %256 = vmatpush1.msra.mxu0 0.0
    %257 = vmatprep.subr.mxu0 0.0
    %258 = vmatpush1.msra.mxu0 0.0
    %259 = vmatprep.subr.mxu0 0.0
    %260 = vmatpush1.msra.mxu0 0.0
    %261 = vmatprep.subr.mxu0 0.0
    %262 = vmatpush1.msra.mxu0 0.0
    %263 = vmatprep.subr.mxu0 0.0
    %264 = vmatpush1.msra.mxu0 0.0
    %265 = vmatprep.subr.mxu0 0.0
    %266 = vmatpush1.msra.mxu0 0.0
    %267 = vmatprep.subr.mxu0 0.0
    %268 = vmatpush1.msra.mxu0 0.0
    %269 = vmatprep.subr.mxu0 0.0
    %270 = vmatpush1.msra.mxu0 0.0
    %271 = vmatprep.subr.mxu0 0.0
    %272 = vmatpush1.msra.mxu0 0.0
    %273 = vmatprep.subr.mxu0 0.0
    %274 = vmatpush1.msra.mxu0 0.0
    %275 = vmatprep.subr.mxu0 0.0
    %276 = vmatpush1.msra.mxu0 0.0
    %277 = vmatprep.subr.mxu0 0.0
    %278 = vmatpush1.msra.mxu0 0.0
    %279 = vmatprep.subr.mxu0 0.0
    %280 = vmatpush1.msra.mxu0 0.0
    %281 = vmatprep.subr.mxu0 0.0
    %282 = vmatpush1.msra.mxu0 0.0
    %283 = vmatprep.subr.mxu0 0.0
    %284 = vmatpush1.msra.mxu0 0.0
    %285 = vmatprep.subr.mxu0 0.0
    %286 = vmatpush1.msra.mxu0 0.0
    %287 = vmatprep.subr.mxu0 0.0
    %288 = vmatpush1.msra.mxu0 0.0
    %289 = vmatprep.subr.mxu0 0.0
    %290 = vmatpush1.msra.mxu0 0.0
    %291 = vmatprep.subr.mxu0 0.0
    %292 = vmatpush1.msra.mxu0 0.0
    %293 = vmatprep.mubr.f32.mxu0 0.0
    %294 = vmatmul.mubr.f32.gmra.mrb[0].mxu0 %v85
    %v295 = vpop.f32.mrb[0].mxu0
    %v296 = vadd.f32 0.0, %v295
    %v297 = vpop.f32.mrb[0].mxu0
    %v298 = vadd.f32 0.0, %v297
    %299 = vdwg.mxu0
    %300 = vmatprep.subr.mxu0 %v71
    %301 = vmatpush1.msra.mxu0 %v70
    %302 = vmatprep.subr.mxu0 0.0
    %303 = vmatpush1.msra.mxu0 0.0
    %304 = vmatprep.subr.mxu0 0.0
    %305 = vmatpush1.msra.mxu0 0.0
    %306 = vmatprep.subr.mxu0 0.0
    %307 = vmatpush1.msra.mxu0 0.0
    %308 = vmatprep.subr.mxu0 0.0
    %309 = vmatpush1.msra.mxu0 0.0
    %310 = vmatprep.subr.mxu0 0.0
    %311 = vmatpush1.msra.mxu0 0.0
    %312 = vmatprep.subr.mxu0 0.0
    %313 = vmatpush1.msra.mxu0 0.0
    %314 = vmatprep.subr.mxu0 0.0
    %315 = vmatpush1.msra.mxu0 0.0
    %316 = vmatprep.subr.mxu0 0.0
    %317 = vmatpush1.msra.mxu0 0.0
    %318 = vmatprep.subr.mxu0 0.0
    %319 = vmatpush1.msra.mxu0 0.0
    %320 = vmatprep.subr.mxu0 0.0
    %321 = vmatpush1.msra.mxu0 0.0
    %322 = vmatprep.subr.mxu0 0.0
    %323 = vmatpush1.msra.mxu0 0.0
    %324 = vmatprep.subr.mxu0 0.0
    %325 = vmatpush1.msra.mxu0 0.0
    %326 = vmatprep.subr.mxu0 0.0
    %327 = vmatpush1.msra.mxu0 0.0
    %328 = vmatprep.subr.mxu0 0.0
    %329 = vmatpush1.msra.mxu0 0.0
    %330 = vmatprep.subr.mxu0 0.0
    %331 = vmatpush1.msra.mxu0 0.0
    %332 = vmatprep.subr.mxu0 0.0
    %333 = vmatpush1.msra.mxu0 0.0
    %334 = vmatprep.subr.mxu0 0.0
    %335 = vmatpush1.msra.mxu0 0.0
    %336 = vmatprep.subr.mxu0 0.0
    %337 = vmatpush1.msra.mxu0 0.0
    %338 = vmatprep.subr.mxu0 0.0
    %339 = vmatpush1.msra.mxu0 0.0
    %340 = vmatprep.subr.mxu0 0.0
    %341 = vmatpush1.msra.mxu0 0.0
    %342 = vmatprep.subr.mxu0 0.0
    %343 = vmatpush1.msra.mxu0 0.0
    %344 = vmatprep.subr.mxu0 0.0
    %345 = vmatpush1.msra.mxu0 0.0
    %346 = vmatprep.subr.mxu0 0.0
    %347 = vmatpush1.msra.mxu0 0.0
    %348 = vmatprep.subr.mxu0 0.0
    %349 = vmatpush1.msra.mxu0 0.0
    %350 = vmatprep.subr.mxu0 0.0
    %351 = vmatpush1.msra.mxu0 0.0
    %352 = vmatprep.subr.mxu0 0.0
    %353 = vmatpush1.msra.mxu0 0.0
    %354 = vmatprep.subr.mxu0 0.0
    %355 = vmatpush1.msra.mxu0 0.0
    %356 = vmatprep.subr.mxu0 0.0
    %357 = vmatpush1.msra.mxu0 0.0
    %358 = vmatprep.subr.mxu0 0.0
    %359 = vmatpush1.msra.mxu0 0.0
    %360 = vmatprep.subr.mxu0 0.0
    %361 = vmatpush1.msra.mxu0 0.0
    %362 = vmatprep.subr.mxu0 0.0
    %363 = vmatpush1.msra.mxu0 0.0
    %364 = vmatprep.mubr.f32.mxu0 0.0
    %365 = vmatmul.mubr.f32.gmra.mrb[0].mxu0 %v85
    %v366 = vpop.f32.mrb[0].mxu0
    %v367 = vadd.f32 0.0, %v366
    %v368 = vpop.f32.mrb[0].mxu0
    %v369 = vadd.f32 0.0, %v368
    %370 = vdwg.mxu0
    %371 = vmatprep.subr.mxu0 %v62
    %372 = vmatpush1.msra.mxu0 %v72
    %373 = vmatprep.subr.mxu0 0.0
    %374 = vmatpush1.msra.mxu0 0.0
    %375 = vmatprep.subr.mxu0 0.0
    %376 = vmatpush1.msra.mxu0 0.0
    %377 = vmatprep.subr.mxu0 0.0
    %378 = vmatpush1.msra.mxu0 0.0
    %379 = vmatprep.subr.mxu0 0.0
    %380 = vmatpush1.msra.mxu0 0.0
    %381 = vmatprep.subr.mxu0 0.0
    %382 = vmatpush1.msra.mxu0 0.0
    %383 = vmatprep.subr.mxu0 0.0
    %384 = vmatpush1.msra.mxu0 0.0
    %385 = vmatprep.subr.mxu0 0.0
    %386 = vmatpush1.msra.mxu0 0.0
    %387 = vmatprep.subr.mxu0 0.0
    %388 = vmatpush1.msra.mxu0 0.0
    %389 = vmatprep.subr.mxu0 0.0
    %390 = vmatpush1.msra.mxu0 0.0
    %391 = vmatprep.subr.mxu0 0.0
    %392 = vmatpush1.msra.mxu0 0.0
    %393 = vmatprep.subr.mxu0 0.0
    %394 = vmatpush1.msra.mxu0 0.0
    %395 = vmatprep.subr.mxu0 0.0
    %396 = vmatpush1.msra.mxu0 0.0
    %397 = vmatprep.subr.mxu0 0.0
    %398 = vmatpush1.msra.mxu0 0.0
    %399 = vmatprep.subr.mxu0 0.0
    %400 = vmatpush1.msra.mxu0 0.0
    %401 = vmatprep.subr.mxu0 0.0
    %402 = vmatpush1.msra.mxu0 0.0
    %403 = vmatprep.subr.mxu0 0.0
    %404 = vmatpush1.msra.mxu0 0.0
    %405 = vmatprep.subr.mxu0 0.0
    %406 = vmatpush1.msra.mxu0 0.0
    %407 = vmatprep.subr.mxu0 0.0
    %408 = vmatpush1.msra.mxu0 0.0
    %409 = vmatprep.subr.mxu0 0.0
    %410 = vmatpush1.msra.mxu0 0.0
    %411 = vmatprep.subr.mxu0 0.0
    %412 = vmatpush1.msra.mxu0 0.0
    %413 = vmatprep.subr.mxu0 0.0
    %414 = vmatpush1.msra.mxu0 0.0
    %415 = vmatprep.subr.mxu0 0.0
    %416 = vmatpush1.msra.mxu0 0.0
    %417 = vmatprep.subr.mxu0 0.0
    %418 = vmatpush1.msra.mxu0 0.0
    %419 = vmatprep.subr.mxu0 0.0
    %420 = vmatpush1.msra.mxu0 0.0
    %421 = vmatprep.subr.mxu0 0.0
    %422 = vmatpush1.msra.mxu0 0.0
    %423 = vmatprep.subr.mxu0 0.0
    %424 = vmatpush1.msra.mxu0 0.0
    %425 = vmatprep.subr.mxu0 0.0
    %426 = vmatpush1.msra.mxu0 0.0
    %427 = vmatprep.subr.mxu0 0.0
    %428 = vmatpush1.msra.mxu0 0.0
    %429 = vmatprep.subr.mxu0 0.0
    %430 = vmatpush1.msra.mxu0 0.0
    %431 = vmatprep.subr.mxu0 0.0
    %432 = vmatpush1.msra.mxu0 0.0
    %433 = vmatprep.subr.mxu0 0.0
    %434 = vmatpush1.msra.mxu0 0.0
    %435 = vmatprep.mubr.f32.mxu0 0.0
    %436 = vmatmul.mubr.f32.gmra.mrb[0].mxu0 %v85
    %v437 = vpop.f32.mrb[0].mxu0
    %v438 = vadd.f32 0.0, %v437
    %v439 = vpop.f32.mrb[0].mxu0
    %v440 = vadd.f32 0.0, %v439
    %441 = vdwg.mxu0
    %v443 = vsel %vm83, %v21, 0
    %445 = vmatprep.subr.mxu0 %v23
    %446 = vmatpush1.msra.mxu0 %v22
    %447 = vmatprep.subr.mxu0 0.0
    %448 = vmatpush1.msra.mxu0 0.0
    %449 = vmatprep.subr.mxu0 0.0
    %450 = vmatpush1.msra.mxu0 0.0
    %451 = vmatprep.subr.mxu0 0.0
    %452 = vmatpush1.msra.mxu0 0.0
    %453 = vmatprep.subr.mxu0 0.0
    %454 = vmatpush1.msra.mxu0 0.0
    %455 = vmatprep.subr.mxu0 0.0
    %456 = vmatpush1.msra.mxu0 0.0
    %457 = vmatprep.subr.mxu0 0.0
    %458 = vmatpush1.msra.mxu0 0.0
    %459 = vmatprep.subr.mxu0 0.0
    %460 = vmatpush1.msra.mxu0 0.0
    %461 = vmatprep.subr.mxu0 0.0
    %462 = vmatpush1.msra.mxu0 0.0
    %463 = vmatprep.subr.mxu0 0.0
    %464 = vmatpush1.msra.mxu0 0.0
    %465 = vmatprep.subr.mxu0 0.0
    %466 = vmatpush1.msra.mxu0 0.0
    %467 = vmatprep.subr.mxu0 0.0
    %468 = vmatpush1.msra.mxu0 0.0
    %469 = vmatprep.subr.mxu0 0.0
    %470 = vmatpush1.msra.mxu0 0.0
    %471 = vmatprep.subr.mxu0 0.0
    %472 = vmatpush1.msra.mxu0 0.0
    %473 = vmatprep.subr.mxu0 0.0
    %474 = vmatpush1.msra.mxu0 0.0
    %475 = vmatprep.subr.mxu0 0.0
    %476 = vmatpush1.msra.mxu0 0.0
    %477 = vmatprep.subr.mxu0 0.0
    %478 = vmatpush1.msra.mxu0 0.0
    %479 = vmatprep.subr.mxu0 0.0
    %480 = vmatpush1.msra.mxu0 0.0
    %481 = vmatprep.subr.mxu0 0.0
    %482 = vmatpush1.msra.mxu0 0.0
    %483 = vmatprep.subr.mxu0 0.0
    %484 = vmatpush1.msra.mxu0 0.0
    %485 = vmatprep.subr.mxu0 0.0
    %486 = vmatpush1.msra.mxu0 0.0
    %487 = vmatprep.subr.mxu0 0.0
    %488 = vmatpush1.msra.mxu0 0.0
    %489 = vmatprep.subr.mxu0 0.0
    %490 = vmatpush1.msra.mxu0 0.0
    %491 = vmatprep.subr.mxu0 0.0
    %492 = vmatpush1.msra.mxu0 0.0
    %493 = vmatprep.subr.mxu0 0.0
    %494 = vmatpush1.msra.mxu0 0.0
    %495 = vmatprep.subr.mxu0 0.0
    %496 = vmatpush1.msra.mxu0 0.0
    %497 = vmatprep.subr.mxu0 0.0
    %498 = vmatpush1.msra.mxu0 0.0
    %499 = vmatprep.subr.mxu0 0.0
    %500 = vmatpush1.msra.mxu0 0.0
    %501 = vmatprep.subr.mxu0 0.0
    %502 = vmatpush1.msra.mxu0 0.0
    %503 = vmatprep.subr.mxu0 0.0
    %504 = vmatpush1.msra.mxu0 0.0
    %505 = vmatprep.subr.mxu0 0.0
    %506 = vmatpush1.msra.mxu0 0.0
    %507 = vmatprep.subr.mxu0 0.0
    %508 = vmatpush1.msra.mxu0 0.0
    %509 = vmatprep.mubr.f32.mxu0 0.0
    %510 = vmatmul.mubr.f32.gmra.mrb[0].mxu0 %v443
    %v511 = vpop.f32.mrb[0].mxu0
    %v512 = vadd.f32 %v154, %v511
    %v513 = vpop.f32.mrb[0].mxu0
    %v514 = vadd.f32 %v156, %v513
    %515 = vdwg.mxu0
    %516 = vmatprep.subr.mxu0 %v25
    %517 = vmatpush1.msra.mxu0 %v24
    %518 = vmatprep.subr.mxu0 0.0
    %519 = vmatpush1.msra.mxu0 0.0
    %520 = vmatprep.subr.mxu0 0.0
    %521 = vmatpush1.msra.mxu0 0.0
    %522 = vmatprep.subr.mxu0 0.0
    %523 = vmatpush1.msra.mxu0 0.0
    %524 = vmatprep.subr.mxu0 0.0
    %525 = vmatpush1.msra.mxu0 0.0
    %526 = vmatprep.subr.mxu0 0.0
    %527 = vmatpush1.msra.mxu0 0.0
    %528 = vmatprep.subr.mxu0 0.0
    %529 = vmatpush1.msra.mxu0 0.0
    %530 = vmatprep.subr.mxu0 0.0
    %531 = vmatpush1.msra.mxu0 0.0
    %532 = vmatprep.subr.mxu0 0.0
    %533 = vmatpush1.msra.mxu0 0.0
    %534 = vmatprep.subr.mxu0 0.0
    %535 = vmatpush1.msra.mxu0 0.0
    %536 = vmatprep.subr.mxu0 0.0
    %537 = vmatpush1.msra.mxu0 0.0
    %538 = vmatprep.subr.mxu0 0.0
    %539 = vmatpush1.msra.mxu0 0.0
    %540 = vmatprep.subr.mxu0 0.0
    %541 = vmatpush1.msra.mxu0 0.0
    %542 = vmatprep.subr.mxu0 0.0
    %543 = vmatpush1.msra.mxu0 0.0
    %544 = vmatprep.subr.mxu0 0.0
    %545 = vmatpush1.msra.mxu0 0.0
    %546 = vmatprep.subr.mxu0 0.0
    %547 = vmatpush1.msra.mxu0 0.0
    %548 = vmatprep.subr.mxu0 0.0
    %549 = vmatpush1.msra.mxu0 0.0
    %550 = vmatprep.subr.mxu0 0.0
    %551 = vmatpush1.msra.mxu0 0.0
    %552 = vmatprep.subr.mxu0 0.0
    %553 = vmatpush1.msra.mxu0 0.0
    %554 = vmatprep.subr.mxu0 0.0
    %555 = vmatpush1.msra.mxu0 0.0
    %556 = vmatprep.subr.mxu0 0.0
    %557 = vmatpush1.msra.mxu0 0.0
    %558 = vmatprep.subr.mxu0 0.0
    %559 = vmatpush1.msra.mxu0 0.0
    %560 = vmatprep.subr.mxu0 0.0
    %561 = vmatpush1.msra.mxu0 0.0
    %562 = vmatprep.subr.mxu0 0.0
    %563 = vmatpush1.msra.mxu0 0.0
    %564 = vmatprep.subr.mxu0 0.0
    %565 = vmatpush1.msra.mxu0 0.0
    %566 = vmatprep.subr.mxu0 0.0
    %567 = vmatpush1.msra.mxu0 0.0
    %568 = vmatprep.subr.mxu0 0.0
    %569 = vmatpush1.msra.mxu0 0.0
    %570 = vmatprep.subr.mxu0 0.0
    %571 = vmatpush1.msra.mxu0 0.0
    %572 = vmatprep.subr.mxu0 0.0
    %573 = vmatpush1.msra.mxu0 0.0
    %574 = vmatprep.subr.mxu0 0.0
    %575 = vmatpush1.msra.mxu0 0.0
    %576 = vmatprep.subr.mxu0 0.0
    %577 = vmatpush1.msra.mxu0 0.0
    %578 = vmatprep.subr.mxu0 0.0
    %579 = vmatpush1.msra.mxu0 0.0
    %580 = vmatprep.mubr.f32.mxu0 0.0
    %581 = vmatmul.mubr.f32.gmra.mrb[0].mxu0 %v443
    %v582 = vpop.f32.mrb[0].mxu0
    %v583 = vadd.f32 %v225, %v582
    %v584 = vpop.f32.mrb[0].mxu0
    %v585 = vadd.f32 %v227, %v584
    %586 = vdwg.mxu0
    %587 = vmatprep.subr.mxu0 %v27
    %588 = vmatpush1.msra.mxu0 %v26
    %589 = vmatprep.subr.mxu0 0.0
    %590 = vmatpush1.msra.mxu0 0.0
    %591 = vmatprep.subr.mxu0 0.0
    %592 = vmatpush1.msra.mxu0 0.0
    %593 = vmatprep.subr.mxu0 0.0
    %594 = vmatpush1.msra.mxu0 0.0
    %595 = vmatprep.subr.mxu0 0.0
    %596 = vmatpush1.msra.mxu0 0.0
    %597 = vmatprep.subr.mxu0 0.0
    %598 = vmatpush1.msra.mxu0 0.0
    %599 = vmatprep.subr.mxu0 0.0
    %600 = vmatpush1.msra.mxu0 0.0
    %601 = vmatprep.subr.mxu0 0.0
    %602 = vmatpush1.msra.mxu0 0.0
    %603 = vmatprep.subr.mxu0 0.0
    %604 = vmatpush1.msra.mxu0 0.0
    %605 = vmatprep.subr.mxu0 0.0
    %606 = vmatpush1.msra.mxu0 0.0
    %607 = vmatprep.subr.mxu0 0.0
    %608 = vmatpush1.msra.mxu0 0.0
    %609 = vmatprep.subr.mxu0 0.0
    %610 = vmatpush1.msra.mxu0 0.0
    %611 = vmatprep.subr.mxu0 0.0
    %612 = vmatpush1.msra.mxu0 0.0
    %613 = vmatprep.subr.mxu0 0.0
    %614 = vmatpush1.msra.mxu0 0.0
    %615 = vmatprep.subr.mxu0 0.0
    %616 = vmatpush1.msra.mxu0 0.0
    %617 = vmatprep.subr.mxu0 0.0
    %618 = vmatpush1.msra.mxu0 0.0
    %619 = vmatprep.subr.mxu0 0.0
    %620 = vmatpush1.msra.mxu0 0.0
    %621 = vmatprep.subr.mxu0 0.0
    %622 = vmatpush1.msra.mxu0 0.0
    %623 = vmatprep.subr.mxu0 0.0
    %624 = vmatpush1.msra.mxu0 0.0
    %625 = vmatprep.subr.mxu0 0.0
    %626 = vmatpush1.msra.mxu0 0.0
    %627 = vmatprep.subr.mxu0 0.0
    %628 = vmatpush1.msra.mxu0 0.0
    %629 = vmatprep.subr.mxu0 0.0
    %630 = vmatpush1.msra.mxu0 0.0
    %631 = vmatprep.subr.mxu0 0.0
    %632 = vmatpush1.msra.mxu0 0.0
    %633 = vmatprep.subr.mxu0 0.0
    %634 = vmatpush1.msra.mxu0 0.0
    %635 = vmatprep.subr.mxu0 0.0
    %636 = vmatpush1.msra.mxu0 0.0
    %637 = vmatprep.subr.mxu0 0.0
    %638 = vmatpush1.msra.mxu0 0.0
    %639 = vmatprep.subr.mxu0 0.0
    %640 = vmatpush1.msra.mxu0 0.0
    %641 = vmatprep.subr.mxu0 0.0
    %642 = vmatpush1.msra.mxu0 0.0
    %643 = vmatprep.subr.mxu0 0.0
    %644 = vmatpush1.msra.mxu0 0.0
    %645 = vmatprep.subr.mxu0 0.0
    %646 = vmatpush1.msra.mxu0 0.0
    %647 = vmatprep.subr.mxu0 0.0
    %648 = vmatpush1.msra.mxu0 0.0
    %649 = vmatprep.subr.mxu0 0.0
    %650 = vmatpush1.msra.mxu0 0.0
    %651 = vmatprep.mubr.f32.mxu0 0.0
    %652 = vmatmul.mubr.f32.gmra.mrb[0].mxu0 %v443
    %v653 = vpop.f32.mrb[0].mxu0
    %v654 = vadd.f32 %v296, %v653
    %v655 = vpop.f32.mrb[0].mxu0
    %v656 = vadd.f32 %v298, %v655
    %657 = vdwg.mxu0
    %658 = vmatprep.subr.mxu0 %v29
    %659 = vmatpush1.msra.mxu0 %v28
    %660 = vmatprep.subr.mxu0 0.0
    %661 = vmatpush1.msra.mxu0 0.0
    %662 = vmatprep.subr.mxu0 0.0
    %663 = vmatpush1.msra.mxu0 0.0
    %664 = vmatprep.subr.mxu0 0.0
    %665 = vmatpush1.msra.mxu0 0.0
    %666 = vmatprep.subr.mxu0 0.0
    %667 = vmatpush1.msra.mxu0 0.0
    %668 = vmatprep.subr.mxu0 0.0
    %669 = vmatpush1.msra.mxu0 0.0
    %670 = vmatprep.subr.mxu0 0.0
    %671 = vmatpush1.msra.mxu0 0.0
    %672 = vmatprep.subr.mxu0 0.0
    %673 = vmatpush1.msra.mxu0 0.0
    %674 = vmatprep.subr.mxu0 0.0
    %675 = vmatpush1.msra.mxu0 0.0
    %676 = vmatprep.subr.mxu0 0.0
    %677 = vmatpush1.msra.mxu0 0.0
    %678 = vmatprep.subr.mxu0 0.0
    %679 = vmatpush1.msra.mxu0 0.0
    %680 = vmatprep.subr.mxu0 0.0
    %681 = vmatpush1.msra.mxu0 0.0
    %682 = vmatprep.subr.mxu0 0.0
    %683 = vmatpush1.msra.mxu0 0.0
    %684 = vmatprep.subr.mxu0 0.0
    %685 = vmatpush1.msra.mxu0 0.0
    %686 = vmatprep.subr.mxu0 0.0
    %687 = vmatpush1.msra.mxu0 0.0
    %688 = vmatprep.subr.mxu0 0.0
    %689 = vmatpush1.msra.mxu0 0.0
    %690 = vmatprep.subr.mxu0 0.0
    %691 = vmatpush1.msra.mxu0 0.0
    %692 = vmatprep.subr.mxu0 0.0
    %693 = vmatpush1.msra.mxu0 0.0
    %694 = vmatprep.subr.mxu0 0.0
    %695 = vmatpush1.msra.mxu0 0.0
    %696 = vmatprep.subr.mxu0 0.0
    %697 = vmatpush1.msra.mxu0 0.0
    %698 = vmatprep.subr.mxu0 0.0
    %699 = vmatpush1.msra.mxu0 0.0
    %700 = vmatprep.subr.mxu0 0.0
    %701 = vmatpush1.msra.mxu0 0.0
    %702 = vmatprep.subr.mxu0 0.0
    %703 = vmatpush1.msra.mxu0 0.0
    %704 = vmatprep.subr.mxu0 0.0
    %705 = vmatpush1.msra.mxu0 0.0
    %706 = vmatprep.subr.mxu0 0.0
    %707 = vmatpush1.msra.mxu0 0.0
    %708 = vmatprep.subr.mxu0 0.0
    %709 = vmatpush1.msra.mxu0 0.0
    %710 = vmatprep.subr.mxu0 0.0
    %711 = vmatpush1.msra.mxu0 0.0
    %712 = vmatprep.subr.mxu0 0.0
    %713 = vmatpush1.msra.mxu0 0.0
    %714 = vmatprep.subr.mxu0 0.0
    %715 = vmatpush1.msra.mxu0 0.0
    %716 = vmatprep.subr.mxu0 0.0
    %717 = vmatpush1.msra.mxu0 0.0
    %718 = vmatprep.subr.mxu0 0.0
    %719 = vmatpush1.msra.mxu0 0.0
    %720 = vmatprep.subr.mxu0 0.0
    %721 = vmatpush1.msra.mxu0 0.0
    %722 = vmatprep.mubr.f32.mxu0 0.0
    %723 = vmatmul.mubr.f32.gmra.mrb[0].mxu0 %v443
    %v724 = vpop.f32.mrb[0].mxu0
    %v725 = vadd.f32 %v367, %v724
    %v726 = vpop.f32.mrb[0].mxu0
    %v727 = vadd.f32 %v369, %v726
    %728 = vdwg.mxu0
    %729 = vmatprep.subr.mxu0 %v31
    %730 = vmatpush1.msra.mxu0 %v30
    %731 = vmatprep.subr.mxu0 0.0
    %732 = vmatpush1.msra.mxu0 0.0
    %733 = vmatprep.subr.mxu0 0.0
    %734 = vmatpush1.msra.mxu0 0.0
    %735 = vmatprep.subr.mxu0 0.0
    %736 = vmatpush1.msra.mxu0 0.0
    %737 = vmatprep.subr.mxu0 0.0
    %738 = vmatpush1.msra.mxu0 0.0
    %739 = vmatprep.subr.mxu0 0.0
    %740 = vmatpush1.msra.mxu0 0.0
    %741 = vmatprep.subr.mxu0 0.0
    %742 = vmatpush1.msra.mxu0 0.0
    %743 = vmatprep.subr.mxu0 0.0
    %744 = vmatpush1.msra.mxu0 0.0
    %745 = vmatprep.subr.mxu0 0.0
    %746 = vmatpush1.msra.mxu0 0.0
    %747 = vmatprep.subr.mxu0 0.0
    %748 = vmatpush1.msra.mxu0 0.0
    %749 = vmatprep.subr.mxu0 0.0
    %750 = vmatpush1.msra.mxu0 0.0
    %751 = vmatprep.subr.mxu0 0.0
    %752 = vmatpush1.msra.mxu0 0.0
    %753 = vmatprep.subr.mxu0 0.0
    %754 = vmatpush1.msra.mxu0 0.0
    %755 = vmatprep.subr.mxu0 0.0
    %756 = vmatpush1.msra.mxu0 0.0
    %757 = vmatprep.subr.mxu0 0.0
    %758 = vmatpush1.msra.mxu0 0.0
    %759 = vmatprep.subr.mxu0 0.0
    %760 = vmatpush1.msra.mxu0 0.0
    %761 = vmatprep.subr.mxu0 0.0
    %762 = vmatpush1.msra.mxu0 0.0
    %763 = vmatprep.subr.mxu0 0.0
    %764 = vmatpush1.msra.mxu0 0.0
    %765 = vmatprep.subr.mxu0 0.0
    %766 = vmatpush1.msra.mxu0 0.0
    %767 = vmatprep.subr.mxu0 0.0
    %768 = vmatpush1.msra.mxu0 0.0
    %769 = vmatprep.subr.mxu0 0.0
    %770 = vmatpush1.msra.mxu0 0.0
    %771 = vmatprep.subr.mxu0 0.0
    %772 = vmatpush1.msra.mxu0 0.0
    %773 = vmatprep.subr.mxu0 0.0
    %774 = vmatpush1.msra.mxu0 0.0
    %775 = vmatprep.subr.mxu0 0.0
    %776 = vmatpush1.msra.mxu0 0.0
    %777 = vmatprep.subr.mxu0 0.0
    %778 = vmatpush1.msra.mxu0 0.0
    %779 = vmatprep.subr.mxu0 0.0
    %780 = vmatpush1.msra.mxu0 0.0
    %781 = vmatprep.subr.mxu0 0.0
    %782 = vmatpush1.msra.mxu0 0.0
    %783 = vmatprep.subr.mxu0 0.0
    %784 = vmatpush1.msra.mxu0 0.0
    %785 = vmatprep.subr.mxu0 0.0
    %786 = vmatpush1.msra.mxu0 0.0
    %787 = vmatprep.subr.mxu0 0.0
    %788 = vmatpush1.msra.mxu0 0.0
    %789 = vmatprep.subr.mxu0 0.0
    %790 = vmatpush1.msra.mxu0 0.0
    %791 = vmatprep.subr.mxu0 0.0
    %792 = vmatpush1.msra.mxu0 0.0
    %793 = vmatprep.mubr.f32.mxu0 0.0
    %794 = vmatmul.mubr.f32.gmra.mrb[0].mxu0 %v443
    %v795 = vpop.f32.mrb[0].mxu0
    %v796 = vadd.f32 %v438, %v795
    %v797 = vpop.f32.mrb[0].mxu0
    %v798 = vadd.f32 %v440, %v797
    %799 = vdwg.mxu0
    %v800 = vld [vmem:[%s1 + $0x10] sm:$0xff]
    %801 = vrot.lane.b32.xlu0 %v22, 126
    %v802 = vpop.permute.xlu0 %801
    %803 = vrot.lane.b32.xlu0 %v23, 126
    %v804 = vpop.permute.xlu0 %803
    %805 = vrot.lane.b32.xlu0 %v24, 126
    %v806 = vpop.permute.xlu0 %805
    %807 = vrot.lane.b32.xlu0 %v25, 126
    %v808 = vpop.permute.xlu0 %807
    %809 = vrot.lane.b32.xlu0 %v26, 126
    %v810 = vpop.permute.xlu0 %809
    %811 = vrot.lane.b32.xlu0 %v27, 126
    %v812 = vpop.permute.xlu0 %811
    %813 = vrot.lane.b32.xlu0 %v28, 126
    %v814 = vpop.permute.xlu0 %813
    %815 = vrot.lane.b32.xlu0 %v29, 126
    %v816 = vpop.permute.xlu0 %815
    %817 = vrot.lane.b32.xlu0 %v30, 126
    %v818 = vpop.permute.xlu0 %817
    %819 = vrot.lane.b32.xlu0 %v31, 126
    %v820 = vpop.permute.xlu0 %819
    %vm821 = vcmask 1031168
    %v822 = vsel %vm821, %v802, %v804
    %v823 = vsel %vm821, %v804, %v806
    %v824 = vsel %vm821, %v806, %v808
    %v825 = vsel %vm821, %v808, %v810
    %v826 = vsel %vm821, %v810, %v812
    %v827 = vsel %vm821, %v812, %v814
    %v828 = vsel %vm821, %v814, %v816
    %v829 = vsel %vm821, %v816, %v818
    %v830 = vsel %vm821, %v818, %v820
    %v842 = vsel %vm83, %v800, 0
    %844 = vmatprep.subr.mxu0 %v823
    %845 = vmatpush1.msra.mxu0 %v822
    %846 = vmatprep.subr.mxu0 0.0
    %847 = vmatpush1.msra.mxu0 0.0
    %848 = vmatprep.subr.mxu0 0.0
    %849 = vmatpush1.msra.mxu0 0.0
    %850 = vmatprep.subr.mxu0 0.0
    %851 = vmatpush1.msra.mxu0 0.0
    %852 = vmatprep.subr.mxu0 0.0
    %853 = vmatpush1.msra.mxu0 0.0
    %854 = vmatprep.subr.mxu0 0.0
    %855 = vmatpush1.msra.mxu0 0.0
    %856 = vmatprep.subr.mxu0 0.0
    %857 = vmatpush1.msra.mxu0 0.0
    %858 = vmatprep.subr.mxu0 0.0
    %859 = vmatpush1.msra.mxu0 0.0
    %860 = vmatprep.subr.mxu0 0.0
    %861 = vmatpush1.msra.mxu0 0.0
    %862 = vmatprep.subr.mxu0 0.0
    %863 = vmatpush1.msra.mxu0 0.0
    %864 = vmatprep.subr.mxu0 0.0
    %865 = vmatpush1.msra.mxu0 0.0
    %866 = vmatprep.subr.mxu0 0.0
    %867 = vmatpush1.msra.mxu0 0.0
    %868 = vmatprep.subr.mxu0 0.0
    %869 = vmatpush1.msra.mxu0 0.0
    %870 = vmatprep.subr.mxu0 0.0
    %871 = vmatpush1.msra.mxu0 0.0
    %872 = vmatprep.subr.mxu0 0.0
    %873 = vmatpush1.msra.mxu0 0.0
    %874 = vmatprep.subr.mxu0 0.0
    %875 = vmatpush1.msra.mxu0 0.0
    %876 = vmatprep.subr.mxu0 0.0
    %877 = vmatpush1.msra.mxu0 0.0
    %878 = vmatprep.subr.mxu0 0.0
    %879 = vmatpush1.msra.mxu0 0.0
    %880 = vmatprep.subr.mxu0 0.0
    %881 = vmatpush1.msra.mxu0 0.0
    %882 = vmatprep.subr.mxu0 0.0
    %883 = vmatpush1.msra.mxu0 0.0
    %884 = vmatprep.subr.mxu0 0.0
    %885 = vmatpush1.msra.mxu0 0.0
    %886 = vmatprep.subr.mxu0 0.0
    %887 = vmatpush1.msra.mxu0 0.0
    %888 = vmatprep.subr.mxu0 0.0
    %889 = vmatpush1.msra.mxu0 0.0
    %890 = vmatprep.subr.mxu0 0.0
    %891 = vmatpush1.msra.mxu0 0.0
    %892 = vmatprep.subr.mxu0 0.0
    %893 = vmatpush1.msra.mxu0 0.0
    %894 = vmatprep.subr.mxu0 0.0
    %895 = vmatpush1.msra.mxu0 0.0
    %896 = vmatprep.subr.mxu0 0.0
    %897 = vmatpush1.msra.mxu0 0.0
    %898 = vmatprep.subr.mxu0 0.0
    %899 = vmatpush1.msra.mxu0 0.0
    %900 = vmatprep.subr.mxu0 0.0
    %901 = vmatpush1.msra.mxu0 0.0
    %902 = vmatprep.subr.mxu0 0.0
    %903 = vmatpush1.msra.mxu0 0.0
    %904 = vmatprep.subr.mxu0 0.0
    %905 = vmatpush1.msra.mxu0 0.0
    %906 = vmatprep.subr.mxu0 0.0
    %907 = vmatpush1.msra.mxu0 0.0
    %908 = vmatprep.mubr.f32.mxu0 0.0
    %909 = vmatmul.mubr.f32.gmra.mrb[0].mxu0 %v842
    %v910 = vpop.f32.mrb[0].mxu0
    %v911 = vadd.f32 0.0, %v910
    %v912 = vpop.f32.mrb[0].mxu0
    %v913 = vadd.f32 0.0, %v912
    %914 = vdwg.mxu0
    %915 = vmatprep.subr.mxu0 %v825
    %916 = vmatpush1.msra.mxu0 %v824
    %917 = vmatprep.subr.mxu0 0.0
    %918 = vmatpush1.msra.mxu0 0.0
    %919 = vmatprep.subr.mxu0 0.0
    %920 = vmatpush1.msra.mxu0 0.0
    %921 = vmatprep.subr.mxu0 0.0
    %922 = vmatpush1.msra.mxu0 0.0
    %923 = vmatprep.subr.mxu0 0.0
    %924 = vmatpush1.msra.mxu0 0.0
    %925 = vmatprep.subr.mxu0 0.0
    %926 = vmatpush1.msra.mxu0 0.0
    %927 = vmatprep.subr.mxu0 0.0
    %928 = vmatpush1.msra.mxu0 0.0
    %929 = vmatprep.subr.mxu0 0.0
    %930 = vmatpush1.msra.mxu0 0.0
    %931 = vmatprep.subr.mxu0 0.0
    %932 = vmatpush1.msra.mxu0 0.0
    %933 = vmatprep.subr.mxu0 0.0
    %934 = vmatpush1.msra.mxu0 0.0
    %935 = vmatprep.subr.mxu0 0.0
    %936 = vmatpush1.msra.mxu0 0.0
    %937 = vmatprep.subr.mxu0 0.0
    %938 = vmatpush1.msra.mxu0 0.0
    %939 = vmatprep.subr.mxu0 0.0
    %940 = vmatpush1.msra.mxu0 0.0
    %941 = vmatprep.subr.mxu0 0.0
    %942 = vmatpush1.msra.mxu0 0.0
    %943 = vmatprep.subr.mxu0 0.0
    %944 = vmatpush1.msra.mxu0 0.0
    %945 = vmatprep.subr.mxu0 0.0
    %946 = vmatpush1.msra.mxu0 0.0
    %947 = vmatprep.subr.mxu0 0.0
    %948 = vmatpush1.msra.mxu0 0.0
    %949 = vmatprep.subr.mxu0 0.0
    %950 = vmatpush1.msra.mxu0 0.0
    %951 = vmatprep.subr.mxu0 0.0
    %952 = vmatpush1.msra.mxu0 0.0
    %953 = vmatprep.subr.mxu0 0.0
    %954 = vmatpush1.msra.mxu0 0.0
    %955 = vmatprep.subr.mxu0 0.0
    %956 = vmatpush1.msra.mxu0 0.0
    %957 = vmatprep.subr.mxu0 0.0
    %958 = vmatpush1.msra.mxu0 0.0
    %959 = vmatprep.subr.mxu0 0.0
    %960 = vmatpush1.msra.mxu0 0.0
    %961 = vmatprep.subr.mxu0 0.0
    %962 = vmatpush1.msra.mxu0 0.0
    %963 = vmatprep.subr.mxu0 0.0
    %964 = vmatpush1.msra.mxu0 0.0
    %965 = vmatprep.subr.mxu0 0.0
    %966 = vmatpush1.msra.mxu0 0.0
    %967 = vmatprep.subr.mxu0 0.0
    %968 = vmatpush1.msra.mxu0 0.0
    %969 = vmatprep.subr.mxu0 0.0
    %970 = vmatpush1.msra.mxu0 0.0
    %971 = vmatprep.subr.mxu0 0.0
    %972 = vmatpush1.msra.mxu0 0.0
    %973 = vmatprep.subr.mxu0 0.0
    %974 = vmatpush1.msra.mxu0 0.0
    %975 = vmatprep.subr.mxu0 0.0
    %976 = vmatpush1.msra.mxu0 0.0
    %977 = vmatprep.subr.mxu0 0.0
    %978 = vmatpush1.msra.mxu0 0.0
    %979 = vmatprep.mubr.f32.mxu0 0.0
    %980 = vmatmul.mubr.f32.gmra.mrb[0].mxu0 %v842
    %v981 = vpop.f32.mrb[0].mxu0
    %v982 = vadd.f32 0.0, %v981
    %v983 = vpop.f32.mrb[0].mxu0
    %v984 = vadd.f32 0.0, %v983
    %985 = vdwg.mxu0
    %986 = vmatprep.subr.mxu0 %v827
    %987 = vmatpush1.msra.mxu0 %v826
    %988 = vmatprep.subr.mxu0 0.0
    %989 = vmatpush1.msra.mxu0 0.0
    %990 = vmatprep.subr.mxu0 0.0
    %991 = vmatpush1.msra.mxu0 0.0
    %992 = vmatprep.subr.mxu0 0.0
    %993 = vmatpush1.msra.mxu0 0.0
    %994 = vmatprep.subr.mxu0 0.0
    %995 = vmatpush1.msra.mxu0 0.0
    %996 = vmatprep.subr.mxu0 0.0
    %997 = vmatpush1.msra.mxu0 0.0
    %998 = vmatprep.subr.mxu0 0.0
    %999 = vmatpush1.msra.mxu0 0.0
    %1000 = vmatprep.subr.mxu0 0.0
    %1001 = vmatpush1.msra.mxu0 0.0
    %1002 = vmatprep.subr.mxu0 0.0
    %1003 = vmatpush1.msra.mxu0 0.0
    %1004 = vmatprep.subr.mxu0 0.0
    %1005 = vmatpush1.msra.mxu0 0.0
    %1006 = vmatprep.subr.mxu0 0.0
    %1007 = vmatpush1.msra.mxu0 0.0
    %1008 = vmatprep.subr.mxu0 0.0
    %1009 = vmatpush1.msra.mxu0 0.0
    %1010 = vmatprep.subr.mxu0 0.0
    %1011 = vmatpush1.msra.mxu0 0.0
    %1012 = vmatprep.subr.mxu0 0.0
    %1013 = vmatpush1.msra.mxu0 0.0
    %1014 = vmatprep.subr.mxu0 0.0
    %1015 = vmatpush1.msra.mxu0 0.0
    %1016 = vmatprep.subr.mxu0 0.0
    %1017 = vmatpush1.msra.mxu0 0.0
    %1018 = vmatprep.subr.mxu0 0.0
    %1019 = vmatpush1.msra.mxu0 0.0
    %1020 = vmatprep.subr.mxu0 0.0
    %1021 = vmatpush1.msra.mxu0 0.0
    %1022 = vmatprep.subr.mxu0 0.0
    %1023 = vmatpush1.msra.mxu0 0.0
    %1024 = vmatprep.subr.mxu0 0.0
    %1025 = vmatpush1.msra.mxu0 0.0
    %1026 = vmatprep.subr.mxu0 0.0
    %1027 = vmatpush1.msra.mxu0 0.0
    %1028 = vmatprep.subr.mxu0 0.0
    %1029 = vmatpush1.msra.mxu0 0.0
    %1030 = vmatprep.subr.mxu0 0.0
    %1031 = vmatpush1.msra.mxu0 0.0
    %1032 = vmatprep.subr.mxu0 0.0
    %1033 = vmatpush1.msra.mxu0 0.0
    %1034 = vmatprep.subr.mxu0 0.0
    %1035 = vmatpush1.msra.mxu0 0.0
    %1036 = vmatprep.subr.mxu0 0.0
    %1037 = vmatpush1.msra.mxu0 0.0
    %1038 = vmatprep.subr.mxu0 0.0
    %1039 = vmatpush1.msra.mxu0 0.0
    %1040 = vmatprep.subr.mxu0 0.0
    %1041 = vmatpush1.msra.mxu0 0.0
    %1042 = vmatprep.subr.mxu0 0.0
    %1043 = vmatpush1.msra.mxu0 0.0
    %1044 = vmatprep.subr.mxu0 0.0
    %1045 = vmatpush1.msra.mxu0 0.0
    %1046 = vmatprep.subr.mxu0 0.0
    %1047 = vmatpush1.msra.mxu0 0.0
    %1048 = vmatprep.subr.mxu0 0.0
    %1049 = vmatpush1.msra.mxu0 0.0
    %1050 = vmatprep.mubr.f32.mxu0 0.0
    %1051 = vmatmul.mubr.f32.gmra.mrb[0].mxu0 %v842
    %v1052 = vpop.f32.mrb[0].mxu0
    %v1053 = vadd.f32 0.0, %v1052
    %v1054 = vpop.f32.mrb[0].mxu0
    %v1055 = vadd.f32 0.0, %v1054
    %1056 = vdwg.mxu0
    %1057 = vmatprep.subr.mxu0 %v829
    %1058 = vmatpush1.msra.mxu0 %v828
    %1059 = vmatprep.subr.mxu0 0.0
    %1060 = vmatpush1.msra.mxu0 0.0
    %1061 = vmatprep.subr.mxu0 0.0
    %1062 = vmatpush1.msra.mxu0 0.0
    %1063 = vmatprep.subr.mxu0 0.0
    %1064 = vmatpush1.msra.mxu0 0.0
    %1065 = vmatprep.subr.mxu0 0.0
    %1066 = vmatpush1.msra.mxu0 0.0
    %1067 = vmatprep.subr.mxu0 0.0
    %1068 = vmatpush1.msra.mxu0 0.0
    %1069 = vmatprep.subr.mxu0 0.0
    %1070 = vmatpush1.msra.mxu0 0.0
    %1071 = vmatprep.subr.mxu0 0.0
    %1072 = vmatpush1.msra.mxu0 0.0
    %1073 = vmatprep.subr.mxu0 0.0
    %1074 = vmatpush1.msra.mxu0 0.0
    %1075 = vmatprep.subr.mxu0 0.0
    %1076 = vmatpush1.msra.mxu0 0.0
    %1077 = vmatprep.subr.mxu0 0.0
    %1078 = vmatpush1.msra.mxu0 0.0
    %1079 = vmatprep.subr.mxu0 0.0
    %1080 = vmatpush1.msra.mxu0 0.0
    %1081 = vmatprep.subr.mxu0 0.0
    %1082 = vmatpush1.msra.mxu0 0.0
    %1083 = vmatprep.subr.mxu0 0.0
    %1084 = vmatpush1.msra.mxu0 0.0
    %1085 = vmatprep.subr.mxu0 0.0
    %1086 = vmatpush1.msra.mxu0 0.0
    %1087 = vmatprep.subr.mxu0 0.0
    %1088 = vmatpush1.msra.mxu0 0.0
    %1089 = vmatprep.subr.mxu0 0.0
    %1090 = vmatpush1.msra.mxu0 0.0
    %1091 = vmatprep.subr.mxu0 0.0
    %1092 = vmatpush1.msra.mxu0 0.0
    %1093 = vmatprep.subr.mxu0 0.0
    %1094 = vmatpush1.msra.mxu0 0.0
    %1095 = vmatprep.subr.mxu0 0.0
    %1096 = vmatpush1.msra.mxu0 0.0
    %1097 = vmatprep.subr.mxu0 0.0
    %1098 = vmatpush1.msra.mxu0 0.0
    %1099 = vmatprep.subr.mxu0 0.0
    %1100 = vmatpush1.msra.mxu0 0.0
    %1101 = vmatprep.subr.mxu0 0.0
    %1102 = vmatpush1.msra.mxu0 0.0
    %1103 = vmatprep.subr.mxu0 0.0
    %1104 = vmatpush1.msra.mxu0 0.0
    %1105 = vmatprep.subr.mxu0 0.0
    %1106 = vmatpush1.msra.mxu0 0.0
    %1107 = vmatprep.subr.mxu0 0.0
    %1108 = vmatpush1.msra.mxu0 0.0
    %1109 = vmatprep.subr.mxu0 0.0
    %1110 = vmatpush1.msra.mxu0 0.0
    %1111 = vmatprep.subr.mxu0 0.0
    %1112 = vmatpush1.msra.mxu0 0.0
    %1113 = vmatprep.subr.mxu0 0.0
    %1114 = vmatpush1.msra.mxu0 0.0
    %1115 = vmatprep.subr.mxu0 0.0
    %1116 = vmatpush1.msra.mxu0 0.0
    %1117 = vmatprep.subr.mxu0 0.0
    %1118 = vmatpush1.msra.mxu0 0.0
    %1119 = vmatprep.subr.mxu0 0.0
    %1120 = vmatpush1.msra.mxu0 0.0
    %1121 = vmatprep.mubr.f32.mxu0 0.0
    %1122 = vmatmul.mubr.f32.gmra.mrb[0].mxu0 %v842
    %v1123 = vpop.f32.mrb[0].mxu0
    %v1124 = vadd.f32 0.0, %v1123
    %v1125 = vpop.f32.mrb[0].mxu0
    %v1126 = vadd.f32 0.0, %v1125
    %1127 = vdwg.mxu0
    %1128 = vmatprep.subr.mxu0 %v820
    %1129 = vmatpush1.msra.mxu0 %v830
    %1130 = vmatprep.subr.mxu0 0.0
    %1131 = vmatpush1.msra.mxu0 0.0
    %1132 = vmatprep.subr.mxu0 0.0
    %1133 = vmatpush1.msra.mxu0 0.0
    %1134 = vmatprep.subr.mxu0 0.0
    %1135 = vmatpush1.msra.mxu0 0.0
    %1136 = vmatprep.subr.mxu0 0.0
    %1137 = vmatpush1.msra.mxu0 0.0
    %1138 = vmatprep.subr.mxu0 0.0
    %1139 = vmatpush1.msra.mxu0 0.0
    %1140 = vmatprep.subr.mxu0 0.0
    %1141 = vmatpush1.msra.mxu0 0.0
    %1142 = vmatprep.subr.mxu0 0.0
    %1143 = vmatpush1.msra.mxu0 0.0
    %1144 = vmatprep.subr.mxu0 0.0
    %1145 = vmatpush1.msra.mxu0 0.0
    %1146 = vmatprep.subr.mxu0 0.0
    %1147 = vmatpush1.msra.mxu0 0.0
    %1148 = vmatprep.subr.mxu0 0.0
    %1149 = vmatpush1.msra.mxu0 0.0
    %1150 = vmatprep.subr.mxu0 0.0
    %1151 = vmatpush1.msra.mxu0 0.0
    %1152 = vmatprep.subr.mxu0 0.0
    %1153 = vmatpush1.msra.mxu0 0.0
    %1154 = vmatprep.subr.mxu0 0.0
    %1155 = vmatpush1.msra.mxu0 0.0
    %1156 = vmatprep.subr.mxu0 0.0
    %1157 = vmatpush1.msra.mxu0 0.0
    %1158 = vmatprep.subr.mxu0 0.0
    %1159 = vmatpush1.msra.mxu0 0.0
    %1160 = vmatprep.subr.mxu0 0.0
    %1161 = vmatpush1.msra.mxu0 0.0
    %1162 = vmatprep.subr.mxu0 0.0
    %1163 = vmatpush1.msra.mxu0 0.0
    %1164 = vmatprep.subr.mxu0 0.0
    %1165 = vmatpush1.msra.mxu0 0.0
    %1166 = vmatprep.subr.mxu0 0.0
    %1167 = vmatpush1.msra.mxu0 0.0
    %1168 = vmatprep.subr.mxu0 0.0
    %1169 = vmatpush1.msra.mxu0 0.0
    %1170 = vmatprep.subr.mxu0 0.0
    %1171 = vmatpush1.msra.mxu0 0.0
    %1172 = vmatprep.subr.mxu0 0.0
    %1173 = vmatpush1.msra.mxu0 0.0
    %1174 = vmatprep.subr.mxu0 0.0
    %1175 = vmatpush1.msra.mxu0 0.0
    %1176 = vmatprep.subr.mxu0 0.0
    %1177 = vmatpush1.msra.mxu0 0.0
    %1178 = vmatprep.subr.mxu0 0.0
    %1179 = vmatpush1.msra.mxu0 0.0
    %1180 = vmatprep.subr.mxu0 0.0
    %1181 = vmatpush1.msra.mxu0 0.0
    %1182 = vmatprep.subr.mxu0 0.0
    %1183 = vmatpush1.msra.mxu0 0.0
    %1184 = vmatprep.subr.mxu0 0.0
    %1185 = vmatpush1.msra.mxu0 0.0
    %1186 = vmatprep.subr.mxu0 0.0
    %1187 = vmatpush1.msra.mxu0 0.0
    %1188 = vmatprep.subr.mxu0 0.0
    %1189 = vmatpush1.msra.mxu0 0.0
    %1190 = vmatprep.subr.mxu0 0.0
    %1191 = vmatpush1.msra.mxu0 0.0
    %1192 = vmatprep.mubr.f32.mxu0 0.0
    %1193 = vmatmul.mubr.f32.gmra.mrb[0].mxu0 %v842
    %v1194 = vpop.f32.mrb[0].mxu0
    %v1195 = vadd.f32 0.0, %v1194
    %v1196 = vpop.f32.mrb[0].mxu0
    %v1197 = vadd.f32 0.0, %v1196
    %1198 = vdwg.mxu0
    %v1199 = vadd.f32 %v512, %v911
    %v1200 = vadd.f32 %v514, %v913
    %v1201 = vadd.f32 %v583, %v982
    %v1202 = vadd.f32 %v585, %v984
    %v1203 = vadd.f32 %v654, %v1053
    %v1204 = vadd.f32 %v656, %v1055
    %v1205 = vadd.f32 %v725, %v1124
    %v1206 = vadd.f32 %v727, %v1126
    %v1207 = vadd.f32 %v796, %v1195
    %v1208 = vadd.f32 %v798, %v1197
    %v1209 = vld [vmem:[%s1 + $0x18] sm:$0xff]
    %1210 = vrot.lane.b32.xlu0 %v22, 96
    %v1211 = vpop.permute.xlu0 %1210
    %1212 = vrot.lane.b32.xlu0 %v23, 96
    %v1213 = vpop.permute.xlu0 %1212
    %1214 = vrot.lane.b32.xlu0 %v24, 96
    %v1215 = vpop.permute.xlu0 %1214
    %1216 = vrot.lane.b32.xlu0 %v25, 96
    %v1217 = vpop.permute.xlu0 %1216
    %1218 = vrot.lane.b32.xlu0 %v26, 96
    %v1219 = vpop.permute.xlu0 %1218
    %1220 = vrot.lane.b32.xlu0 %v27, 96
    %v1221 = vpop.permute.xlu0 %1220
    %1222 = vrot.lane.b32.xlu0 %v28, 96
    %v1223 = vpop.permute.xlu0 %1222
    %1224 = vrot.lane.b32.xlu0 %v29, 96
    %v1225 = vpop.permute.xlu0 %1224
    %1226 = vrot.lane.b32.xlu0 %v30, 96
    %v1227 = vpop.permute.xlu0 %1226
    %1228 = vrot.lane.b32.xlu0 %v31, 96
    %v1229 = vpop.permute.xlu0 %1228
    %vm1230 = vcmask 785408
    %v1231 = vsel %vm1230, %v1211, %v1213
    %v1232 = vsel %vm1230, %v1213, %v1215
    %v1233 = vsel %vm1230, %v1215, %v1217
    %v1234 = vsel %vm1230, %v1217, %v1219
    %v1235 = vsel %vm1230, %v1219, %v1221
    %v1236 = vsel %vm1230, %v1221, %v1223
    %v1237 = vsel %vm1230, %v1223, %v1225
    %v1238 = vsel %vm1230, %v1225, %v1227
    %v1239 = vsel %vm1230, %v1227, %v1229
    %v1251 = vsel %vm83, %v1209, 0
    %1253 = vmatprep.subr.mxu0 %v1232
    %1254 = vmatpush1.msra.mxu0 %v1231
    %1255 = vmatprep.subr.mxu0 0.0
    %1256 = vmatpush1.msra.mxu0 0.0
    %1257 = vmatprep.subr.mxu0 0.0
    %1258 = vmatpush1.msra.mxu0 0.0
    %1259 = vmatprep.subr.mxu0 0.0
    %1260 = vmatpush1.msra.mxu0 0.0
    %1261 = vmatprep.subr.mxu0 0.0
    %1262 = vmatpush1.msra.mxu0 0.0
    %1263 = vmatprep.subr.mxu0 0.0
    %1264 = vmatpush1.msra.mxu0 0.0
    %1265 = vmatprep.subr.mxu0 0.0
    %1266 = vmatpush1.msra.mxu0 0.0
    %1267 = vmatprep.subr.mxu0 0.0
    %1268 = vmatpush1.msra.mxu0 0.0
    %1269 = vmatprep.subr.mxu0 0.0
    %1270 = vmatpush1.msra.mxu0 0.0
    %1271 = vmatprep.subr.mxu0 0.0
    %1272 = vmatpush1.msra.mxu0 0.0
    %1273 = vmatprep.subr.mxu0 0.0
    %1274 = vmatpush1.msra.mxu0 0.0
    %1275 = vmatprep.subr.mxu0 0.0
    %1276 = vmatpush1.msra.mxu0 0.0
    %1277 = vmatprep.subr.mxu0 0.0
    %1278 = vmatpush1.msra.mxu0 0.0
    %1279 = vmatprep.subr.mxu0 0.0
    %1280 = vmatpush1.msra.mxu0 0.0
    %1281 = vmatprep.subr.mxu0 0.0
    %1282 = vmatpush1.msra.mxu0 0.0
    %1283 = vmatprep.subr.mxu0 0.0
    %1284 = vmatpush1.msra.mxu0 0.0
    %1285 = vmatprep.subr.mxu0 0.0
    %1286 = vmatpush1.msra.mxu0 0.0
    %1287 = vmatprep.subr.mxu0 0.0
    %1288 = vmatpush1.msra.mxu0 0.0
    %1289 = vmatprep.subr.mxu0 0.0
    %1290 = vmatpush1.msra.mxu0 0.0
    %1291 = vmatprep.subr.mxu0 0.0
    %1292 = vmatpush1.msra.mxu0 0.0
    %1293 = vmatprep.subr.mxu0 0.0
    %1294 = vmatpush1.msra.mxu0 0.0
    %1295 = vmatprep.subr.mxu0 0.0
    %1296 = vmatpush1.msra.mxu0 0.0
    %1297 = vmatprep.subr.mxu0 0.0
    %1298 = vmatpush1.msra.mxu0 0.0
    %1299 = vmatprep.subr.mxu0 0.0
    %1300 = vmatpush1.msra.mxu0 0.0
    %1301 = vmatprep.subr.mxu0 0.0
    %1302 = vmatpush1.msra.mxu0 0.0
    %1303 = vmatprep.subr.mxu0 0.0
    %1304 = vmatpush1.msra.mxu0 0.0
    %1305 = vmatprep.subr.mxu0 0.0
    %1306 = vmatpush1.msra.mxu0 0.0
    %1307 = vmatprep.subr.mxu0 0.0
    %1308 = vmatpush1.msra.mxu0 0.0
    %1309 = vmatprep.subr.mxu0 0.0
    %1310 = vmatpush1.msra.mxu0 0.0
    %1311 = vmatprep.subr.mxu0 0.0
    %1312 = vmatpush1.msra.mxu0 0.0
    %1313 = vmatprep.subr.mxu0 0.0
    %1314 = vmatpush1.msra.mxu0 0.0
    %1315 = vmatprep.subr.mxu0 0.0
    %1316 = vmatpush1.msra.mxu0 0.0
    %1317 = vmatprep.mubr.f32.mxu0 0.0
    %1318 = vmatmul.mubr.f32.gmra.mrb[0].mxu0 %v1251
    %v1319 = vpop.f32.mrb[0].mxu0
    %v1320 = vadd.f32 0.0, %v1319
    %v1321 = vpop.f32.mrb[0].mxu0
    %v1322 = vadd.f32 0.0, %v1321
    %1323 = vdwg.mxu0
    %1324 = vmatprep.subr.mxu0 %v1234
    %1325 = vmatpush1.msra.mxu0 %v1233
    %1326 = vmatprep.subr.mxu0 0.0
    %1327 = vmatpush1.msra.mxu0 0.0
    %1328 = vmatprep.subr.mxu0 0.0
    %1329 = vmatpush1.msra.mxu0 0.0
    %1330 = vmatprep.subr.mxu0 0.0
    %1331 = vmatpush1.msra.mxu0 0.0
    %1332 = vmatprep.subr.mxu0 0.0
    %1333 = vmatpush1.msra.mxu0 0.0
    %1334 = vmatprep.subr.mxu0 0.0
    %1335 = vmatpush1.msra.mxu0 0.0
    %1336 = vmatprep.subr.mxu0 0.0
    %1337 = vmatpush1.msra.mxu0 0.0
    %1338 = vmatprep.subr.mxu0 0.0
    %1339 = vmatpush1.msra.mxu0 0.0
    %1340 = vmatprep.subr.mxu0 0.0
    %1341 = vmatpush1.msra.mxu0 0.0
    %1342 = vmatprep.subr.mxu0 0.0
    %1343 = vmatpush1.msra.mxu0 0.0
    %1344 = vmatprep.subr.mxu0 0.0
    %1345 = vmatpush1.msra.mxu0 0.0
    %1346 = vmatprep.subr.mxu0 0.0
    %1347 = vmatpush1.msra.mxu0 0.0
    %1348 = vmatprep.subr.mxu0 0.0
    %1349 = vmatpush1.msra.mxu0 0.0
    %1350 = vmatprep.subr.mxu0 0.0
    %1351 = vmatpush1.msra.mxu0 0.0
    %1352 = vmatprep.subr.mxu0 0.0
    %1353 = vmatpush1.msra.mxu0 0.0
    %1354 = vmatprep.subr.mxu0 0.0
    %1355 = vmatpush1.msra.mxu0 0.0
    %1356 = vmatprep.subr.mxu0 0.0
    %1357 = vmatpush1.msra.mxu0 0.0
    %1358 = vmatprep.subr.mxu0 0.0
    %1359 = vmatpush1.msra.mxu0 0.0
    %1360 = vmatprep.subr.mxu0 0.0
    %1361 = vmatpush1.msra.mxu0 0.0
    %1362 = vmatprep.subr.mxu0 0.0
    %1363 = vmatpush1.msra.mxu0 0.0
    %1364 = vmatprep.subr.mxu0 0.0
    %1365 = vmatpush1.msra.mxu0 0.0
    %1366 = vmatprep.subr.mxu0 0.0
    %1367 = vmatpush1.msra.mxu0 0.0
    %1368 = vmatprep.subr.mxu0 0.0
    %1369 = vmatpush1.msra.mxu0 0.0
    %1370 = vmatprep.subr.mxu0 0.0
    %1371 = vmatpush1.msra.mxu0 0.0
    %1372 = vmatprep.subr.mxu0 0.0
    %1373 = vmatpush1.msra.mxu0 0.0
    %1374 = vmatprep.subr.mxu0 0.0
    %1375 = vmatpush1.msra.mxu0 0.0
    %1376 = vmatprep.subr.mxu0 0.0
    %1377 = vmatpush1.msra.mxu0 0.0
    %1378 = vmatprep.subr.mxu0 0.0
    %1379 = vmatpush1.msra.mxu0 0.0
    %1380 = vmatprep.subr.mxu0 0.0
    %1381 = vmatpush1.msra.mxu0 0.0
    %1382 = vmatprep.subr.mxu0 0.0
    %1383 = vmatpush1.msra.mxu0 0.0
    %1384 = vmatprep.subr.mxu0 0.0
    %1385 = vmatpush1.msra.mxu0 0.0
    %1386 = vmatprep.subr.mxu0 0.0
    %1387 = vmatpush1.msra.mxu0 0.0
    %1388 = vmatprep.mubr.f32.mxu0 0.0
    %1389 = vmatmul.mubr.f32.gmra.mrb[0].mxu0 %v1251
    %v1390 = vpop.f32.mrb[0].mxu0
    %v1391 = vadd.f32 0.0, %v1390
    %v1392 = vpop.f32.mrb[0].mxu0
    %v1393 = vadd.f32 0.0, %v1392
    %1394 = vdwg.mxu0
    %1395 = vmatprep.subr.mxu0 %v1236
    %1396 = vmatpush1.msra.mxu0 %v1235
    %1397 = vmatprep.subr.mxu0 0.0
    %1398 = vmatpush1.msra.mxu0 0.0
    %1399 = vmatprep.subr.mxu0 0.0
    %1400 = vmatpush1.msra.mxu0 0.0
    %1401 = vmatprep.subr.mxu0 0.0
    %1402 = vmatpush1.msra.mxu0 0.0
    %1403 = vmatprep.subr.mxu0 0.0
    %1404 = vmatpush1.msra.mxu0 0.0
    %1405 = vmatprep.subr.mxu0 0.0
    %1406 = vmatpush1.msra.mxu0 0.0
    %1407 = vmatprep.subr.mxu0 0.0
    %1408 = vmatpush1.msra.mxu0 0.0
    %1409 = vmatprep.subr.mxu0 0.0
    %1410 = vmatpush1.msra.mxu0 0.0
    %1411 = vmatprep.subr.mxu0 0.0
    %1412 = vmatpush1.msra.mxu0 0.0
    %1413 = vmatprep.subr.mxu0 0.0
    %1414 = vmatpush1.msra.mxu0 0.0
    %1415 = vmatprep.subr.mxu0 0.0
    %1416 = vmatpush1.msra.mxu0 0.0
    %1417 = vmatprep.subr.mxu0 0.0
    %1418 = vmatpush1.msra.mxu0 0.0
    %1419 = vmatprep.subr.mxu0 0.0
    %1420 = vmatpush1.msra.mxu0 0.0
    %1421 = vmatprep.subr.mxu0 0.0
    %1422 = vmatpush1.msra.mxu0 0.0
    %1423 = vmatprep.subr.mxu0 0.0
    %1424 = vmatpush1.msra.mxu0 0.0
    %1425 = vmatprep.subr.mxu0 0.0
    %1426 = vmatpush1.msra.mxu0 0.0
    %1427 = vmatprep.subr.mxu0 0.0
    %1428 = vmatpush1.msra.mxu0 0.0
    %1429 = vmatprep.subr.mxu0 0.0
    %1430 = vmatpush1.msra.mxu0 0.0
    %1431 = vmatprep.subr.mxu0 0.0
    %1432 = vmatpush1.msra.mxu0 0.0
    %1433 = vmatprep.subr.mxu0 0.0
    %1434 = vmatpush1.msra.mxu0 0.0
    %1435 = vmatprep.subr.mxu0 0.0
    %1436 = vmatpush1.msra.mxu0 0.0
    %1437 = vmatprep.subr.mxu0 0.0
    %1438 = vmatpush1.msra.mxu0 0.0
    %1439 = vmatprep.subr.mxu0 0.0
    %1440 = vmatpush1.msra.mxu0 0.0
    %1441 = vmatprep.subr.mxu0 0.0
    %1442 = vmatpush1.msra.mxu0 0.0
    %1443 = vmatprep.subr.mxu0 0.0
    %1444 = vmatpush1.msra.mxu0 0.0
    %1445 = vmatprep.subr.mxu0 0.0
    %1446 = vmatpush1.msra.mxu0 0.0
    %1447 = vmatprep.subr.mxu0 0.0
    %1448 = vmatpush1.msra.mxu0 0.0
    %1449 = vmatprep.subr.mxu0 0.0
    %1450 = vmatpush1.msra.mxu0 0.0
    %1451 = vmatprep.subr.mxu0 0.0
    %1452 = vmatpush1.msra.mxu0 0.0
    %1453 = vmatprep.subr.mxu0 0.0
    %1454 = vmatpush1.msra.mxu0 0.0
    %1455 = vmatprep.subr.mxu0 0.0
    %1456 = vmatpush1.msra.mxu0 0.0
    %1457 = vmatprep.subr.mxu0 0.0
    %1458 = vmatpush1.msra.mxu0 0.0
    %1459 = vmatprep.mubr.f32.mxu0 0.0
    %1460 = vmatmul.mubr.f32.gmra.mrb[0].mxu0 %v1251
    %v1461 = vpop.f32.mrb[0].mxu0
    %v1462 = vadd.f32 0.0, %v1461
    %v1463 = vpop.f32.mrb[0].mxu0
    %v1464 = vadd.f32 0.0, %v1463
    %1465 = vdwg.mxu0
    %1466 = vmatprep.subr.mxu0 %v1238
    %1467 = vmatpush1.msra.mxu0 %v1237
    %1468 = vmatprep.subr.mxu0 0.0
    %1469 = vmatpush1.msra.mxu0 0.0
    %1470 = vmatprep.subr.mxu0 0.0
    %1471 = vmatpush1.msra.mxu0 0.0
    %1472 = vmatprep.subr.mxu0 0.0
    %1473 = vmatpush1.msra.mxu0 0.0
    %1474 = vmatprep.subr.mxu0 0.0
    %1475 = vmatpush1.msra.mxu0 0.0
    %1476 = vmatprep.subr.mxu0 0.0
    %1477 = vmatpush1.msra.mxu0 0.0
    %1478 = vmatprep.subr.mxu0 0.0
    %1479 = vmatpush1.msra.mxu0 0.0
    %1480 = vmatprep.subr.mxu0 0.0
    %1481 = vmatpush1.msra.mxu0 0.0
    %1482 = vmatprep.subr.mxu0 0.0
    %1483 = vmatpush1.msra.mxu0 0.0
    %1484 = vmatprep.subr.mxu0 0.0
    %1485 = vmatpush1.msra.mxu0 0.0
    %1486 = vmatprep.subr.mxu0 0.0
    %1487 = vmatpush1.msra.mxu0 0.0
    %1488 = vmatprep.subr.mxu0 0.0
    %1489 = vmatpush1.msra.mxu0 0.0
    %1490 = vmatprep.subr.mxu0 0.0
    %1491 = vmatpush1.msra.mxu0 0.0
    %1492 = vmatprep.subr.mxu0 0.0
    %1493 = vmatpush1.msra.mxu0 0.0
    %1494 = vmatprep.subr.mxu0 0.0
    %1495 = vmatpush1.msra.mxu0 0.0
    %1496 = vmatprep.subr.mxu0 0.0
    %1497 = vmatpush1.msra.mxu0 0.0
    %1498 = vmatprep.subr.mxu0 0.0
    %1499 = vmatpush1.msra.mxu0 0.0
    %1500 = vmatprep.subr.mxu0 0.0
    %1501 = vmatpush1.msra.mxu0 0.0
    %1502 = vmatprep.subr.mxu0 0.0
    %1503 = vmatpush1.msra.mxu0 0.0
    %1504 = vmatprep.subr.mxu0 0.0
    %1505 = vmatpush1.msra.mxu0 0.0
    %1506 = vmatprep.subr.mxu0 0.0
    %1507 = vmatpush1.msra.mxu0 0.0
    %1508 = vmatprep.subr.mxu0 0.0
    %1509 = vmatpush1.msra.mxu0 0.0
    %1510 = vmatprep.subr.mxu0 0.0
    %1511 = vmatpush1.msra.mxu0 0.0
    %1512 = vmatprep.subr.mxu0 0.0
    %1513 = vmatpush1.msra.mxu0 0.0
    %1514 = vmatprep.subr.mxu0 0.0
    %1515 = vmatpush1.msra.mxu0 0.0
    %1516 = vmatprep.subr.mxu0 0.0
    %1517 = vmatpush1.msra.mxu0 0.0
    %1518 = vmatprep.subr.mxu0 0.0
    %1519 = vmatpush1.msra.mxu0 0.0
    %1520 = vmatprep.subr.mxu0 0.0
    %1521 = vmatpush1.msra.mxu0 0.0
    %1522 = vmatprep.subr.mxu0 0.0
    %1523 = vmatpush1.msra.mxu0 0.0
    %1524 = vmatprep.subr.mxu0 0.0
    %1525 = vmatpush1.msra.mxu0 0.0
    %1526 = vmatprep.subr.mxu0 0.0
    %1527 = vmatpush1.msra.mxu0 0.0
    %1528 = vmatprep.subr.mxu0 0.0
    %1529 = vmatpush1.msra.mxu0 0.0
    %1530 = vmatprep.mubr.f32.mxu0 0.0
    %1531 = vmatmul.mubr.f32.gmra.mrb[0].mxu0 %v1251
    %v1532 = vpop.f32.mrb[0].mxu0
    %v1533 = vadd.f32 0.0, %v1532
    %v1534 = vpop.f32.mrb[0].mxu0
    %v1535 = vadd.f32 0.0, %v1534
    %1536 = vdwg.mxu0
    %1537 = vmatprep.subr.mxu0 %v1229
    %1538 = vmatpush1.msra.mxu0 %v1239
    %1539 = vmatprep.subr.mxu0 0.0
    %1540 = vmatpush1.msra.mxu0 0.0
    %1541 = vmatprep.subr.mxu0 0.0
    %1542 = vmatpush1.msra.mxu0 0.0
    %1543 = vmatprep.subr.mxu0 0.0
    %1544 = vmatpush1.msra.mxu0 0.0
    %1545 = vmatprep.subr.mxu0 0.0
    %1546 = vmatpush1.msra.mxu0 0.0
    %1547 = vmatprep.subr.mxu0 0.0
    %1548 = vmatpush1.msra.mxu0 0.0
    %1549 = vmatprep.subr.mxu0 0.0
    %1550 = vmatpush1.msra.mxu0 0.0
    %1551 = vmatprep.subr.mxu0 0.0
    %1552 = vmatpush1.msra.mxu0 0.0
    %1553 = vmatprep.subr.mxu0 0.0
    %1554 = vmatpush1.msra.mxu0 0.0
    %1555 = vmatprep.subr.mxu0 0.0
    %1556 = vmatpush1.msra.mxu0 0.0
    %1557 = vmatprep.subr.mxu0 0.0
    %1558 = vmatpush1.msra.mxu0 0.0
    %1559 = vmatprep.subr.mxu0 0.0
    %1560 = vmatpush1.msra.mxu0 0.0
    %1561 = vmatprep.subr.mxu0 0.0
    %1562 = vmatpush1.msra.mxu0 0.0
    %1563 = vmatprep.subr.mxu0 0.0
    %1564 = vmatpush1.msra.mxu0 0.0
    %1565 = vmatprep.subr.mxu0 0.0
    %1566 = vmatpush1.msra.mxu0 0.0
    %1567 = vmatprep.subr.mxu0 0.0
    %1568 = vmatpush1.msra.mxu0 0.0
    %1569 = vmatprep.subr.mxu0 0.0
    %1570 = vmatpush1.msra.mxu0 0.0
    %1571 = vmatprep.subr.mxu0 0.0
    %1572 = vmatpush1.msra.mxu0 0.0
    %1573 = vmatprep.subr.mxu0 0.0
    %1574 = vmatpush1.msra.mxu0 0.0
    %1575 = vmatprep.subr.mxu0 0.0
    %1576 = vmatpush1.msra.mxu0 0.0
    %1577 = vmatprep.subr.mxu0 0.0
    %1578 = vmatpush1.msra.mxu0 0.0
    %1579 = vmatprep.subr.mxu0 0.0
    %1580 = vmatpush1.msra.mxu0 0.0
    %1581 = vmatprep.subr.mxu0 0.0
    %1582 = vmatpush1.msra.mxu0 0.0
    %1583 = vmatprep.subr.mxu0 0.0
    %1584 = vmatpush1.msra.mxu0 0.0
    %1585 = vmatprep.subr.mxu0 0.0
    %1586 = vmatpush1.msra.mxu0 0.0
    %1587 = vmatprep.subr.mxu0 0.0
    %1588 = vmatpush1.msra.mxu0 0.0
    %1589 = vmatprep.subr.mxu0 0.0
    %1590 = vmatpush1.msra.mxu0 0.0
    %1591 = vmatprep.subr.mxu0 0.0
    %1592 = vmatpush1.msra.mxu0 0.0
    %1593 = vmatprep.subr.mxu0 0.0
    %1594 = vmatpush1.msra.mxu0 0.0
    %1595 = vmatprep.subr.mxu0 0.0
    %1596 = vmatpush1.msra.mxu0 0.0
    %1597 = vmatprep.subr.mxu0 0.0
    %1598 = vmatpush1.msra.mxu0 0.0
    %1599 = vmatprep.subr.mxu0 0.0
    %1600 = vmatpush1.msra.mxu0 0.0
    %1601 = vmatprep.mubr.f32.mxu0 0.0
    %1602 = vmatmul.mubr.f32.gmra.mrb[0].mxu0 %v1251
    %v1603 = vpop.f32.mrb[0].mxu0
    %v1604 = vadd.f32 0.0, %v1603
    %v1605 = vpop.f32.mrb[0].mxu0
    %v1606 = vadd.f32 0.0, %v1605
    %1607 = vdwg.mxu0
    %v1608 = vadd.f32 %v1199, %v1320
    %v1609 = vadd.f32 %v1200, %v1322
    %v1610 = vadd.f32 %v1201, %v1391
    %v1611 = vadd.f32 %v1202, %v1393
    %v1612 = vadd.f32 %v1203, %v1462
    %v1613 = vadd.f32 %v1204, %v1464
    %v1614 = vadd.f32 %v1205, %v1533
    %v1615 = vadd.f32 %v1206, %v1535
    %v1616 = vadd.f32 %v1207, %v1604
    %v1617 = vadd.f32 %v1208, %v1606
    %v1618 = vld [vmem:[%s1 + $0x20] sm:$0xff]
    %1619 = vrot.lane.b32.xlu0 %v22, 95
    %v1620 = vpop.permute.xlu0 %1619
    %1621 = vrot.lane.b32.xlu0 %v23, 95
    %v1622 = vpop.permute.xlu0 %1621
    %1623 = vrot.lane.b32.xlu0 %v24, 95
    %v1624 = vpop.permute.xlu0 %1623
    %1625 = vrot.lane.b32.xlu0 %v25, 95
    %v1626 = vpop.permute.xlu0 %1625
    %1627 = vrot.lane.b32.xlu0 %v26, 95
    %v1628 = vpop.permute.xlu0 %1627
    %1629 = vrot.lane.b32.xlu0 %v27, 95
    %v1630 = vpop.permute.xlu0 %1629
    %1631 = vrot.lane.b32.xlu0 %v28, 95
    %v1632 = vpop.permute.xlu0 %1631
    %1633 = vrot.lane.b32.xlu0 %v29, 95
    %v1634 = vpop.permute.xlu0 %1633
    %1635 = vrot.lane.b32.xlu0 %v30, 95
    %v1636 = vpop.permute.xlu0 %1635
    %1637 = vrot.lane.b32.xlu0 %v31, 95
    %v1638 = vpop.permute.xlu0 %1637
    %vm1639 = vcmask 777216
    %v1640 = vsel %vm1639, %v1620, %v1622
    %v1641 = vsel %vm1639, %v1622, %v1624
    %v1642 = vsel %vm1639, %v1624, %v1626
    %v1643 = vsel %vm1639, %v1626, %v1628
    %v1644 = vsel %vm1639, %v1628, %v1630
    %v1645 = vsel %vm1639, %v1630, %v1632
    %v1646 = vsel %vm1639, %v1632, %v1634
    %v1647 = vsel %vm1639, %v1634, %v1636
    %v1648 = vsel %vm1639, %v1636, %v1638
    %v1660 = vsel %vm83, %v1618, 0
    %1662 = vmatprep.subr.mxu0 %v1641
    %1663 = vmatpush1.msra.mxu0 %v1640
    %1664 = vmatprep.subr.mxu0 0.0
    %1665 = vmatpush1.msra.mxu0 0.0
    %1666 = vmatprep.subr.mxu0 0.0
    %1667 = vmatpush1.msra.mxu0 0.0
    %1668 = vmatprep.subr.mxu0 0.0
    %1669 = vmatpush1.msra.mxu0 0.0
    %1670 = vmatprep.subr.mxu0 0.0
    %1671 = vmatpush1.msra.mxu0 0.0
    %1672 = vmatprep.subr.mxu0 0.0
    %1673 = vmatpush1.msra.mxu0 0.0
    %1674 = vmatprep.subr.mxu0 0.0
    %1675 = vmatpush1.msra.mxu0 0.0
    %1676 = vmatprep.subr.mxu0 0.0
    %1677 = vmatpush1.msra.mxu0 0.0
    %1678 = vmatprep.subr.mxu0 0.0
    %1679 = vmatpush1.msra.mxu0 0.0
    %1680 = vmatprep.subr.mxu0 0.0
    %1681 = vmatpush1.msra.mxu0 0.0
    %1682 = vmatprep.subr.mxu0 0.0
    %1683 = vmatpush1.msra.mxu0 0.0
    %1684 = vmatprep.subr.mxu0 0.0
    %1685 = vmatpush1.msra.mxu0 0.0
    %1686 = vmatprep.subr.mxu0 0.0
    %1687 = vmatpush1.msra.mxu0 0.0
    %1688 = vmatprep.subr.mxu0 0.0
    %1689 = vmatpush1.msra.mxu0 0.0
    %1690 = vmatprep.subr.mxu0 0.0
    %1691 = vmatpush1.msra.mxu0 0.0
    %1692 = vmatprep.subr.mxu0 0.0
    %1693 = vmatpush1.msra.mxu0 0.0
    %1694 = vmatprep.subr.mxu0 0.0
    %1695 = vmatpush1.msra.mxu0 0.0
    %1696 = vmatprep.subr.mxu0 0.0
    %1697 = vmatpush1.msra.mxu0 0.0
    %1698 = vmatprep.subr.mxu0 0.0
    %1699 = vmatpush1.msra.mxu0 0.0
    %1700 = vmatprep.subr.mxu0 0.0
    %1701 = vmatpush1.msra.mxu0 0.0
    %1702 = vmatprep.subr.mxu0 0.0
    %1703 = vmatpush1.msra.mxu0 0.0
    %1704 = vmatprep.subr.mxu0 0.0
    %1705 = vmatpush1.msra.mxu0 0.0
    %1706 = vmatprep.subr.mxu0 0.0
    %1707 = vmatpush1.msra.mxu0 0.0
    %1708 = vmatprep.subr.mxu0 0.0
    %1709 = vmatpush1.msra.mxu0 0.0
    %1710 = vmatprep.subr.mxu0 0.0
    %1711 = vmatpush1.msra.mxu0 0.0
    %1712 = vmatprep.subr.mxu0 0.0
    %1713 = vmatpush1.msra.mxu0 0.0
    %1714 = vmatprep.subr.mxu0 0.0
    %1715 = vmatpush1.msra.mxu0 0.0
    %1716 = vmatprep.subr.mxu0 0.0
    %1717 = vmatpush1.msra.mxu0 0.0
    %1718 = vmatprep.subr.mxu0 0.0
    %1719 = vmatpush1.msra.mxu0 0.0
    %1720 = vmatprep.subr.mxu0 0.0
    %1721 = vmatpush1.msra.mxu0 0.0
    %1722 = vmatprep.subr.mxu0 0.0
    %1723 = vmatpush1.msra.mxu0 0.0
    %1724 = vmatprep.subr.mxu0 0.0
    %1725 = vmatpush1.msra.mxu0 0.0
    %1726 = vmatprep.mubr.f32.mxu0 0.0
    %1727 = vmatmul.mubr.f32.gmra.mrb[0].mxu0 %v1660
    %v1728 = vpop.f32.mrb[0].mxu0
    %v1729 = vadd.f32 0.0, %v1728
    %v1730 = vpop.f32.mrb[0].mxu0
    %v1731 = vadd.f32 0.0, %v1730
    %1732 = vdwg.mxu0
    %1733 = vmatprep.subr.mxu0 %v1643
    %1734 = vmatpush1.msra.mxu0 %v1642
    %1735 = vmatprep.subr.mxu0 0.0
    %1736 = vmatpush1.msra.mxu0 0.0
    %1737 = vmatprep.subr.mxu0 0.0
    %1738 = vmatpush1.msra.mxu0 0.0
    %1739 = vmatprep.subr.mxu0 0.0
    %1740 = vmatpush1.msra.mxu0 0.0
    %1741 = vmatprep.subr.mxu0 0.0
    %1742 = vmatpush1.msra.mxu0 0.0
    %1743 = vmatprep.subr.mxu0 0.0
    %1744 = vmatpush1.msra.mxu0 0.0
    %1745 = vmatprep.subr.mxu0 0.0
    %1746 = vmatpush1.msra.mxu0 0.0
    %1747 = vmatprep.subr.mxu0 0.0
    %1748 = vmatpush1.msra.mxu0 0.0
    %1749 = vmatprep.subr.mxu0 0.0
    %1750 = vmatpush1.msra.mxu0 0.0
    %1751 = vmatprep.subr.mxu0 0.0
    %1752 = vmatpush1.msra.mxu0 0.0
    %1753 = vmatprep.subr.mxu0 0.0
    %1754 = vmatpush1.msra.mxu0 0.0
    %1755 = vmatprep.subr.mxu0 0.0
    %1756 = vmatpush1.msra.mxu0 0.0
    %1757 = vmatprep.subr.mxu0 0.0
    %1758 = vmatpush1.msra.mxu0 0.0
    %1759 = vmatprep.subr.mxu0 0.0
    %1760 = vmatpush1.msra.mxu0 0.0
    %1761 = vmatprep.subr.mxu0 0.0
    %1762 = vmatpush1.msra.mxu0 0.0
    %1763 = vmatprep.subr.mxu0 0.0
    %1764 = vmatpush1.msra.mxu0 0.0
    %1765 = vmatprep.subr.mxu0 0.0
    %1766 = vmatpush1.msra.mxu0 0.0
    %1767 = vmatprep.subr.mxu0 0.0
    %1768 = vmatpush1.msra.mxu0 0.0
    %1769 = vmatprep.subr.mxu0 0.0
    %1770 = vmatpush1.msra.mxu0 0.0
    %1771 = vmatprep.subr.mxu0 0.0
    %1772 = vmatpush1.msra.mxu0 0.0
    %1773 = vmatprep.subr.mxu0 0.0
    %1774 = vmatpush1.msra.mxu0 0.0
    %1775 = vmatprep.subr.mxu0 0.0
    %1776 = vmatpush1.msra.mxu0 0.0
    %1777 = vmatprep.subr.mxu0 0.0
    %1778 = vmatpush1.msra.mxu0 0.0
    %1779 = vmatprep.subr.mxu0 0.0
    %1780 = vmatpush1.msra.mxu0 0.0
    %1781 = vmatprep.subr.mxu0 0.0
    %1782 = vmatpush1.msra.mxu0 0.0
    %1783 = vmatprep.subr.mxu0 0.0
    %1784 = vmatpush1.msra.mxu0 0.0
    %1785 = vmatprep.subr.mxu0 0.0
    %1786 = vmatpush1.msra.mxu0 0.0
    %1787 = vmatprep.subr.mxu0 0.0
    %1788 = vmatpush1.msra.mxu0 0.0
    %1789 = vmatprep.subr.mxu0 0.0
    %1790 = vmatpush1.msra.mxu0 0.0
    %1791 = vmatprep.subr.mxu0 0.0
    %1792 = vmatpush1.msra.mxu0 0.0
    %1793 = vmatprep.subr.mxu0 0.0
    %1794 = vmatpush1.msra.mxu0 0.0
    %1795 = vmatprep.subr.mxu0 0.0
    %1796 = vmatpush1.msra.mxu0 0.0
    %1797 = vmatprep.mubr.f32.mxu0 0.0
    %1798 = vmatmul.mubr.f32.gmra.mrb[0].mxu0 %v1660
    %v1799 = vpop.f32.mrb[0].mxu0
    %v1800 = vadd.f32 0.0, %v1799
    %v1801 = vpop.f32.mrb[0].mxu0
    %v1802 = vadd.f32 0.0, %v1801
    %1803 = vdwg.mxu0
    %1804 = vmatprep.subr.mxu0 %v1645
    %1805 = vmatpush1.msra.mxu0 %v1644
    %1806 = vmatprep.subr.mxu0 0.0
    %1807 = vmatpush1.msra.mxu0 0.0
    %1808 = vmatprep.subr.mxu0 0.0
    %1809 = vmatpush1.msra.mxu0 0.0
    %1810 = vmatprep.subr.mxu0 0.0
    %1811 = vmatpush1.msra.mxu0 0.0
    %1812 = vmatprep.subr.mxu0 0.0
    %1813 = vmatpush1.msra.mxu0 0.0
    %1814 = vmatprep.subr.mxu0 0.0
    %1815 = vmatpush1.msra.mxu0 0.0
    %1816 = vmatprep.subr.mxu0 0.0
    %1817 = vmatpush1.msra.mxu0 0.0
    %1818 = vmatprep.subr.mxu0 0.0
    %1819 = vmatpush1.msra.mxu0 0.0
    %1820 = vmatprep.subr.mxu0 0.0
    %1821 = vmatpush1.msra.mxu0 0.0
    %1822 = vmatprep.subr.mxu0 0.0
    %1823 = vmatpush1.msra.mxu0 0.0
    %1824 = vmatprep.subr.mxu0 0.0
    %1825 = vmatpush1.msra.mxu0 0.0
    %1826 = vmatprep.subr.mxu0 0.0
    %1827 = vmatpush1.msra.mxu0 0.0
    %1828 = vmatprep.subr.mxu0 0.0
    %1829 = vmatpush1.msra.mxu0 0.0
    %1830 = vmatprep.subr.mxu0 0.0
    %1831 = vmatpush1.msra.mxu0 0.0
    %1832 = vmatprep.subr.mxu0 0.0
    %1833 = vmatpush1.msra.mxu0 0.0
    %1834 = vmatprep.subr.mxu0 0.0
    %1835 = vmatpush1.msra.mxu0 0.0
    %1836 = vmatprep.subr.mxu0 0.0
    %1837 = vmatpush1.msra.mxu0 0.0
    %1838 = vmatprep.subr.mxu0 0.0
    %1839 = vmatpush1.msra.mxu0 0.0
    %1840 = vmatprep.subr.mxu0 0.0
    %1841 = vmatpush1.msra.mxu0 0.0
    %1842 = vmatprep.subr.mxu0 0.0
    %1843 = vmatpush1.msra.mxu0 0.0
    %1844 = vmatprep.subr.mxu0 0.0
    %1845 = vmatpush1.msra.mxu0 0.0
    %1846 = vmatprep.subr.mxu0 0.0
    %1847 = vmatpush1.msra.mxu0 0.0
    %1848 = vmatprep.subr.mxu0 0.0
    %1849 = vmatpush1.msra.mxu0 0.0
    %1850 = vmatprep.subr.mxu0 0.0
    %1851 = vmatpush1.msra.mxu0 0.0
    %1852 = vmatprep.subr.mxu0 0.0
    %1853 = vmatpush1.msra.mxu0 0.0
    %1854 = vmatprep.subr.mxu0 0.0
    %1855 = vmatpush1.msra.mxu0 0.0
    %1856 = vmatprep.subr.mxu0 0.0
    %1857 = vmatpush1.msra.mxu0 0.0
    %1858 = vmatprep.subr.mxu0 0.0
    %1859 = vmatpush1.msra.mxu0 0.0
    %1860 = vmatprep.subr.mxu0 0.0
    %1861 = vmatpush1.msra.mxu0 0.0
    %1862 = vmatprep.subr.mxu0 0.0
    %1863 = vmatpush1.msra.mxu0 0.0
    %1864 = vmatprep.subr.mxu0 0.0
    %1865 = vmatpush1.msra.mxu0 0.0
    %1866 = vmatprep.subr.mxu0 0.0
    %1867 = vmatpush1.msra.mxu0 0.0
    %1868 = vmatprep.mubr.f32.mxu0 0.0
    %1869 = vmatmul.mubr.f32.gmra.mrb[0].mxu0 %v1660
    %v1870 = vpop.f32.mrb[0].mxu0
    %v1871 = vadd.f32 0.0, %v1870
    %v1872 = vpop.f32.mrb[0].mxu0
    %v1873 = vadd.f32 0.0, %v1872
    %1874 = vdwg.mxu0
    %1875 = vmatprep.subr.mxu0 %v1647
    %1876 = vmatpush1.msra.mxu0 %v1646
    %1877 = vmatprep.subr.mxu0 0.0
    %1878 = vmatpush1.msra.mxu0 0.0
    %1879 = vmatprep.subr.mxu0 0.0
    %1880 = vmatpush1.msra.mxu0 0.0
    %1881 = vmatprep.subr.mxu0 0.0
    %1882 = vmatpush1.msra.mxu0 0.0
    %1883 = vmatprep.subr.mxu0 0.0
    %1884 = vmatpush1.msra.mxu0 0.0
    %1885 = vmatprep.subr.mxu0 0.0
    %1886 = vmatpush1.msra.mxu0 0.0
    %1887 = vmatprep.subr.mxu0 0.0
    %1888 = vmatpush1.msra.mxu0 0.0
    %1889 = vmatprep.subr.mxu0 0.0
    %1890 = vmatpush1.msra.mxu0 0.0
    %1891 = vmatprep.subr.mxu0 0.0
    %1892 = vmatpush1.msra.mxu0 0.0
    %1893 = vmatprep.subr.mxu0 0.0
    %1894 = vmatpush1.msra.mxu0 0.0
    %1895 = vmatprep.subr.mxu0 0.0
    %1896 = vmatpush1.msra.mxu0 0.0
    %1897 = vmatprep.subr.mxu0 0.0
    %1898 = vmatpush1.msra.mxu0 0.0
    %1899 = vmatprep.subr.mxu0 0.0
    %1900 = vmatpush1.msra.mxu0 0.0
    %1901 = vmatprep.subr.mxu0 0.0
    %1902 = vmatpush1.msra.mxu0 0.0
    %1903 = vmatprep.subr.mxu0 0.0
    %1904 = vmatpush1.msra.mxu0 0.0
    %1905 = vmatprep.subr.mxu0 0.0
    %1906 = vmatpush1.msra.mxu0 0.0
    %1907 = vmatprep.subr.mxu0 0.0
    %1908 = vmatpush1.msra.mxu0 0.0
    %1909 = vmatprep.subr.mxu0 0.0
    %1910 = vmatpush1.msra.mxu0 0.0
    %1911 = vmatprep.subr.mxu0 0.0
    %1912 = vmatpush1.msra.mxu0 0.0
    %1913 = vmatprep.subr.mxu0 0.0
    %1914 = vmatpush1.msra.mxu0 0.0
    %1915 = vmatprep.subr.mxu0 0.0
    %1916 = vmatpush1.msra.mxu0 0.0
    %1917 = vmatprep.subr.mxu0 0.0
    %1918 = vmatpush1.msra.mxu0 0.0
    %1919 = vmatprep.subr.mxu0 0.0
    %1920 = vmatpush1.msra.mxu0 0.0
    %1921 = vmatprep.subr.mxu0 0.0
    %1922 = vmatpush1.msra.mxu0 0.0
    %1923 = vmatprep.subr.mxu0 0.0
    %1924 = vmatpush1.msra.mxu0 0.0
    %1925 = vmatprep.subr.mxu0 0.0
    %1926 = vmatpush1.msra.mxu0 0.0
    %1927 = vmatprep.subr.mxu0 0.0
    %1928 = vmatpush1.msra.mxu0 0.0
    %1929 = vmatprep.subr.mxu0 0.0
    %1930 = vmatpush1.msra.mxu0 0.0
    %1931 = vmatprep.subr.mxu0 0.0
    %1932 = vmatpush1.msra.mxu0 0.0
    %1933 = vmatprep.subr.mxu0 0.0
    %1934 = vmatpush1.msra.mxu0 0.0
    %1935 = vmatprep.subr.mxu0 0.0
    %1936 = vmatpush1.msra.mxu0 0.0
    %1937 = vmatprep.subr.mxu0 0.0
    %1938 = vmatpush1.msra.mxu0 0.0
    %1939 = vmatprep.mubr.f32.mxu0 0.0
    %1940 = vmatmul.mubr.f32.gmra.mrb[0].mxu0 %v1660
    %v1941 = vpop.f32.mrb[0].mxu0
    %v1942 = vadd.f32 0.0, %v1941
    %v1943 = vpop.f32.mrb[0].mxu0
    %v1944 = vadd.f32 0.0, %v1943
    %1945 = vdwg.mxu0
    %1946 = vmatprep.subr.mxu0 %v1638
    %1947 = vmatpush1.msra.mxu0 %v1648
    %1948 = vmatprep.subr.mxu0 0.0
    %1949 = vmatpush1.msra.mxu0 0.0
    %1950 = vmatprep.subr.mxu0 0.0
    %1951 = vmatpush1.msra.mxu0 0.0
    %1952 = vmatprep.subr.mxu0 0.0
    %1953 = vmatpush1.msra.mxu0 0.0
    %1954 = vmatprep.subr.mxu0 0.0
    %1955 = vmatpush1.msra.mxu0 0.0
    %1956 = vmatprep.subr.mxu0 0.0
    %1957 = vmatpush1.msra.mxu0 0.0
    %1958 = vmatprep.subr.mxu0 0.0
    %1959 = vmatpush1.msra.mxu0 0.0
    %1960 = vmatprep.subr.mxu0 0.0
    %1961 = vmatpush1.msra.mxu0 0.0
    %1962 = vmatprep.subr.mxu0 0.0
    %1963 = vmatpush1.msra.mxu0 0.0
    %1964 = vmatprep.subr.mxu0 0.0
    %1965 = vmatpush1.msra.mxu0 0.0
    %1966 = vmatprep.subr.mxu0 0.0
    %1967 = vmatpush1.msra.mxu0 0.0
    %1968 = vmatprep.subr.mxu0 0.0
    %1969 = vmatpush1.msra.mxu0 0.0
    %1970 = vmatprep.subr.mxu0 0.0
    %1971 = vmatpush1.msra.mxu0 0.0
    %1972 = vmatprep.subr.mxu0 0.0
    %1973 = vmatpush1.msra.mxu0 0.0
    %1974 = vmatprep.subr.mxu0 0.0
    %1975 = vmatpush1.msra.mxu0 0.0
    %1976 = vmatprep.subr.mxu0 0.0
    %1977 = vmatpush1.msra.mxu0 0.0
    %1978 = vmatprep.subr.mxu0 0.0
    %1979 = vmatpush1.msra.mxu0 0.0
    %1980 = vmatprep.subr.mxu0 0.0
    %1981 = vmatpush1.msra.mxu0 0.0
    %1982 = vmatprep.subr.mxu0 0.0
    %1983 = vmatpush1.msra.mxu0 0.0
    %1984 = vmatprep.subr.mxu0 0.0
    %1985 = vmatpush1.msra.mxu0 0.0
    %1986 = vmatprep.subr.mxu0 0.0
    %1987 = vmatpush1.msra.mxu0 0.0
    %1988 = vmatprep.subr.mxu0 0.0
    %1989 = vmatpush1.msra.mxu0 0.0
    %1990 = vmatprep.subr.mxu0 0.0
    %1991 = vmatpush1.msra.mxu0 0.0
    %1992 = vmatprep.subr.mxu0 0.0
    %1993 = vmatpush1.msra.mxu0 0.0
    %1994 = vmatprep.subr.mxu0 0.0
    %1995 = vmatpush1.msra.mxu0 0.0
    %1996 = vmatprep.subr.mxu0 0.0
    %1997 = vmatpush1.msra.mxu0 0.0
    %1998 = vmatprep.subr.mxu0 0.0
    %1999 = vmatpush1.msra.mxu0 0.0
    %2000 = vmatprep.subr.mxu0 0.0
    %2001 = vmatpush1.msra.mxu0 0.0
    %2002 = vmatprep.subr.mxu0 0.0
    %2003 = vmatpush1.msra.mxu0 0.0
    %2004 = vmatprep.subr.mxu0 0.0
    %2005 = vmatpush1.msra.mxu0 0.0
    %2006 = vmatprep.subr.mxu0 0.0
    %2007 = vmatpush1.msra.mxu0 0.0
    %2008 = vmatprep.subr.mxu0 0.0
    %2009 = vmatpush1.msra.mxu0 0.0
    %2010 = vmatprep.mubr.f32.mxu0 0.0
    %2011 = vmatmul.mubr.f32.gmra.mrb[0].mxu0 %v1660
    %v2012 = vpop.f32.mrb[0].mxu0
    %v2013 = vadd.f32 0.0, %v2012
    %v2014 = vpop.f32.mrb[0].mxu0
    %v2015 = vadd.f32 0.0, %v2014
    %2016 = vdwg.mxu0
    %v2017 = vadd.f32 %v1608, %v1729
    %v2018 = vadd.f32 %v1609, %v1731
    %v2019 = vadd.f32 %v1610, %v1800
    %v2020 = vadd.f32 %v1611, %v1802
    %v2021 = vadd.f32 %v1612, %v1871
    %v2022 = vadd.f32 %v1613, %v1873
    %v2023 = vadd.f32 %v1614, %v1942
    %v2024 = vadd.f32 %v1615, %v1944
    %v2025 = vadd.f32 %v1616, %v2013
    %v2026 = vadd.f32 %v1617, %v2015
    %v2027 = vld [vmem:[%s1 + $0x28] sm:$0xff]
    %2028 = vrot.lane.b32.xlu0 %v22, 94
    %v2029 = vpop.permute.xlu0 %2028
    %2030 = vrot.lane.b32.xlu0 %v23, 94
    %v2031 = vpop.permute.xlu0 %2030
    %2032 = vrot.lane.b32.xlu0 %v24, 94
    %v2033 = vpop.permute.xlu0 %2032
    %2034 = vrot.lane.b32.xlu0 %v25, 94
    %v2035 = vpop.permute.xlu0 %2034
    %2036 = vrot.lane.b32.xlu0 %v26, 94
    %v2037 = vpop.permute.xlu0 %2036
    %2038 = vrot.lane.b32.xlu0 %v27, 94
    %v2039 = vpop.permute.xlu0 %2038
    %2040 = vrot.lane.b32.xlu0 %v28, 94
    %v2041 = vpop.permute.xlu0 %2040
    %2042 = vrot.lane.b32.xlu0 %v29, 94
    %v2043 = vpop.permute.xlu0 %2042
    %2044 = vrot.lane.b32.xlu0 %v30, 94
    %v2045 = vpop.permute.xlu0 %2044
    %2046 = vrot.lane.b32.xlu0 %v31, 94
    %v2047 = vpop.permute.xlu0 %2046
    %vm2048 = vcmask 769024
    %v2049 = vsel %vm2048, %v2029, %v2031
    %v2050 = vsel %vm2048, %v2031, %v2033
    %v2051 = vsel %vm2048, %v2033, %v2035
    %v2052 = vsel %vm2048, %v2035, %v2037
    %v2053 = vsel %vm2048, %v2037, %v2039
    %v2054 = vsel %vm2048, %v2039, %v2041
    %v2055 = vsel %vm2048, %v2041, %v2043
    %v2056 = vsel %vm2048, %v2043, %v2045
    %v2057 = vsel %vm2048, %v2045, %v2047
    %v2069 = vsel %vm83, %v2027, 0
    %2071 = vmatprep.subr.mxu0 %v2050
    %2072 = vmatpush1.msra.mxu0 %v2049
    %2073 = vmatprep.subr.mxu0 0.0
    %2074 = vmatpush1.msra.mxu0 0.0
    %2075 = vmatprep.subr.mxu0 0.0
    %2076 = vmatpush1.msra.mxu0 0.0
    %2077 = vmatprep.subr.mxu0 0.0
    %2078 = vmatpush1.msra.mxu0 0.0
    %2079 = vmatprep.subr.mxu0 0.0
    %2080 = vmatpush1.msra.mxu0 0.0
    %2081 = vmatprep.subr.mxu0 0.0
    %2082 = vmatpush1.msra.mxu0 0.0
    %2083 = vmatprep.subr.mxu0 0.0
    %2084 = vmatpush1.msra.mxu0 0.0
    %2085 = vmatprep.subr.mxu0 0.0
    %2086 = vmatpush1.msra.mxu0 0.0
    %2087 = vmatprep.subr.mxu0 0.0
    %2088 = vmatpush1.msra.mxu0 0.0
    %2089 = vmatprep.subr.mxu0 0.0
    %2090 = vmatpush1.msra.mxu0 0.0
    %2091 = vmatprep.subr.mxu0 0.0
    %2092 = vmatpush1.msra.mxu0 0.0
    %2093 = vmatprep.subr.mxu0 0.0
    %2094 = vmatpush1.msra.mxu0 0.0
    %2095 = vmatprep.subr.mxu0 0.0
    %2096 = vmatpush1.msra.mxu0 0.0
    %2097 = vmatprep.subr.mxu0 0.0
    %2098 = vmatpush1.msra.mxu0 0.0
    %2099 = vmatprep.subr.mxu0 0.0
    %2100 = vmatpush1.msra.mxu0 0.0
    %2101 = vmatprep.subr.mxu0 0.0
    %2102 = vmatpush1.msra.mxu0 0.0
    %2103 = vmatprep.subr.mxu0 0.0
    %2104 = vmatpush1.msra.mxu0 0.0
    %2105 = vmatprep.subr.mxu0 0.0
    %2106 = vmatpush1.msra.mxu0 0.0
    %2107 = vmatprep.subr.mxu0 0.0
    %2108 = vmatpush1.msra.mxu0 0.0
    %2109 = vmatprep.subr.mxu0 0.0
    %2110 = vmatpush1.msra.mxu0 0.0
    %2111 = vmatprep.subr.mxu0 0.0
    %2112 = vmatpush1.msra.mxu0 0.0
    %2113 = vmatprep.subr.mxu0 0.0
    %2114 = vmatpush1.msra.mxu0 0.0
    %2115 = vmatprep.subr.mxu0 0.0
    %2116 = vmatpush1.msra.mxu0 0.0
    %2117 = vmatprep.subr.mxu0 0.0
    %2118 = vmatpush1.msra.mxu0 0.0
    %2119 = vmatprep.subr.mxu0 0.0
    %2120 = vmatpush1.msra.mxu0 0.0
    %2121 = vmatprep.subr.mxu0 0.0
    %2122 = vmatpush1.msra.mxu0 0.0
    %2123 = vmatprep.subr.mxu0 0.0
    %2124 = vmatpush1.msra.mxu0 0.0
    %2125 = vmatprep.subr.mxu0 0.0
    %2126 = vmatpush1.msra.mxu0 0.0
    %2127 = vmatprep.subr.mxu0 0.0
    %2128 = vmatpush1.msra.mxu0 0.0
    %2129 = vmatprep.subr.mxu0 0.0
    %2130 = vmatpush1.msra.mxu0 0.0
    %2131 = vmatprep.subr.mxu0 0.0
    %2132 = vmatpush1.msra.mxu0 0.0
    %2133 = vmatprep.subr.mxu0 0.0
    %2134 = vmatpush1.msra.mxu0 0.0
    %2135 = vmatprep.mubr.f32.mxu0 0.0
    %2136 = vmatmul.mubr.f32.gmra.mrb[0].mxu0 %v2069
    %v2137 = vpop.f32.mrb[0].mxu0
    %v2138 = vadd.f32 0.0, %v2137
    %v2139 = vpop.f32.mrb[0].mxu0
    %v2140 = vadd.f32 0.0, %v2139
    %2141 = vdwg.mxu0
    %2142 = vmatprep.subr.mxu0 %v2052
    %2143 = vmatpush1.msra.mxu0 %v2051
    %2144 = vmatprep.subr.mxu0 0.0
    %2145 = vmatpush1.msra.mxu0 0.0
    %2146 = vmatprep.subr.mxu0 0.0
    %2147 = vmatpush1.msra.mxu0 0.0
    %2148 = vmatprep.subr.mxu0 0.0
    %2149 = vmatpush1.msra.mxu0 0.0
    %2150 = vmatprep.subr.mxu0 0.0
    %2151 = vmatpush1.msra.mxu0 0.0
    %2152 = vmatprep.subr.mxu0 0.0
    %2153 = vmatpush1.msra.mxu0 0.0
    %2154 = vmatprep.subr.mxu0 0.0
    %2155 = vmatpush1.msra.mxu0 0.0
    %2156 = vmatprep.subr.mxu0 0.0
    %2157 = vmatpush1.msra.mxu0 0.0
    %2158 = vmatprep.subr.mxu0 0.0
    %2159 = vmatpush1.msra.mxu0 0.0
    %2160 = vmatprep.subr.mxu0 0.0
    %2161 = vmatpush1.msra.mxu0 0.0
    %2162 = vmatprep.subr.mxu0 0.0
    %2163 = vmatpush1.msra.mxu0 0.0
    %2164 = vmatprep.subr.mxu0 0.0
    %2165 = vmatpush1.msra.mxu0 0.0
    %2166 = vmatprep.subr.mxu0 0.0
    %2167 = vmatpush1.msra.mxu0 0.0
    %2168 = vmatprep.subr.mxu0 0.0
    %2169 = vmatpush1.msra.mxu0 0.0
    %2170 = vmatprep.subr.mxu0 0.0
    %2171 = vmatpush1.msra.mxu0 0.0
    %2172 = vmatprep.subr.mxu0 0.0
    %2173 = vmatpush1.msra.mxu0 0.0
    %2174 = vmatprep.subr.mxu0 0.0
    %2175 = vmatpush1.msra.mxu0 0.0
    %2176 = vmatprep.subr.mxu0 0.0
    %2177 = vmatpush1.msra.mxu0 0.0
    %2178 = vmatprep.subr.mxu0 0.0
    %2179 = vmatpush1.msra.mxu0 0.0
    %2180 = vmatprep.subr.mxu0 0.0
    %2181 = vmatpush1.msra.mxu0 0.0
    %2182 = vmatprep.subr.mxu0 0.0
    %2183 = vmatpush1.msra.mxu0 0.0
    %2184 = vmatprep.subr.mxu0 0.0
    %2185 = vmatpush1.msra.mxu0 0.0
    %2186 = vmatprep.subr.mxu0 0.0
    %2187 = vmatpush1.msra.mxu0 0.0
    %2188 = vmatprep.subr.mxu0 0.0
    %2189 = vmatpush1.msra.mxu0 0.0
    %2190 = vmatprep.subr.mxu0 0.0
    %2191 = vmatpush1.msra.mxu0 0.0
    %2192 = vmatprep.subr.mxu0 0.0
    %2193 = vmatpush1.msra.mxu0 0.0
    %2194 = vmatprep.subr.mxu0 0.0
    %2195 = vmatpush1.msra.mxu0 0.0
    %2196 = vmatprep.subr.mxu0 0.0
    %2197 = vmatpush1.msra.mxu0 0.0
    %2198 = vmatprep.subr.mxu0 0.0
    %2199 = vmatpush1.msra.mxu0 0.0
    %2200 = vmatprep.subr.mxu0 0.0
    %2201 = vmatpush1.msra.mxu0 0.0
    %2202 = vmatprep.subr.mxu0 0.0
    %2203 = vmatpush1.msra.mxu0 0.0
    %2204 = vmatprep.subr.mxu0 0.0
    %2205 = vmatpush1.msra.mxu0 0.0
    %2206 = vmatprep.mubr.f32.mxu0 0.0
    %2207 = vmatmul.mubr.f32.gmra.mrb[0].mxu0 %v2069
    %v2208 = vpop.f32.mrb[0].mxu0
    %v2209 = vadd.f32 0.0, %v2208
    %v2210 = vpop.f32.mrb[0].mxu0
    %v2211 = vadd.f32 0.0, %v2210
    %2212 = vdwg.mxu0
    %2213 = vmatprep.subr.mxu0 %v2054
    %2214 = vmatpush1.msra.mxu0 %v2053
    %2215 = vmatprep.subr.mxu0 0.0
    %2216 = vmatpush1.msra.mxu0 0.0
    %2217 = vmatprep.subr.mxu0 0.0
    %2218 = vmatpush1.msra.mxu0 0.0
    %2219 = vmatprep.subr.mxu0 0.0
    %2220 = vmatpush1.msra.mxu0 0.0
    %2221 = vmatprep.subr.mxu0 0.0
    %2222 = vmatpush1.msra.mxu0 0.0
    %2223 = vmatprep.subr.mxu0 0.0
    %2224 = vmatpush1.msra.mxu0 0.0
    %2225 = vmatprep.subr.mxu0 0.0
    %2226 = vmatpush1.msra.mxu0 0.0
    %2227 = vmatprep.subr.mxu0 0.0
    %2228 = vmatpush1.msra.mxu0 0.0
    %2229 = vmatprep.subr.mxu0 0.0
    %2230 = vmatpush1.msra.mxu0 0.0
    %2231 = vmatprep.subr.mxu0 0.0
    %2232 = vmatpush1.msra.mxu0 0.0
    %2233 = vmatprep.subr.mxu0 0.0
    %2234 = vmatpush1.msra.mxu0 0.0
    %2235 = vmatprep.subr.mxu0 0.0
    %2236 = vmatpush1.msra.mxu0 0.0
    %2237 = vmatprep.subr.mxu0 0.0
    %2238 = vmatpush1.msra.mxu0 0.0
    %2239 = vmatprep.subr.mxu0 0.0
    %2240 = vmatpush1.msra.mxu0 0.0
    %2241 = vmatprep.subr.mxu0 0.0
    %2242 = vmatpush1.msra.mxu0 0.0
    %2243 = vmatprep.subr.mxu0 0.0
    %2244 = vmatpush1.msra.mxu0 0.0
    %2245 = vmatprep.subr.mxu0 0.0
    %2246 = vmatpush1.msra.mxu0 0.0
    %2247 = vmatprep.subr.mxu0 0.0
    %2248 = vmatpush1.msra.mxu0 0.0
    %2249 = vmatprep.subr.mxu0 0.0
    %2250 = vmatpush1.msra.mxu0 0.0
    %2251 = vmatprep.subr.mxu0 0.0
    %2252 = vmatpush1.msra.mxu0 0.0
    %2253 = vmatprep.subr.mxu0 0.0
    %2254 = vmatpush1.msra.mxu0 0.0
    %2255 = vmatprep.subr.mxu0 0.0
    %2256 = vmatpush1.msra.mxu0 0.0
    %2257 = vmatprep.subr.mxu0 0.0
    %2258 = vmatpush1.msra.mxu0 0.0
    %2259 = vmatprep.subr.mxu0 0.0
    %2260 = vmatpush1.msra.mxu0 0.0
    %2261 = vmatprep.subr.mxu0 0.0
    %2262 = vmatpush1.msra.mxu0 0.0
    %2263 = vmatprep.subr.mxu0 0.0
    %2264 = vmatpush1.msra.mxu0 0.0
    %2265 = vmatprep.subr.mxu0 0.0
    %2266 = vmatpush1.msra.mxu0 0.0
    %2267 = vmatprep.subr.mxu0 0.0
    %2268 = vmatpush1.msra.mxu0 0.0
    %2269 = vmatprep.subr.mxu0 0.0
    %2270 = vmatpush1.msra.mxu0 0.0
    %2271 = vmatprep.subr.mxu0 0.0
    %2272 = vmatpush1.msra.mxu0 0.0
    %2273 = vmatprep.subr.mxu0 0.0
    %2274 = vmatpush1.msra.mxu0 0.0
    %2275 = vmatprep.subr.mxu0 0.0
    %2276 = vmatpush1.msra.mxu0 0.0
    %2277 = vmatprep.mubr.f32.mxu0 0.0
    %2278 = vmatmul.mubr.f32.gmra.mrb[0].mxu0 %v2069
    %v2279 = vpop.f32.mrb[0].mxu0
    %v2280 = vadd.f32 0.0, %v2279
    %v2281 = vpop.f32.mrb[0].mxu0
    %v2282 = vadd.f32 0.0, %v2281
    %2283 = vdwg.mxu0
    %2284 = vmatprep.subr.mxu0 %v2056
    %2285 = vmatpush1.msra.mxu0 %v2055
    %2286 = vmatprep.subr.mxu0 0.0
    %2287 = vmatpush1.msra.mxu0 0.0
    %2288 = vmatprep.subr.mxu0 0.0
    %2289 = vmatpush1.msra.mxu0 0.0
    %2290 = vmatprep.subr.mxu0 0.0
    %2291 = vmatpush1.msra.mxu0 0.0
    %2292 = vmatprep.subr.mxu0 0.0
    %2293 = vmatpush1.msra.mxu0 0.0
    %2294 = vmatprep.subr.mxu0 0.0
    %2295 = vmatpush1.msra.mxu0 0.0
    %2296 = vmatprep.subr.mxu0 0.0
    %2297 = vmatpush1.msra.mxu0 0.0
    %2298 = vmatprep.subr.mxu0 0.0
    %2299 = vmatpush1.msra.mxu0 0.0
    %2300 = vmatprep.subr.mxu0 0.0
    %2301 = vmatpush1.msra.mxu0 0.0
    %2302 = vmatprep.subr.mxu0 0.0
    %2303 = vmatpush1.msra.mxu0 0.0
    %2304 = vmatprep.subr.mxu0 0.0
    %2305 = vmatpush1.msra.mxu0 0.0
    %2306 = vmatprep.subr.mxu0 0.0
    %2307 = vmatpush1.msra.mxu0 0.0
    %2308 = vmatprep.subr.mxu0 0.0
    %2309 = vmatpush1.msra.mxu0 0.0
    %2310 = vmatprep.subr.mxu0 0.0
    %2311 = vmatpush1.msra.mxu0 0.0
    %2312 = vmatprep.subr.mxu0 0.0
    %2313 = vmatpush1.msra.mxu0 0.0
    %2314 = vmatprep.subr.mxu0 0.0
    %2315 = vmatpush1.msra.mxu0 0.0
    %2316 = vmatprep.subr.mxu0 0.0
    %2317 = vmatpush1.msra.mxu0 0.0
    %2318 = vmatprep.subr.mxu0 0.0
    %2319 = vmatpush1.msra.mxu0 0.0
    %2320 = vmatprep.subr.mxu0 0.0
    %2321 = vmatpush1.msra.mxu0 0.0
    %2322 = vmatprep.subr.mxu0 0.0
    %2323 = vmatpush1.msra.mxu0 0.0
    %2324 = vmatprep.subr.mxu0 0.0
    %2325 = vmatpush1.msra.mxu0 0.0
    %2326 = vmatprep.subr.mxu0 0.0
    %2327 = vmatpush1.msra.mxu0 0.0
    %2328 = vmatprep.subr.mxu0 0.0
    %2329 = vmatpush1.msra.mxu0 0.0
    %2330 = vmatprep.subr.mxu0 0.0
    %2331 = vmatpush1.msra.mxu0 0.0
    %2332 = vmatprep.subr.mxu0 0.0
    %2333 = vmatpush1.msra.mxu0 0.0
    %2334 = vmatprep.subr.mxu0 0.0
    %2335 = vmatpush1.msra.mxu0 0.0
    %2336 = vmatprep.subr.mxu0 0.0
    %2337 = vmatpush1.msra.mxu0 0.0
    %2338 = vmatprep.subr.mxu0 0.0
    %2339 = vmatpush1.msra.mxu0 0.0
    %2340 = vmatprep.subr.mxu0 0.0
    %2341 = vmatpush1.msra.mxu0 0.0
    %2342 = vmatprep.subr.mxu0 0.0
    %2343 = vmatpush1.msra.mxu0 0.0
    %2344 = vmatprep.subr.mxu0 0.0
    %2345 = vmatpush1.msra.mxu0 0.0
    %2346 = vmatprep.subr.mxu0 0.0
    %2347 = vmatpush1.msra.mxu0 0.0
    %2348 = vmatprep.mubr.f32.mxu0 0.0
    %2349 = vmatmul.mubr.f32.gmra.mrb[0].mxu0 %v2069
    %v2350 = vpop.f32.mrb[0].mxu0
    %v2351 = vadd.f32 0.0, %v2350
    %v2352 = vpop.f32.mrb[0].mxu0
    %v2353 = vadd.f32 0.0, %v2352
    %2354 = vdwg.mxu0
    %2355 = vmatprep.subr.mxu0 %v2047
    %2356 = vmatpush1.msra.mxu0 %v2057
    %2357 = vmatprep.subr.mxu0 0.0
    %2358 = vmatpush1.msra.mxu0 0.0
    %2359 = vmatprep.subr.mxu0 0.0
    %2360 = vmatpush1.msra.mxu0 0.0
    %2361 = vmatprep.subr.mxu0 0.0
    %2362 = vmatpush1.msra.mxu0 0.0
    %2363 = vmatprep.subr.mxu0 0.0
    %2364 = vmatpush1.msra.mxu0 0.0
    %2365 = vmatprep.subr.mxu0 0.0
    %2366 = vmatpush1.msra.mxu0 0.0
    %2367 = vmatprep.subr.mxu0 0.0
    %2368 = vmatpush1.msra.mxu0 0.0
    %2369 = vmatprep.subr.mxu0 0.0
    %2370 = vmatpush1.msra.mxu0 0.0
    %2371 = vmatprep.subr.mxu0 0.0
    %2372 = vmatpush1.msra.mxu0 0.0
    %2373 = vmatprep.subr.mxu0 0.0
    %2374 = vmatpush1.msra.mxu0 0.0
    %2375 = vmatprep.subr.mxu0 0.0
    %2376 = vmatpush1.msra.mxu0 0.0
    %2377 = vmatprep.subr.mxu0 0.0
    %2378 = vmatpush1.msra.mxu0 0.0
    %2379 = vmatprep.subr.mxu0 0.0
    %2380 = vmatpush1.msra.mxu0 0.0
    %2381 = vmatprep.subr.mxu0 0.0
    %2382 = vmatpush1.msra.mxu0 0.0
    %2383 = vmatprep.subr.mxu0 0.0
    %2384 = vmatpush1.msra.mxu0 0.0
    %2385 = vmatprep.subr.mxu0 0.0
    %2386 = vmatpush1.msra.mxu0 0.0
    %2387 = vmatprep.subr.mxu0 0.0
    %2388 = vmatpush1.msra.mxu0 0.0
    %2389 = vmatprep.subr.mxu0 0.0
    %2390 = vmatpush1.msra.mxu0 0.0
    %2391 = vmatprep.subr.mxu0 0.0
    %2392 = vmatpush1.msra.mxu0 0.0
    %2393 = vmatprep.subr.mxu0 0.0
    %2394 = vmatpush1.msra.mxu0 0.0
    %2395 = vmatprep.subr.mxu0 0.0
    %2396 = vmatpush1.msra.mxu0 0.0
    %2397 = vmatprep.subr.mxu0 0.0
    %2398 = vmatpush1.msra.mxu0 0.0
    %2399 = vmatprep.subr.mxu0 0.0
    %2400 = vmatpush1.msra.mxu0 0.0
    %2401 = vmatprep.subr.mxu0 0.0
    %2402 = vmatpush1.msra.mxu0 0.0
    %2403 = vmatprep.subr.mxu0 0.0
    %2404 = vmatpush1.msra.mxu0 0.0
    %2405 = vmatprep.subr.mxu0 0.0
    %2406 = vmatpush1.msra.mxu0 0.0
    %2407 = vmatprep.subr.mxu0 0.0
    %2408 = vmatpush1.msra.mxu0 0.0
    %2409 = vmatprep.subr.mxu0 0.0
    %2410 = vmatpush1.msra.mxu0 0.0
    %2411 = vmatprep.subr.mxu0 0.0
    %2412 = vmatpush1.msra.mxu0 0.0
    %2413 = vmatprep.subr.mxu0 0.0
    %2414 = vmatpush1.msra.mxu0 0.0
    %2415 = vmatprep.subr.mxu0 0.0
    %2416 = vmatpush1.msra.mxu0 0.0
    %2417 = vmatprep.subr.mxu0 0.0
    %2418 = vmatpush1.msra.mxu0 0.0
    %2419 = vmatprep.mubr.f32.mxu0 0.0
    %2420 = vmatmul.mubr.f32.gmra.mrb[0].mxu0 %v2069
    %v2421 = vpop.f32.mrb[0].mxu0
    %v2422 = vadd.f32 0.0, %v2421
    %v2423 = vpop.f32.mrb[0].mxu0
    %v2424 = vadd.f32 0.0, %v2423
    %2425 = vdwg.mxu0
    %v2426 = vadd.f32 %v2017, %v2138
    %v2427 = vadd.f32 %v2018, %v2140
    %v2428 = vadd.f32 %v2019, %v2209
    %v2429 = vadd.f32 %v2020, %v2211
    %v2430 = vadd.f32 %v2021, %v2280
    %v2431 = vadd.f32 %v2022, %v2282
    %v2432 = vadd.f32 %v2023, %v2351
    %v2433 = vadd.f32 %v2024, %v2353
    %v2434 = vadd.f32 %v2025, %v2422
    %v2435 = vadd.f32 %v2026, %v2424
    %v2436 = vld [vmem:[%s1 + $0x30] sm:$0xff]
    %v2437 = vld [vmem:[%s0] sm:$0xff]
    %v2438 = vld [vmem:[%s0 + $0x8] sm:$0xff]
    %v2439 = vld [vmem:[%s0 + $0x10] sm:$0xff]
    %v2440 = vld [vmem:[%s0 + $0x18] sm:$0xff]
    %v2441 = vld [vmem:[%s0 + $0x20] sm:$0xff]
    %v2442 = vld [vmem:[%s0 + $0x28] sm:$0xff]
    %v2443 = vld [vmem:[%s0 + $0x30] sm:$0xff]
    %v2444 = vld [vmem:[%s0 + $0x38] sm:$0xff]
    %v2445 = vld [vmem:[%s0 + $0x40] sm:$0xff]
    %v2446 = vld [vmem:[%s0 + $0x48] sm:$0xff]
    %v2447 = vld [vmem:[%s0 + $0x50] sm:$0xff]
    %2459 = vrot.lane.b32.xlu0 %v2437, 64
    %v2460 = vpop.permute.xlu0 %2459
    %2461 = vrot.lane.b32.xlu0 %v2438, 64
    %v2462 = vpop.permute.xlu0 %2461
    %2463 = vrot.lane.b32.xlu0 %v2439, 64
    %v2464 = vpop.permute.xlu0 %2463
    %2465 = vrot.lane.b32.xlu0 %v2440, 64
    %v2466 = vpop.permute.xlu0 %2465
    %2467 = vrot.lane.b32.xlu0 %v2441, 64
    %v2468 = vpop.permute.xlu0 %2467
    %2469 = vrot.lane.b32.xlu0 %v2442, 64
    %v2470 = vpop.permute.xlu0 %2469
    %2471 = vrot.lane.b32.xlu0 %v2443, 64
    %v2472 = vpop.permute.xlu0 %2471
    %2473 = vrot.lane.b32.xlu0 %v2444, 64
    %v2474 = vpop.permute.xlu0 %2473
    %2475 = vrot.lane.b32.xlu0 %v2445, 64
    %v2476 = vpop.permute.xlu0 %2475
    %2477 = vrot.lane.b32.xlu0 %v2446, 64
    %v2478 = vpop.permute.xlu0 %2477
    %2479 = vrot.lane.b32.xlu0 %v2447, 64
    %v2480 = vpop.permute.xlu0 %2479
    %vm2481 = vcmask 523264
    %v2482 = vsel %vm2481, %v2460, %v2462
    %v2483 = vsel %vm2481, %v2462, %v2464
    %v2484 = vsel %vm2481, %v2464, %v2466
    %v2485 = vsel %vm2481, %v2466, %v2468
    %v2486 = vsel %vm2481, %v2468, %v2470
    %v2487 = vsel %vm2481, %v2470, %v2472
    %v2488 = vsel %vm2481, %v2472, %v2474
    %v2489 = vsel %vm2481, %v2474, %v2476
    %v2490 = vsel %vm2481, %v2476, %v2478
    %v2491 = vsel %vm2481, %v2478, %v2480
    %v2503 = vsel %vm83, %v2436, 0
    %2505 = vmatprep.subr.mxu0 %v2483
    %2506 = vmatpush1.msra.mxu0 %v2482
    %2507 = vmatprep.subr.mxu0 0.0
    %2508 = vmatpush1.msra.mxu0 0.0
    %2509 = vmatprep.subr.mxu0 0.0
    %2510 = vmatpush1.msra.mxu0 0.0
    %2511 = vmatprep.subr.mxu0 0.0
    %2512 = vmatpush1.msra.mxu0 0.0
    %2513 = vmatprep.subr.mxu0 0.0
    %2514 = vmatpush1.msra.mxu0 0.0
    %2515 = vmatprep.subr.mxu0 0.0
    %2516 = vmatpush1.msra.mxu0 0.0
    %2517 = vmatprep.subr.mxu0 0.0
    %2518 = vmatpush1.msra.mxu0 0.0
    %2519 = vmatprep.subr.mxu0 0.0
    %2520 = vmatpush1.msra.mxu0 0.0
    %2521 = vmatprep.subr.mxu0 0.0
    %2522 = vmatpush1.msra.mxu0 0.0
    %2523 = vmatprep.subr.mxu0 0.0
    %2524 = vmatpush1.msra.mxu0 0.0
    %2525 = vmatprep.subr.mxu0 0.0
    %2526 = vmatpush1.msra.mxu0 0.0
    %2527 = vmatprep.subr.mxu0 0.0
    %2528 = vmatpush1.msra.mxu0 0.0
    %2529 = vmatprep.subr.mxu0 0.0
    %2530 = vmatpush1.msra.mxu0 0.0
    %2531 = vmatprep.subr.mxu0 0.0
    %2532 = vmatpush1.msra.mxu0 0.0
    %2533 = vmatprep.subr.mxu0 0.0
    %2534 = vmatpush1.msra.mxu0 0.0
    %2535 = vmatprep.subr.mxu0 0.0
    %2536 = vmatpush1.msra.mxu0 0.0
    %2537 = vmatprep.subr.mxu0 0.0
    %2538 = vmatpush1.msra.mxu0 0.0
    %2539 = vmatprep.subr.mxu0 0.0
    %2540 = vmatpush1.msra.mxu0 0.0
    %2541 = vmatprep.subr.mxu0 0.0
    %2542 = vmatpush1.msra.mxu0 0.0
    %2543 = vmatprep.subr.mxu0 0.0
    %2544 = vmatpush1.msra.mxu0 0.0
    %2545 = vmatprep.subr.mxu0 0.0
    %2546 = vmatpush1.msra.mxu0 0.0
    %2547 = vmatprep.subr.mxu0 0.0
    %2548 = vmatpush1.msra.mxu0 0.0
    %2549 = vmatprep.subr.mxu0 0.0
    %2550 = vmatpush1.msra.mxu0 0.0
    %2551 = vmatprep.subr.mxu0 0.0
    %2552 = vmatpush1.msra.mxu0 0.0
    %2553 = vmatprep.subr.mxu0 0.0
    %2554 = vmatpush1.msra.mxu0 0.0
    %2555 = vmatprep.subr.mxu0 0.0
    %2556 = vmatpush1.msra.mxu0 0.0
    %2557 = vmatprep.subr.mxu0 0.0
    %2558 = vmatpush1.msra.mxu0 0.0
    %2559 = vmatprep.subr.mxu0 0.0
    %2560 = vmatpush1.msra.mxu0 0.0
    %2561 = vmatprep.subr.mxu0 0.0
    %2562 = vmatpush1.msra.mxu0 0.0
    %2563 = vmatprep.subr.mxu0 0.0
    %2564 = vmatpush1.msra.mxu0 0.0
    %2565 = vmatprep.subr.mxu0 0.0
    %2566 = vmatpush1.msra.mxu0 0.0
    %2567 = vmatprep.subr.mxu0 0.0
    %2568 = vmatpush1.msra.mxu0 0.0
    %2569 = vmatprep.mubr.f32.mxu0 0.0
    %2570 = vmatmul.mubr.f32.gmra.mrb[0].mxu0 %v2503
    %v2571 = vpop.f32.mrb[0].mxu0
    %v2572 = vadd.f32 0.0, %v2571
    %v2573 = vpop.f32.mrb[0].mxu0
    %v2574 = vadd.f32 0.0, %v2573
    %2575 = vdwg.mxu0
    %2576 = vmatprep.subr.mxu0 %v2485
    %2577 = vmatpush1.msra.mxu0 %v2484
    %2578 = vmatprep.subr.mxu0 0.0
    %2579 = vmatpush1.msra.mxu0 0.0
    %2580 = vmatprep.subr.mxu0 0.0
    %2581 = vmatpush1.msra.mxu0 0.0
    %2582 = vmatprep.subr.mxu0 0.0
    %2583 = vmatpush1.msra.mxu0 0.0
    %2584 = vmatprep.subr.mxu0 0.0
    %2585 = vmatpush1.msra.mxu0 0.0
    %2586 = vmatprep.subr.mxu0 0.0
    %2587 = vmatpush1.msra.mxu0 0.0
    %2588 = vmatprep.subr.mxu0 0.0
    %2589 = vmatpush1.msra.mxu0 0.0
    %2590 = vmatprep.subr.mxu0 0.0
    %2591 = vmatpush1.msra.mxu0 0.0
    %2592 = vmatprep.subr.mxu0 0.0
    %2593 = vmatpush1.msra.mxu0 0.0
    %2594 = vmatprep.subr.mxu0 0.0
    %2595 = vmatpush1.msra.mxu0 0.0
    %2596 = vmatprep.subr.mxu0 0.0
    %2597 = vmatpush1.msra.mxu0 0.0
    %2598 = vmatprep.subr.mxu0 0.0
    %2599 = vmatpush1.msra.mxu0 0.0
    %2600 = vmatprep.subr.mxu0 0.0
    %2601 = vmatpush1.msra.mxu0 0.0
    %2602 = vmatprep.subr.mxu0 0.0
    %2603 = vmatpush1.msra.mxu0 0.0
    %2604 = vmatprep.subr.mxu0 0.0
    %2605 = vmatpush1.msra.mxu0 0.0
    %2606 = vmatprep.subr.mxu0 0.0
    %2607 = vmatpush1.msra.mxu0 0.0
    %2608 = vmatprep.subr.mxu0 0.0
    %2609 = vmatpush1.msra.mxu0 0.0
    %2610 = vmatprep.subr.mxu0 0.0
    %2611 = vmatpush1.msra.mxu0 0.0
    %2612 = vmatprep.subr.mxu0 0.0
    %2613 = vmatpush1.msra.mxu0 0.0
    %2614 = vmatprep.subr.mxu0 0.0
    %2615 = vmatpush1.msra.mxu0 0.0
    %2616 = vmatprep.subr.mxu0 0.0
    %2617 = vmatpush1.msra.mxu0 0.0
    %2618 = vmatprep.subr.mxu0 0.0
    %2619 = vmatpush1.msra.mxu0 0.0
    %2620 = vmatprep.subr.mxu0 0.0
    %2621 = vmatpush1.msra.mxu0 0.0
    %2622 = vmatprep.subr.mxu0 0.0
    %2623 = vmatpush1.msra.mxu0 0.0
    %2624 = vmatprep.subr.mxu0 0.0
    %2625 = vmatpush1.msra.mxu0 0.0
    %2626 = vmatprep.subr.mxu0 0.0
    %2627 = vmatpush1.msra.mxu0 0.0
    %2628 = vmatprep.subr.mxu0 0.0
    %2629 = vmatpush1.msra.mxu0 0.0
    %2630 = vmatprep.subr.mxu0 0.0
    %2631 = vmatpush1.msra.mxu0 0.0
    %2632 = vmatprep.subr.mxu0 0.0
    %2633 = vmatpush1.msra.mxu0 0.0
    %2634 = vmatprep.subr.mxu0 0.0
    %2635 = vmatpush1.msra.mxu0 0.0
    %2636 = vmatprep.subr.mxu0 0.0
    %2637 = vmatpush1.msra.mxu0 0.0
    %2638 = vmatprep.subr.mxu0 0.0
    %2639 = vmatpush1.msra.mxu0 0.0
    %2640 = vmatprep.mubr.f32.mxu0 0.0
    %2641 = vmatmul.mubr.f32.gmra.mrb[0].mxu0 %v2503
    %v2642 = vpop.f32.mrb[0].mxu0
    %v2643 = vadd.f32 0.0, %v2642
    %v2644 = vpop.f32.mrb[0].mxu0
    %v2645 = vadd.f32 0.0, %v2644
    %2646 = vdwg.mxu0
    %2647 = vmatprep.subr.mxu0 %v2487
    %2648 = vmatpush1.msra.mxu0 %v2486
    %2649 = vmatprep.subr.mxu0 0.0
    %2650 = vmatpush1.msra.mxu0 0.0
    %2651 = vmatprep.subr.mxu0 0.0
    %2652 = vmatpush1.msra.mxu0 0.0
    %2653 = vmatprep.subr.mxu0 0.0
    %2654 = vmatpush1.msra.mxu0 0.0
    %2655 = vmatprep.subr.mxu0 0.0
    %2656 = vmatpush1.msra.mxu0 0.0
    %2657 = vmatprep.subr.mxu0 0.0
    %2658 = vmatpush1.msra.mxu0 0.0
    %2659 = vmatprep.subr.mxu0 0.0
    %2660 = vmatpush1.msra.mxu0 0.0
    %2661 = vmatprep.subr.mxu0 0.0
    %2662 = vmatpush1.msra.mxu0 0.0
    %2663 = vmatprep.subr.mxu0 0.0
    %2664 = vmatpush1.msra.mxu0 0.0
    %2665 = vmatprep.subr.mxu0 0.0
    %2666 = vmatpush1.msra.mxu0 0.0
    %2667 = vmatprep.subr.mxu0 0.0
    %2668 = vmatpush1.msra.mxu0 0.0
    %2669 = vmatprep.subr.mxu0 0.0
    %2670 = vmatpush1.msra.mxu0 0.0
    %2671 = vmatprep.subr.mxu0 0.0
    %2672 = vmatpush1.msra.mxu0 0.0
    %2673 = vmatprep.subr.mxu0 0.0
    %2674 = vmatpush1.msra.mxu0 0.0
    %2675 = vmatprep.subr.mxu0 0.0
    %2676 = vmatpush1.msra.mxu0 0.0
    %2677 = vmatprep.subr.mxu0 0.0
    %2678 = vmatpush1.msra.mxu0 0.0
    %2679 = vmatprep.subr.mxu0 0.0
    %2680 = vmatpush1.msra.mxu0 0.0
    %2681 = vmatprep.subr.mxu0 0.0
    %2682 = vmatpush1.msra.mxu0 0.0
    %2683 = vmatprep.subr.mxu0 0.0
    %2684 = vmatpush1.msra.mxu0 0.0
    %2685 = vmatprep.subr.mxu0 0.0
    %2686 = vmatpush1.msra.mxu0 0.0
    %2687 = vmatprep.subr.mxu0 0.0
    %2688 = vmatpush1.msra.mxu0 0.0
    %2689 = vmatprep.subr.mxu0 0.0
    %2690 = vmatpush1.msra.mxu0 0.0
    %2691 = vmatprep.subr.mxu0 0.0
    %2692 = vmatpush1.msra.mxu0 0.0
    %2693 = vmatprep.subr.mxu0 0.0
    %2694 = vmatpush1.msra.mxu0 0.0
    %2695 = vmatprep.subr.mxu0 0.0
    %2696 = vmatpush1.msra.mxu0 0.0
    %2697 = vmatprep.subr.mxu0 0.0
    %2698 = vmatpush1.msra.mxu0 0.0
    %2699 = vmatprep.subr.mxu0 0.0
    %2700 = vmatpush1.msra.mxu0 0.0
    %2701 = vmatprep.subr.mxu0 0.0
    %2702 = vmatpush1.msra.mxu0 0.0
    %2703 = vmatprep.subr.mxu0 0.0
    %2704 = vmatpush1.msra.mxu0 0.0
    %2705 = vmatprep.subr.mxu0 0.0
    %2706 = vmatpush1.msra.mxu0 0.0
    %2707 = vmatprep.subr.mxu0 0.0
    %2708 = vmatpush1.msra.mxu0 0.0
    %2709 = vmatprep.subr.mxu0 0.0
    %2710 = vmatpush1.msra.mxu0 0.0
    %2711 = vmatprep.mubr.f32.mxu0 0.0
    %2712 = vmatmul.mubr.f32.gmra.mrb[0].mxu0 %v2503
    %v2713 = vpop.f32.mrb[0].mxu0
    %v2714 = vadd.f32 0.0, %v2713
    %v2715 = vpop.f32.mrb[0].mxu0
    %v2716 = vadd.f32 0.0, %v2715
    %2717 = vdwg.mxu0
    %2718 = vmatprep.subr.mxu0 %v2489
    %2719 = vmatpush1.msra.mxu0 %v2488
    %2720 = vmatprep.subr.mxu0 0.0
    %2721 = vmatpush1.msra.mxu0 0.0
    %2722 = vmatprep.subr.mxu0 0.0
    %2723 = vmatpush1.msra.mxu0 0.0
    %2724 = vmatprep.subr.mxu0 0.0
    %2725 = vmatpush1.msra.mxu0 0.0
    %2726 = vmatprep.subr.mxu0 0.0
    %2727 = vmatpush1.msra.mxu0 0.0
    %2728 = vmatprep.subr.mxu0 0.0
    %2729 = vmatpush1.msra.mxu0 0.0
    %2730 = vmatprep.subr.mxu0 0.0
    %2731 = vmatpush1.msra.mxu0 0.0
    %2732 = vmatprep.subr.mxu0 0.0
    %2733 = vmatpush1.msra.mxu0 0.0
    %2734 = vmatprep.subr.mxu0 0.0
    %2735 = vmatpush1.msra.mxu0 0.0
    %2736 = vmatprep.subr.mxu0 0.0
    %2737 = vmatpush1.msra.mxu0 0.0
    %2738 = vmatprep.subr.mxu0 0.0
    %2739 = vmatpush1.msra.mxu0 0.0
    %2740 = vmatprep.subr.mxu0 0.0
    %2741 = vmatpush1.msra.mxu0 0.0
    %2742 = vmatprep.subr.mxu0 0.0
    %2743 = vmatpush1.msra.mxu0 0.0
    %2744 = vmatprep.subr.mxu0 0.0
    %2745 = vmatpush1.msra.mxu0 0.0
    %2746 = vmatprep.subr.mxu0 0.0
    %2747 = vmatpush1.msra.mxu0 0.0
    %2748 = vmatprep.subr.mxu0 0.0
    %2749 = vmatpush1.msra.mxu0 0.0
    %2750 = vmatprep.subr.mxu0 0.0
    %2751 = vmatpush1.msra.mxu0 0.0
    %2752 = vmatprep.subr.mxu0 0.0
    %2753 = vmatpush1.msra.mxu0 0.0
    %2754 = vmatprep.subr.mxu0 0.0
    %2755 = vmatpush1.msra.mxu0 0.0
    %2756 = vmatprep.subr.mxu0 0.0
    %2757 = vmatpush1.msra.mxu0 0.0
    %2758 = vmatprep.subr.mxu0 0.0
    %2759 = vmatpush1.msra.mxu0 0.0
    %2760 = vmatprep.subr.mxu0 0.0
    %2761 = vmatpush1.msra.mxu0 0.0
    %2762 = vmatprep.subr.mxu0 0.0
    %2763 = vmatpush1.msra.mxu0 0.0
    %2764 = vmatprep.subr.mxu0 0.0
    %2765 = vmatpush1.msra.mxu0 0.0
    %2766 = vmatprep.subr.mxu0 0.0
    %2767 = vmatpush1.msra.mxu0 0.0
    %2768 = vmatprep.subr.mxu0 0.0
    %2769 = vmatpush1.msra.mxu0 0.0
    %2770 = vmatprep.subr.mxu0 0.0
    %2771 = vmatpush1.msra.mxu0 0.0
    %2772 = vmatprep.subr.mxu0 0.0
    %2773 = vmatpush1.msra.mxu0 0.0
    %2774 = vmatprep.subr.mxu0 0.0
    %2775 = vmatpush1.msra.mxu0 0.0
    %2776 = vmatprep.subr.mxu0 0.0
    %2777 = vmatpush1.msra.mxu0 0.0
    %2778 = vmatprep.subr.mxu0 0.0
    %2779 = vmatpush1.msra.mxu0 0.0
    %2780 = vmatprep.subr.mxu0 0.0
    %2781 = vmatpush1.msra.mxu0 0.0
    %2782 = vmatprep.mubr.f32.mxu0 0.0
    %2783 = vmatmul.mubr.f32.gmra.mrb[0].mxu0 %v2503
    %v2784 = vpop.f32.mrb[0].mxu0
    %v2785 = vadd.f32 0.0, %v2784
    %v2786 = vpop.f32.mrb[0].mxu0
    %v2787 = vadd.f32 0.0, %v2786
    %2788 = vdwg.mxu0
    %2789 = vmatprep.subr.mxu0 %v2491
    %2790 = vmatpush1.msra.mxu0 %v2490
    %2791 = vmatprep.subr.mxu0 0.0
    %2792 = vmatpush1.msra.mxu0 0.0
    %2793 = vmatprep.subr.mxu0 0.0
    %2794 = vmatpush1.msra.mxu0 0.0
    %2795 = vmatprep.subr.mxu0 0.0
    %2796 = vmatpush1.msra.mxu0 0.0
    %2797 = vmatprep.subr.mxu0 0.0
    %2798 = vmatpush1.msra.mxu0 0.0
    %2799 = vmatprep.subr.mxu0 0.0
    %2800 = vmatpush1.msra.mxu0 0.0
    %2801 = vmatprep.subr.mxu0 0.0
    %2802 = vmatpush1.msra.mxu0 0.0
    %2803 = vmatprep.subr.mxu0 0.0
    %2804 = vmatpush1.msra.mxu0 0.0
    %2805 = vmatprep.subr.mxu0 0.0
    %2806 = vmatpush1.msra.mxu0 0.0
    %2807 = vmatprep.subr.mxu0 0.0
    %2808 = vmatpush1.msra.mxu0 0.0
    %2809 = vmatprep.subr.mxu0 0.0
    %2810 = vmatpush1.msra.mxu0 0.0
    %2811 = vmatprep.subr.mxu0 0.0
    %2812 = vmatpush1.msra.mxu0 0.0
    %2813 = vmatprep.subr.mxu0 0.0
    %2814 = vmatpush1.msra.mxu0 0.0
    %2815 = vmatprep.subr.mxu0 0.0
    %2816 = vmatpush1.msra.mxu0 0.0
    %2817 = vmatprep.subr.mxu0 0.0
    %2818 = vmatpush1.msra.mxu0 0.0
    %2819 = vmatprep.subr.mxu0 0.0
    %2820 = vmatpush1.msra.mxu0 0.0
    %2821 = vmatprep.subr.mxu0 0.0
    %2822 = vmatpush1.msra.mxu0 0.0
    %2823 = vmatprep.subr.mxu0 0.0
    %2824 = vmatpush1.msra.mxu0 0.0
    %2825 = vmatprep.subr.mxu0 0.0
    %2826 = vmatpush1.msra.mxu0 0.0
    %2827 = vmatprep.subr.mxu0 0.0
    %2828 = vmatpush1.msra.mxu0 0.0
    %2829 = vmatprep.subr.mxu0 0.0
    %2830 = vmatpush1.msra.mxu0 0.0
    %2831 = vmatprep.subr.mxu0 0.0
    %2832 = vmatpush1.msra.mxu0 0.0
    %2833 = vmatprep.subr.mxu0 0.0
    %2834 = vmatpush1.msra.mxu0 0.0
    %2835 = vmatprep.subr.mxu0 0.0
    %2836 = vmatpush1.msra.mxu0 0.0
    %2837 = vmatprep.subr.mxu0 0.0
    %2838 = vmatpush1.msra.mxu0 0.0
    %2839 = vmatprep.subr.mxu0 0.0
    %2840 = vmatpush1.msra.mxu0 0.0
    %2841 = vmatprep.subr.mxu0 0.0
    %2842 = vmatpush1.msra.mxu0 0.0
    %2843 = vmatprep.subr.mxu0 0.0
    %2844 = vmatpush1.msra.mxu0 0.0
    %2845 = vmatprep.subr.mxu0 0.0
    %2846 = vmatpush1.msra.mxu0 0.0
    %2847 = vmatprep.subr.mxu0 0.0
    %2848 = vmatpush1.msra.mxu0 0.0
    %2849 = vmatprep.subr.mxu0 0.0
    %2850 = vmatpush1.msra.mxu0 0.0
    %2851 = vmatprep.subr.mxu0 0.0
    %2852 = vmatpush1.msra.mxu0 0.0
    %2853 = vmatprep.mubr.f32.mxu0 0.0
    %2854 = vmatmul.mubr.f32.gmra.mrb[0].mxu0 %v2503
    %v2855 = vpop.f32.mrb[0].mxu0
    %v2856 = vadd.f32 0.0, %v2855
    %v2857 = vpop.f32.mrb[0].mxu0
    %v2858 = vadd.f32 0.0, %v2857
    %2859 = vdwg.mxu0
    %v2860 = vadd.f32 %v2426, %v2572
    %v2861 = vadd.f32 %v2427, %v2574
    %v2862 = vadd.f32 %v2428, %v2643
    %v2863 = vadd.f32 %v2429, %v2645
    %v2864 = vadd.f32 %v2430, %v2714
    %v2865 = vadd.f32 %v2431, %v2716
    %v2866 = vadd.f32 %v2432, %v2785
    %v2867 = vadd.f32 %v2433, %v2787
    %v2868 = vadd.f32 %v2434, %v2856
    %v2869 = vadd.f32 %v2435, %v2858
    %v2870 = vld [vmem:[%s1 + $0x38] sm:$0xff]
    %2871 = vrot.lane.b32.xlu0 %v2437, 63
    %v2872 = vpop.permute.xlu0 %2871
    %2873 = vrot.lane.b32.xlu0 %v2438, 63
    %v2874 = vpop.permute.xlu0 %2873
    %2875 = vrot.lane.b32.xlu0 %v2439, 63
    %v2876 = vpop.permute.xlu0 %2875
    %2877 = vrot.lane.b32.xlu0 %v2440, 63
    %v2878 = vpop.permute.xlu0 %2877
    %2879 = vrot.lane.b32.xlu0 %v2441, 63
    %v2880 = vpop.permute.xlu0 %2879
    %2881 = vrot.lane.b32.xlu0 %v2442, 63
    %v2882 = vpop.permute.xlu0 %2881
    %2883 = vrot.lane.b32.xlu0 %v2443, 63
    %v2884 = vpop.permute.xlu0 %2883
    %2885 = vrot.lane.b32.xlu0 %v2444, 63
    %v2886 = vpop.permute.xlu0 %2885
    %2887 = vrot.lane.b32.xlu0 %v2445, 63
    %v2888 = vpop.permute.xlu0 %2887
    %2889 = vrot.lane.b32.xlu0 %v2446, 63
    %v2890 = vpop.permute.xlu0 %2889
    %2891 = vrot.lane.b32.xlu0 %v2447, 63
    %v2892 = vpop.permute.xlu0 %2891
    %vm2893 = vcmask 515072
    %v2894 = vsel %vm2893, %v2872, %v2874
    %v2895 = vsel %vm2893, %v2874, %v2876
    %v2896 = vsel %vm2893, %v2876, %v2878
    %v2897 = vsel %vm2893, %v2878, %v2880
    %v2898 = vsel %vm2893, %v2880, %v2882
    %v2899 = vsel %vm2893, %v2882, %v2884
    %v2900 = vsel %vm2893, %v2884, %v2886
    %v2901 = vsel %vm2893, %v2886, %v2888
    %v2902 = vsel %vm2893, %v2888, %v2890
    %v2903 = vsel %vm2893, %v2890, %v2892
    %v2915 = vsel %vm83, %v2870, 0
    %2917 = vmatprep.subr.mxu0 %v2895
    %2918 = vmatpush1.msra.mxu0 %v2894
    %2919 = vmatprep.subr.mxu0 0.0
    %2920 = vmatpush1.msra.mxu0 0.0
    %2921 = vmatprep.subr.mxu0 0.0
    %2922 = vmatpush1.msra.mxu0 0.0
    %2923 = vmatprep.subr.mxu0 0.0
    %2924 = vmatpush1.msra.mxu0 0.0
    %2925 = vmatprep.subr.mxu0 0.0
    %2926 = vmatpush1.msra.mxu0 0.0
    %2927 = vmatprep.subr.mxu0 0.0
    %2928 = vmatpush1.msra.mxu0 0.0
    %2929 = vmatprep.subr.mxu0 0.0
    %2930 = vmatpush1.msra.mxu0 0.0
    %2931 = vmatprep.subr.mxu0 0.0
    %2932 = vmatpush1.msra.mxu0 0.0
    %2933 = vmatprep.subr.mxu0 0.0
    %2934 = vmatpush1.msra.mxu0 0.0
    %2935 = vmatprep.subr.mxu0 0.0
    %2936 = vmatpush1.msra.mxu0 0.0
    %2937 = vmatprep.subr.mxu0 0.0
    %2938 = vmatpush1.msra.mxu0 0.0
    %2939 = vmatprep.subr.mxu0 0.0
    %2940 = vmatpush1.msra.mxu0 0.0
    %2941 = vmatprep.subr.mxu0 0.0
    %2942 = vmatpush1.msra.mxu0 0.0
    %2943 = vmatprep.subr.mxu0 0.0
    %2944 = vmatpush1.msra.mxu0 0.0
    %2945 = vmatprep.subr.mxu0 0.0
    %2946 = vmatpush1.msra.mxu0 0.0
    %2947 = vmatprep.subr.mxu0 0.0
    %2948 = vmatpush1.msra.mxu0 0.0
    %2949 = vmatprep.subr.mxu0 0.0
    %2950 = vmatpush1.msra.mxu0 0.0
    %2951 = vmatprep.subr.mxu0 0.0
    %2952 = vmatpush1.msra.mxu0 0.0
    %2953 = vmatprep.subr.mxu0 0.0
    %2954 = vmatpush1.msra.mxu0 0.0
    %2955 = vmatprep.subr.mxu0 0.0
    %2956 = vmatpush1.msra.mxu0 0.0
    %2957 = vmatprep.subr.mxu0 0.0
    %2958 = vmatpush1.msra.mxu0 0.0
    %2959 = vmatprep.subr.mxu0 0.0
    %2960 = vmatpush1.msra.mxu0 0.0
    %2961 = vmatprep.subr.mxu0 0.0
    %2962 = vmatpush1.msra.mxu0 0.0
    %2963 = vmatprep.subr.mxu0 0.0
    %2964 = vmatpush1.msra.mxu0 0.0
    %2965 = vmatprep.subr.mxu0 0.0
    %2966 = vmatpush1.msra.mxu0 0.0
    %2967 = vmatprep.subr.mxu0 0.0
    %2968 = vmatpush1.msra.mxu0 0.0
    %2969 = vmatprep.subr.mxu0 0.0
    %2970 = vmatpush1.msra.mxu0 0.0
    %2971 = vmatprep.subr.mxu0 0.0
    %2972 = vmatpush1.msra.mxu0 0.0
    %2973 = vmatprep.subr.mxu0 0.0
    %2974 = vmatpush1.msra.mxu0 0.0
    %2975 = vmatprep.subr.mxu0 0.0
    %2976 = vmatpush1.msra.mxu0 0.0
    %2977 = vmatprep.subr.mxu0 0.0
    %2978 = vmatpush1.msra.mxu0 0.0
    %2979 = vmatprep.subr.mxu0 0.0
    %2980 = vmatpush1.msra.mxu0 0.0
    %2981 = vmatprep.mubr.f32.mxu0 0.0
    %2982 = vmatmul.mubr.f32.gmra.mrb[0].mxu0 %v2915
    %v2983 = vpop.f32.mrb[0].mxu0
    %v2984 = vadd.f32 0.0, %v2983
    %v2985 = vpop.f32.mrb[0].mxu0
    %v2986 = vadd.f32 0.0, %v2985
    %2987 = vdwg.mxu0
    %2988 = vmatprep.subr.mxu0 %v2897
    %2989 = vmatpush1.msra.mxu0 %v2896
    %2990 = vmatprep.subr.mxu0 0.0
    %2991 = vmatpush1.msra.mxu0 0.0
    %2992 = vmatprep.subr.mxu0 0.0
    %2993 = vmatpush1.msra.mxu0 0.0
    %2994 = vmatprep.subr.mxu0 0.0
    %2995 = vmatpush1.msra.mxu0 0.0
    %2996 = vmatprep.subr.mxu0 0.0
    %2997 = vmatpush1.msra.mxu0 0.0
    %2998 = vmatprep.subr.mxu0 0.0
    %2999 = vmatpush1.msra.mxu0 0.0
    %3000 = vmatprep.subr.mxu0 0.0
    %3001 = vmatpush1.msra.mxu0 0.0
    %3002 = vmatprep.subr.mxu0 0.0
    %3003 = vmatpush1.msra.mxu0 0.0
    %3004 = vmatprep.subr.mxu0 0.0
    %3005 = vmatpush1.msra.mxu0 0.0
    %3006 = vmatprep.subr.mxu0 0.0
    %3007 = vmatpush1.msra.mxu0 0.0
    %3008 = vmatprep.subr.mxu0 0.0
    %3009 = vmatpush1.msra.mxu0 0.0
    %3010 = vmatprep.subr.mxu0 0.0
    %3011 = vmatpush1.msra.mxu0 0.0
    %3012 = vmatprep.subr.mxu0 0.0
    %3013 = vmatpush1.msra.mxu0 0.0
    %3014 = vmatprep.subr.mxu0 0.0
    %3015 = vmatpush1.msra.mxu0 0.0
    %3016 = vmatprep.subr.mxu0 0.0
    %3017 = vmatpush1.msra.mxu0 0.0
    %3018 = vmatprep.subr.mxu0 0.0
    %3019 = vmatpush1.msra.mxu0 0.0
    %3020 = vmatprep.subr.mxu0 0.0
    %3021 = vmatpush1.msra.mxu0 0.0
    %3022 = vmatprep.subr.mxu0 0.0
    %3023 = vmatpush1.msra.mxu0 0.0
    %3024 = vmatprep.subr.mxu0 0.0
    %3025 = vmatpush1.msra.mxu0 0.0
    %3026 = vmatprep.subr.mxu0 0.0
    %3027 = vmatpush1.msra.mxu0 0.0
    %3028 = vmatprep.subr.mxu0 0.0
    %3029 = vmatpush1.msra.mxu0 0.0
    %3030 = vmatprep.subr.mxu0 0.0
    %3031 = vmatpush1.msra.mxu0 0.0
    %3032 = vmatprep.subr.mxu0 0.0
    %3033 = vmatpush1.msra.mxu0 0.0
    %3034 = vmatprep.subr.mxu0 0.0
    %3035 = vmatpush1.msra.mxu0 0.0
    %3036 = vmatprep.subr.mxu0 0.0
    %3037 = vmatpush1.msra.mxu0 0.0
    %3038 = vmatprep.subr.mxu0 0.0
    %3039 = vmatpush1.msra.mxu0 0.0
    %3040 = vmatprep.subr.mxu0 0.0
    %3041 = vmatpush1.msra.mxu0 0.0
    %3042 = vmatprep.subr.mxu0 0.0
    %3043 = vmatpush1.msra.mxu0 0.0
    %3044 = vmatprep.subr.mxu0 0.0
    %3045 = vmatpush1.msra.mxu0 0.0
    %3046 = vmatprep.subr.mxu0 0.0
    %3047 = vmatpush1.msra.mxu0 0.0
    %3048 = vmatprep.subr.mxu0 0.0
    %3049 = vmatpush1.msra.mxu0 0.0
    %3050 = vmatprep.subr.mxu0 0.0
    %3051 = vmatpush1.msra.mxu0 0.0
    %3052 = vmatprep.mubr.f32.mxu0 0.0
    %3053 = vmatmul.mubr.f32.gmra.mrb[0].mxu0 %v2915
    %v3054 = vpop.f32.mrb[0].mxu0
    %v3055 = vadd.f32 0.0, %v3054
    %v3056 = vpop.f32.mrb[0].mxu0
    %v3057 = vadd.f32 0.0, %v3056
    %3058 = vdwg.mxu0
    %3059 = vmatprep.subr.mxu0 %v2899
    %3060 = vmatpush1.msra.mxu0 %v2898
    %3061 = vmatprep.subr.mxu0 0.0
    %3062 = vmatpush1.msra.mxu0 0.0
    %3063 = vmatprep.subr.mxu0 0.0
    %3064 = vmatpush1.msra.mxu0 0.0
    %3065 = vmatprep.subr.mxu0 0.0
    %3066 = vmatpush1.msra.mxu0 0.0
    %3067 = vmatprep.subr.mxu0 0.0
    %3068 = vmatpush1.msra.mxu0 0.0
    %3069 = vmatprep.subr.mxu0 0.0
    %3070 = vmatpush1.msra.mxu0 0.0
    %3071 = vmatprep.subr.mxu0 0.0
    %3072 = vmatpush1.msra.mxu0 0.0
    %3073 = vmatprep.subr.mxu0 0.0
    %3074 = vmatpush1.msra.mxu0 0.0
    %3075 = vmatprep.subr.mxu0 0.0
    %3076 = vmatpush1.msra.mxu0 0.0
    %3077 = vmatprep.subr.mxu0 0.0
    %3078 = vmatpush1.msra.mxu0 0.0
    %3079 = vmatprep.subr.mxu0 0.0
    %3080 = vmatpush1.msra.mxu0 0.0
    %3081 = vmatprep.subr.mxu0 0.0
    %3082 = vmatpush1.msra.mxu0 0.0
    %3083 = vmatprep.subr.mxu0 0.0
    %3084 = vmatpush1.msra.mxu0 0.0
    %3085 = vmatprep.subr.mxu0 0.0
    %3086 = vmatpush1.msra.mxu0 0.0
    %3087 = vmatprep.subr.mxu0 0.0
    %3088 = vmatpush1.msra.mxu0 0.0
    %3089 = vmatprep.subr.mxu0 0.0
    %3090 = vmatpush1.msra.mxu0 0.0
    %3091 = vmatprep.subr.mxu0 0.0
    %3092 = vmatpush1.msra.mxu0 0.0
    %3093 = vmatprep.subr.mxu0 0.0
    %3094 = vmatpush1.msra.mxu0 0.0
    %3095 = vmatprep.subr.mxu0 0.0
    %3096 = vmatpush1.msra.mxu0 0.0
    %3097 = vmatprep.subr.mxu0 0.0
    %3098 = vmatpush1.msra.mxu0 0.0
    %3099 = vmatprep.subr.mxu0 0.0
    %3100 = vmatpush1.msra.mxu0 0.0
    %3101 = vmatprep.subr.mxu0 0.0
    %3102 = vmatpush1.msra.mxu0 0.0
    %3103 = vmatprep.subr.mxu0 0.0
    %3104 = vmatpush1.msra.mxu0 0.0
    %3105 = vmatprep.subr.mxu0 0.0
    %3106 = vmatpush1.msra.mxu0 0.0
    %3107 = vmatprep.subr.mxu0 0.0
    %3108 = vmatpush1.msra.mxu0 0.0
    %3109 = vmatprep.subr.mxu0 0.0
    %3110 = vmatpush1.msra.mxu0 0.0
    %3111 = vmatprep.subr.mxu0 0.0
    %3112 = vmatpush1.msra.mxu0 0.0
    %3113 = vmatprep.subr.mxu0 0.0
    %3114 = vmatpush1.msra.mxu0 0.0
    %3115 = vmatprep.subr.mxu0 0.0
    %3116 = vmatpush1.msra.mxu0 0.0
    %3117 = vmatprep.subr.mxu0 0.0
    %3118 = vmatpush1.msra.mxu0 0.0
    %3119 = vmatprep.subr.mxu0 0.0
    %3120 = vmatpush1.msra.mxu0 0.0
    %3121 = vmatprep.subr.mxu0 0.0
    %3122 = vmatpush1.msra.mxu0 0.0
    %3123 = vmatprep.mubr.f32.mxu0 0.0
    %3124 = vmatmul.mubr.f32.gmra.mrb[0].mxu0 %v2915
    %v3125 = vpop.f32.mrb[0].mxu0
    %v3126 = vadd.f32 0.0, %v3125
    %v3127 = vpop.f32.mrb[0].mxu0
    %v3128 = vadd.f32 0.0, %v3127
    %3129 = vdwg.mxu0
    %3130 = vmatprep.subr.mxu0 %v2901
    %3131 = vmatpush1.msra.mxu0 %v2900
    %3132 = vmatprep.subr.mxu0 0.0
    %3133 = vmatpush1.msra.mxu0 0.0
    %3134 = vmatprep.subr.mxu0 0.0
    %3135 = vmatpush1.msra.mxu0 0.0
    %3136 = vmatprep.subr.mxu0 0.0
    %3137 = vmatpush1.msra.mxu0 0.0
    %3138 = vmatprep.subr.mxu0 0.0
    %3139 = vmatpush1.msra.mxu0 0.0
    %3140 = vmatprep.subr.mxu0 0.0
    %3141 = vmatpush1.msra.mxu0 0.0
    %3142 = vmatprep.subr.mxu0 0.0
    %3143 = vmatpush1.msra.mxu0 0.0
    %3144 = vmatprep.subr.mxu0 0.0
    %3145 = vmatpush1.msra.mxu0 0.0
    %3146 = vmatprep.subr.mxu0 0.0
    %3147 = vmatpush1.msra.mxu0 0.0
    %3148 = vmatprep.subr.mxu0 0.0
    %3149 = vmatpush1.msra.mxu0 0.0
    %3150 = vmatprep.subr.mxu0 0.0
    %3151 = vmatpush1.msra.mxu0 0.0
    %3152 = vmatprep.subr.mxu0 0.0
    %3153 = vmatpush1.msra.mxu0 0.0
    %3154 = vmatprep.subr.mxu0 0.0
    %3155 = vmatpush1.msra.mxu0 0.0
    %3156 = vmatprep.subr.mxu0 0.0
    %3157 = vmatpush1.msra.mxu0 0.0
    %3158 = vmatprep.subr.mxu0 0.0
    %3159 = vmatpush1.msra.mxu0 0.0
    %3160 = vmatprep.subr.mxu0 0.0
    %3161 = vmatpush1.msra.mxu0 0.0
    %3162 = vmatprep.subr.mxu0 0.0
    %3163 = vmatpush1.msra.mxu0 0.0
    %3164 = vmatprep.subr.mxu0 0.0
    %3165 = vmatpush1.msra.mxu0 0.0
    %3166 = vmatprep.subr.mxu0 0.0
    %3167 = vmatpush1.msra.mxu0 0.0
    %3168 = vmatprep.subr.mxu0 0.0
    %3169 = vmatpush1.msra.mxu0 0.0
    %3170 = vmatprep.subr.mxu0 0.0
    %3171 = vmatpush1.msra.mxu0 0.0
    %3172 = vmatprep.subr.mxu0 0.0
    %3173 = vmatpush1.msra.mxu0 0.0
    %3174 = vmatprep.subr.mxu0 0.0
    %3175 = vmatpush1.msra.mxu0 0.0
    %3176 = vmatprep.subr.mxu0 0.0
    %3177 = vmatpush1.msra.mxu0 0.0
    %3178 = vmatprep.subr.mxu0 0.0
    %3179 = vmatpush1.msra.mxu0 0.0
    %3180 = vmatprep.subr.mxu0 0.0
    %3181 = vmatpush1.msra.mxu0 0.0
    %3182 = vmatprep.subr.mxu0 0.0
    %3183 = vmatpush1.msra.mxu0 0.0
    %3184 = vmatprep.subr.mxu0 0.0
    %3185 = vmatpush1.msra.mxu0 0.0
    %3186 = vmatprep.subr.mxu0 0.0
    %3187 = vmatpush1.msra.mxu0 0.0
    %3188 = vmatprep.subr.mxu0 0.0
    %3189 = vmatpush1.msra.mxu0 0.0
    %3190 = vmatprep.subr.mxu0 0.0
    %3191 = vmatpush1.msra.mxu0 0.0
    %3192 = vmatprep.subr.mxu0 0.0
    %3193 = vmatpush1.msra.mxu0 0.0
    %3194 = vmatprep.mubr.f32.mxu0 0.0
    %3195 = vmatmul.mubr.f32.gmra.mrb[0].mxu0 %v2915
    %v3196 = vpop.f32.mrb[0].mxu0
    %v3197 = vadd.f32 0.0, %v3196
    %v3198 = vpop.f32.mrb[0].mxu0
    %v3199 = vadd.f32 0.0, %v3198
    %3200 = vdwg.mxu0
    %3201 = vmatprep.subr.mxu0 %v2903
    %3202 = vmatpush1.msra.mxu0 %v2902
    %3203 = vmatprep.subr.mxu0 0.0
    %3204 = vmatpush1.msra.mxu0 0.0
    %3205 = vmatprep.subr.mxu0 0.0
    %3206 = vmatpush1.msra.mxu0 0.0
    %3207 = vmatprep.subr.mxu0 0.0
    %3208 = vmatpush1.msra.mxu0 0.0
    %3209 = vmatprep.subr.mxu0 0.0
    %3210 = vmatpush1.msra.mxu0 0.0
    %3211 = vmatprep.subr.mxu0 0.0
    %3212 = vmatpush1.msra.mxu0 0.0
    %3213 = vmatprep.subr.mxu0 0.0
    %3214 = vmatpush1.msra.mxu0 0.0
    %3215 = vmatprep.subr.mxu0 0.0
    %3216 = vmatpush1.msra.mxu0 0.0
    %3217 = vmatprep.subr.mxu0 0.0
    %3218 = vmatpush1.msra.mxu0 0.0
    %3219 = vmatprep.subr.mxu0 0.0
    %3220 = vmatpush1.msra.mxu0 0.0
    %3221 = vmatprep.subr.mxu0 0.0
    %3222 = vmatpush1.msra.mxu0 0.0
    %3223 = vmatprep.subr.mxu0 0.0
    %3224 = vmatpush1.msra.mxu0 0.0
    %3225 = vmatprep.subr.mxu0 0.0
    %3226 = vmatpush1.msra.mxu0 0.0
    %3227 = vmatprep.subr.mxu0 0.0
    %3228 = vmatpush1.msra.mxu0 0.0
    %3229 = vmatprep.subr.mxu0 0.0
    %3230 = vmatpush1.msra.mxu0 0.0
    %3231 = vmatprep.subr.mxu0 0.0
    %3232 = vmatpush1.msra.mxu0 0.0
    %3233 = vmatprep.subr.mxu0 0.0
    %3234 = vmatpush1.msra.mxu0 0.0
    %3235 = vmatprep.subr.mxu0 0.0
    %3236 = vmatpush1.msra.mxu0 0.0
    %3237 = vmatprep.subr.mxu0 0.0
    %3238 = vmatpush1.msra.mxu0 0.0
    %3239 = vmatprep.subr.mxu0 0.0
    %3240 = vmatpush1.msra.mxu0 0.0
    %3241 = vmatprep.subr.mxu0 0.0
    %3242 = vmatpush1.msra.mxu0 0.0
    %3243 = vmatprep.subr.mxu0 0.0
    %3244 = vmatpush1.msra.mxu0 0.0
    %3245 = vmatprep.subr.mxu0 0.0
    %3246 = vmatpush1.msra.mxu0 0.0
    %3247 = vmatprep.subr.mxu0 0.0
    %3248 = vmatpush1.msra.mxu0 0.0
    %3249 = vmatprep.subr.mxu0 0.0
    %3250 = vmatpush1.msra.mxu0 0.0
    %3251 = vmatprep.subr.mxu0 0.0
    %3252 = vmatpush1.msra.mxu0 0.0
    %3253 = vmatprep.subr.mxu0 0.0
    %3254 = vmatpush1.msra.mxu0 0.0
    %3255 = vmatprep.subr.mxu0 0.0
    %3256 = vmatpush1.msra.mxu0 0.0
    %3257 = vmatprep.subr.mxu0 0.0
    %3258 = vmatpush1.msra.mxu0 0.0
    %3259 = vmatprep.subr.mxu0 0.0
    %3260 = vmatpush1.msra.mxu0 0.0
    %3261 = vmatprep.subr.mxu0 0.0
    %3262 = vmatpush1.msra.mxu0 0.0
    %3263 = vmatprep.subr.mxu0 0.0
    %3264 = vmatpush1.msra.mxu0 0.0
    %3265 = vmatprep.mubr.f32.mxu0 0.0
    %3266 = vmatmul.mubr.f32.gmra.mrb[0].mxu0 %v2915
    %v3267 = vpop.f32.mrb[0].mxu0
    %v3268 = vadd.f32 0.0, %v3267
    %v3269 = vpop.f32.mrb[0].mxu0
    %v3270 = vadd.f32 0.0, %v3269
    %3271 = vdwg.mxu0
    %v3272 = vadd.f32 %v2860, %v2984
    %v3273 = vadd.f32 %v2861, %v2986
    %v3274 = vadd.f32 %v2862, %v3055
    %v3275 = vadd.f32 %v2863, %v3057
    %v3276 = vadd.f32 %v2864, %v3126
    %v3277 = vadd.f32 %v2865, %v3128
    %v3278 = vadd.f32 %v2866, %v3197
    %v3279 = vadd.f32 %v2867, %v3199
    %v3280 = vadd.f32 %v2868, %v3268
    %v3281 = vadd.f32 %v2869, %v3270
    %v3282 = vld [vmem:[%s1 + $0x40] sm:$0xff]
    %3283 = vrot.lane.b32.xlu0 %v2437, 62
    %v3284 = vpop.permute.xlu0 %3283
    %3285 = vrot.lane.b32.xlu0 %v2438, 62
    %v3286 = vpop.permute.xlu0 %3285
    %3287 = vrot.lane.b32.xlu0 %v2439, 62
    %v3288 = vpop.permute.xlu0 %3287
    %3289 = vrot.lane.b32.xlu0 %v2440, 62
    %v3290 = vpop.permute.xlu0 %3289
    %3291 = vrot.lane.b32.xlu0 %v2441, 62
    %v3292 = vpop.permute.xlu0 %3291
    %3293 = vrot.lane.b32.xlu0 %v2442, 62
    %v3294 = vpop.permute.xlu0 %3293
    %3295 = vrot.lane.b32.xlu0 %v2443, 62
    %v3296 = vpop.permute.xlu0 %3295
    %3297 = vrot.lane.b32.xlu0 %v2444, 62
    %v3298 = vpop.permute.xlu0 %3297
    %3299 = vrot.lane.b32.xlu0 %v2445, 62
    %v3300 = vpop.permute.xlu0 %3299
    %3301 = vrot.lane.b32.xlu0 %v2446, 62
    %v3302 = vpop.permute.xlu0 %3301
    %3303 = vrot.lane.b32.xlu0 %v2447, 62
    %v3304 = vpop.permute.xlu0 %3303
    %vm3305 = vcmask 506880
    %v3306 = vsel %vm3305, %v3284, %v3286
    %v3307 = vsel %vm3305, %v3286, %v3288
    %v3308 = vsel %vm3305, %v3288, %v3290
    %v3309 = vsel %vm3305, %v3290, %v3292
    %v3310 = vsel %vm3305, %v3292, %v3294
    %v3311 = vsel %vm3305, %v3294, %v3296
    %v3312 = vsel %vm3305, %v3296, %v3298
    %v3313 = vsel %vm3305, %v3298, %v3300
    %v3314 = vsel %vm3305, %v3300, %v3302
    %v3315 = vsel %vm3305, %v3302, %v3304
    %v3327 = vsel %vm83, %v3282, 0
    %3329 = vmatprep.subr.mxu0 %v3307
    %3330 = vmatpush1.msra.mxu0 %v3306
    %3331 = vmatprep.subr.mxu0 0.0
    %3332 = vmatpush1.msra.mxu0 0.0
    %3333 = vmatprep.subr.mxu0 0.0
    %3334 = vmatpush1.msra.mxu0 0.0
    %3335 = vmatprep.subr.mxu0 0.0
    %3336 = vmatpush1.msra.mxu0 0.0
    %3337 = vmatprep.subr.mxu0 0.0
    %3338 = vmatpush1.msra.mxu0 0.0
    %3339 = vmatprep.subr.mxu0 0.0
    %3340 = vmatpush1.msra.mxu0 0.0
    %3341 = vmatprep.subr.mxu0 0.0
    %3342 = vmatpush1.msra.mxu0 0.0
    %3343 = vmatprep.subr.mxu0 0.0
    %3344 = vmatpush1.msra.mxu0 0.0
    %3345 = vmatprep.subr.mxu0 0.0
    %3346 = vmatpush1.msra.mxu0 0.0
    %3347 = vmatprep.subr.mxu0 0.0
    %3348 = vmatpush1.msra.mxu0 0.0
    %3349 = vmatprep.subr.mxu0 0.0
    %3350 = vmatpush1.msra.mxu0 0.0
    %3351 = vmatprep.subr.mxu0 0.0
    %3352 = vmatpush1.msra.mxu0 0.0
    %3353 = vmatprep.subr.mxu0 0.0
    %3354 = vmatpush1.msra.mxu0 0.0
    %3355 = vmatprep.subr.mxu0 0.0
    %3356 = vmatpush1.msra.mxu0 0.0
    %3357 = vmatprep.subr.mxu0 0.0
    %3358 = vmatpush1.msra.mxu0 0.0
    %3359 = vmatprep.subr.mxu0 0.0
    %3360 = vmatpush1.msra.mxu0 0.0
    %3361 = vmatprep.subr.mxu0 0.0
    %3362 = vmatpush1.msra.mxu0 0.0
    %3363 = vmatprep.subr.mxu0 0.0
    %3364 = vmatpush1.msra.mxu0 0.0
    %3365 = vmatprep.subr.mxu0 0.0
    %3366 = vmatpush1.msra.mxu0 0.0
    %3367 = vmatprep.subr.mxu0 0.0
    %3368 = vmatpush1.msra.mxu0 0.0
    %3369 = vmatprep.subr.mxu0 0.0
    %3370 = vmatpush1.msra.mxu0 0.0
    %3371 = vmatprep.subr.mxu0 0.0
    %3372 = vmatpush1.msra.mxu0 0.0
    %3373 = vmatprep.subr.mxu0 0.0
    %3374 = vmatpush1.msra.mxu0 0.0
    %3375 = vmatprep.subr.mxu0 0.0
    %3376 = vmatpush1.msra.mxu0 0.0
    %3377 = vmatprep.subr.mxu0 0.0
    %3378 = vmatpush1.msra.mxu0 0.0
    %3379 = vmatprep.subr.mxu0 0.0
    %3380 = vmatpush1.msra.mxu0 0.0
    %3381 = vmatprep.subr.mxu0 0.0
    %3382 = vmatpush1.msra.mxu0 0.0
    %3383 = vmatprep.subr.mxu0 0.0
    %3384 = vmatpush1.msra.mxu0 0.0
    %3385 = vmatprep.subr.mxu0 0.0
    %3386 = vmatpush1.msra.mxu0 0.0
    %3387 = vmatprep.subr.mxu0 0.0
    %3388 = vmatpush1.msra.mxu0 0.0
    %3389 = vmatprep.subr.mxu0 0.0
    %3390 = vmatpush1.msra.mxu0 0.0
    %3391 = vmatprep.subr.mxu0 0.0
    %3392 = vmatpush1.msra.mxu0 0.0
    %3393 = vmatprep.mubr.f32.mxu0 0.0
    %3394 = vmatmul.mubr.f32.gmra.mrb[0].mxu0 %v3327
    %v3395 = vpop.f32.mrb[0].mxu0
    %v3396 = vadd.f32 0.0, %v3395
    %v3397 = vpop.f32.mrb[0].mxu0
    %v3398 = vadd.f32 0.0, %v3397
    %3399 = vdwg.mxu0
    %3400 = vmatprep.subr.mxu0 %v3309
    %3401 = vmatpush1.msra.mxu0 %v3308
    %3402 = vmatprep.subr.mxu0 0.0
    %3403 = vmatpush1.msra.mxu0 0.0
    %3404 = vmatprep.subr.mxu0 0.0
    %3405 = vmatpush1.msra.mxu0 0.0
    %3406 = vmatprep.subr.mxu0 0.0
    %3407 = vmatpush1.msra.mxu0 0.0
    %3408 = vmatprep.subr.mxu0 0.0
    %3409 = vmatpush1.msra.mxu0 0.0
    %3410 = vmatprep.subr.mxu0 0.0
    %3411 = vmatpush1.msra.mxu0 0.0
    %3412 = vmatprep.subr.mxu0 0.0
    %3413 = vmatpush1.msra.mxu0 0.0
    %3414 = vmatprep.subr.mxu0 0.0
    %3415 = vmatpush1.msra.mxu0 0.0
    %3416 = vmatprep.subr.mxu0 0.0
    %3417 = vmatpush1.msra.mxu0 0.0
    %3418 = vmatprep.subr.mxu0 0.0
    %3419 = vmatpush1.msra.mxu0 0.0
    %3420 = vmatprep.subr.mxu0 0.0
    %3421 = vmatpush1.msra.mxu0 0.0
    %3422 = vmatprep.subr.mxu0 0.0
    %3423 = vmatpush1.msra.mxu0 0.0
    %3424 = vmatprep.subr.mxu0 0.0
    %3425 = vmatpush1.msra.mxu0 0.0
    %3426 = vmatprep.subr.mxu0 0.0
    %3427 = vmatpush1.msra.mxu0 0.0
    %3428 = vmatprep.subr.mxu0 0.0
    %3429 = vmatpush1.msra.mxu0 0.0
    %3430 = vmatprep.subr.mxu0 0.0
    %3431 = vmatpush1.msra.mxu0 0.0
    %3432 = vmatprep.subr.mxu0 0.0
    %3433 = vmatpush1.msra.mxu0 0.0
    %3434 = vmatprep.subr.mxu0 0.0
    %3435 = vmatpush1.msra.mxu0 0.0
    %3436 = vmatprep.subr.mxu0 0.0
    %3437 = vmatpush1.msra.mxu0 0.0
    %3438 = vmatprep.subr.mxu0 0.0
    %3439 = vmatpush1.msra.mxu0 0.0
    %3440 = vmatprep.subr.mxu0 0.0
    %3441 = vmatpush1.msra.mxu0 0.0
    %3442 = vmatprep.subr.mxu0 0.0
    %3443 = vmatpush1.msra.mxu0 0.0
    %3444 = vmatprep.subr.mxu0 0.0
    %3445 = vmatpush1.msra.mxu0 0.0
    %3446 = vmatprep.subr.mxu0 0.0
    %3447 = vmatpush1.msra.mxu0 0.0
    %3448 = vmatprep.subr.mxu0 0.0
    %3449 = vmatpush1.msra.mxu0 0.0
    %3450 = vmatprep.subr.mxu0 0.0
    %3451 = vmatpush1.msra.mxu0 0.0
    %3452 = vmatprep.subr.mxu0 0.0
    %3453 = vmatpush1.msra.mxu0 0.0
    %3454 = vmatprep.subr.mxu0 0.0
    %3455 = vmatpush1.msra.mxu0 0.0
    %3456 = vmatprep.subr.mxu0 0.0
    %3457 = vmatpush1.msra.mxu0 0.0
    %3458 = vmatprep.subr.mxu0 0.0
    %3459 = vmatpush1.msra.mxu0 0.0
    %3460 = vmatprep.subr.mxu0 0.0
    %3461 = vmatpush1.msra.mxu0 0.0
    %3462 = vmatprep.subr.mxu0 0.0
    %3463 = vmatpush1.msra.mxu0 0.0
    %3464 = vmatprep.mubr.f32.mxu0 0.0
    %3465 = vmatmul.mubr.f32.gmra.mrb[0].mxu0 %v3327
    %v3466 = vpop.f32.mrb[0].mxu0
    %v3467 = vadd.f32 0.0, %v3466
    %v3468 = vpop.f32.mrb[0].mxu0
    %v3469 = vadd.f32 0.0, %v3468
    %3470 = vdwg.mxu0
    %3471 = vmatprep.subr.mxu0 %v3311
    %3472 = vmatpush1.msra.mxu0 %v3310
    %3473 = vmatprep.subr.mxu0 0.0
    %3474 = vmatpush1.msra.mxu0 0.0
    %3475 = vmatprep.subr.mxu0 0.0
    %3476 = vmatpush1.msra.mxu0 0.0
    %3477 = vmatprep.subr.mxu0 0.0
    %3478 = vmatpush1.msra.mxu0 0.0
    %3479 = vmatprep.subr.mxu0 0.0
    %3480 = vmatpush1.msra.mxu0 0.0
    %3481 = vmatprep.subr.mxu0 0.0
    %3482 = vmatpush1.msra.mxu0 0.0
    %3483 = vmatprep.subr.mxu0 0.0
    %3484 = vmatpush1.msra.mxu0 0.0
    %3485 = vmatprep.subr.mxu0 0.0
    %3486 = vmatpush1.msra.mxu0 0.0
    %3487 = vmatprep.subr.mxu0 0.0
    %3488 = vmatpush1.msra.mxu0 0.0
    %3489 = vmatprep.subr.mxu0 0.0
    %3490 = vmatpush1.msra.mxu0 0.0
    %3491 = vmatprep.subr.mxu0 0.0
    %3492 = vmatpush1.msra.mxu0 0.0
    %3493 = vmatprep.subr.mxu0 0.0
    %3494 = vmatpush1.msra.mxu0 0.0
    %3495 = vmatprep.subr.mxu0 0.0
    %3496 = vmatpush1.msra.mxu0 0.0
    %3497 = vmatprep.subr.mxu0 0.0
    %3498 = vmatpush1.msra.mxu0 0.0
    %3499 = vmatprep.subr.mxu0 0.0
    %3500 = vmatpush1.msra.mxu0 0.0
    %3501 = vmatprep.subr.mxu0 0.0
    %3502 = vmatpush1.msra.mxu0 0.0
    %3503 = vmatprep.subr.mxu0 0.0
    %3504 = vmatpush1.msra.mxu0 0.0
    %3505 = vmatprep.subr.mxu0 0.0
    %3506 = vmatpush1.msra.mxu0 0.0
    %3507 = vmatprep.subr.mxu0 0.0
    %3508 = vmatpush1.msra.mxu0 0.0
    %3509 = vmatprep.subr.mxu0 0.0
    %3510 = vmatpush1.msra.mxu0 0.0
    %3511 = vmatprep.subr.mxu0 0.0
    %3512 = vmatpush1.msra.mxu0 0.0
    %3513 = vmatprep.subr.mxu0 0.0
    %3514 = vmatpush1.msra.mxu0 0.0
    %3515 = vmatprep.subr.mxu0 0.0
    %3516 = vmatpush1.msra.mxu0 0.0
    %3517 = vmatprep.subr.mxu0 0.0
    %3518 = vmatpush1.msra.mxu0 0.0
    %3519 = vmatprep.subr.mxu0 0.0
    %3520 = vmatpush1.msra.mxu0 0.0
    %3521 = vmatprep.subr.mxu0 0.0
    %3522 = vmatpush1.msra.mxu0 0.0
    %3523 = vmatprep.subr.mxu0 0.0
    %3524 = vmatpush1.msra.mxu0 0.0
    %3525 = vmatprep.subr.mxu0 0.0
    %3526 = vmatpush1.msra.mxu0 0.0
    %3527 = vmatprep.subr.mxu0 0.0
    %3528 = vmatpush1.msra.mxu0 0.0
    %3529 = vmatprep.subr.mxu0 0.0
    %3530 = vmatpush1.msra.mxu0 0.0
    %3531 = vmatprep.subr.mxu0 0.0
    %3532 = vmatpush1.msra.mxu0 0.0
    %3533 = vmatprep.subr.mxu0 0.0
    %3534 = vmatpush1.msra.mxu0 0.0
    %3535 = vmatprep.mubr.f32.mxu0 0.0
    %3536 = vmatmul.mubr.f32.gmra.mrb[0].mxu0 %v3327
    %v3537 = vpop.f32.mrb[0].mxu0
    %v3538 = vadd.f32 0.0, %v3537
    %v3539 = vpop.f32.mrb[0].mxu0
    %v3540 = vadd.f32 0.0, %v3539
    %3541 = vdwg.mxu0
    %3542 = vmatprep.subr.mxu0 %v3313
    %3543 = vmatpush1.msra.mxu0 %v3312
    %3544 = vmatprep.subr.mxu0 0.0
    %3545 = vmatpush1.msra.mxu0 0.0
    %3546 = vmatprep.subr.mxu0 0.0
    %3547 = vmatpush1.msra.mxu0 0.0
    %3548 = vmatprep.subr.mxu0 0.0
    %3549 = vmatpush1.msra.mxu0 0.0
    %3550 = vmatprep.subr.mxu0 0.0
    %3551 = vmatpush1.msra.mxu0 0.0
    %3552 = vmatprep.subr.mxu0 0.0
    %3553 = vmatpush1.msra.mxu0 0.0
    %3554 = vmatprep.subr.mxu0 0.0
    %3555 = vmatpush1.msra.mxu0 0.0
    %3556 = vmatprep.subr.mxu0 0.0
    %3557 = vmatpush1.msra.mxu0 0.0
    %3558 = vmatprep.subr.mxu0 0.0
    %3559 = vmatpush1.msra.mxu0 0.0
    %3560 = vmatprep.subr.mxu0 0.0
    %3561 = vmatpush1.msra.mxu0 0.0
    %3562 = vmatprep.subr.mxu0 0.0
    %3563 = vmatpush1.msra.mxu0 0.0
    %3564 = vmatprep.subr.mxu0 0.0
    %3565 = vmatpush1.msra.mxu0 0.0
    %3566 = vmatprep.subr.mxu0 0.0
    %3567 = vmatpush1.msra.mxu0 0.0
    %3568 = vmatprep.subr.mxu0 0.0
    %3569 = vmatpush1.msra.mxu0 0.0
    %3570 = vmatprep.subr.mxu0 0.0
    %3571 = vmatpush1.msra.mxu0 0.0
    %3572 = vmatprep.subr.mxu0 0.0
    %3573 = vmatpush1.msra.mxu0 0.0
    %3574 = vmatprep.subr.mxu0 0.0
    %3575 = vmatpush1.msra.mxu0 0.0
    %3576 = vmatprep.subr.mxu0 0.0
    %3577 = vmatpush1.msra.mxu0 0.0
    %3578 = vmatprep.subr.mxu0 0.0
    %3579 = vmatpush1.msra.mxu0 0.0
    %3580 = vmatprep.subr.mxu0 0.0
    %3581 = vmatpush1.msra.mxu0 0.0
    %3582 = vmatprep.subr.mxu0 0.0
    %3583 = vmatpush1.msra.mxu0 0.0
    %3584 = vmatprep.subr.mxu0 0.0
    %3585 = vmatpush1.msra.mxu0 0.0
    %3586 = vmatprep.subr.mxu0 0.0
    %3587 = vmatpush1.msra.mxu0 0.0
    %3588 = vmatprep.subr.mxu0 0.0
    %3589 = vmatpush1.msra.mxu0 0.0
    %3590 = vmatprep.subr.mxu0 0.0
    %3591 = vmatpush1.msra.mxu0 0.0
    %3592 = vmatprep.subr.mxu0 0.0
    %3593 = vmatpush1.msra.mxu0 0.0
    %3594 = vmatprep.subr.mxu0 0.0
    %3595 = vmatpush1.msra.mxu0 0.0
    %3596 = vmatprep.subr.mxu0 0.0
    %3597 = vmatpush1.msra.mxu0 0.0
    %3598 = vmatprep.subr.mxu0 0.0
    %3599 = vmatpush1.msra.mxu0 0.0
    %3600 = vmatprep.subr.mxu0 0.0
    %3601 = vmatpush1.msra.mxu0 0.0
    %3602 = vmatprep.subr.mxu0 0.0
    %3603 = vmatpush1.msra.mxu0 0.0
    %3604 = vmatprep.subr.mxu0 0.0
    %3605 = vmatpush1.msra.mxu0 0.0
    %3606 = vmatprep.mubr.f32.mxu0 0.0
    %3607 = vmatmul.mubr.f32.gmra.mrb[0].mxu0 %v3327
    %v3608 = vpop.f32.mrb[0].mxu0
    %v3609 = vadd.f32 0.0, %v3608
    %v3610 = vpop.f32.mrb[0].mxu0
    %v3611 = vadd.f32 0.0, %v3610
    %3612 = vdwg.mxu0
    %3613 = vmatprep.subr.mxu0 %v3315
    %3614 = vmatpush1.msra.mxu0 %v3314
    %3615 = vmatprep.subr.mxu0 0.0
    %3616 = vmatpush1.msra.mxu0 0.0
    %3617 = vmatprep.subr.mxu0 0.0
    %3618 = vmatpush1.msra.mxu0 0.0
    %3619 = vmatprep.subr.mxu0 0.0
    %3620 = vmatpush1.msra.mxu0 0.0
    %3621 = vmatprep.subr.mxu0 0.0
    %3622 = vmatpush1.msra.mxu0 0.0
    %3623 = vmatprep.subr.mxu0 0.0
    %3624 = vmatpush1.msra.mxu0 0.0
    %3625 = vmatprep.subr.mxu0 0.0
    %3626 = vmatpush1.msra.mxu0 0.0
    %3627 = vmatprep.subr.mxu0 0.0
    %3628 = vmatpush1.msra.mxu0 0.0
    %3629 = vmatprep.subr.mxu0 0.0
    %3630 = vmatpush1.msra.mxu0 0.0
    %3631 = vmatprep.subr.mxu0 0.0
    %3632 = vmatpush1.msra.mxu0 0.0
    %3633 = vmatprep.subr.mxu0 0.0
    %3634 = vmatpush1.msra.mxu0 0.0
    %3635 = vmatprep.subr.mxu0 0.0
    %3636 = vmatpush1.msra.mxu0 0.0
    %3637 = vmatprep.subr.mxu0 0.0
    %3638 = vmatpush1.msra.mxu0 0.0
    %3639 = vmatprep.subr.mxu0 0.0
    %3640 = vmatpush1.msra.mxu0 0.0
    %3641 = vmatprep.subr.mxu0 0.0
    %3642 = vmatpush1.msra.mxu0 0.0
    %3643 = vmatprep.subr.mxu0 0.0
    %3644 = vmatpush1.msra.mxu0 0.0
    %3645 = vmatprep.subr.mxu0 0.0
    %3646 = vmatpush1.msra.mxu0 0.0
    %3647 = vmatprep.subr.mxu0 0.0
    %3648 = vmatpush1.msra.mxu0 0.0
    %3649 = vmatprep.subr.mxu0 0.0
    %3650 = vmatpush1.msra.mxu0 0.0
    %3651 = vmatprep.subr.mxu0 0.0
    %3652 = vmatpush1.msra.mxu0 0.0
    %3653 = vmatprep.subr.mxu0 0.0
    %3654 = vmatpush1.msra.mxu0 0.0
    %3655 = vmatprep.subr.mxu0 0.0
    %3656 = vmatpush1.msra.mxu0 0.0
    %3657 = vmatprep.subr.mxu0 0.0
    %3658 = vmatpush1.msra.mxu0 0.0
    %3659 = vmatprep.subr.mxu0 0.0
    %3660 = vmatpush1.msra.mxu0 0.0
    %3661 = vmatprep.subr.mxu0 0.0
    %3662 = vmatpush1.msra.mxu0 0.0
    %3663 = vmatprep.subr.mxu0 0.0
    %3664 = vmatpush1.msra.mxu0 0.0
    %3665 = vmatprep.subr.mxu0 0.0
    %3666 = vmatpush1.msra.mxu0 0.0
    %3667 = vmatprep.subr.mxu0 0.0
    %3668 = vmatpush1.msra.mxu0 0.0
    %3669 = vmatprep.subr.mxu0 0.0
    %3670 = vmatpush1.msra.mxu0 0.0
    %3671 = vmatprep.subr.mxu0 0.0
    %3672 = vmatpush1.msra.mxu0 0.0
    %3673 = vmatprep.subr.mxu0 0.0
    %3674 = vmatpush1.msra.mxu0 0.0
    %3675 = vmatprep.subr.mxu0 0.0
    %3676 = vmatpush1.msra.mxu0 0.0
    %3677 = vmatprep.mubr.f32.mxu0 0.0
    %3678 = vmatmul.mubr.f32.gmra.mrb[0].mxu0 %v3327
    %v3679 = vpop.f32.mrb[0].mxu0
    %v3680 = vadd.f32 0.0, %v3679
    %v3681 = vpop.f32.mrb[0].mxu0
    %v3682 = vadd.f32 0.0, %v3681
    %3683 = vdwg.mxu0
    %v3684 = vadd.f32 %v3272, %v3396
    %v3685 = vadd.f32 %v3273, %v3398
    %v3686 = vadd.f32 %v3274, %v3467
    %v3687 = vadd.f32 %v3275, %v3469
    %v3688 = vadd.f32 %v3276, %v3538
    %v3689 = vadd.f32 %v3277, %v3540
    %v3690 = vadd.f32 %v3278, %v3609
    %v3691 = vadd.f32 %v3279, %v3611
    %v3692 = vadd.f32 %v3280, %v3680
    %v3693 = vadd.f32 %v3281, %v3682
    %v3696 = vlaneseq
    %v3697 = vshrl.u32 %v3696, 7
    %v3698 = vsub.s32 0, %v3697
    %v3699 = vrot.slane %v18, %v3698
    %v3700 = vlaneseq
    %v3701 = vshrl.u32 %v3700, 7
    %v3702 = vsub.s32 1, %v3701
    %v3703 = vrot.slane %v18, %v3702
    %v3704 = vlaneseq
    %v3705 = vshrl.u32 %v3704, 7
    %v3706 = vsub.s32 2, %v3705
    %v3707 = vrot.slane %v18, %v3706
    %v3708 = vlaneseq
    %v3709 = vshrl.u32 %v3708, 7
    %v3710 = vsub.s32 3, %v3709
    %v3711 = vrot.slane %v18, %v3710
    %v3712 = vlaneseq
    %v3713 = vshrl.u32 %v3712, 7
    %v3714 = vsub.s32 4, %v3713
    %v3715 = vrot.slane %v18, %v3714
    %v3716 = vlaneseq
    %v3717 = vshrl.u32 %v3716, 7
    %v3718 = vsub.s32 5, %v3717
    %v3719 = vrot.slane %v18, %v3718
    %v3720 = vlaneseq
    %v3721 = vshrl.u32 %v3720, 7
    %v3722 = vsub.s32 6, %v3721
    %v3723 = vrot.slane %v18, %v3722
    %v3724 = vlaneseq
    %v3725 = vshrl.u32 %v3724, 7
    %v3726 = vsub.s32 7, %v3725
    %v3727 = vrot.slane %v18, %v3726
    %v3728 = vlaneseq
    %v3729 = vshrl.u32 %v3728, 7
    %v3730 = vsub.s32 0, %v3729
    %v3731 = vrot.slane %v20, %v3730
    %v3732 = vlaneseq
    %v3733 = vshrl.u32 %v3732, 7
    %v3734 = vsub.s32 1, %v3733
    %v3735 = vrot.slane %v20, %v3734
    %3736 = vrot.lane.b32.xlu0 %v3699, 95
    %v3737 = vpop.permute.xlu0 %3736
    %3738 = vrot.lane.b32.xlu0 %v3703, 95
    %v3739 = vpop.permute.xlu0 %3738
    %3740 = vrot.lane.b32.xlu0 %v3707, 95
    %v3741 = vpop.permute.xlu0 %3740
    %3742 = vrot.lane.b32.xlu0 %v3711, 95
    %v3743 = vpop.permute.xlu0 %3742
    %3744 = vrot.lane.b32.xlu0 %v3715, 95
    %v3745 = vpop.permute.xlu0 %3744
    %3746 = vrot.lane.b32.xlu0 %v3719, 95
    %v3747 = vpop.permute.xlu0 %3746
    %3748 = vrot.lane.b32.xlu0 %v3723, 95
    %v3749 = vpop.permute.xlu0 %3748
    %3750 = vrot.lane.b32.xlu0 %v3727, 95
    %v3751 = vpop.permute.xlu0 %3750
    %3752 = vrot.lane.b32.xlu0 %v3731, 95
    %v3753 = vpop.permute.xlu0 %3752
    %3754 = vrot.lane.b32.xlu0 %v3735, 95
    %v3755 = vpop.permute.xlu0 %3754
    %v3756 = vsel %vm1639, %v3737, %v3739
    %v3757 = vsel %vm1639, %v3739, %v3741
    %v3758 = vsel %vm1639, %v3741, %v3743
    %v3759 = vsel %vm1639, %v3743, %v3745
    %v3760 = vsel %vm1639, %v3745, %v3747
    %v3761 = vsel %vm1639, %v3747, %v3749
    %v3762 = vsel %vm1639, %v3749, %v3751
    %v3763 = vsel %vm1639, %v3751, %v3753
    %v3764 = vsel %vm1639, %v3753, %v3755
    %v3775 = vmul.f32 %v3684, %v3756
    %v3776 = vmul.f32 %v3685, %v3757
    %v3777 = vmul.f32 %v3686, %v3758
    %v3778 = vmul.f32 %v3687, %v3759
    %v3779 = vmul.f32 %v3688, %v3760
    %v3780 = vmul.f32 %v3689, %v3761
    %v3781 = vmul.f32 %v3690, %v3762
    %v3782 = vmul.f32 %v3691, %v3763
    %v3783 = vmul.f32 %v3692, %v3764
    %v3784 = vmul.f32 %v3693, %v3755
    %v3785 = vadd.f32 %v3775, %v3776
    %v3786 = vadd.f32 %v3785, %v3777
    %v3787 = vadd.f32 %v3786, %v3778
    %v3788 = vadd.f32 %v3787, %v3779
    %v3789 = vadd.f32 %v3788, %v3780
    %v3790 = vadd.f32 %v3789, %v3781
    %v3791 = vadd.f32 %v3790, %v3782
    %v3792 = vadd.f32 %v3791, %v3783
    %vm3793 = vcmask 539648
    %v3794 = vsel %vm3793, %v3784, 0.0
    %v3795 = vadd.f32 %v3792, %v3794
    %3796 = vadd.xlane.f32.xlu0 %v3795
    %v3797 = vpop.xlane.xlu0 %3796
    %v3798 = vmul.f32 %v3775, %v3684
    %v3799 = vmul.f32 %v3776, %v3685
    %v3800 = vmul.f32 %v3777, %v3686
    %v3801 = vmul.f32 %v3778, %v3687
    %v3802 = vmul.f32 %v3779, %v3688
    %v3803 = vmul.f32 %v3780, %v3689
    %v3804 = vmul.f32 %v3781, %v3690
    %v3805 = vmul.f32 %v3782, %v3691
    %v3806 = vmul.f32 %v3783, %v3692
    %v3807 = vmul.f32 %v3784, %v3693
    %v3808 = vadd.f32 %v3798, %v3799
    %v3809 = vadd.f32 %v3808, %v3800
    %v3810 = vadd.f32 %v3809, %v3801
    %v3811 = vadd.f32 %v3810, %v3802
    %v3812 = vadd.f32 %v3811, %v3803
    %v3813 = vadd.f32 %v3812, %v3804
    %v3814 = vadd.f32 %v3813, %v3805
    %v3815 = vadd.f32 %v3814, %v3806
    %v3816 = vsel %vm3793, %v3807, 0.0
    %v3817 = vadd.f32 %v3815, %v3816
    %3818 = vadd.xlane.f32.xlu0 %v3817
    %v3819 = vpop.xlane.xlu0 %3818
    %v3820 = vmul.f32 %v3797, 0.001953125
    %v3821 = vmul.f32 %v3819, 0.001953125
    %v3822 = vmul.f32 %v3820, %v3820
    %v3823 = vsub.f32 %v3821, %v3822
    %v3824 = vld [vmem:[%s2] sm:$0xff]
    %v3825 = vadd.f32 %v3823, 1e-05
    %v3826 = vrsqrt.pop %v3825
    %v3827 = vmul.f32 %v3824, %v3826
    %v3828 = vmul.f32 %v3820, %v3827
    %3830 = vrot.lane.b32.xlu0 %v3828, 1
    %v3831 = vpop.permute.xlu0 %3830
    %v3833 = vsub.f32 %v3824, %v3831
    %3835 = vset.pattern.permute.xlu0 0
    %3836 = vperm.xlu0 %3835, %v3827
    %v3837 = vpop.permute.xlu0 %3836
    %v3839 = vmul.f32 %v3684, %v3837
    %v3840 = vmul.f32 %v3685, %v3837
    %v3841 = vmul.f32 %v3686, %v3837
    %v3842 = vmul.f32 %v3687, %v3837
    %v3843 = vmul.f32 %v3688, %v3837
    %v3844 = vmul.f32 %v3689, %v3837
    %v3845 = vmul.f32 %v3690, %v3837
    %v3846 = vmul.f32 %v3691, %v3837
    %v3847 = vmul.f32 %v3692, %v3837
    %v3848 = vmul.f32 %v3693, %v3837
    %3850 = vset.pattern.permute.xlu0 1
    %3851 = vperm.xlu0 %3850, %v3833
    %v3852 = vpop.permute.xlu0 %3851
    %v3854 = vadd.f32 %v3839, %v3852
    %v3855 = vadd.f32 %v3840, %v3852
    %v3856 = vadd.f32 %v3841, %v3852
    %v3857 = vadd.f32 %v3842, %v3852
    %v3858 = vadd.f32 %v3843, %v3852
    %v3859 = vadd.f32 %v3844, %v3852
    %v3860 = vadd.f32 %v3845, %v3852
    %v3861 = vadd.f32 %v3846, %v3852
    %v3862 = vadd.f32 %v3847, %v3852
    %v3863 = vadd.f32 %v3848, %v3852
    %vm3864 = vcmp.gt.f32.partialorder %v3854, 0.0
    %vm3865 = vcmp.gt.f32.partialorder %v3855, 0.0
    %vm3866 = vcmp.gt.f32.partialorder %v3856, 0.0
    %vm3867 = vcmp.gt.f32.partialorder %v3857, 0.0
    %vm3868 = vcmp.gt.f32.partialorder %v3858, 0.0
    %vm3869 = vcmp.gt.f32.partialorder %v3859, 0.0
    %vm3870 = vcmp.gt.f32.partialorder %v3860, 0.0
    %vm3871 = vcmp.gt.f32.partialorder %v3861, 0.0
    %vm3872 = vcmp.gt.f32.partialorder %v3862, 0.0
    %vm3873 = vcmp.gt.f32.partialorder %v3863, 0.0
    %v3874 = vmul.f32 %v3854, 0.2
    %v3875 = vmul.f32 %v3855, 0.2
    %v3876 = vmul.f32 %v3856, 0.2
    %v3877 = vmul.f32 %v3857, 0.2
    %v3878 = vmul.f32 %v3858, 0.2
    %v3879 = vmul.f32 %v3859, 0.2
    %v3880 = vmul.f32 %v3860, 0.2
    %v3881 = vmul.f32 %v3861, 0.2
    %v3882 = vmul.f32 %v3862, 0.2
    %v3883 = vmul.f32 %v3863, 0.2
    %v3884 = vsel %vm3864, %v3854, %v3874
    %v3885 = vsel %vm3865, %v3855, %v3875
    %v3886 = vsel %vm3866, %v3856, %v3876
    %v3887 = vsel %vm3867, %v3857, %v3877
    %v3888 = vsel %vm3868, %v3858, %v3878
    %v3889 = vsel %vm3869, %v3859, %v3879
    %v3890 = vsel %vm3870, %v3860, %v3880
    %v3891 = vsel %vm3871, %v3861, %v3881
    %v3892 = vsel %vm3872, %v3862, %v3882
    %v3893 = vsel %vm3873, %v3863, %v3883
    %v3894 = vmul.f32 %v3884, %v3756
    %v3895 = vmul.f32 %v3885, %v3757
    %v3896 = vmul.f32 %v3886, %v3758
    %v3897 = vmul.f32 %v3887, %v3759
    %v3898 = vmul.f32 %v3888, %v3760
    %v3899 = vmul.f32 %v3889, %v3761
    %v3900 = vmul.f32 %v3890, %v3762
    %v3901 = vmul.f32 %v3891, %v3763
    %v3902 = vmul.f32 %v3892, %v3764
    %v3903 = vmul.f32 %v3893, %v3755
    %3904 = vst [vmem:[#allocation2] sm:$0xff] %v3894
    %3905 = vst [vmem:[#allocation2 + $0x8] sm:$0xff] %v3895
    %3906 = vst [vmem:[#allocation2 + $0x10] sm:$0xff] %v3896
    %3907 = vst [vmem:[#allocation2 + $0x18] sm:$0xff] %v3897
    %3908 = vst [vmem:[#allocation2 + $0x20] sm:$0xff] %v3898
    %3909 = vst [vmem:[#allocation2 + $0x28] sm:$0xff] %v3899
    %3910 = vst [vmem:[#allocation2 + $0x30] sm:$0xff] %v3900
    %3911 = vst [vmem:[#allocation2 + $0x38] sm:$0xff] %v3901
    %3912 = vst [vmem:[#allocation2 + $0x40] sm:$0xff] %v3902
    %3913 = vst.msk [vmem:[#allocation2 + $0x48] sm:$0xff] %vm3793, %v3903
    %v3914 = vld [vmem:[%s1 + $0x48] sm:$0xff]
    %v3915 = vld [vmem:[#allocation2] sm:$0xff]
    %v3916 = vld [vmem:[#allocation2 + $0x8] sm:$0xff]
    %v3917 = vld [vmem:[#allocation2 + $0x10] sm:$0xff]
    %v3918 = vld [vmem:[#allocation2 + $0x18] sm:$0xff]
    %v3919 = vld [vmem:[#allocation2 + $0x20] sm:$0xff]
    %v3920 = vld [vmem:[#allocation2 + $0x28] sm:$0xff]
    %v3921 = vld [vmem:[#allocation2 + $0x30] sm:$0xff]
    %v3922 = vld [vmem:[#allocation2 + $0x38] sm:$0xff]
    %v3923 = vld [vmem:[#allocation2 + $0x40] sm:$0xff]
    %v3924 = vld [vmem:[%s1 + $0x50] sm:$0xff]
    %v3925 = vld [vmem:[#allocation2 + $0x48] sm:$0xff]
    %3936 = vrot.lane.b32.xlu0 %v3915, 127
    %v3937 = vpop.permute.xlu0 %3936
    %3938 = vrot.lane.b32.xlu0 %v3916, 127
    %v3939 = vpop.permute.xlu0 %3938
    %3940 = vrot.lane.b32.xlu0 %v3917, 127
    %v3941 = vpop.permute.xlu0 %3940
    %3942 = vrot.lane.b32.xlu0 %v3918, 127
    %v3943 = vpop.permute.xlu0 %3942
    %3944 = vrot.lane.b32.xlu0 %v3919, 127
    %v3945 = vpop.permute.xlu0 %3944
    %3946 = vrot.lane.b32.xlu0 %v3920, 127
    %v3947 = vpop.permute.xlu0 %3946
    %3948 = vrot.lane.b32.xlu0 %v3921, 127
    %v3949 = vpop.permute.xlu0 %3948
    %3950 = vrot.lane.b32.xlu0 %v3922, 127
    %v3951 = vpop.permute.xlu0 %3950
    %3952 = vrot.lane.b32.xlu0 %v3923, 127
    %v3953 = vpop.permute.xlu0 %3952
    %3954 = vrot.lane.b32.xlu0 %v3925, 127
    %v3955 = vpop.permute.xlu0 %3954
    %v3956 = vsel %vm63, %v3937, %v3939
    %v3957 = vsel %vm63, %v3939, %v3941
    %v3958 = vsel %vm63, %v3941, %v3943
    %v3959 = vsel %vm63, %v3943, %v3945
    %v3960 = vsel %vm63, %v3945, %v3947
    %v3961 = vsel %vm63, %v3947, %v3949
    %v3962 = vsel %vm63, %v3949, %v3951
    %v3963 = vsel %vm63, %v3951, %v3953
    %v3964 = vsel %vm63, %v3953, %v3955
    %v3975 = vsel %vm83, %v3924, 0
    %3977 = vmatprep.subr.mxu0 %v3957
    %3978 = vmatpush1.msra.mxu0 %v3956
    %3979 = vmatprep.subr.mxu0 0.0
    %3980 = vmatpush1.msra.mxu0 0.0
    %3981 = vmatprep.subr.mxu0 0.0
    %3982 = vmatpush1.msra.mxu0 0.0
    %3983 = vmatprep.subr.mxu0 0.0
    %3984 = vmatpush1.msra.mxu0 0.0
    %3985 = vmatprep.subr.mxu0 0.0
    %3986 = vmatpush1.msra.mxu0 0.0
    %3987 = vmatprep.subr.mxu0 0.0
    %3988 = vmatpush1.msra.mxu0 0.0
    %3989 = vmatprep.subr.mxu0 0.0
    %3990 = vmatpush1.msra.mxu0 0.0
    %3991 = vmatprep.subr.mxu0 0.0
    %3992 = vmatpush1.msra.mxu0 0.0
    %3993 = vmatprep.subr.mxu0 0.0
    %3994 = vmatpush1.msra.mxu0 0.0
    %3995 = vmatprep.subr.mxu0 0.0
    %3996 = vmatpush1.msra.mxu0 0.0
    %3997 = vmatprep.subr.mxu0 0.0
    %3998 = vmatpush1.msra.mxu0 0.0
    %3999 = vmatprep.subr.mxu0 0.0
    %4000 = vmatpush1.msra.mxu0 0.0
    %4001 = vmatprep.subr.mxu0 0.0
    %4002 = vmatpush1.msra.mxu0 0.0
    %4003 = vmatprep.subr.mxu0 0.0
    %4004 = vmatpush1.msra.mxu0 0.0
    %4005 = vmatprep.subr.mxu0 0.0
    %4006 = vmatpush1.msra.mxu0 0.0
    %4007 = vmatprep.subr.mxu0 0.0
    %4008 = vmatpush1.msra.mxu0 0.0
    %4009 = vmatprep.subr.mxu0 0.0
    %4010 = vmatpush1.msra.mxu0 0.0
    %4011 = vmatprep.subr.mxu0 0.0
    %4012 = vmatpush1.msra.mxu0 0.0
    %4013 = vmatprep.subr.mxu0 0.0
    %4014 = vmatpush1.msra.mxu0 0.0
    %4015 = vmatprep.subr.mxu0 0.0
    %4016 = vmatpush1.msra.mxu0 0.0
    %4017 = vmatprep.subr.mxu0 0.0
    %4018 = vmatpush1.msra.mxu0 0.0
    %4019 = vmatprep.subr.mxu0 0.0
    %4020 = vmatpush1.msra.mxu0 0.0
    %4021 = vmatprep.subr.mxu0 0.0
    %4022 = vmatpush1.msra.mxu0 0.0
    %4023 = vmatprep.subr.mxu0 0.0
    %4024 = vmatpush1.msra.mxu0 0.0
    %4025 = vmatprep.subr.mxu0 0.0
    %4026 = vmatpush1.msra.mxu0 0.0
    %4027 = vmatprep.subr.mxu0 0.0
    %4028 = vmatpush1.msra.mxu0 0.0
    %4029 = vmatprep.subr.mxu0 0.0
    %4030 = vmatpush1.msra.mxu0 0.0
    %4031 = vmatprep.subr.mxu0 0.0
    %4032 = vmatpush1.msra.mxu0 0.0
    %4033 = vmatprep.subr.mxu0 0.0
    %4034 = vmatpush1.msra.mxu0 0.0
    %4035 = vmatprep.subr.mxu0 0.0
    %4036 = vmatpush1.msra.mxu0 0.0
    %4037 = vmatprep.subr.mxu0 0.0
    %4038 = vmatpush1.msra.mxu0 0.0
    %4039 = vmatprep.subr.mxu0 0.0
    %4040 = vmatpush1.msra.mxu0 0.0
    %4041 = vmatprep.mubr.f32.mxu0 0.0
    %4042 = vmatmul.mubr.f32.gmra.mrb[0].mxu0 %v3975
    %v4043 = vpop.f32.mrb[0].mxu0
    %v4044 = vadd.f32 0.0, %v4043
    %v4045 = vpop.f32.mrb[0].mxu0
    %v4046 = vadd.f32 0.0, %v4045
    %4047 = vdwg.mxu0
    %4048 = vmatprep.subr.mxu0 %v3959
    %4049 = vmatpush1.msra.mxu0 %v3958
    %4050 = vmatprep.subr.mxu0 0.0
    %4051 = vmatpush1.msra.mxu0 0.0
    %4052 = vmatprep.subr.mxu0 0.0
    %4053 = vmatpush1.msra.mxu0 0.0
    %4054 = vmatprep.subr.mxu0 0.0
    %4055 = vmatpush1.msra.mxu0 0.0
    %4056 = vmatprep.subr.mxu0 0.0
    %4057 = vmatpush1.msra.mxu0 0.0
    %4058 = vmatprep.subr.mxu0 0.0
    %4059 = vmatpush1.msra.mxu0 0.0
    %4060 = vmatprep.subr.mxu0 0.0
    %4061 = vmatpush1.msra.mxu0 0.0
    %4062 = vmatprep.subr.mxu0 0.0
    %4063 = vmatpush1.msra.mxu0 0.0
    %4064 = vmatprep.subr.mxu0 0.0
    %4065 = vmatpush1.msra.mxu0 0.0
    %4066 = vmatprep.subr.mxu0 0.0
    %4067 = vmatpush1.msra.mxu0 0.0
    %4068 = vmatprep.subr.mxu0 0.0
    %4069 = vmatpush1.msra.mxu0 0.0
    %4070 = vmatprep.subr.mxu0 0.0
    %4071 = vmatpush1.msra.mxu0 0.0
    %4072 = vmatprep.subr.mxu0 0.0
    %4073 = vmatpush1.msra.mxu0 0.0
    %4074 = vmatprep.subr.mxu0 0.0
    %4075 = vmatpush1.msra.mxu0 0.0
    %4076 = vmatprep.subr.mxu0 0.0
    %4077 = vmatpush1.msra.mxu0 0.0
    %4078 = vmatprep.subr.mxu0 0.0
    %4079 = vmatpush1.msra.mxu0 0.0
    %4080 = vmatprep.subr.mxu0 0.0
    %4081 = vmatpush1.msra.mxu0 0.0
    %4082 = vmatprep.subr.mxu0 0.0
    %4083 = vmatpush1.msra.mxu0 0.0
    %4084 = vmatprep.subr.mxu0 0.0
    %4085 = vmatpush1.msra.mxu0 0.0
    %4086 = vmatprep.subr.mxu0 0.0
    %4087 = vmatpush1.msra.mxu0 0.0
    %4088 = vmatprep.subr.mxu0 0.0
    %4089 = vmatpush1.msra.mxu0 0.0
    %4090 = vmatprep.subr.mxu0 0.0
    %4091 = vmatpush1.msra.mxu0 0.0
    %4092 = vmatprep.subr.mxu0 0.0
    %4093 = vmatpush1.msra.mxu0 0.0
    %4094 = vmatprep.subr.mxu0 0.0
    %4095 = vmatpush1.msra.mxu0 0.0
    %4096 = vmatprep.subr.mxu0 0.0
    %4097 = vmatpush1.msra.mxu0 0.0
    %4098 = vmatprep.subr.mxu0 0.0
    %4099 = vmatpush1.msra.mxu0 0.0
    %4100 = vmatprep.subr.mxu0 0.0
    %4101 = vmatpush1.msra.mxu0 0.0
    %4102 = vmatprep.subr.mxu0 0.0
    %4103 = vmatpush1.msra.mxu0 0.0
    %4104 = vmatprep.subr.mxu0 0.0
    %4105 = vmatpush1.msra.mxu0 0.0
    %4106 = vmatprep.subr.mxu0 0.0
    %4107 = vmatpush1.msra.mxu0 0.0
    %4108 = vmatprep.subr.mxu0 0.0
    %4109 = vmatpush1.msra.mxu0 0.0
    %4110 = vmatprep.subr.mxu0 0.0
    %4111 = vmatpush1.msra.mxu0 0.0
    %4112 = vmatprep.mubr.f32.mxu0 0.0
    %4113 = vmatmul.mubr.f32.gmra.mrb[0].mxu0 %v3975
    %v4114 = vpop.f32.mrb[0].mxu0
    %v4115 = vadd.f32 0.0, %v4114
    %v4116 = vpop.f32.mrb[0].mxu0
    %v4117 = vadd.f32 0.0, %v4116
    %4118 = vdwg.mxu0
    %4119 = vmatprep.subr.mxu0 %v3961
    %4120 = vmatpush1.msra.mxu0 %v3960
    %4121 = vmatprep.subr.mxu0 0.0
    %4122 = vmatpush1.msra.mxu0 0.0
    %4123 = vmatprep.subr.mxu0 0.0
    %4124 = vmatpush1.msra.mxu0 0.0
    %4125 = vmatprep.subr.mxu0 0.0
    %4126 = vmatpush1.msra.mxu0 0.0
    %4127 = vmatprep.subr.mxu0 0.0
    %4128 = vmatpush1.msra.mxu0 0.0
    %4129 = vmatprep.subr.mxu0 0.0
    %4130 = vmatpush1.msra.mxu0 0.0
    %4131 = vmatprep.subr.mxu0 0.0
    %4132 = vmatpush1.msra.mxu0 0.0
    %4133 = vmatprep.subr.mxu0 0.0
    %4134 = vmatpush1.msra.mxu0 0.0
    %4135 = vmatprep.subr.mxu0 0.0
    %4136 = vmatpush1.msra.mxu0 0.0
    %4137 = vmatprep.subr.mxu0 0.0
    %4138 = vmatpush1.msra.mxu0 0.0
    %4139 = vmatprep.subr.mxu0 0.0
    %4140 = vmatpush1.msra.mxu0 0.0
    %4141 = vmatprep.subr.mxu0 0.0
    %4142 = vmatpush1.msra.mxu0 0.0
    %4143 = vmatprep.subr.mxu0 0.0
    %4144 = vmatpush1.msra.mxu0 0.0
    %4145 = vmatprep.subr.mxu0 0.0
    %4146 = vmatpush1.msra.mxu0 0.0
    %4147 = vmatprep.subr.mxu0 0.0
    %4148 = vmatpush1.msra.mxu0 0.0
    %4149 = vmatprep.subr.mxu0 0.0
    %4150 = vmatpush1.msra.mxu0 0.0
    %4151 = vmatprep.subr.mxu0 0.0
    %4152 = vmatpush1.msra.mxu0 0.0
    %4153 = vmatprep.subr.mxu0 0.0
    %4154 = vmatpush1.msra.mxu0 0.0
    %4155 = vmatprep.subr.mxu0 0.0
    %4156 = vmatpush1.msra.mxu0 0.0
    %4157 = vmatprep.subr.mxu0 0.0
    %4158 = vmatpush1.msra.mxu0 0.0
    %4159 = vmatprep.subr.mxu0 0.0
    %4160 = vmatpush1.msra.mxu0 0.0
    %4161 = vmatprep.subr.mxu0 0.0
    %4162 = vmatpush1.msra.mxu0 0.0
    %4163 = vmatprep.subr.mxu0 0.0
    %4164 = vmatpush1.msra.mxu0 0.0
    %4165 = vmatprep.subr.mxu0 0.0
    %4166 = vmatpush1.msra.mxu0 0.0
    %4167 = vmatprep.subr.mxu0 0.0
    %4168 = vmatpush1.msra.mxu0 0.0
    %4169 = vmatprep.subr.mxu0 0.0
    %4170 = vmatpush1.msra.mxu0 0.0
    %4171 = vmatprep.subr.mxu0 0.0
    %4172 = vmatpush1.msra.mxu0 0.0
    %4173 = vmatprep.subr.mxu0 0.0
    %4174 = vmatpush1.msra.mxu0 0.0
    %4175 = vmatprep.subr.mxu0 0.0
    %4176 = vmatpush1.msra.mxu0 0.0
    %4177 = vmatprep.subr.mxu0 0.0
    %4178 = vmatpush1.msra.mxu0 0.0
    %4179 = vmatprep.subr.mxu0 0.0
    %4180 = vmatpush1.msra.mxu0 0.0
    %4181 = vmatprep.subr.mxu0 0.0
    %4182 = vmatpush1.msra.mxu0 0.0
    %4183 = vmatprep.mubr.f32.mxu0 0.0
    %4184 = vmatmul.mubr.f32.gmra.mrb[0].mxu0 %v3975
    %v4185 = vpop.f32.mrb[0].mxu0
    %v4186 = vadd.f32 0.0, %v4185
    %v4187 = vpop.f32.mrb[0].mxu0
    %v4188 = vadd.f32 0.0, %v4187
    %4189 = vdwg.mxu0
    %4190 = vmatprep.subr.mxu0 %v3963
    %4191 = vmatpush1.msra.mxu0 %v3962
    %4192 = vmatprep.subr.mxu0 0.0
    %4193 = vmatpush1.msra.mxu0 0.0
    %4194 = vmatprep.subr.mxu0 0.0
    %4195 = vmatpush1.msra.mxu0 0.0
    %4196 = vmatprep.subr.mxu0 0.0
    %4197 = vmatpush1.msra.mxu0 0.0
    %4198 = vmatprep.subr.mxu0 0.0
    %4199 = vmatpush1.msra.mxu0 0.0
    %4200 = vmatprep.subr.mxu0 0.0
    %4201 = vmatpush1.msra.mxu0 0.0
    %4202 = vmatprep.subr.mxu0 0.0
    %4203 = vmatpush1.msra.mxu0 0.0
    %4204 = vmatprep.subr.mxu0 0.0
    %4205 = vmatpush1.msra.mxu0 0.0
    %4206 = vmatprep.subr.mxu0 0.0
    %4207 = vmatpush1.msra.mxu0 0.0
    %4208 = vmatprep.subr.mxu0 0.0
    %4209 = vmatpush1.msra.mxu0 0.0
    %4210 = vmatprep.subr.mxu0 0.0
    %4211 = vmatpush1.msra.mxu0 0.0
    %4212 = vmatprep.subr.mxu0 0.0
    %4213 = vmatpush1.msra.mxu0 0.0
    %4214 = vmatprep.subr.mxu0 0.0
    %4215 = vmatpush1.msra.mxu0 0.0
    %4216 = vmatprep.subr.mxu0 0.0
    %4217 = vmatpush1.msra.mxu0 0.0
    %4218 = vmatprep.subr.mxu0 0.0
    %4219 = vmatpush1.msra.mxu0 0.0
    %4220 = vmatprep.subr.mxu0 0.0
    %4221 = vmatpush1.msra.mxu0 0.0
    %4222 = vmatprep.subr.mxu0 0.0
    %4223 = vmatpush1.msra.mxu0 0.0
    %4224 = vmatprep.subr.mxu0 0.0
    %4225 = vmatpush1.msra.mxu0 0.0
    %4226 = vmatprep.subr.mxu0 0.0
    %4227 = vmatpush1.msra.mxu0 0.0
    %4228 = vmatprep.subr.mxu0 0.0
    %4229 = vmatpush1.msra.mxu0 0.0
    %4230 = vmatprep.subr.mxu0 0.0
    %4231 = vmatpush1.msra.mxu0 0.0
    %4232 = vmatprep.subr.mxu0 0.0
    %4233 = vmatpush1.msra.mxu0 0.0
    %4234 = vmatprep.subr.mxu0 0.0
    %4235 = vmatpush1.msra.mxu0 0.0
    %4236 = vmatprep.subr.mxu0 0.0
    %4237 = vmatpush1.msra.mxu0 0.0
    %4238 = vmatprep.subr.mxu0 0.0
    %4239 = vmatpush1.msra.mxu0 0.0
    %4240 = vmatprep.subr.mxu0 0.0
    %4241 = vmatpush1.msra.mxu0 0.0
    %4242 = vmatprep.subr.mxu0 0.0
    %4243 = vmatpush1.msra.mxu0 0.0
    %4244 = vmatprep.subr.mxu0 0.0
    %4245 = vmatpush1.msra.mxu0 0.0
    %4246 = vmatprep.subr.mxu0 0.0
    %4247 = vmatpush1.msra.mxu0 0.0
    %4248 = vmatprep.subr.mxu0 0.0
    %4249 = vmatpush1.msra.mxu0 0.0
    %4250 = vmatprep.subr.mxu0 0.0
    %4251 = vmatpush1.msra.mxu0 0.0
    %4252 = vmatprep.subr.mxu0 0.0
    %4253 = vmatpush1.msra.mxu0 0.0
    %4254 = vmatprep.mubr.f32.mxu0 0.0
    %4255 = vmatmul.mubr.f32.gmra.mrb[0].mxu0 %v3975
    %v4256 = vpop.f32.mrb[0].mxu0
    %v4257 = vadd.f32 0.0, %v4256
    %v4258 = vpop.f32.mrb[0].mxu0
    %v4259 = vadd.f32 0.0, %v4258
    %4260 = vdwg.mxu0
    %4261 = vmatprep.subr.mxu0 0.0
    %4262 = vmatpush1.msra.mxu0 %v3964
    %4263 = vmatprep.subr.mxu0 0.0
    %4264 = vmatpush1.msra.mxu0 0.0
    %4265 = vmatprep.subr.mxu0 0.0
    %4266 = vmatpush1.msra.mxu0 0.0
    %4267 = vmatprep.subr.mxu0 0.0
    %4268 = vmatpush1.msra.mxu0 0.0
    %4269 = vmatprep.subr.mxu0 0.0
    %4270 = vmatpush1.msra.mxu0 0.0
    %4271 = vmatprep.subr.mxu0 0.0
    %4272 = vmatpush1.msra.mxu0 0.0
    %4273 = vmatprep.subr.mxu0 0.0
    %4274 = vmatpush1.msra.mxu0 0.0
    %4275 = vmatprep.subr.mxu0 0.0
    %4276 = vmatpush1.msra.mxu0 0.0
    %4277 = vmatprep.subr.mxu0 0.0
    %4278 = vmatpush1.msra.mxu0 0.0
    %4279 = vmatprep.subr.mxu0 0.0
    %4280 = vmatpush1.msra.mxu0 0.0
    %4281 = vmatprep.subr.mxu0 0.0
    %4282 = vmatpush1.msra.mxu0 0.0
    %4283 = vmatprep.subr.mxu0 0.0
    %4284 = vmatpush1.msra.mxu0 0.0
    %4285 = vmatprep.subr.mxu0 0.0
    %4286 = vmatpush1.msra.mxu0 0.0
    %4287 = vmatprep.subr.mxu0 0.0
    %4288 = vmatpush1.msra.mxu0 0.0
    %4289 = vmatprep.subr.mxu0 0.0
    %4290 = vmatpush1.msra.mxu0 0.0
    %4291 = vmatprep.subr.mxu0 0.0
    %4292 = vmatpush1.msra.mxu0 0.0
    %4293 = vmatprep.subr.mxu0 0.0
    %4294 = vmatpush1.msra.mxu0 0.0
    %4295 = vmatprep.subr.mxu0 0.0
    %4296 = vmatpush1.msra.mxu0 0.0
    %4297 = vmatprep.subr.mxu0 0.0
    %4298 = vmatpush1.msra.mxu0 0.0
    %4299 = vmatprep.subr.mxu0 0.0
    %4300 = vmatpush1.msra.mxu0 0.0
    %4301 = vmatprep.subr.mxu0 0.0
    %4302 = vmatpush1.msra.mxu0 0.0
    %4303 = vmatprep.subr.mxu0 0.0
    %4304 = vmatpush1.msra.mxu0 0.0
    %4305 = vmatprep.subr.mxu0 0.0
    %4306 = vmatpush1.msra.mxu0 0.0
    %4307 = vmatprep.subr.mxu0 0.0
    %4308 = vmatpush1.msra.mxu0 0.0
    %4309 = vmatprep.subr.mxu0 0.0
    %4310 = vmatpush1.msra.mxu0 0.0
    %4311 = vmatprep.subr.mxu0 0.0
    %4312 = vmatpush1.msra.mxu0 0.0
    %4313 = vmatprep.subr.mxu0 0.0
    %4314 = vmatpush1.msra.mxu0 0.0
    %4315 = vmatprep.subr.mxu0 0.0
    %4316 = vmatpush1.msra.mxu0 0.0
    %4317 = vmatprep.subr.mxu0 0.0
    %4318 = vmatpush1.msra.mxu0 0.0
    %4319 = vmatprep.subr.mxu0 0.0
    %4320 = vmatpush1.msra.mxu0 0.0
    %4321 = vmatprep.subr.mxu0 0.0
    %4322 = vmatpush1.msra.mxu0 0.0
    %4323 = vmatprep.subr.mxu0 0.0
    %4324 = vmatpush1.msra.mxu0 0.0
    %4325 = vmatprep.mubr.f32.mxu0 0.0
    %4326 = vmatmul.mubr.f32.gmra.mrb[0].mxu0 %v3975
    %v4327 = vpop.f32.mrb[0].mxu0
    %v4328 = vadd.f32 0.0, %v4327
    %v4329 = vpop.f32.mrb[0].mxu0
    %4330 = vdwg.mxu0
    %v4332 = vsel %vm83, %v3914, 0
    %4334 = vmatprep.subr.mxu0 %v3916
    %4335 = vmatpush1.msra.mxu0 %v3915
    %4336 = vmatprep.subr.mxu0 0.0
    %4337 = vmatpush1.msra.mxu0 0.0
    %4338 = vmatprep.subr.mxu0 0.0
    %4339 = vmatpush1.msra.mxu0 0.0
    %4340 = vmatprep.subr.mxu0 0.0
    %4341 = vmatpush1.msra.mxu0 0.0
    %4342 = vmatprep.subr.mxu0 0.0
    %4343 = vmatpush1.msra.mxu0 0.0
    %4344 = vmatprep.subr.mxu0 0.0
    %4345 = vmatpush1.msra.mxu0 0.0
    %4346 = vmatprep.subr.mxu0 0.0
    %4347 = vmatpush1.msra.mxu0 0.0
    %4348 = vmatprep.subr.mxu0 0.0
    %4349 = vmatpush1.msra.mxu0 0.0
    %4350 = vmatprep.subr.mxu0 0.0
    %4351 = vmatpush1.msra.mxu0 0.0
    %4352 = vmatprep.subr.mxu0 0.0
    %4353 = vmatpush1.msra.mxu0 0.0
    %4354 = vmatprep.subr.mxu0 0.0
    %4355 = vmatpush1.msra.mxu0 0.0
    %4356 = vmatprep.subr.mxu0 0.0
    %4357 = vmatpush1.msra.mxu0 0.0
    %4358 = vmatprep.subr.mxu0 0.0
    %4359 = vmatpush1.msra.mxu0 0.0
    %4360 = vmatprep.subr.mxu0 0.0
    %4361 = vmatpush1.msra.mxu0 0.0
    %4362 = vmatprep.subr.mxu0 0.0
    %4363 = vmatpush1.msra.mxu0 0.0
    %4364 = vmatprep.subr.mxu0 0.0
    %4365 = vmatpush1.msra.mxu0 0.0
    %4366 = vmatprep.subr.mxu0 0.0
    %4367 = vmatpush1.msra.mxu0 0.0
    %4368 = vmatprep.subr.mxu0 0.0
    %4369 = vmatpush1.msra.mxu0 0.0
    %4370 = vmatprep.subr.mxu0 0.0
    %4371 = vmatpush1.msra.mxu0 0.0
    %4372 = vmatprep.subr.mxu0 0.0
    %4373 = vmatpush1.msra.mxu0 0.0
    %4374 = vmatprep.subr.mxu0 0.0
    %4375 = vmatpush1.msra.mxu0 0.0
    %4376 = vmatprep.subr.mxu0 0.0
    %4377 = vmatpush1.msra.mxu0 0.0
    %4378 = vmatprep.subr.mxu0 0.0
    %4379 = vmatpush1.msra.mxu0 0.0
    %4380 = vmatprep.subr.mxu0 0.0
    %4381 = vmatpush1.msra.mxu0 0.0
    %4382 = vmatprep.subr.mxu0 0.0
    %4383 = vmatpush1.msra.mxu0 0.0
    %4384 = vmatprep.subr.mxu0 0.0
    %4385 = vmatpush1.msra.mxu0 0.0
    %4386 = vmatprep.subr.mxu0 0.0
    %4387 = vmatpush1.msra.mxu0 0.0
    %4388 = vmatprep.subr.mxu0 0.0
    %4389 = vmatpush1.msra.mxu0 0.0
    %4390 = vmatprep.subr.mxu0 0.0
    %4391 = vmatpush1.msra.mxu0 0.0
    %4392 = vmatprep.subr.mxu0 0.0
    %4393 = vmatpush1.msra.mxu0 0.0
    %4394 = vmatprep.subr.mxu0 0.0
    %4395 = vmatpush1.msra.mxu0 0.0
    %4396 = vmatprep.subr.mxu0 0.0
    %4397 = vmatpush1.msra.mxu0 0.0
    %4398 = vmatprep.mubr.f32.mxu0 0.0
    %4399 = vmatmul.mubr.f32.gmra.mrb[0].mxu0 %v4332
    %v4400 = vpop.f32.mrb[0].mxu0
    %v4401 = vadd.f32 %v4044, %v4400
    %v4402 = vpop.f32.mrb[0].mxu0
    %v4403 = vadd.f32 %v4046, %v4402
    %4404 = vdwg.mxu0
    %4405 = vmatprep.subr.mxu0 %v3918
    %4406 = vmatpush1.msra.mxu0 %v3917
    %4407 = vmatprep.subr.mxu0 0.0
    %4408 = vmatpush1.msra.mxu0 0.0
    %4409 = vmatprep.subr.mxu0 0.0
    %4410 = vmatpush1.msra.mxu0 0.0
    %4411 = vmatprep.subr.mxu0 0.0
    %4412 = vmatpush1.msra.mxu0 0.0
    %4413 = vmatprep.subr.mxu0 0.0
    %4414 = vmatpush1.msra.mxu0 0.0
    %4415 = vmatprep.subr.mxu0 0.0
    %4416 = vmatpush1.msra.mxu0 0.0
    %4417 = vmatprep.subr.mxu0 0.0
    %4418 = vmatpush1.msra.mxu0 0.0
    %4419 = vmatprep.subr.mxu0 0.0
    %4420 = vmatpush1.msra.mxu0 0.0
    %4421 = vmatprep.subr.mxu0 0.0
    %4422 = vmatpush1.msra.mxu0 0.0
    %4423 = vmatprep.subr.mxu0 0.0
    %4424 = vmatpush1.msra.mxu0 0.0
    %4425 = vmatprep.subr.mxu0 0.0
    %4426 = vmatpush1.msra.mxu0 0.0
    %4427 = vmatprep.subr.mxu0 0.0
    %4428 = vmatpush1.msra.mxu0 0.0
    %4429 = vmatprep.subr.mxu0 0.0
    %4430 = vmatpush1.msra.mxu0 0.0
    %4431 = vmatprep.subr.mxu0 0.0
    %4432 = vmatpush1.msra.mxu0 0.0
    %4433 = vmatprep.subr.mxu0 0.0
    %4434 = vmatpush1.msra.mxu0 0.0
    %4435 = vmatprep.subr.mxu0 0.0
    %4436 = vmatpush1.msra.mxu0 0.0
    %4437 = vmatprep.subr.mxu0 0.0
    %4438 = vmatpush1.msra.mxu0 0.0
    %4439 = vmatprep.subr.mxu0 0.0
    %4440 = vmatpush1.msra.mxu0 0.0
    %4441 = vmatprep.subr.mxu0 0.0
    %4442 = vmatpush1.msra.mxu0 0.0
    %4443 = vmatprep.subr.mxu0 0.0
    %4444 = vmatpush1.msra.mxu0 0.0
    %4445 = vmatprep.subr.mxu0 0.0
    %4446 = vmatpush1.msra.mxu0 0.0
    %4447 = vmatprep.subr.mxu0 0.0
    %4448 = vmatpush1.msra.mxu0 0.0
    %4449 = vmatprep.subr.mxu0 0.0
    %4450 = vmatpush1.msra.mxu0 0.0
    %4451 = vmatprep.subr.mxu0 0.0
    %4452 = vmatpush1.msra.mxu0 0.0
    %4453 = vmatprep.subr.mxu0 0.0
    %4454 = vmatpush1.msra.mxu0 0.0
    %4455 = vmatprep.subr.mxu0 0.0
    %4456 = vmatpush1.msra.mxu0 0.0
    %4457 = vmatprep.subr.mxu0 0.0
    %4458 = vmatpush1.msra.mxu0 0.0
    %4459 = vmatprep.subr.mxu0 0.0
    %4460 = vmatpush1.msra.mxu0 0.0
    %4461 = vmatprep.subr.mxu0 0.0
    %4462 = vmatpush1.msra.mxu0 0.0
    %4463 = vmatprep.subr.mxu0 0.0
    %4464 = vmatpush1.msra.mxu0 0.0
    %4465 = vmatprep.subr.mxu0 0.0
    %4466 = vmatpush1.msra.mxu0 0.0
    %4467 = vmatprep.subr.mxu0 0.0
    %4468 = vmatpush1.msra.mxu0 0.0
    %4469 = vmatprep.mubr.f32.mxu0 0.0
    %4470 = vmatmul.mubr.f32.gmra.mrb[0].mxu0 %v4332
    %v4471 = vpop.f32.mrb[0].mxu0
    %v4472 = vadd.f32 %v4115, %v4471
    %v4473 = vpop.f32.mrb[0].mxu0
    %v4474 = vadd.f32 %v4117, %v4473
    %4475 = vdwg.mxu0
    %4476 = vmatprep.subr.mxu0 %v3920
    %4477 = vmatpush1.msra.mxu0 %v3919
    %4478 = vmatprep.subr.mxu0 0.0
    %4479 = vmatpush1.msra.mxu0 0.0
    %4480 = vmatprep.subr.mxu0 0.0
    %4481 = vmatpush1.msra.mxu0 0.0
    %4482 = vmatprep.subr.mxu0 0.0
    %4483 = vmatpush1.msra.mxu0 0.0
    %4484 = vmatprep.subr.mxu0 0.0
    %4485 = vmatpush1.msra.mxu0 0.0
    %4486 = vmatprep.subr.mxu0 0.0
    %4487 = vmatpush1.msra.mxu0 0.0
    %4488 = vmatprep.subr.mxu0 0.0
    %4489 = vmatpush1.msra.mxu0 0.0
    %4490 = vmatprep.subr.mxu0 0.0
    %4491 = vmatpush1.msra.mxu0 0.0
    %4492 = vmatprep.subr.mxu0 0.0
    %4493 = vmatpush1.msra.mxu0 0.0
    %4494 = vmatprep.subr.mxu0 0.0
    %4495 = vmatpush1.msra.mxu0 0.0
    %4496 = vmatprep.subr.mxu0 0.0
    %4497 = vmatpush1.msra.mxu0 0.0
    %4498 = vmatprep.subr.mxu0 0.0
    %4499 = vmatpush1.msra.mxu0 0.0
    %4500 = vmatprep.subr.mxu0 0.0
    %4501 = vmatpush1.msra.mxu0 0.0
    %4502 = vmatprep.subr.mxu0 0.0
    %4503 = vmatpush1.msra.mxu0 0.0
    %4504 = vmatprep.subr.mxu0 0.0
    %4505 = vmatpush1.msra.mxu0 0.0
    %4506 = vmatprep.subr.mxu0 0.0
    %4507 = vmatpush1.msra.mxu0 0.0
    %4508 = vmatprep.subr.mxu0 0.0
    %4509 = vmatpush1.msra.mxu0 0.0
    %4510 = vmatprep.subr.mxu0 0.0
    %4511 = vmatpush1.msra.mxu0 0.0
    %4512 = vmatprep.subr.mxu0 0.0
    %4513 = vmatpush1.msra.mxu0 0.0
    %4514 = vmatprep.subr.mxu0 0.0
    %4515 = vmatpush1.msra.mxu0 0.0
    %4516 = vmatprep.subr.mxu0 0.0
    %4517 = vmatpush1.msra.mxu0 0.0
    %4518 = vmatprep.subr.mxu0 0.0
    %4519 = vmatpush1.msra.mxu0 0.0
    %4520 = vmatprep.subr.mxu0 0.0
    %4521 = vmatpush1.msra.mxu0 0.0
    %4522 = vmatprep.subr.mxu0 0.0
    %4523 = vmatpush1.msra.mxu0 0.0
    %4524 = vmatprep.subr.mxu0 0.0
    %4525 = vmatpush1.msra.mxu0 0.0
    %4526 = vmatprep.subr.mxu0 0.0
    %4527 = vmatpush1.msra.mxu0 0.0
    %4528 = vmatprep.subr.mxu0 0.0
    %4529 = vmatpush1.msra.mxu0 0.0
    %4530 = vmatprep.subr.mxu0 0.0
    %4531 = vmatpush1.msra.mxu0 0.0
    %4532 = vmatprep.subr.mxu0 0.0
    %4533 = vmatpush1.msra.mxu0 0.0
    %4534 = vmatprep.subr.mxu0 0.0
    %4535 = vmatpush1.msra.mxu0 0.0
    %4536 = vmatprep.subr.mxu0 0.0
    %4537 = vmatpush1.msra.mxu0 0.0
    %4538 = vmatprep.subr.mxu0 0.0
    %4539 = vmatpush1.msra.mxu0 0.0
    %4540 = vmatprep.mubr.f32.mxu0 0.0
    %4541 = vmatmul.mubr.f32.gmra.mrb[0].mxu0 %v4332
    %v4542 = vpop.f32.mrb[0].mxu0
    %v4543 = vadd.f32 %v4186, %v4542
    %v4544 = vpop.f32.mrb[0].mxu0
    %v4545 = vadd.f32 %v4188, %v4544
    %4546 = vdwg.mxu0
    %4547 = vmatprep.subr.mxu0 %v3922
    %4548 = vmatpush1.msra.mxu0 %v3921
    %4549 = vmatprep.subr.mxu0 0.0
    %4550 = vmatpush1.msra.mxu0 0.0
    %4551 = vmatprep.subr.mxu0 0.0
    %4552 = vmatpush1.msra.mxu0 0.0
    %4553 = vmatprep.subr.mxu0 0.0
    %4554 = vmatpush1.msra.mxu0 0.0
    %4555 = vmatprep.subr.mxu0 0.0
    %4556 = vmatpush1.msra.mxu0 0.0
    %4557 = vmatprep.subr.mxu0 0.0
    %4558 = vmatpush1.msra.mxu0 0.0
    %4559 = vmatprep.subr.mxu0 0.0
    %4560 = vmatpush1.msra.mxu0 0.0
    %4561 = vmatprep.subr.mxu0 0.0
    %4562 = vmatpush1.msra.mxu0 0.0
    %4563 = vmatprep.subr.mxu0 0.0
    %4564 = vmatpush1.msra.mxu0 0.0
    %4565 = vmatprep.subr.mxu0 0.0
    %4566 = vmatpush1.msra.mxu0 0.0
    %4567 = vmatprep.subr.mxu0 0.0
    %4568 = vmatpush1.msra.mxu0 0.0
    %4569 = vmatprep.subr.mxu0 0.0
    %4570 = vmatpush1.msra.mxu0 0.0
    %4571 = vmatprep.subr.mxu0 0.0
    %4572 = vmatpush1.msra.mxu0 0.0
    %4573 = vmatprep.subr.mxu0 0.0
    %4574 = vmatpush1.msra.mxu0 0.0
    %4575 = vmatprep.subr.mxu0 0.0
    %4576 = vmatpush1.msra.mxu0 0.0
    %4577 = vmatprep.subr.mxu0 0.0
    %4578 = vmatpush1.msra.mxu0 0.0
    %4579 = vmatprep.subr.mxu0 0.0
    %4580 = vmatpush1.msra.mxu0 0.0
    %4581 = vmatprep.subr.mxu0 0.0
    %4582 = vmatpush1.msra.mxu0 0.0
    %4583 = vmatprep.subr.mxu0 0.0
    %4584 = vmatpush1.msra.mxu0 0.0
    %4585 = vmatprep.subr.mxu0 0.0
    %4586 = vmatpush1.msra.mxu0 0.0
    %4587 = vmatprep.subr.mxu0 0.0
    %4588 = vmatpush1.msra.mxu0 0.0
    %4589 = vmatprep.subr.mxu0 0.0
    %4590 = vmatpush1.msra.mxu0 0.0
    %4591 = vmatprep.subr.mxu0 0.0
    %4592 = vmatpush1.msra.mxu0 0.0
    %4593 = vmatprep.subr.mxu0 0.0
    %4594 = vmatpush1.msra.mxu0 0.0
    %4595 = vmatprep.subr.mxu0 0.0
    %4596 = vmatpush1.msra.mxu0 0.0
    %4597 = vmatprep.subr.mxu0 0.0
    %4598 = vmatpush1.msra.mxu0 0.0
    %4599 = vmatprep.subr.mxu0 0.0
    %4600 = vmatpush1.msra.mxu0 0.0
    %4601 = vmatprep.subr.mxu0 0.0
    %4602 = vmatpush1.msra.mxu0 0.0
    %4603 = vmatprep.subr.mxu0 0.0
    %4604 = vmatpush1.msra.mxu0 0.0
    %4605 = vmatprep.subr.mxu0 0.0
    %4606 = vmatpush1.msra.mxu0 0.0
    %4607 = vmatprep.subr.mxu0 0.0
    %4608 = vmatpush1.msra.mxu0 0.0
    %4609 = vmatprep.subr.mxu0 0.0
    %4610 = vmatpush1.msra.mxu0 0.0
    %4611 = vmatprep.mubr.f32.mxu0 0.0
    %4612 = vmatmul.mubr.f32.gmra.mrb[0].mxu0 %v4332
    %v4613 = vpop.f32.mrb[0].mxu0
    %v4614 = vadd.f32 %v4257, %v4613
    %v4615 = vpop.f32.mrb[0].mxu0
    %v4616 = vadd.f32 %v4259, %v4615
    %4617 = vdwg.mxu0
    %4618 = vmatprep.subr.mxu0 0.0
    %4619 = vmatpush1.msra.mxu0 %v3923
    %4620 = vmatprep.subr.mxu0 0.0
    %4621 = vmatpush1.msra.mxu0 0.0
    %4622 = vmatprep.subr.mxu0 0.0
    %4623 = vmatpush1.msra.mxu0 0.0
    %4624 = vmatprep.subr.mxu0 0.0
    %4625 = vmatpush1.msra.mxu0 0.0
    %4626 = vmatprep.subr.mxu0 0.0
    %4627 = vmatpush1.msra.mxu0 0.0
    %4628 = vmatprep.subr.mxu0 0.0
    %4629 = vmatpush1.msra.mxu0 0.0
    %4630 = vmatprep.subr.mxu0 0.0
    %4631 = vmatpush1.msra.mxu0 0.0
    %4632 = vmatprep.subr.mxu0 0.0
    %4633 = vmatpush1.msra.mxu0 0.0
    %4634 = vmatprep.subr.mxu0 0.0
    %4635 = vmatpush1.msra.mxu0 0.0
    %4636 = vmatprep.subr.mxu0 0.0
    %4637 = vmatpush1.msra.mxu0 0.0
    %4638 = vmatprep.subr.mxu0 0.0
    %4639 = vmatpush1.msra.mxu0 0.0
    %4640 = vmatprep.subr.mxu0 0.0
    %4641 = vmatpush1.msra.mxu0 0.0
    %4642 = vmatprep.subr.mxu0 0.0
    %4643 = vmatpush1.msra.mxu0 0.0
    %4644 = vmatprep.subr.mxu0 0.0
    %4645 = vmatpush1.msra.mxu0 0.0
    %4646 = vmatprep.subr.mxu0 0.0
    %4647 = vmatpush1.msra.mxu0 0.0
    %4648 = vmatprep.subr.mxu0 0.0
    %4649 = vmatpush1.msra.mxu0 0.0
    %4650 = vmatprep.subr.mxu0 0.0
    %4651 = vmatpush1.msra.mxu0 0.0
    %4652 = vmatprep.subr.mxu0 0.0
    %4653 = vmatpush1.msra.mxu0 0.0
    %4654 = vmatprep.subr.mxu0 0.0
    %4655 = vmatpush1.msra.mxu0 0.0
    %4656 = vmatprep.subr.mxu0 0.0
    %4657 = vmatpush1.msra.mxu0 0.0
    %4658 = vmatprep.subr.mxu0 0.0
    %4659 = vmatpush1.msra.mxu0 0.0
    %4660 = vmatprep.subr.mxu0 0.0
    %4661 = vmatpush1.msra.mxu0 0.0
    %4662 = vmatprep.subr.mxu0 0.0
    %4663 = vmatpush1.msra.mxu0 0.0
    %4664 = vmatprep.subr.mxu0 0.0
    %4665 = vmatpush1.msra.mxu0 0.0
    %4666 = vmatprep.subr.mxu0 0.0
    %4667 = vmatpush1.msra.mxu0 0.0
    %4668 = vmatprep.subr.mxu0 0.0
    %4669 = vmatpush1.msra.mxu0 0.0
    %4670 = vmatprep.subr.mxu0 0.0
    %4671 = vmatpush1.msra.mxu0 0.0
    %4672 = vmatprep.subr.mxu0 0.0
    %4673 = vmatpush1.msra.mxu0 0.0
    %4674 = vmatprep.subr.mxu0 0.0
    %4675 = vmatpush1.msra.mxu0 0.0
    %4676 = vmatprep.subr.mxu0 0.0
    %4677 = vmatpush1.msra.mxu0 0.0
    %4678 = vmatprep.subr.mxu0 0.0
    %4679 = vmatpush1.msra.mxu0 0.0
    %4680 = vmatprep.subr.mxu0 0.0
    %4681 = vmatpush1.msra.mxu0 0.0
    %4682 = vmatprep.mubr.f32.mxu0 0.0
    %4683 = vmatmul.mubr.f32.gmra.mrb[0].mxu0 %v4332
    %v4684 = vpop.f32.mrb[0].mxu0
    %v4685 = vadd.f32 %v4328, %v4684
    %v4686 = vpop.f32.mrb[0].mxu0
    %4687 = vdwg.mxu0
    %v4688 = vld [vmem:[%s1 + $0x58] sm:$0xff]
    %4689 = vrot.lane.b32.xlu0 %v3915, 126
    %v4690 = vpop.permute.xlu0 %4689
    %4691 = vrot.lane.b32.xlu0 %v3916, 126
    %v4692 = vpop.permute.xlu0 %4691
    %4693 = vrot.lane.b32.xlu0 %v3917, 126
    %v4694 = vpop.permute.xlu0 %4693
    %4695 = vrot.lane.b32.xlu0 %v3918, 126
    %v4696 = vpop.permute.xlu0 %4695
    %4697 = vrot.lane.b32.xlu0 %v3919, 126
    %v4698 = vpop.permute.xlu0 %4697
    %4699 = vrot.lane.b32.xlu0 %v3920, 126
    %v4700 = vpop.permute.xlu0 %4699
    %4701 = vrot.lane.b32.xlu0 %v3921, 126
    %v4702 = vpop.permute.xlu0 %4701
    %4703 = vrot.lane.b32.xlu0 %v3922, 126
    %v4704 = vpop.permute.xlu0 %4703
    %4705 = vrot.lane.b32.xlu0 %v3923, 126
    %v4706 = vpop.permute.xlu0 %4705
    %4707 = vrot.lane.b32.xlu0 %v3925, 126
    %v4708 = vpop.permute.xlu0 %4707
    %v4709 = vsel %vm821, %v4690, %v4692
    %v4710 = vsel %vm821, %v4692, %v4694
    %v4711 = vsel %vm821, %v4694, %v4696
    %v4712 = vsel %vm821, %v4696, %v4698
    %v4713 = vsel %vm821, %v4698, %v4700
    %v4714 = vsel %vm821, %v4700, %v4702
    %v4715 = vsel %vm821, %v4702, %v4704
    %v4716 = vsel %vm821, %v4704, %v4706
    %v4717 = vsel %vm821, %v4706, %v4708
    %v4728 = vsel %vm83, %v4688, 0
    %4730 = vmatprep.subr.mxu0 %v4710
    %4731 = vmatpush1.msra.mxu0 %v4709
    %4732 = vmatprep.subr.mxu0 0.0
    %4733 = vmatpush1.msra.mxu0 0.0
    %4734 = vmatprep.subr.mxu0 0.0
    %4735 = vmatpush1.msra.mxu0 0.0
    %4736 = vmatprep.subr.mxu0 0.0
    %4737 = vmatpush1.msra.mxu0 0.0
    %4738 = vmatprep.subr.mxu0 0.0
    %4739 = vmatpush1.msra.mxu0 0.0
    %4740 = vmatprep.subr.mxu0 0.0
    %4741 = vmatpush1.msra.mxu0 0.0
    %4742 = vmatprep.subr.mxu0 0.0
    %4743 = vmatpush1.msra.mxu0 0.0
    %4744 = vmatprep.subr.mxu0 0.0
    %4745 = vmatpush1.msra.mxu0 0.0
    %4746 = vmatprep.subr.mxu0 0.0
    %4747 = vmatpush1.msra.mxu0 0.0
    %4748 = vmatprep.subr.mxu0 0.0
    %4749 = vmatpush1.msra.mxu0 0.0
    %4750 = vmatprep.subr.mxu0 0.0
    %4751 = vmatpush1.msra.mxu0 0.0
    %4752 = vmatprep.subr.mxu0 0.0
    %4753 = vmatpush1.msra.mxu0 0.0
    %4754 = vmatprep.subr.mxu0 0.0
    %4755 = vmatpush1.msra.mxu0 0.0
    %4756 = vmatprep.subr.mxu0 0.0
    %4757 = vmatpush1.msra.mxu0 0.0
    %4758 = vmatprep.subr.mxu0 0.0
    %4759 = vmatpush1.msra.mxu0 0.0
    %4760 = vmatprep.subr.mxu0 0.0
    %4761 = vmatpush1.msra.mxu0 0.0
    %4762 = vmatprep.subr.mxu0 0.0
    %4763 = vmatpush1.msra.mxu0 0.0
    %4764 = vmatprep.subr.mxu0 0.0
    %4765 = vmatpush1.msra.mxu0 0.0
    %4766 = vmatprep.subr.mxu0 0.0
    %4767 = vmatpush1.msra.mxu0 0.0
    %4768 = vmatprep.subr.mxu0 0.0
    %4769 = vmatpush1.msra.mxu0 0.0
    %4770 = vmatprep.subr.mxu0 0.0
    %4771 = vmatpush1.msra.mxu0 0.0
    %4772 = vmatprep.subr.mxu0 0.0
    %4773 = vmatpush1.msra.mxu0 0.0
    %4774 = vmatprep.subr.mxu0 0.0
    %4775 = vmatpush1.msra.mxu0 0.0
    %4776 = vmatprep.subr.mxu0 0.0
    %4777 = vmatpush1.msra.mxu0 0.0
    %4778 = vmatprep.subr.mxu0 0.0
    %4779 = vmatpush1.msra.mxu0 0.0
    %4780 = vmatprep.subr.mxu0 0.0
    %4781 = vmatpush1.msra.mxu0 0.0
    %4782 = vmatprep.subr.mxu0 0.0
    %4783 = vmatpush1.msra.mxu0 0.0
    %4784 = vmatprep.subr.mxu0 0.0
    %4785 = vmatpush1.msra.mxu0 0.0
    %4786 = vmatprep.subr.mxu0 0.0
    %4787 = vmatpush1.msra.mxu0 0.0
    %4788 = vmatprep.subr.mxu0 0.0
    %4789 = vmatpush1.msra.mxu0 0.0
    %4790 = vmatprep.subr.mxu0 0.0
    %4791 = vmatpush1.msra.mxu0 0.0
    %4792 = vmatprep.subr.mxu0 0.0
    %4793 = vmatpush1.msra.mxu0 0.0
    %4794 = vmatprep.mubr.f32.mxu0 0.0
    %4795 = vmatmul.mubr.f32.gmra.mrb[0].mxu0 %v4728
    %v4796 = vpop.f32.mrb[0].mxu0
    %v4797 = vadd.f32 0.0, %v4796
    %v4798 = vpop.f32.mrb[0].mxu0
    %v4799 = vadd.f32 0.0, %v4798
    %4800 = vdwg.mxu0
    %4801 = vmatprep.subr.mxu0 %v4712
    %4802 = vmatpush1.msra.mxu0 %v4711
    %4803 = vmatprep.subr.mxu0 0.0
    %4804 = vmatpush1.msra.mxu0 0.0
    %4805 = vmatprep.subr.mxu0 0.0
    %4806 = vmatpush1.msra.mxu0 0.0
    %4807 = vmatprep.subr.mxu0 0.0
    %4808 = vmatpush1.msra.mxu0 0.0
    %4809 = vmatprep.subr.mxu0 0.0
    %4810 = vmatpush1.msra.mxu0 0.0
    %4811 = vmatprep.subr.mxu0 0.0
    %4812 = vmatpush1.msra.mxu0 0.0
    %4813 = vmatprep.subr.mxu0 0.0
    %4814 = vmatpush1.msra.mxu0 0.0
    %4815 = vmatprep.subr.mxu0 0.0
    %4816 = vmatpush1.msra.mxu0 0.0
    %4817 = vmatprep.subr.mxu0 0.0
    %4818 = vmatpush1.msra.mxu0 0.0
    %4819 = vmatprep.subr.mxu0 0.0
    %4820 = vmatpush1.msra.mxu0 0.0
    %4821 = vmatprep.subr.mxu0 0.0
    %4822 = vmatpush1.msra.mxu0 0.0
    %4823 = vmatprep.subr.mxu0 0.0
    %4824 = vmatpush1.msra.mxu0 0.0
    %4825 = vmatprep.subr.mxu0 0.0
    %4826 = vmatpush1.msra.mxu0 0.0
    %4827 = vmatprep.subr.mxu0 0.0
    %4828 = vmatpush1.msra.mxu0 0.0
    %4829 = vmatprep.subr.mxu0 0.0
    %4830 = vmatpush1.msra.mxu0 0.0
    %4831 = vmatprep.subr.mxu0 0.0
    %4832 = vmatpush1.msra.mxu0 0.0
    %4833 = vmatprep.subr.mxu0 0.0
    %4834 = vmatpush1.msra.mxu0 0.0
    %4835 = vmatprep.subr.mxu0 0.0
    %4836 = vmatpush1.msra.mxu0 0.0
    %4837 = vmatprep.subr.mxu0 0.0
    %4838 = vmatpush1.msra.mxu0 0.0
    %4839 = vmatprep.subr.mxu0 0.0
    %4840 = vmatpush1.msra.mxu0 0.0
    %4841 = vmatprep.subr.mxu0 0.0
    %4842 = vmatpush1.msra.mxu0 0.0
    %4843 = vmatprep.subr.mxu0 0.0
    %4844 = vmatpush1.msra.mxu0 0.0
    %4845 = vmatprep.subr.mxu0 0.0
    %4846 = vmatpush1.msra.mxu0 0.0
    %4847 = vmatprep.subr.mxu0 0.0
    %4848 = vmatpush1.msra.mxu0 0.0
    %4849 = vmatprep.subr.mxu0 0.0
    %4850 = vmatpush1.msra.mxu0 0.0
    %4851 = vmatprep.subr.mxu0 0.0
    %4852 = vmatpush1.msra.mxu0 0.0
    %4853 = vmatprep.subr.mxu0 0.0
    %4854 = vmatpush1.msra.mxu0 0.0
    %4855 = vmatprep.subr.mxu0 0.0
    %4856 = vmatpush1.msra.mxu0 0.0
    %4857 = vmatprep.subr.mxu0 0.0
    %4858 = vmatpush1.msra.mxu0 0.0
    %4859 = vmatprep.subr.mxu0 0.0
    %4860 = vmatpush1.msra.mxu0 0.0
    %4861 = vmatprep.subr.mxu0 0.0
    %4862 = vmatpush1.msra.mxu0 0.0
    %4863 = vmatprep.subr.mxu0 0.0
    %4864 = vmatpush1.msra.mxu0 0.0
    %4865 = vmatprep.mubr.f32.mxu0 0.0
    %4866 = vmatmul.mubr.f32.gmra.mrb[0].mxu0 %v4728
    %v4867 = vpop.f32.mrb[0].mxu0
    %v4868 = vadd.f32 0.0, %v4867
    %v4869 = vpop.f32.mrb[0].mxu0
    %v4870 = vadd.f32 0.0, %v4869
    %4871 = vdwg.mxu0
    %4872 = vmatprep.subr.mxu0 %v4714
    %4873 = vmatpush1.msra.mxu0 %v4713
    %4874 = vmatprep.subr.mxu0 0.0
    %4875 = vmatpush1.msra.mxu0 0.0
    %4876 = vmatprep.subr.mxu0 0.0
    %4877 = vmatpush1.msra.mxu0 0.0
    %4878 = vmatprep.subr.mxu0 0.0
    %4879 = vmatpush1.msra.mxu0 0.0
    %4880 = vmatprep.subr.mxu0 0.0
    %4881 = vmatpush1.msra.mxu0 0.0
    %4882 = vmatprep.subr.mxu0 0.0
    %4883 = vmatpush1.msra.mxu0 0.0
    %4884 = vmatprep.subr.mxu0 0.0
    %4885 = vmatpush1.msra.mxu0 0.0
    %4886 = vmatprep.subr.mxu0 0.0
    %4887 = vmatpush1.msra.mxu0 0.0
    %4888 = vmatprep.subr.mxu0 0.0
    %4889 = vmatpush1.msra.mxu0 0.0
    %4890 = vmatprep.subr.mxu0 0.0
    %4891 = vmatpush1.msra.mxu0 0.0
    %4892 = vmatprep.subr.mxu0 0.0
    %4893 = vmatpush1.msra.mxu0 0.0
    %4894 = vmatprep.subr.mxu0 0.0
    %4895 = vmatpush1.msra.mxu0 0.0
    %4896 = vmatprep.subr.mxu0 0.0
    %4897 = vmatpush1.msra.mxu0 0.0
    %4898 = vmatprep.subr.mxu0 0.0
    %4899 = vmatpush1.msra.mxu0 0.0
    %4900 = vmatprep.subr.mxu0 0.0
    %4901 = vmatpush1.msra.mxu0 0.0
    %4902 = vmatprep.subr.mxu0 0.0
    %4903 = vmatpush1.msra.mxu0 0.0
    %4904 = vmatprep.subr.mxu0 0.0
    %4905 = vmatpush1.msra.mxu0 0.0
    %4906 = vmatprep.subr.mxu0 0.0
    %4907 = vmatpush1.msra.mxu0 0.0
    %4908 = vmatprep.subr.mxu0 0.0
    %4909 = vmatpush1.msra.mxu0 0.0
    %4910 = vmatprep.subr.mxu0 0.0
    %4911 = vmatpush1.msra.mxu0 0.0
    %4912 = vmatprep.subr.mxu0 0.0
    %4913 = vmatpush1.msra.mxu0 0.0
    %4914 = vmatprep.subr.mxu0 0.0
    %4915 = vmatpush1.msra.mxu0 0.0
    %4916 = vmatprep.subr.mxu0 0.0
    %4917 = vmatpush1.msra.mxu0 0.0
    %4918 = vmatprep.subr.mxu0 0.0
    %4919 = vmatpush1.msra.mxu0 0.0
    %4920 = vmatprep.subr.mxu0 0.0
    %4921 = vmatpush1.msra.mxu0 0.0
    %4922 = vmatprep.subr.mxu0 0.0
    %4923 = vmatpush1.msra.mxu0 0.0
    %4924 = vmatprep.subr.mxu0 0.0
    %4925 = vmatpush1.msra.mxu0 0.0
    %4926 = vmatprep.subr.mxu0 0.0
    %4927 = vmatpush1.msra.mxu0 0.0
    %4928 = vmatprep.subr.mxu0 0.0
    %4929 = vmatpush1.msra.mxu0 0.0
    %4930 = vmatprep.subr.mxu0 0.0
    %4931 = vmatpush1.msra.mxu0 0.0
    %4932 = vmatprep.subr.mxu0 0.0
    %4933 = vmatpush1.msra.mxu0 0.0
    %4934 = vmatprep.subr.mxu0 0.0
    %4935 = vmatpush1.msra.mxu0 0.0
    %4936 = vmatprep.mubr.f32.mxu0 0.0
    %4937 = vmatmul.mubr.f32.gmra.mrb[0].mxu0 %v4728
    %v4938 = vpop.f32.mrb[0].mxu0
    %v4939 = vadd.f32 0.0, %v4938
    %v4940 = vpop.f32.mrb[0].mxu0
    %v4941 = vadd.f32 0.0, %v4940
    %4942 = vdwg.mxu0
    %4943 = vmatprep.subr.mxu0 %v4716
    %4944 = vmatpush1.msra.mxu0 %v4715
    %4945 = vmatprep.subr.mxu0 0.0
    %4946 = vmatpush1.msra.mxu0 0.0
    %4947 = vmatprep.subr.mxu0 0.0
    %4948 = vmatpush1.msra.mxu0 0.0
    %4949 = vmatprep.subr.mxu0 0.0
    %4950 = vmatpush1.msra.mxu0 0.0
    %4951 = vmatprep.subr.mxu0 0.0
    %4952 = vmatpush1.msra.mxu0 0.0
    %4953 = vmatprep.subr.mxu0 0.0
    %4954 = vmatpush1.msra.mxu0 0.0
    %4955 = vmatprep.subr.mxu0 0.0
    %4956 = vmatpush1.msra.mxu0 0.0
    %4957 = vmatprep.subr.mxu0 0.0
    %4958 = vmatpush1.msra.mxu0 0.0
    %4959 = vmatprep.subr.mxu0 0.0
    %4960 = vmatpush1.msra.mxu0 0.0
    %4961 = vmatprep.subr.mxu0 0.0
    %4962 = vmatpush1.msra.mxu0 0.0
    %4963 = vmatprep.subr.mxu0 0.0
    %4964 = vmatpush1.msra.mxu0 0.0
    %4965 = vmatprep.subr.mxu0 0.0
    %4966 = vmatpush1.msra.mxu0 0.0
    %4967 = vmatprep.subr.mxu0 0.0
    %4968 = vmatpush1.msra.mxu0 0.0
    %4969 = vmatprep.subr.mxu0 0.0
    %4970 = vmatpush1.msra.mxu0 0.0
    %4971 = vmatprep.subr.mxu0 0.0
    %4972 = vmatpush1.msra.mxu0 0.0
    %4973 = vmatprep.subr.mxu0 0.0
    %4974 = vmatpush1.msra.mxu0 0.0
    %4975 = vmatprep.subr.mxu0 0.0
    %4976 = vmatpush1.msra.mxu0 0.0
    %4977 = vmatprep.subr.mxu0 0.0
    %4978 = vmatpush1.msra.mxu0 0.0
    %4979 = vmatprep.subr.mxu0 0.0
    %4980 = vmatpush1.msra.mxu0 0.0
    %4981 = vmatprep.subr.mxu0 0.0
    %4982 = vmatpush1.msra.mxu0 0.0
    %4983 = vmatprep.subr.mxu0 0.0
    %4984 = vmatpush1.msra.mxu0 0.0
    %4985 = vmatprep.subr.mxu0 0.0
    %4986 = vmatpush1.msra.mxu0 0.0
    %4987 = vmatprep.subr.mxu0 0.0
    %4988 = vmatpush1.msra.mxu0 0.0
    %4989 = vmatprep.subr.mxu0 0.0
    %4990 = vmatpush1.msra.mxu0 0.0
    %4991 = vmatprep.subr.mxu0 0.0
    %4992 = vmatpush1.msra.mxu0 0.0
    %4993 = vmatprep.subr.mxu0 0.0
    %4994 = vmatpush1.msra.mxu0 0.0
    %4995 = vmatprep.subr.mxu0 0.0
    %4996 = vmatpush1.msra.mxu0 0.0
    %4997 = vmatprep.subr.mxu0 0.0
    %4998 = vmatpush1.msra.mxu0 0.0
    %4999 = vmatprep.subr.mxu0 0.0
    %5000 = vmatpush1.msra.mxu0 0.0
    %5001 = vmatprep.subr.mxu0 0.0
    %5002 = vmatpush1.msra.mxu0 0.0
    %5003 = vmatprep.subr.mxu0 0.0
    %5004 = vmatpush1.msra.mxu0 0.0
    %5005 = vmatprep.subr.mxu0 0.0
    %5006 = vmatpush1.msra.mxu0 0.0
    %5007 = vmatprep.mubr.f32.mxu0 0.0
    %5008 = vmatmul.mubr.f32.gmra.mrb[0].mxu0 %v4728
    %v5009 = vpop.f32.mrb[0].mxu0
    %v5010 = vadd.f32 0.0, %v5009
    %v5011 = vpop.f32.mrb[0].mxu0
    %v5012 = vadd.f32 0.0, %v5011
    %5013 = vdwg.mxu0
    %5014 = vmatprep.subr.mxu0 0.0
    %5015 = vmatpush1.msra.mxu0 %v4717
    %5016 = vmatprep.subr.mxu0 0.0
    %5017 = vmatpush1.msra.mxu0 0.0
    %5018 = vmatprep.subr.mxu0 0.0
    %5019 = vmatpush1.msra.mxu0 0.0
    %5020 = vmatprep.subr.mxu0 0.0
    %5021 = vmatpush1.msra.mxu0 0.0
    %5022 = vmatprep.subr.mxu0 0.0
    %5023 = vmatpush1.msra.mxu0 0.0
    %5024 = vmatprep.subr.mxu0 0.0
    %5025 = vmatpush1.msra.mxu0 0.0
    %5026 = vmatprep.subr.mxu0 0.0
    %5027 = vmatpush1.msra.mxu0 0.0
    %5028 = vmatprep.subr.mxu0 0.0
    %5029 = vmatpush1.msra.mxu0 0.0
    %5030 = vmatprep.subr.mxu0 0.0
    %5031 = vmatpush1.msra.mxu0 0.0
    %5032 = vmatprep.subr.mxu0 0.0
    %5033 = vmatpush1.msra.mxu0 0.0
    %5034 = vmatprep.subr.mxu0 0.0
    %5035 = vmatpush1.msra.mxu0 0.0
    %5036 = vmatprep.subr.mxu0 0.0
    %5037 = vmatpush1.msra.mxu0 0.0
    %5038 = vmatprep.subr.mxu0 0.0
    %5039 = vmatpush1.msra.mxu0 0.0
    %5040 = vmatprep.subr.mxu0 0.0
    %5041 = vmatpush1.msra.mxu0 0.0
    %5042 = vmatprep.subr.mxu0 0.0
    %5043 = vmatpush1.msra.mxu0 0.0
    %5044 = vmatprep.subr.mxu0 0.0
    %5045 = vmatpush1.msra.mxu0 0.0
    %5046 = vmatprep.subr.mxu0 0.0
    %5047 = vmatpush1.msra.mxu0 0.0
    %5048 = vmatprep.subr.mxu0 0.0
    %5049 = vmatpush1.msra.mxu0 0.0
    %5050 = vmatprep.subr.mxu0 0.0
    %5051 = vmatpush1.msra.mxu0 0.0
    %5052 = vmatprep.subr.mxu0 0.0
    %5053 = vmatpush1.msra.mxu0 0.0
    %5054 = vmatprep.subr.mxu0 0.0
    %5055 = vmatpush1.msra.mxu0 0.0
    %5056 = vmatprep.subr.mxu0 0.0
    %5057 = vmatpush1.msra.mxu0 0.0
    %5058 = vmatprep.subr.mxu0 0.0
    %5059 = vmatpush1.msra.mxu0 0.0
    %5060 = vmatprep.subr.mxu0 0.0
    %5061 = vmatpush1.msra.mxu0 0.0
    %5062 = vmatprep.subr.mxu0 0.0
    %5063 = vmatpush1.msra.mxu0 0.0
    %5064 = vmatprep.subr.mxu0 0.0
    %5065 = vmatpush1.msra.mxu0 0.0
    %5066 = vmatprep.subr.mxu0 0.0
    %5067 = vmatpush1.msra.mxu0 0.0
    %5068 = vmatprep.subr.mxu0 0.0
    %5069 = vmatpush1.msra.mxu0 0.0
    %5070 = vmatprep.subr.mxu0 0.0
    %5071 = vmatpush1.msra.mxu0 0.0
    %5072 = vmatprep.subr.mxu0 0.0
    %5073 = vmatpush1.msra.mxu0 0.0
    %5074 = vmatprep.subr.mxu0 0.0
    %5075 = vmatpush1.msra.mxu0 0.0
    %5076 = vmatprep.subr.mxu0 0.0
    %5077 = vmatpush1.msra.mxu0 0.0
    %5078 = vmatprep.mubr.f32.mxu0 0.0
    %5079 = vmatmul.mubr.f32.gmra.mrb[0].mxu0 %v4728
    %v5080 = vpop.f32.mrb[0].mxu0
    %v5081 = vadd.f32 0.0, %v5080
    %v5082 = vpop.f32.mrb[0].mxu0
    %5083 = vdwg.mxu0
    %v5084 = vadd.f32 %v4401, %v4797
    %v5085 = vadd.f32 %v4403, %v4799
    %v5086 = vadd.f32 %v4472, %v4868
    %v5087 = vadd.f32 %v4474, %v4870
    %v5088 = vadd.f32 %v4543, %v4939
    %v5089 = vadd.f32 %v4545, %v4941
    %v5090 = vadd.f32 %v4614, %v5010
    %v5091 = vadd.f32 %v4616, %v5012
    %v5092 = vadd.f32 %v4685, %v5081
    %v5093 = vld [vmem:[%s1 + $0x60] sm:$0xff]
    %5094 = vrot.lane.b32.xlu0 %v3915, 96
    %v5095 = vpop.permute.xlu0 %5094
    %5096 = vrot.lane.b32.xlu0 %v3916, 96
    %v5097 = vpop.permute.xlu0 %5096
    %5098 = vrot.lane.b32.xlu0 %v3917, 96
    %v5099 = vpop.permute.xlu0 %5098
    %5100 = vrot.lane.b32.xlu0 %v3918, 96
    %v5101 = vpop.permute.xlu0 %5100
    %5102 = vrot.lane.b32.xlu0 %v3919, 96
    %v5103 = vpop.permute.xlu0 %5102
    %5104 = vrot.lane.b32.xlu0 %v3920, 96
    %v5105 = vpop.permute.xlu0 %5104
    %5106 = vrot.lane.b32.xlu0 %v3921, 96
    %v5107 = vpop.permute.xlu0 %5106
    %5108 = vrot.lane.b32.xlu0 %v3922, 96
    %v5109 = vpop.permute.xlu0 %5108
    %5110 = vrot.lane.b32.xlu0 %v3923, 96
    %v5111 = vpop.permute.xlu0 %5110
    %5112 = vrot.lane.b32.xlu0 %v3925, 96
    %v5113 = vpop.permute.xlu0 %5112
    %v5114 = vsel %vm1230, %v5095, %v5097
    %v5115 = vsel %vm1230, %v5097, %v5099
    %v5116 = vsel %vm1230, %v5099, %v5101
    %v5117 = vsel %vm1230, %v5101, %v5103
    %v5118 = vsel %vm1230, %v5103, %v5105
    %v5119 = vsel %vm1230, %v5105, %v5107
    %v5120 = vsel %vm1230, %v5107, %v5109
    %v5121 = vsel %vm1230, %v5109, %v5111
    %v5122 = vsel %vm1230, %v5111, %v5113
    %v5133 = vsel %vm83, %v5093, 0
    %5135 = vmatprep.subr.mxu0 %v5115
    %5136 = vmatpush1.msra.mxu0 %v5114
    %5137 = vmatprep.subr.mxu0 0.0
    %5138 = vmatpush1.msra.mxu0 0.0
    %5139 = vmatprep.subr.mxu0 0.0
    %5140 = vmatpush1.msra.mxu0 0.0
    %5141 = vmatprep.subr.mxu0 0.0
    %5142 = vmatpush1.msra.mxu0 0.0
    %5143 = vmatprep.subr.mxu0 0.0
    %5144 = vmatpush1.msra.mxu0 0.0
    %5145 = vmatprep.subr.mxu0 0.0
    %5146 = vmatpush1.msra.mxu0 0.0
    %5147 = vmatprep.subr.mxu0 0.0
    %5148 = vmatpush1.msra.mxu0 0.0
    %5149 = vmatprep.subr.mxu0 0.0
    %5150 = vmatpush1.msra.mxu0 0.0
    %5151 = vmatprep.subr.mxu0 0.0
    %5152 = vmatpush1.msra.mxu0 0.0
    %5153 = vmatprep.subr.mxu0 0.0
    %5154 = vmatpush1.msra.mxu0 0.0
    %5155 = vmatprep.subr.mxu0 0.0
    %5156 = vmatpush1.msra.mxu0 0.0
    %5157 = vmatprep.subr.mxu0 0.0
    %5158 = vmatpush1.msra.mxu0 0.0
    %5159 = vmatprep.subr.mxu0 0.0
    %5160 = vmatpush1.msra.mxu0 0.0
    %5161 = vmatprep.subr.mxu0 0.0
    %5162 = vmatpush1.msra.mxu0 0.0
    %5163 = vmatprep.subr.mxu0 0.0
    %5164 = vmatpush1.msra.mxu0 0.0
    %5165 = vmatprep.subr.mxu0 0.0
    %5166 = vmatpush1.msra.mxu0 0.0
    %5167 = vmatprep.subr.mxu0 0.0
    %5168 = vmatpush1.msra.mxu0 0.0
    %5169 = vmatprep.subr.mxu0 0.0
    %5170 = vmatpush1.msra.mxu0 0.0
    %5171 = vmatprep.subr.mxu0 0.0
    %5172 = vmatpush1.msra.mxu0 0.0
    %5173 = vmatprep.subr.mxu0 0.0
    %5174 = vmatpush1.msra.mxu0 0.0
    %5175 = vmatprep.subr.mxu0 0.0
    %5176 = vmatpush1.msra.mxu0 0.0
    %5177 = vmatprep.subr.mxu0 0.0
    %5178 = vmatpush1.msra.mxu0 0.0
    %5179 = vmatprep.subr.mxu0 0.0
    %5180 = vmatpush1.msra.mxu0 0.0
    %5181 = vmatprep.subr.mxu0 0.0
    %5182 = vmatpush1.msra.mxu0 0.0
    %5183 = vmatprep.subr.mxu0 0.0
    %5184 = vmatpush1.msra.mxu0 0.0
    %5185 = vmatprep.subr.mxu0 0.0
    %5186 = vmatpush1.msra.mxu0 0.0
    %5187 = vmatprep.subr.mxu0 0.0
    %5188 = vmatpush1.msra.mxu0 0.0
    %5189 = vmatprep.subr.mxu0 0.0
    %5190 = vmatpush1.msra.mxu0 0.0
    %5191 = vmatprep.subr.mxu0 0.0
    %5192 = vmatpush1.msra.mxu0 0.0
    %5193 = vmatprep.subr.mxu0 0.0
    %5194 = vmatpush1.msra.mxu0 0.0
    %5195 = vmatprep.subr.mxu0 0.0
    %5196 = vmatpush1.msra.mxu0 0.0
    %5197 = vmatprep.subr.mxu0 0.0
    %5198 = vmatpush1.msra.mxu0 0.0
    %5199 = vmatprep.mubr.f32.mxu0 0.0
    %5200 = vmatmul.mubr.f32.gmra.mrb[0].mxu0 %v5133
    %v5201 = vpop.f32.mrb[0].mxu0
    %v5202 = vadd.f32 0.0, %v5201
    %v5203 = vpop.f32.mrb[0].mxu0
    %v5204 = vadd.f32 0.0, %v5203
    %5205 = vdwg.mxu0
    %5206 = vmatprep.subr.mxu0 %v5117
    %5207 = vmatpush1.msra.mxu0 %v5116
    %5208 = vmatprep.subr.mxu0 0.0
    %5209 = vmatpush1.msra.mxu0 0.0
    %5210 = vmatprep.subr.mxu0 0.0
    %5211 = vmatpush1.msra.mxu0 0.0
    %5212 = vmatprep.subr.mxu0 0.0
    %5213 = vmatpush1.msra.mxu0 0.0
    %5214 = vmatprep.subr.mxu0 0.0
    %5215 = vmatpush1.msra.mxu0 0.0
    %5216 = vmatprep.subr.mxu0 0.0
    %5217 = vmatpush1.msra.mxu0 0.0
    %5218 = vmatprep.subr.mxu0 0.0
    %5219 = vmatpush1.msra.mxu0 0.0
    %5220 = vmatprep.subr.mxu0 0.0
    %5221 = vmatpush1.msra.mxu0 0.0
    %5222 = vmatprep.subr.mxu0 0.0
    %5223 = vmatpush1.msra.mxu0 0.0
    %5224 = vmatprep.subr.mxu0 0.0
    %5225 = vmatpush1.msra.mxu0 0.0
    %5226 = vmatprep.subr.mxu0 0.0
    %5227 = vmatpush1.msra.mxu0 0.0
    %5228 = vmatprep.subr.mxu0 0.0
    %5229 = vmatpush1.msra.mxu0 0.0
    %5230 = vmatprep.subr.mxu0 0.0
    %5231 = vmatpush1.msra.mxu0 0.0
    %5232 = vmatprep.subr.mxu0 0.0
    %5233 = vmatpush1.msra.mxu0 0.0
    %5234 = vmatprep.subr.mxu0 0.0
    %5235 = vmatpush1.msra.mxu0 0.0
    %5236 = vmatprep.subr.mxu0 0.0
    %5237 = vmatpush1.msra.mxu0 0.0
    %5238 = vmatprep.subr.mxu0 0.0
    %5239 = vmatpush1.msra.mxu0 0.0
    %5240 = vmatprep.subr.mxu0 0.0
    %5241 = vmatpush1.msra.mxu0 0.0
    %5242 = vmatprep.subr.mxu0 0.0
    %5243 = vmatpush1.msra.mxu0 0.0
    %5244 = vmatprep.subr.mxu0 0.0
    %5245 = vmatpush1.msra.mxu0 0.0
    %5246 = vmatprep.subr.mxu0 0.0
    %5247 = vmatpush1.msra.mxu0 0.0
    %5248 = vmatprep.subr.mxu0 0.0
    %5249 = vmatpush1.msra.mxu0 0.0
    %5250 = vmatprep.subr.mxu0 0.0
    %5251 = vmatpush1.msra.mxu0 0.0
    %5252 = vmatprep.subr.mxu0 0.0
    %5253 = vmatpush1.msra.mxu0 0.0
    %5254 = vmatprep.subr.mxu0 0.0
    %5255 = vmatpush1.msra.mxu0 0.0
    %5256 = vmatprep.subr.mxu0 0.0
    %5257 = vmatpush1.msra.mxu0 0.0
    %5258 = vmatprep.subr.mxu0 0.0
    %5259 = vmatpush1.msra.mxu0 0.0
    %5260 = vmatprep.subr.mxu0 0.0
    %5261 = vmatpush1.msra.mxu0 0.0
    %5262 = vmatprep.subr.mxu0 0.0
    %5263 = vmatpush1.msra.mxu0 0.0
    %5264 = vmatprep.subr.mxu0 0.0
    %5265 = vmatpush1.msra.mxu0 0.0
    %5266 = vmatprep.subr.mxu0 0.0
    %5267 = vmatpush1.msra.mxu0 0.0
    %5268 = vmatprep.subr.mxu0 0.0
    %5269 = vmatpush1.msra.mxu0 0.0
    %5270 = vmatprep.mubr.f32.mxu0 0.0
    %5271 = vmatmul.mubr.f32.gmra.mrb[0].mxu0 %v5133
    %v5272 = vpop.f32.mrb[0].mxu0
    %v5273 = vadd.f32 0.0, %v5272
    %v5274 = vpop.f32.mrb[0].mxu0
    %v5275 = vadd.f32 0.0, %v5274
    %5276 = vdwg.mxu0
    %5277 = vmatprep.subr.mxu0 %v5119
    %5278 = vmatpush1.msra.mxu0 %v5118
    %5279 = vmatprep.subr.mxu0 0.0
    %5280 = vmatpush1.msra.mxu0 0.0
    %5281 = vmatprep.subr.mxu0 0.0
    %5282 = vmatpush1.msra.mxu0 0.0
    %5283 = vmatprep.subr.mxu0 0.0
    %5284 = vmatpush1.msra.mxu0 0.0
    %5285 = vmatprep.subr.mxu0 0.0
    %5286 = vmatpush1.msra.mxu0 0.0
    %5287 = vmatprep.subr.mxu0 0.0
    %5288 = vmatpush1.msra.mxu0 0.0
    %5289 = vmatprep.subr.mxu0 0.0
    %5290 = vmatpush1.msra.mxu0 0.0
    %5291 = vmatprep.subr.mxu0 0.0
    %5292 = vmatpush1.msra.mxu0 0.0
    %5293 = vmatprep.subr.mxu0 0.0
    %5294 = vmatpush1.msra.mxu0 0.0
    %5295 = vmatprep.subr.mxu0 0.0
    %5296 = vmatpush1.msra.mxu0 0.0
    %5297 = vmatprep.subr.mxu0 0.0
    %5298 = vmatpush1.msra.mxu0 0.0
    %5299 = vmatprep.subr.mxu0 0.0
    %5300 = vmatpush1.msra.mxu0 0.0
    %5301 = vmatprep.subr.mxu0 0.0
    %5302 = vmatpush1.msra.mxu0 0.0
    %5303 = vmatprep.subr.mxu0 0.0
    %5304 = vmatpush1.msra.mxu0 0.0
    %5305 = vmatprep.subr.mxu0 0.0
    %5306 = vmatpush1.msra.mxu0 0.0
    %5307 = vmatprep.subr.mxu0 0.0
    %5308 = vmatpush1.msra.mxu0 0.0
    %5309 = vmatprep.subr.mxu0 0.0
    %5310 = vmatpush1.msra.mxu0 0.0
    %5311 = vmatprep.subr.mxu0 0.0
    %5312 = vmatpush1.msra.mxu0 0.0
    %5313 = vmatprep.subr.mxu0 0.0
    %5314 = vmatpush1.msra.mxu0 0.0
    %5315 = vmatprep.subr.mxu0 0.0
    %5316 = vmatpush1.msra.mxu0 0.0
    %5317 = vmatprep.subr.mxu0 0.0
    %5318 = vmatpush1.msra.mxu0 0.0
    %5319 = vmatprep.subr.mxu0 0.0
    %5320 = vmatpush1.msra.mxu0 0.0
    %5321 = vmatprep.subr.mxu0 0.0
    %5322 = vmatpush1.msra.mxu0 0.0
    %5323 = vmatprep.subr.mxu0 0.0
    %5324 = vmatpush1.msra.mxu0 0.0
    %5325 = vmatprep.subr.mxu0 0.0
    %5326 = vmatpush1.msra.mxu0 0.0
    %5327 = vmatprep.subr.mxu0 0.0
    %5328 = vmatpush1.msra.mxu0 0.0
    %5329 = vmatprep.subr.mxu0 0.0
    %5330 = vmatpush1.msra.mxu0 0.0
    %5331 = vmatprep.subr.mxu0 0.0
    %5332 = vmatpush1.msra.mxu0 0.0
    %5333 = vmatprep.subr.mxu0 0.0
    %5334 = vmatpush1.msra.mxu0 0.0
    %5335 = vmatprep.subr.mxu0 0.0
    %5336 = vmatpush1.msra.mxu0 0.0
    %5337 = vmatprep.subr.mxu0 0.0
    %5338 = vmatpush1.msra.mxu0 0.0
    %5339 = vmatprep.subr.mxu0 0.0
    %5340 = vmatpush1.msra.mxu0 0.0
    %5341 = vmatprep.mubr.f32.mxu0 0.0
    %5342 = vmatmul.mubr.f32.gmra.mrb[0].mxu0 %v5133
    %v5343 = vpop.f32.mrb[0].mxu0
    %v5344 = vadd.f32 0.0, %v5343
    %v5345 = vpop.f32.mrb[0].mxu0
    %v5346 = vadd.f32 0.0, %v5345
    %5347 = vdwg.mxu0
    %5348 = vmatprep.subr.mxu0 %v5121
    %5349 = vmatpush1.msra.mxu0 %v5120
    %5350 = vmatprep.subr.mxu0 0.0
    %5351 = vmatpush1.msra.mxu0 0.0
    %5352 = vmatprep.subr.mxu0 0.0
    %5353 = vmatpush1.msra.mxu0 0.0
    %5354 = vmatprep.subr.mxu0 0.0
    %5355 = vmatpush1.msra.mxu0 0.0
    %5356 = vmatprep.subr.mxu0 0.0
    %5357 = vmatpush1.msra.mxu0 0.0
    %5358 = vmatprep.subr.mxu0 0.0
    %5359 = vmatpush1.msra.mxu0 0.0
    %5360 = vmatprep.subr.mxu0 0.0
    %5361 = vmatpush1.msra.mxu0 0.0
    %5362 = vmatprep.subr.mxu0 0.0
    %5363 = vmatpush1.msra.mxu0 0.0
    %5364 = vmatprep.subr.mxu0 0.0
    %5365 = vmatpush1.msra.mxu0 0.0
    %5366 = vmatprep.subr.mxu0 0.0
    %5367 = vmatpush1.msra.mxu0 0.0
    %5368 = vmatprep.subr.mxu0 0.0
    %5369 = vmatpush1.msra.mxu0 0.0
    %5370 = vmatprep.subr.mxu0 0.0
    %5371 = vmatpush1.msra.mxu0 0.0
    %5372 = vmatprep.subr.mxu0 0.0
    %5373 = vmatpush1.msra.mxu0 0.0
    %5374 = vmatprep.subr.mxu0 0.0
    %5375 = vmatpush1.msra.mxu0 0.0
    %5376 = vmatprep.subr.mxu0 0.0
    %5377 = vmatpush1.msra.mxu0 0.0
    %5378 = vmatprep.subr.mxu0 0.0
    %5379 = vmatpush1.msra.mxu0 0.0
    %5380 = vmatprep.subr.mxu0 0.0
    %5381 = vmatpush1.msra.mxu0 0.0
    %5382 = vmatprep.subr.mxu0 0.0
    %5383 = vmatpush1.msra.mxu0 0.0
    %5384 = vmatprep.subr.mxu0 0.0
    %5385 = vmatpush1.msra.mxu0 0.0
    %5386 = vmatprep.subr.mxu0 0.0
    %5387 = vmatpush1.msra.mxu0 0.0
    %5388 = vmatprep.subr.mxu0 0.0
    %5389 = vmatpush1.msra.mxu0 0.0
    %5390 = vmatprep.subr.mxu0 0.0
    %5391 = vmatpush1.msra.mxu0 0.0
    %5392 = vmatprep.subr.mxu0 0.0
    %5393 = vmatpush1.msra.mxu0 0.0
    %5394 = vmatprep.subr.mxu0 0.0
    %5395 = vmatpush1.msra.mxu0 0.0
    %5396 = vmatprep.subr.mxu0 0.0
    %5397 = vmatpush1.msra.mxu0 0.0
    %5398 = vmatprep.subr.mxu0 0.0
    %5399 = vmatpush1.msra.mxu0 0.0
    %5400 = vmatprep.subr.mxu0 0.0
    %5401 = vmatpush1.msra.mxu0 0.0
    %5402 = vmatprep.subr.mxu0 0.0
    %5403 = vmatpush1.msra.mxu0 0.0
    %5404 = vmatprep.subr.mxu0 0.0
    %5405 = vmatpush1.msra.mxu0 0.0
    %5406 = vmatprep.subr.mxu0 0.0
    %5407 = vmatpush1.msra.mxu0 0.0
    %5408 = vmatprep.subr.mxu0 0.0
    %5409 = vmatpush1.msra.mxu0 0.0
    %5410 = vmatprep.subr.mxu0 0.0
    %5411 = vmatpush1.msra.mxu0 0.0
    %5412 = vmatprep.mubr.f32.mxu0 0.0
    %5413 = vmatmul.mubr.f32.gmra.mrb[0].mxu0 %v5133
    %v5414 = vpop.f32.mrb[0].mxu0
    %v5415 = vadd.f32 0.0, %v5414
    %v5416 = vpop.f32.mrb[0].mxu0
    %v5417 = vadd.f32 0.0, %v5416
    %5418 = vdwg.mxu0
    %5419 = vmatprep.subr.mxu0 0.0
    %5420 = vmatpush1.msra.mxu0 %v5122
    %5421 = vmatprep.subr.mxu0 0.0
    %5422 = vmatpush1.msra.mxu0 0.0
    %5423 = vmatprep.subr.mxu0 0.0
    %5424 = vmatpush1.msra.mxu0 0.0
    %5425 = vmatprep.subr.mxu0 0.0
    %5426 = vmatpush1.msra.mxu0 0.0
    %5427 = vmatprep.subr.mxu0 0.0
    %5428 = vmatpush1.msra.mxu0 0.0
    %5429 = vmatprep.subr.mxu0 0.0
    %5430 = vmatpush1.msra.mxu0 0.0
    %5431 = vmatprep.subr.mxu0 0.0
    %5432 = vmatpush1.msra.mxu0 0.0
    %5433 = vmatprep.subr.mxu0 0.0
    %5434 = vmatpush1.msra.mxu0 0.0
    %5435 = vmatprep.subr.mxu0 0.0
    %5436 = vmatpush1.msra.mxu0 0.0
    %5437 = vmatprep.subr.mxu0 0.0
    %5438 = vmatpush1.msra.mxu0 0.0
    %5439 = vmatprep.subr.mxu0 0.0
    %5440 = vmatpush1.msra.mxu0 0.0
    %5441 = vmatprep.subr.mxu0 0.0
    %5442 = vmatpush1.msra.mxu0 0.0
    %5443 = vmatprep.subr.mxu0 0.0
    %5444 = vmatpush1.msra.mxu0 0.0
    %5445 = vmatprep.subr.mxu0 0.0
    %5446 = vmatpush1.msra.mxu0 0.0
    %5447 = vmatprep.subr.mxu0 0.0
    %5448 = vmatpush1.msra.mxu0 0.0
    %5449 = vmatprep.subr.mxu0 0.0
    %5450 = vmatpush1.msra.mxu0 0.0
    %5451 = vmatprep.subr.mxu0 0.0
    %5452 = vmatpush1.msra.mxu0 0.0
    %5453 = vmatprep.subr.mxu0 0.0
    %5454 = vmatpush1.msra.mxu0 0.0
    %5455 = vmatprep.subr.mxu0 0.0
    %5456 = vmatpush1.msra.mxu0 0.0
    %5457 = vmatprep.subr.mxu0 0.0
    %5458 = vmatpush1.msra.mxu0 0.0
    %5459 = vmatprep.subr.mxu0 0.0
    %5460 = vmatpush1.msra.mxu0 0.0
    %5461 = vmatprep.subr.mxu0 0.0
    %5462 = vmatpush1.msra.mxu0 0.0
    %5463 = vmatprep.subr.mxu0 0.0
    %5464 = vmatpush1.msra.mxu0 0.0
    %5465 = vmatprep.subr.mxu0 0.0
    %5466 = vmatpush1.msra.mxu0 0.0
    %5467 = vmatprep.subr.mxu0 0.0
    %5468 = vmatpush1.msra.mxu0 0.0
    %5469 = vmatprep.subr.mxu0 0.0
    %5470 = vmatpush1.msra.mxu0 0.0
    %5471 = vmatprep.subr.mxu0 0.0
    %5472 = vmatpush1.msra.mxu0 0.0
    %5473 = vmatprep.subr.mxu0 0.0
    %5474 = vmatpush1.msra.mxu0 0.0
    %5475 = vmatprep.subr.mxu0 0.0
    %5476 = vmatpush1.msra.mxu0 0.0
    %5477 = vmatprep.subr.mxu0 0.0
    %5478 = vmatpush1.msra.mxu0 0.0
    %5479 = vmatprep.subr.mxu0 0.0
    %5480 = vmatpush1.msra.mxu0 0.0
    %5481 = vmatprep.subr.mxu0 0.0
    %5482 = vmatpush1.msra.mxu0 0.0
    %5483 = vmatprep.mubr.f32.mxu0 0.0
    %5484 = vmatmul.mubr.f32.gmra.mrb[0].mxu0 %v5133
    %v5485 = vpop.f32.mrb[0].mxu0
    %v5486 = vadd.f32 0.0, %v5485
    %v5487 = vpop.f32.mrb[0].mxu0
    %5488 = vdwg.mxu0
    %v5489 = vadd.f32 %v5084, %v5202
    %v5490 = vadd.f32 %v5085, %v5204
    %v5491 = vadd.f32 %v5086, %v5273
    %v5492 = vadd.f32 %v5087, %v5275
    %v5493 = vadd.f32 %v5088, %v5344
    %v5494 = vadd.f32 %v5089, %v5346
    %v5495 = vadd.f32 %v5090, %v5415
    %v5496 = vadd.f32 %v5091, %v5417
    %v5497 = vadd.f32 %v5092, %v5486
    %v5498 = vld [vmem:[%s1 + $0x68] sm:$0xff]
    %5499 = vrot.lane.b32.xlu0 %v3915, 95
    %v5500 = vpop.permute.xlu0 %5499
    %5501 = vrot.lane.b32.xlu0 %v3916, 95
    %v5502 = vpop.permute.xlu0 %5501
    %5503 = vrot.lane.b32.xlu0 %v3917, 95
    %v5504 = vpop.permute.xlu0 %5503
    %5505 = vrot.lane.b32.xlu0 %v3918, 95
    %v5506 = vpop.permute.xlu0 %5505
    %5507 = vrot.lane.b32.xlu0 %v3919, 95
    %v5508 = vpop.permute.xlu0 %5507
    %5509 = vrot.lane.b32.xlu0 %v3920, 95
    %v5510 = vpop.permute.xlu0 %5509
    %5511 = vrot.lane.b32.xlu0 %v3921, 95
    %v5512 = vpop.permute.xlu0 %5511
    %5513 = vrot.lane.b32.xlu0 %v3922, 95
    %v5514 = vpop.permute.xlu0 %5513
    %5515 = vrot.lane.b32.xlu0 %v3923, 95
    %v5516 = vpop.permute.xlu0 %5515
    %5517 = vrot.lane.b32.xlu0 %v3925, 95
    %v5518 = vpop.permute.xlu0 %5517
    %v5519 = vsel %vm1639, %v5500, %v5502
    %v5520 = vsel %vm1639, %v5502, %v5504
    %v5521 = vsel %vm1639, %v5504, %v5506
    %v5522 = vsel %vm1639, %v5506, %v5508
    %v5523 = vsel %vm1639, %v5508, %v5510
    %v5524 = vsel %vm1639, %v5510, %v5512
    %v5525 = vsel %vm1639, %v5512, %v5514
    %v5526 = vsel %vm1639, %v5514, %v5516
    %v5527 = vsel %vm1639, %v5516, %v5518
    %v5538 = vsel %vm83, %v5498, 0
    %5540 = vmatprep.subr.mxu0 %v5520
    %5541 = vmatpush1.msra.mxu0 %v5519
    %5542 = vmatprep.subr.mxu0 0.0
    %5543 = vmatpush1.msra.mxu0 0.0
    %5544 = vmatprep.subr.mxu0 0.0
    %5545 = vmatpush1.msra.mxu0 0.0
    %5546 = vmatprep.subr.mxu0 0.0
    %5547 = vmatpush1.msra.mxu0 0.0
    %5548 = vmatprep.subr.mxu0 0.0
    %5549 = vmatpush1.msra.mxu0 0.0
    %5550 = vmatprep.subr.mxu0 0.0
    %5551 = vmatpush1.msra.mxu0 0.0
    %5552 = vmatprep.subr.mxu0 0.0
    %5553 = vmatpush1.msra.mxu0 0.0
    %5554 = vmatprep.subr.mxu0 0.0
    %5555 = vmatpush1.msra.mxu0 0.0
    %5556 = vmatprep.subr.mxu0 0.0
    %5557 = vmatpush1.msra.mxu0 0.0
    %5558 = vmatprep.subr.mxu0 0.0
    %5559 = vmatpush1.msra.mxu0 0.0
    %5560 = vmatprep.subr.mxu0 0.0
    %5561 = vmatpush1.msra.mxu0 0.0
    %5562 = vmatprep.subr.mxu0 0.0
    %5563 = vmatpush1.msra.mxu0 0.0
    %5564 = vmatprep.subr.mxu0 0.0
    %5565 = vmatpush1.msra.mxu0 0.0
    %5566 = vmatprep.subr.mxu0 0.0
    %5567 = vmatpush1.msra.mxu0 0.0
    %5568 = vmatprep.subr.mxu0 0.0
    %5569 = vmatpush1.msra.mxu0 0.0
    %5570 = vmatprep.subr.mxu0 0.0
    %5571 = vmatpush1.msra.mxu0 0.0
    %5572 = vmatprep.subr.mxu0 0.0
    %5573 = vmatpush1.msra.mxu0 0.0
    %5574 = vmatprep.subr.mxu0 0.0
    %5575 = vmatpush1.msra.mxu0 0.0
    %5576 = vmatprep.subr.mxu0 0.0
    %5577 = vmatpush1.msra.mxu0 0.0
    %5578 = vmatprep.subr.mxu0 0.0
    %5579 = vmatpush1.msra.mxu0 0.0
    %5580 = vmatprep.subr.mxu0 0.0
    %5581 = vmatpush1.msra.mxu0 0.0
    %5582 = vmatprep.subr.mxu0 0.0
    %5583 = vmatpush1.msra.mxu0 0.0
    %5584 = vmatprep.subr.mxu0 0.0
    %5585 = vmatpush1.msra.mxu0 0.0
    %5586 = vmatprep.subr.mxu0 0.0
    %5587 = vmatpush1.msra.mxu0 0.0
    %5588 = vmatprep.subr.mxu0 0.0
    %5589 = vmatpush1.msra.mxu0 0.0
    %5590 = vmatprep.subr.mxu0 0.0
    %5591 = vmatpush1.msra.mxu0 0.0
    %5592 = vmatprep.subr.mxu0 0.0
    %5593 = vmatpush1.msra.mxu0 0.0
    %5594 = vmatprep.subr.mxu0 0.0
    %5595 = vmatpush1.msra.mxu0 0.0
    %5596 = vmatprep.subr.mxu0 0.0
    %5597 = vmatpush1.msra.mxu0 0.0
    %5598 = vmatprep.subr.mxu0 0.0
    %5599 = vmatpush1.msra.mxu0 0.0
    %5600 = vmatprep.subr.mxu0 0.0
    %5601 = vmatpush1.msra.mxu0 0.0
    %5602 = vmatprep.subr.mxu0 0.0
    %5603 = vmatpush1.msra.mxu0 0.0
    %5604 = vmatprep.mubr.f32.mxu0 0.0
    %5605 = vmatmul.mubr.f32.gmra.mrb[0].mxu0 %v5538
    %v5606 = vpop.f32.mrb[0].mxu0
    %v5607 = vadd.f32 0.0, %v5606
    %v5608 = vpop.f32.mrb[0].mxu0
    %v5609 = vadd.f32 0.0, %v5608
    %5610 = vdwg.mxu0
    %5611 = vmatprep.subr.mxu0 %v5522
    %5612 = vmatpush1.msra.mxu0 %v5521
    %5613 = vmatprep.subr.mxu0 0.0
    %5614 = vmatpush1.msra.mxu0 0.0
    %5615 = vmatprep.subr.mxu0 0.0
    %5616 = vmatpush1.msra.mxu0 0.0
    %5617 = vmatprep.subr.mxu0 0.0
    %5618 = vmatpush1.msra.mxu0 0.0
    %5619 = vmatprep.subr.mxu0 0.0
    %5620 = vmatpush1.msra.mxu0 0.0
    %5621 = vmatprep.subr.mxu0 0.0
    %5622 = vmatpush1.msra.mxu0 0.0
    %5623 = vmatprep.subr.mxu0 0.0
    %5624 = vmatpush1.msra.mxu0 0.0
    %5625 = vmatprep.subr.mxu0 0.0
    %5626 = vmatpush1.msra.mxu0 0.0
    %5627 = vmatprep.subr.mxu0 0.0
    %5628 = vmatpush1.msra.mxu0 0.0
    %5629 = vmatprep.subr.mxu0 0.0
    %5630 = vmatpush1.msra.mxu0 0.0
    %5631 = vmatprep.subr.mxu0 0.0
    %5632 = vmatpush1.msra.mxu0 0.0
    %5633 = vmatprep.subr.mxu0 0.0
    %5634 = vmatpush1.msra.mxu0 0.0
    %5635 = vmatprep.subr.mxu0 0.0
    %5636 = vmatpush1.msra.mxu0 0.0
    %5637 = vmatprep.subr.mxu0 0.0
    %5638 = vmatpush1.msra.mxu0 0.0
    %5639 = vmatprep.subr.mxu0 0.0
    %5640 = vmatpush1.msra.mxu0 0.0
    %5641 = vmatprep.subr.mxu0 0.0
    %5642 = vmatpush1.msra.mxu0 0.0
    %5643 = vmatprep.subr.mxu0 0.0
    %5644 = vmatpush1.msra.mxu0 0.0
    %5645 = vmatprep.subr.mxu0 0.0
    %5646 = vmatpush1.msra.mxu0 0.0
    %5647 = vmatprep.subr.mxu0 0.0
    %5648 = vmatpush1.msra.mxu0 0.0
    %5649 = vmatprep.subr.mxu0 0.0
    %5650 = vmatpush1.msra.mxu0 0.0
    %5651 = vmatprep.subr.mxu0 0.0
    %5652 = vmatpush1.msra.mxu0 0.0
    %5653 = vmatprep.subr.mxu0 0.0
    %5654 = vmatpush1.msra.mxu0 0.0
    %5655 = vmatprep.subr.mxu0 0.0
    %5656 = vmatpush1.msra.mxu0 0.0
    %5657 = vmatprep.subr.mxu0 0.0
    %5658 = vmatpush1.msra.mxu0 0.0
    %5659 = vmatprep.subr.mxu0 0.0
    %5660 = vmatpush1.msra.mxu0 0.0
    %5661 = vmatprep.subr.mxu0 0.0
    %5662 = vmatpush1.msra.mxu0 0.0
    %5663 = vmatprep.subr.mxu0 0.0
    %5664 = vmatpush1.msra.mxu0 0.0
    %5665 = vmatprep.subr.mxu0 0.0
    %5666 = vmatpush1.msra.mxu0 0.0
    %5667 = vmatprep.subr.mxu0 0.0
    %5668 = vmatpush1.msra.mxu0 0.0
    %5669 = vmatprep.subr.mxu0 0.0
    %5670 = vmatpush1.msra.mxu0 0.0
    %5671 = vmatprep.subr.mxu0 0.0
    %5672 = vmatpush1.msra.mxu0 0.0
    %5673 = vmatprep.subr.mxu0 0.0
    %5674 = vmatpush1.msra.mxu0 0.0
    %5675 = vmatprep.mubr.f32.mxu0 0.0
    %5676 = vmatmul.mubr.f32.gmra.mrb[0].mxu0 %v5538
    %v5677 = vpop.f32.mrb[0].mxu0
    %v5678 = vadd.f32 0.0, %v5677
    %v5679 = vpop.f32.mrb[0].mxu0
    %v5680 = vadd.f32 0.0, %v5679
    %5681 = vdwg.mxu0
    %5682 = vmatprep.subr.mxu0 %v5524
    %5683 = vmatpush1.msra.mxu0 %v5523
    %5684 = vmatprep.subr.mxu0 0.0
    %5685 = vmatpush1.msra.mxu0 0.0
    %5686 = vmatprep.subr.mxu0 0.0
    %5687 = vmatpush1.msra.mxu0 0.0
    %5688 = vmatprep.subr.mxu0 0.0
    %5689 = vmatpush1.msra.mxu0 0.0
    %5690 = vmatprep.subr.mxu0 0.0
    %5691 = vmatpush1.msra.mxu0 0.0
    %5692 = vmatprep.subr.mxu0 0.0
    %5693 = vmatpush1.msra.mxu0 0.0
    %5694 = vmatprep.subr.mxu0 0.0
    %5695 = vmatpush1.msra.mxu0 0.0
    %5696 = vmatprep.subr.mxu0 0.0
    %5697 = vmatpush1.msra.mxu0 0.0
    %5698 = vmatprep.subr.mxu0 0.0
    %5699 = vmatpush1.msra.mxu0 0.0
    %5700 = vmatprep.subr.mxu0 0.0
    %5701 = vmatpush1.msra.mxu0 0.0
    %5702 = vmatprep.subr.mxu0 0.0
    %5703 = vmatpush1.msra.mxu0 0.0
    %5704 = vmatprep.subr.mxu0 0.0
    %5705 = vmatpush1.msra.mxu0 0.0
    %5706 = vmatprep.subr.mxu0 0.0
    %5707 = vmatpush1.msra.mxu0 0.0
    %5708 = vmatprep.subr.mxu0 0.0
    %5709 = vmatpush1.msra.mxu0 0.0
    %5710 = vmatprep.subr.mxu0 0.0
    %5711 = vmatpush1.msra.mxu0 0.0
    %5712 = vmatprep.subr.mxu0 0.0
    %5713 = vmatpush1.msra.mxu0 0.0
    %5714 = vmatprep.subr.mxu0 0.0
    %5715 = vmatpush1.msra.mxu0 0.0
    %5716 = vmatprep.subr.mxu0 0.0
    %5717 = vmatpush1.msra.mxu0 0.0
    %5718 = vmatprep.subr.mxu0 0.0
    %5719 = vmatpush1.msra.mxu0 0.0
    %5720 = vmatprep.subr.mxu0 0.0
    %5721 = vmatpush1.msra.mxu0 0.0
    %5722 = vmatprep.subr.mxu0 0.0
    %5723 = vmatpush1.msra.mxu0 0.0
    %5724 = vmatprep.subr.mxu0 0.0
    %5725 = vmatpush1.msra.mxu0 0.0
    %5726 = vmatprep.subr.mxu0 0.0
    %5727 = vmatpush1.msra.mxu0 0.0
    %5728 = vmatprep.subr.mxu0 0.0
    %5729 = vmatpush1.msra.mxu0 0.0
    %5730 = vmatprep.subr.mxu0 0.0
    %5731 = vmatpush1.msra.mxu0 0.0
    %5732 = vmatprep.subr.mxu0 0.0
    %5733 = vmatpush1.msra.mxu0 0.0
    %5734 = vmatprep.subr.mxu0 0.0
    %5735 = vmatpush1.msra.mxu0 0.0
    %5736 = vmatprep.subr.mxu0 0.0
    %5737 = vmatpush1.msra.mxu0 0.0
    %5738 = vmatprep.subr.mxu0 0.0
    %5739 = vmatpush1.msra.mxu0 0.0
    %5740 = vmatprep.subr.mxu0 0.0
    %5741 = vmatpush1.msra.mxu0 0.0
    %5742 = vmatprep.subr.mxu0 0.0
    %5743 = vmatpush1.msra.mxu0 0.0
    %5744 = vmatprep.subr.mxu0 0.0
    %5745 = vmatpush1.msra.mxu0 0.0
    %5746 = vmatprep.mubr.f32.mxu0 0.0
    %5747 = vmatmul.mubr.f32.gmra.mrb[0].mxu0 %v5538
    %v5748 = vpop.f32.mrb[0].mxu0
    %v5749 = vadd.f32 0.0, %v5748
    %v5750 = vpop.f32.mrb[0].mxu0
    %v5751 = vadd.f32 0.0, %v5750
    %5752 = vdwg.mxu0
    %5753 = vmatprep.subr.mxu0 %v5526
    %5754 = vmatpush1.msra.mxu0 %v5525
    %5755 = vmatprep.subr.mxu0 0.0
    %5756 = vmatpush1.msra.mxu0 0.0
    %5757 = vmatprep.subr.mxu0 0.0
    %5758 = vmatpush1.msra.mxu0 0.0
    %5759 = vmatprep.subr.mxu0 0.0
    %5760 = vmatpush1.msra.mxu0 0.0
    %5761 = vmatprep.subr.mxu0 0.0
    %5762 = vmatpush1.msra.mxu0 0.0
    %5763 = vmatprep.subr.mxu0 0.0
    %5764 = vmatpush1.msra.mxu0 0.0
    %5765 = vmatprep.subr.mxu0 0.0
    %5766 = vmatpush1.msra.mxu0 0.0
    %5767 = vmatprep.subr.mxu0 0.0
    %5768 = vmatpush1.msra.mxu0 0.0
    %5769 = vmatprep.subr.mxu0 0.0
    %5770 = vmatpush1.msra.mxu0 0.0
    %5771 = vmatprep.subr.mxu0 0.0
    %5772 = vmatpush1.msra.mxu0 0.0
    %5773 = vmatprep.subr.mxu0 0.0
    %5774 = vmatpush1.msra.mxu0 0.0
    %5775 = vmatprep.subr.mxu0 0.0
    %5776 = vmatpush1.msra.mxu0 0.0
    %5777 = vmatprep.subr.mxu0 0.0
    %5778 = vmatpush1.msra.mxu0 0.0
    %5779 = vmatprep.subr.mxu0 0.0
    %5780 = vmatpush1.msra.mxu0 0.0
    %5781 = vmatprep.subr.mxu0 0.0
    %5782 = vmatpush1.msra.mxu0 0.0
    %5783 = vmatprep.subr.mxu0 0.0
    %5784 = vmatpush1.msra.mxu0 0.0
    %5785 = vmatprep.subr.mxu0 0.0
    %5786 = vmatpush1.msra.mxu0 0.0
    %5787 = vmatprep.subr.mxu0 0.0
    %5788 = vmatpush1.msra.mxu0 0.0
    %5789 = vmatprep.subr.mxu0 0.0
    %5790 = vmatpush1.msra.mxu0 0.0
    %5791 = vmatprep.subr.mxu0 0.0
    %5792 = vmatpush1.msra.mxu0 0.0
    %5793 = vmatprep.subr.mxu0 0.0
    %5794 = vmatpush1.msra.mxu0 0.0
    %5795 = vmatprep.subr.mxu0 0.0
    %5796 = vmatpush1.msra.mxu0 0.0
    %5797 = vmatprep.subr.mxu0 0.0
    %5798 = vmatpush1.msra.mxu0 0.0
    %5799 = vmatprep.subr.mxu0 0.0
    %5800 = vmatpush1.msra.mxu0 0.0
    %5801 = vmatprep.subr.mxu0 0.0
    %5802 = vmatpush1.msra.mxu0 0.0
    %5803 = vmatprep.subr.mxu0 0.0
    %5804 = vmatpush1.msra.mxu0 0.0
    %5805 = vmatprep.subr.mxu0 0.0
    %5806 = vmatpush1.msra.mxu0 0.0
    %5807 = vmatprep.subr.mxu0 0.0
    %5808 = vmatpush1.msra.mxu0 0.0
    %5809 = vmatprep.subr.mxu0 0.0
    %5810 = vmatpush1.msra.mxu0 0.0
    %5811 = vmatprep.subr.mxu0 0.0
    %5812 = vmatpush1.msra.mxu0 0.0
    %5813 = vmatprep.subr.mxu0 0.0
    %5814 = vmatpush1.msra.mxu0 0.0
    %5815 = vmatprep.subr.mxu0 0.0
    %5816 = vmatpush1.msra.mxu0 0.0
    %5817 = vmatprep.mubr.f32.mxu0 0.0
    %5818 = vmatmul.mubr.f32.gmra.mrb[0].mxu0 %v5538
    %v5819 = vpop.f32.mrb[0].mxu0
    %v5820 = vadd.f32 0.0, %v5819
    %v5821 = vpop.f32.mrb[0].mxu0
    %v5822 = vadd.f32 0.0, %v5821
    %5823 = vdwg.mxu0
    %5824 = vmatprep.subr.mxu0 0.0
    %5825 = vmatpush1.msra.mxu0 %v5527
    %5826 = vmatprep.subr.mxu0 0.0
    %5827 = vmatpush1.msra.mxu0 0.0
    %5828 = vmatprep.subr.mxu0 0.0
    %5829 = vmatpush1.msra.mxu0 0.0
    %5830 = vmatprep.subr.mxu0 0.0
    %5831 = vmatpush1.msra.mxu0 0.0
    %5832 = vmatprep.subr.mxu0 0.0
    %5833 = vmatpush1.msra.mxu0 0.0
    %5834 = vmatprep.subr.mxu0 0.0
    %5835 = vmatpush1.msra.mxu0 0.0
    %5836 = vmatprep.subr.mxu0 0.0
    %5837 = vmatpush1.msra.mxu0 0.0
    %5838 = vmatprep.subr.mxu0 0.0
    %5839 = vmatpush1.msra.mxu0 0.0
    %5840 = vmatprep.subr.mxu0 0.0
    %5841 = vmatpush1.msra.mxu0 0.0
    %5842 = vmatprep.subr.mxu0 0.0
    %5843 = vmatpush1.msra.mxu0 0.0
    %5844 = vmatprep.subr.mxu0 0.0
    %5845 = vmatpush1.msra.mxu0 0.0
    %5846 = vmatprep.subr.mxu0 0.0
    %5847 = vmatpush1.msra.mxu0 0.0
    %5848 = vmatprep.subr.mxu0 0.0
    %5849 = vmatpush1.msra.mxu0 0.0
    %5850 = vmatprep.subr.mxu0 0.0
    %5851 = vmatpush1.msra.mxu0 0.0
    %5852 = vmatprep.subr.mxu0 0.0
    %5853 = vmatpush1.msra.mxu0 0.0
    %5854 = vmatprep.subr.mxu0 0.0
    %5855 = vmatpush1.msra.mxu0 0.0
    %5856 = vmatprep.subr.mxu0 0.0
    %5857 = vmatpush1.msra.mxu0 0.0
    %5858 = vmatprep.subr.mxu0 0.0
    %5859 = vmatpush1.msra.mxu0 0.0
    %5860 = vmatprep.subr.mxu0 0.0
    %5861 = vmatpush1.msra.mxu0 0.0
    %5862 = vmatprep.subr.mxu0 0.0
    %5863 = vmatpush1.msra.mxu0 0.0
    %5864 = vmatprep.subr.mxu0 0.0
    %5865 = vmatpush1.msra.mxu0 0.0
    %5866 = vmatprep.subr.mxu0 0.0
    %5867 = vmatpush1.msra.mxu0 0.0
    %5868 = vmatprep.subr.mxu0 0.0
    %5869 = vmatpush1.msra.mxu0 0.0
    %5870 = vmatprep.subr.mxu0 0.0
    %5871 = vmatpush1.msra.mxu0 0.0
    %5872 = vmatprep.subr.mxu0 0.0
    %5873 = vmatpush1.msra.mxu0 0.0
    %5874 = vmatprep.subr.mxu0 0.0
    %5875 = vmatpush1.msra.mxu0 0.0
    %5876 = vmatprep.subr.mxu0 0.0
    %5877 = vmatpush1.msra.mxu0 0.0
    %5878 = vmatprep.subr.mxu0 0.0
    %5879 = vmatpush1.msra.mxu0 0.0
    %5880 = vmatprep.subr.mxu0 0.0
    %5881 = vmatpush1.msra.mxu0 0.0
    %5882 = vmatprep.subr.mxu0 0.0
    %5883 = vmatpush1.msra.mxu0 0.0
    %5884 = vmatprep.subr.mxu0 0.0
    %5885 = vmatpush1.msra.mxu0 0.0
    %5886 = vmatprep.subr.mxu0 0.0
    %5887 = vmatpush1.msra.mxu0 0.0
    %5888 = vmatprep.mubr.f32.mxu0 0.0
    %5889 = vmatmul.mubr.f32.gmra.mrb[0].mxu0 %v5538
    %v5890 = vpop.f32.mrb[0].mxu0
    %v5891 = vadd.f32 0.0, %v5890
    %v5892 = vpop.f32.mrb[0].mxu0
    %5893 = vdwg.mxu0
    %v5894 = vadd.f32 %v5489, %v5607
    %v5895 = vadd.f32 %v5490, %v5609
    %v5896 = vadd.f32 %v5491, %v5678
    %v5897 = vadd.f32 %v5492, %v5680
    %v5898 = vadd.f32 %v5493, %v5749
    %v5899 = vadd.f32 %v5494, %v5751
    %v5900 = vadd.f32 %v5495, %v5820
    %v5901 = vadd.f32 %v5496, %v5822
    %v5902 = vadd.f32 %v5497, %v5891
    %v5903 = vld [vmem:[%s1 + $0x70] sm:$0xff]
    %5904 = vrot.lane.b32.xlu0 %v3915, 94
    %v5905 = vpop.permute.xlu0 %5904
    %5906 = vrot.lane.b32.xlu0 %v3916, 94
    %v5907 = vpop.permute.xlu0 %5906
    %5908 = vrot.lane.b32.xlu0 %v3917, 94
    %v5909 = vpop.permute.xlu0 %5908
    %5910 = vrot.lane.b32.xlu0 %v3918, 94
    %v5911 = vpop.permute.xlu0 %5910
    %5912 = vrot.lane.b32.xlu0 %v3919, 94
    %v5913 = vpop.permute.xlu0 %5912
    %5914 = vrot.lane.b32.xlu0 %v3920, 94
    %v5915 = vpop.permute.xlu0 %5914
    %5916 = vrot.lane.b32.xlu0 %v3921, 94
    %v5917 = vpop.permute.xlu0 %5916
    %5918 = vrot.lane.b32.xlu0 %v3922, 94
    %v5919 = vpop.permute.xlu0 %5918
    %5920 = vrot.lane.b32.xlu0 %v3923, 94
    %v5921 = vpop.permute.xlu0 %5920
    %5922 = vrot.lane.b32.xlu0 %v3925, 94
    %v5923 = vpop.permute.xlu0 %5922
    %v5924 = vsel %vm2048, %v5905, %v5907
    %v5925 = vsel %vm2048, %v5907, %v5909
    %v5926 = vsel %vm2048, %v5909, %v5911
    %v5927 = vsel %vm2048, %v5911, %v5913
    %v5928 = vsel %vm2048, %v5913, %v5915
    %v5929 = vsel %vm2048, %v5915, %v5917
    %v5930 = vsel %vm2048, %v5917, %v5919
    %v5931 = vsel %vm2048, %v5919, %v5921
    %v5932 = vsel %vm2048, %v5921, %v5923
    %v5943 = vsel %vm83, %v5903, 0
    %5945 = vmatprep.subr.mxu0 %v5925
    %5946 = vmatpush1.msra.mxu0 %v5924
    %5947 = vmatprep.subr.mxu0 0.0
    %5948 = vmatpush1.msra.mxu0 0.0
    %5949 = vmatprep.subr.mxu0 0.0
    %5950 = vmatpush1.msra.mxu0 0.0
    %5951 = vmatprep.subr.mxu0 0.0
    %5952 = vmatpush1.msra.mxu0 0.0
    %5953 = vmatprep.subr.mxu0 0.0
    %5954 = vmatpush1.msra.mxu0 0.0
    %5955 = vmatprep.subr.mxu0 0.0
    %5956 = vmatpush1.msra.mxu0 0.0
    %5957 = vmatprep.subr.mxu0 0.0
    %5958 = vmatpush1.msra.mxu0 0.0
    %5959 = vmatprep.subr.mxu0 0.0
    %5960 = vmatpush1.msra.mxu0 0.0
    %5961 = vmatprep.subr.mxu0 0.0
    %5962 = vmatpush1.msra.mxu0 0.0
    %5963 = vmatprep.subr.mxu0 0.0
    %5964 = vmatpush1.msra.mxu0 0.0
    %5965 = vmatprep.subr.mxu0 0.0
    %5966 = vmatpush1.msra.mxu0 0.0
    %5967 = vmatprep.subr.mxu0 0.0
    %5968 = vmatpush1.msra.mxu0 0.0
    %5969 = vmatprep.subr.mxu0 0.0
    %5970 = vmatpush1.msra.mxu0 0.0
    %5971 = vmatprep.subr.mxu0 0.0
    %5972 = vmatpush1.msra.mxu0 0.0
    %5973 = vmatprep.subr.mxu0 0.0
    %5974 = vmatpush1.msra.mxu0 0.0
    %5975 = vmatprep.subr.mxu0 0.0
    %5976 = vmatpush1.msra.mxu0 0.0
    %5977 = vmatprep.subr.mxu0 0.0
    %5978 = vmatpush1.msra.mxu0 0.0
    %5979 = vmatprep.subr.mxu0 0.0
    %5980 = vmatpush1.msra.mxu0 0.0
    %5981 = vmatprep.subr.mxu0 0.0
    %5982 = vmatpush1.msra.mxu0 0.0
    %5983 = vmatprep.subr.mxu0 0.0
    %5984 = vmatpush1.msra.mxu0 0.0
    %5985 = vmatprep.subr.mxu0 0.0
    %5986 = vmatpush1.msra.mxu0 0.0
    %5987 = vmatprep.subr.mxu0 0.0
    %5988 = vmatpush1.msra.mxu0 0.0
    %5989 = vmatprep.subr.mxu0 0.0
    %5990 = vmatpush1.msra.mxu0 0.0
    %5991 = vmatprep.subr.mxu0 0.0
    %5992 = vmatpush1.msra.mxu0 0.0
    %5993 = vmatprep.subr.mxu0 0.0
    %5994 = vmatpush1.msra.mxu0 0.0
    %5995 = vmatprep.subr.mxu0 0.0
    %5996 = vmatpush1.msra.mxu0 0.0
    %5997 = vmatprep.subr.mxu0 0.0
    %5998 = vmatpush1.msra.mxu0 0.0
    %5999 = vmatprep.subr.mxu0 0.0
    %6000 = vmatpush1.msra.mxu0 0.0
    %6001 = vmatprep.subr.mxu0 0.0
    %6002 = vmatpush1.msra.mxu0 0.0
    %6003 = vmatprep.subr.mxu0 0.0
    %6004 = vmatpush1.msra.mxu0 0.0
    %6005 = vmatprep.subr.mxu0 0.0
    %6006 = vmatpush1.msra.mxu0 0.0
    %6007 = vmatprep.subr.mxu0 0.0
    %6008 = vmatpush1.msra.mxu0 0.0
    %6009 = vmatprep.mubr.f32.mxu0 0.0
    %6010 = vmatmul.mubr.f32.gmra.mrb[0].mxu0 %v5943
    %v6011 = vpop.f32.mrb[0].mxu0
    %v6012 = vadd.f32 0.0, %v6011
    %v6013 = vpop.f32.mrb[0].mxu0
    %v6014 = vadd.f32 0.0, %v6013
    %6015 = vdwg.mxu0
    %6016 = vmatprep.subr.mxu0 %v5927
    %6017 = vmatpush1.msra.mxu0 %v5926
    %6018 = vmatprep.subr.mxu0 0.0
    %6019 = vmatpush1.msra.mxu0 0.0
    %6020 = vmatprep.subr.mxu0 0.0
    %6021 = vmatpush1.msra.mxu0 0.0
    %6022 = vmatprep.subr.mxu0 0.0
    %6023 = vmatpush1.msra.mxu0 0.0
    %6024 = vmatprep.subr.mxu0 0.0
    %6025 = vmatpush1.msra.mxu0 0.0
    %6026 = vmatprep.subr.mxu0 0.0
    %6027 = vmatpush1.msra.mxu0 0.0
    %6028 = vmatprep.subr.mxu0 0.0
    %6029 = vmatpush1.msra.mxu0 0.0
    %6030 = vmatprep.subr.mxu0 0.0
    %6031 = vmatpush1.msra.mxu0 0.0
    %6032 = vmatprep.subr.mxu0 0.0
    %6033 = vmatpush1.msra.mxu0 0.0
    %6034 = vmatprep.subr.mxu0 0.0
    %6035 = vmatpush1.msra.mxu0 0.0
    %6036 = vmatprep.subr.mxu0 0.0
    %6037 = vmatpush1.msra.mxu0 0.0
    %6038 = vmatprep.subr.mxu0 0.0
    %6039 = vmatpush1.msra.mxu0 0.0
    %6040 = vmatprep.subr.mxu0 0.0
    %6041 = vmatpush1.msra.mxu0 0.0
    %6042 = vmatprep.subr.mxu0 0.0
    %6043 = vmatpush1.msra.mxu0 0.0
    %6044 = vmatprep.subr.mxu0 0.0
    %6045 = vmatpush1.msra.mxu0 0.0
    %6046 = vmatprep.subr.mxu0 0.0
    %6047 = vmatpush1.msra.mxu0 0.0
    %6048 = vmatprep.subr.mxu0 0.0
    %6049 = vmatpush1.msra.mxu0 0.0
    %6050 = vmatprep.subr.mxu0 0.0
    %6051 = vmatpush1.msra.mxu0 0.0
    %6052 = vmatprep.subr.mxu0 0.0
    %6053 = vmatpush1.msra.mxu0 0.0
    %6054 = vmatprep.subr.mxu0 0.0
    %6055 = vmatpush1.msra.mxu0 0.0
    %6056 = vmatprep.subr.mxu0 0.0
    %6057 = vmatpush1.msra.mxu0 0.0
    %6058 = vmatprep.subr.mxu0 0.0
    %6059 = vmatpush1.msra.mxu0 0.0
    %6060 = vmatprep.subr.mxu0 0.0
    %6061 = vmatpush1.msra.mxu0 0.0
    %6062 = vmatprep.subr.mxu0 0.0
    %6063 = vmatpush1.msra.mxu0 0.0
    %6064 = vmatprep.subr.mxu0 0.0
    %6065 = vmatpush1.msra.mxu0 0.0
    %6066 = vmatprep.subr.mxu0 0.0
    %6067 = vmatpush1.msra.mxu0 0.0
    %6068 = vmatprep.subr.mxu0 0.0
    %6069 = vmatpush1.msra.mxu0 0.0
    %6070 = vmatprep.subr.mxu0 0.0
    %6071 = vmatpush1.msra.mxu0 0.0
    %6072 = vmatprep.subr.mxu0 0.0
    %6073 = vmatpush1.msra.mxu0 0.0
    %6074 = vmatprep.subr.mxu0 0.0
    %6075 = vmatpush1.msra.mxu0 0.0
    %6076 = vmatprep.subr.mxu0 0.0
    %6077 = vmatpush1.msra.mxu0 0.0
    %6078 = vmatprep.subr.mxu0 0.0
    %6079 = vmatpush1.msra.mxu0 0.0
    %6080 = vmatprep.mubr.f32.mxu0 0.0
    %6081 = vmatmul.mubr.f32.gmra.mrb[0].mxu0 %v5943
    %v6082 = vpop.f32.mrb[0].mxu0
    %v6083 = vadd.f32 0.0, %v6082
    %v6084 = vpop.f32.mrb[0].mxu0
    %v6085 = vadd.f32 0.0, %v6084
    %6086 = vdwg.mxu0
    %6087 = vmatprep.subr.mxu0 %v5929
    %6088 = vmatpush1.msra.mxu0 %v5928
    %6089 = vmatprep.subr.mxu0 0.0
    %6090 = vmatpush1.msra.mxu0 0.0
    %6091 = vmatprep.subr.mxu0 0.0
    %6092 = vmatpush1.msra.mxu0 0.0
    %6093 = vmatprep.subr.mxu0 0.0
    %6094 = vmatpush1.msra.mxu0 0.0
    %6095 = vmatprep.subr.mxu0 0.0
    %6096 = vmatpush1.msra.mxu0 0.0
    %6097 = vmatprep.subr.mxu0 0.0
    %6098 = vmatpush1.msra.mxu0 0.0
    %6099 = vmatprep.subr.mxu0 0.0
    %6100 = vmatpush1.msra.mxu0 0.0
    %6101 = vmatprep.subr.mxu0 0.0
    %6102 = vmatpush1.msra.mxu0 0.0
    %6103 = vmatprep.subr.mxu0 0.0
    %6104 = vmatpush1.msra.mxu0 0.0
    %6105 = vmatprep.subr.mxu0 0.0
    %6106 = vmatpush1.msra.mxu0 0.0
    %6107 = vmatprep.subr.mxu0 0.0
    %6108 = vmatpush1.msra.mxu0 0.0
    %6109 = vmatprep.subr.mxu0 0.0
    %6110 = vmatpush1.msra.mxu0 0.0
    %6111 = vmatprep.subr.mxu0 0.0
    %6112 = vmatpush1.msra.mxu0 0.0
    %6113 = vmatprep.subr.mxu0 0.0
    %6114 = vmatpush1.msra.mxu0 0.0
    %6115 = vmatprep.subr.mxu0 0.0
    %6116 = vmatpush1.msra.mxu0 0.0
    %6117 = vmatprep.subr.mxu0 0.0
    %6118 = vmatpush1.msra.mxu0 0.0
    %6119 = vmatprep.subr.mxu0 0.0
    %6120 = vmatpush1.msra.mxu0 0.0
    %6121 = vmatprep.subr.mxu0 0.0
    %6122 = vmatpush1.msra.mxu0 0.0
    %6123 = vmatprep.subr.mxu0 0.0
    %6124 = vmatpush1.msra.mxu0 0.0
    %6125 = vmatprep.subr.mxu0 0.0
    %6126 = vmatpush1.msra.mxu0 0.0
    %6127 = vmatprep.subr.mxu0 0.0
    %6128 = vmatpush1.msra.mxu0 0.0
    %6129 = vmatprep.subr.mxu0 0.0
    %6130 = vmatpush1.msra.mxu0 0.0
    %6131 = vmatprep.subr.mxu0 0.0
    %6132 = vmatpush1.msra.mxu0 0.0
    %6133 = vmatprep.subr.mxu0 0.0
    %6134 = vmatpush1.msra.mxu0 0.0
    %6135 = vmatprep.subr.mxu0 0.0
    %6136 = vmatpush1.msra.mxu0 0.0
    %6137 = vmatprep.subr.mxu0 0.0
    %6138 = vmatpush1.msra.mxu0 0.0
    %6139 = vmatprep.subr.mxu0 0.0
    %6140 = vmatpush1.msra.mxu0 0.0
    %6141 = vmatprep.subr.mxu0 0.0
    %6142 = vmatpush1.msra.mxu0 0.0
    %6143 = vmatprep.subr.mxu0 0.0
    %6144 = vmatpush1.msra.mxu0 0.0
    %6145 = vmatprep.subr.mxu0 0.0
    %6146 = vmatpush1.msra.mxu0 0.0
    %6147 = vmatprep.subr.mxu0 0.0
    %6148 = vmatpush1.msra.mxu0 0.0
    %6149 = vmatprep.subr.mxu0 0.0
    %6150 = vmatpush1.msra.mxu0 0.0
    %6151 = vmatprep.mubr.f32.mxu0 0.0
    %6152 = vmatmul.mubr.f32.gmra.mrb[0].mxu0 %v5943
    %v6153 = vpop.f32.mrb[0].mxu0
    %v6154 = vadd.f32 0.0, %v6153
    %v6155 = vpop.f32.mrb[0].mxu0
    %v6156 = vadd.f32 0.0, %v6155
    %6157 = vdwg.mxu0
    %6158 = vmatprep.subr.mxu0 %v5931
    %6159 = vmatpush1.msra.mxu0 %v5930
    %6160 = vmatprep.subr.mxu0 0.0
    %6161 = vmatpush1.msra.mxu0 0.0
    %6162 = vmatprep.subr.mxu0 0.0
    %6163 = vmatpush1.msra.mxu0 0.0
    %6164 = vmatprep.subr.mxu0 0.0
    %6165 = vmatpush1.msra.mxu0 0.0
    %6166 = vmatprep.subr.mxu0 0.0
    %6167 = vmatpush1.msra.mxu0 0.0
    %6168 = vmatprep.subr.mxu0 0.0
    %6169 = vmatpush1.msra.mxu0 0.0
    %6170 = vmatprep.subr.mxu0 0.0
    %6171 = vmatpush1.msra.mxu0 0.0
    %6172 = vmatprep.subr.mxu0 0.0
    %6173 = vmatpush1.msra.mxu0 0.0
    %6174 = vmatprep.subr.mxu0 0.0
    %6175 = vmatpush1.msra.mxu0 0.0
    %6176 = vmatprep.subr.mxu0 0.0
    %6177 = vmatpush1.msra.mxu0 0.0
    %6178 = vmatprep.subr.mxu0 0.0
    %6179 = vmatpush1.msra.mxu0 0.0
    %6180 = vmatprep.subr.mxu0 0.0
    %6181 = vmatpush1.msra.mxu0 0.0
    %6182 = vmatprep.subr.mxu0 0.0
    %6183 = vmatpush1.msra.mxu0 0.0
    %6184 = vmatprep.subr.mxu0 0.0
    %6185 = vmatpush1.msra.mxu0 0.0
    %6186 = vmatprep.subr.mxu0 0.0
    %6187 = vmatpush1.msra.mxu0 0.0
    %6188 = vmatprep.subr.mxu0 0.0
    %6189 = vmatpush1.msra.mxu0 0.0
    %6190 = vmatprep.subr.mxu0 0.0
    %6191 = vmatpush1.msra.mxu0 0.0
    %6192 = vmatprep.subr.mxu0 0.0
    %6193 = vmatpush1.msra.mxu0 0.0
    %6194 = vmatprep.subr.mxu0 0.0
    %6195 = vmatpush1.msra.mxu0 0.0
    %6196 = vmatprep.subr.mxu0 0.0
    %6197 = vmatpush1.msra.mxu0 0.0
    %6198 = vmatprep.subr.mxu0 0.0
    %6199 = vmatpush1.msra.mxu0 0.0
    %6200 = vmatprep.subr.mxu0 0.0
    %6201 = vmatpush1.msra.mxu0 0.0
    %6202 = vmatprep.subr.mxu0 0.0
    %6203 = vmatpush1.msra.mxu0 0.0
    %6204 = vmatprep.subr.mxu0 0.0
    %6205 = vmatpush1.msra.mxu0 0.0
    %6206 = vmatprep.subr.mxu0 0.0
    %6207 = vmatpush1.msra.mxu0 0.0
    %6208 = vmatprep.subr.mxu0 0.0
    %6209 = vmatpush1.msra.mxu0 0.0
    %6210 = vmatprep.subr.mxu0 0.0
    %6211 = vmatpush1.msra.mxu0 0.0
    %6212 = vmatprep.subr.mxu0 0.0
    %6213 = vmatpush1.msra.mxu0 0.0
    %6214 = vmatprep.subr.mxu0 0.0
    %6215 = vmatpush1.msra.mxu0 0.0
    %6216 = vmatprep.subr.mxu0 0.0
    %6217 = vmatpush1.msra.mxu0 0.0
    %6218 = vmatprep.subr.mxu0 0.0
    %6219 = vmatpush1.msra.mxu0 0.0
    %6220 = vmatprep.subr.mxu0 0.0
    %6221 = vmatpush1.msra.mxu0 0.0
    %6222 = vmatprep.mubr.f32.mxu0 0.0
    %6223 = vmatmul.mubr.f32.gmra.mrb[0].mxu0 %v5943
    %v6224 = vpop.f32.mrb[0].mxu0
    %v6225 = vadd.f32 0.0, %v6224
    %v6226 = vpop.f32.mrb[0].mxu0
    %v6227 = vadd.f32 0.0, %v6226
    %6228 = vdwg.mxu0
    %6229 = vmatprep.subr.mxu0 0.0
    %6230 = vmatpush1.msra.mxu0 %v5932
    %6231 = vmatprep.subr.mxu0 0.0
    %6232 = vmatpush1.msra.mxu0 0.0
    %6233 = vmatprep.subr.mxu0 0.0
    %6234 = vmatpush1.msra.mxu0 0.0
    %6235 = vmatprep.subr.mxu0 0.0
    %6236 = vmatpush1.msra.mxu0 0.0
    %6237 = vmatprep.subr.mxu0 0.0
    %6238 = vmatpush1.msra.mxu0 0.0
    %6239 = vmatprep.subr.mxu0 0.0
    %6240 = vmatpush1.msra.mxu0 0.0
    %6241 = vmatprep.subr.mxu0 0.0
    %6242 = vmatpush1.msra.mxu0 0.0
    %6243 = vmatprep.subr.mxu0 0.0
    %6244 = vmatpush1.msra.mxu0 0.0
    %6245 = vmatprep.subr.mxu0 0.0
    %6246 = vmatpush1.msra.mxu0 0.0
    %6247 = vmatprep.subr.mxu0 0.0
    %6248 = vmatpush1.msra.mxu0 0.0
    %6249 = vmatprep.subr.mxu0 0.0
    %6250 = vmatpush1.msra.mxu0 0.0
    %6251 = vmatprep.subr.mxu0 0.0
    %6252 = vmatpush1.msra.mxu0 0.0
    %6253 = vmatprep.subr.mxu0 0.0
    %6254 = vmatpush1.msra.mxu0 0.0
    %6255 = vmatprep.subr.mxu0 0.0
    %6256 = vmatpush1.msra.mxu0 0.0
    %6257 = vmatprep.subr.mxu0 0.0
    %6258 = vmatpush1.msra.mxu0 0.0
    %6259 = vmatprep.subr.mxu0 0.0
    %6260 = vmatpush1.msra.mxu0 0.0
    %6261 = vmatprep.subr.mxu0 0.0
    %6262 = vmatpush1.msra.mxu0 0.0
    %6263 = vmatprep.subr.mxu0 0.0
    %6264 = vmatpush1.msra.mxu0 0.0
    %6265 = vmatprep.subr.mxu0 0.0
    %6266 = vmatpush1.msra.mxu0 0.0
    %6267 = vmatprep.subr.mxu0 0.0
    %6268 = vmatpush1.msra.mxu0 0.0
    %6269 = vmatprep.subr.mxu0 0.0
    %6270 = vmatpush1.msra.mxu0 0.0
    %6271 = vmatprep.subr.mxu0 0.0
    %6272 = vmatpush1.msra.mxu0 0.0
    %6273 = vmatprep.subr.mxu0 0.0
    %6274 = vmatpush1.msra.mxu0 0.0
    %6275 = vmatprep.subr.mxu0 0.0
    %6276 = vmatpush1.msra.mxu0 0.0
    %6277 = vmatprep.subr.mxu0 0.0
    %6278 = vmatpush1.msra.mxu0 0.0
    %6279 = vmatprep.subr.mxu0 0.0
    %6280 = vmatpush1.msra.mxu0 0.0
    %6281 = vmatprep.subr.mxu0 0.0
    %6282 = vmatpush1.msra.mxu0 0.0
    %6283 = vmatprep.subr.mxu0 0.0
    %6284 = vmatpush1.msra.mxu0 0.0
    %6285 = vmatprep.subr.mxu0 0.0
    %6286 = vmatpush1.msra.mxu0 0.0
    %6287 = vmatprep.subr.mxu0 0.0
    %6288 = vmatpush1.msra.mxu0 0.0
    %6289 = vmatprep.subr.mxu0 0.0
    %6290 = vmatpush1.msra.mxu0 0.0
    %6291 = vmatprep.subr.mxu0 0.0
    %6292 = vmatpush1.msra.mxu0 0.0
    %6293 = vmatprep.mubr.f32.mxu0 0.0
    %6294 = vmatmul.mubr.f32.gmra.mrb[0].mxu0 %v5943
    %v6295 = vpop.f32.mrb[0].mxu0
    %v6296 = vadd.f32 0.0, %v6295
    %v6297 = vpop.f32.mrb[0].mxu0
    %6298 = vdwg.mxu0
    %v6299 = vadd.f32 %v5894, %v6012
    %v6300 = vadd.f32 %v5895, %v6014
    %v6301 = vadd.f32 %v5896, %v6083
    %v6302 = vadd.f32 %v5897, %v6085
    %v6303 = vadd.f32 %v5898, %v6154
    %v6304 = vadd.f32 %v5899, %v6156
    %v6305 = vadd.f32 %v5900, %v6225
    %v6306 = vadd.f32 %v5901, %v6227
    %v6307 = vadd.f32 %v5902, %v6296
    %v6308 = vld [vmem:[%s1 + $0x78] sm:$0xff]
    %6309 = vrot.lane.b32.xlu0 %v3915, 64
    %v6310 = vpop.permute.xlu0 %6309
    %6311 = vrot.lane.b32.xlu0 %v3916, 64
    %v6312 = vpop.permute.xlu0 %6311
    %6313 = vrot.lane.b32.xlu0 %v3917, 64
    %v6314 = vpop.permute.xlu0 %6313
    %6315 = vrot.lane.b32.xlu0 %v3918, 64
    %v6316 = vpop.permute.xlu0 %6315
    %6317 = vrot.lane.b32.xlu0 %v3919, 64
    %v6318 = vpop.permute.xlu0 %6317
    %6319 = vrot.lane.b32.xlu0 %v3920, 64
    %v6320 = vpop.permute.xlu0 %6319
    %6321 = vrot.lane.b32.xlu0 %v3921, 64
    %v6322 = vpop.permute.xlu0 %6321
    %6323 = vrot.lane.b32.xlu0 %v3922, 64
    %v6324 = vpop.permute.xlu0 %6323
    %6325 = vrot.lane.b32.xlu0 %v3923, 64
    %v6326 = vpop.permute.xlu0 %6325
    %6327 = vrot.lane.b32.xlu0 %v3925, 64
    %v6328 = vpop.permute.xlu0 %6327
    %v6329 = vsel %vm2481, %v6310, %v6312
    %v6330 = vsel %vm2481, %v6312, %v6314
    %v6331 = vsel %vm2481, %v6314, %v6316
    %v6332 = vsel %vm2481, %v6316, %v6318
    %v6333 = vsel %vm2481, %v6318, %v6320
    %v6334 = vsel %vm2481, %v6320, %v6322
    %v6335 = vsel %vm2481, %v6322, %v6324
    %v6336 = vsel %vm2481, %v6324, %v6326
    %v6337 = vsel %vm2481, %v6326, %v6328
    %v6348 = vsel %vm83, %v6308, 0
    %6350 = vmatprep.subr.mxu0 %v6330
    %6351 = vmatpush1.msra.mxu0 %v6329
    %6352 = vmatprep.subr.mxu0 0.0
    %6353 = vmatpush1.msra.mxu0 0.0
    %6354 = vmatprep.subr.mxu0 0.0
    %6355 = vmatpush1.msra.mxu0 0.0
    %6356 = vmatprep.subr.mxu0 0.0
    %6357 = vmatpush1.msra.mxu0 0.0
    %6358 = vmatprep.subr.mxu0 0.0
    %6359 = vmatpush1.msra.mxu0 0.0
    %6360 = vmatprep.subr.mxu0 0.0
    %6361 = vmatpush1.msra.mxu0 0.0
    %6362 = vmatprep.subr.mxu0 0.0
    %6363 = vmatpush1.msra.mxu0 0.0
    %6364 = vmatprep.subr.mxu0 0.0
    %6365 = vmatpush1.msra.mxu0 0.0
    %6366 = vmatprep.subr.mxu0 0.0
    %6367 = vmatpush1.msra.mxu0 0.0
    %6368 = vmatprep.subr.mxu0 0.0
    %6369 = vmatpush1.msra.mxu0 0.0
    %6370 = vmatprep.subr.mxu0 0.0
    %6371 = vmatpush1.msra.mxu0 0.0
    %6372 = vmatprep.subr.mxu0 0.0
    %6373 = vmatpush1.msra.mxu0 0.0
    %6374 = vmatprep.subr.mxu0 0.0
    %6375 = vmatpush1.msra.mxu0 0.0
    %6376 = vmatprep.subr.mxu0 0.0
    %6377 = vmatpush1.msra.mxu0 0.0
    %6378 = vmatprep.subr.mxu0 0.0
    %6379 = vmatpush1.msra.mxu0 0.0
    %6380 = vmatprep.subr.mxu0 0.0
    %6381 = vmatpush1.msra.mxu0 0.0
    %6382 = vmatprep.subr.mxu0 0.0
    %6383 = vmatpush1.msra.mxu0 0.0
    %6384 = vmatprep.subr.mxu0 0.0
    %6385 = vmatpush1.msra.mxu0 0.0
    %6386 = vmatprep.subr.mxu0 0.0
    %6387 = vmatpush1.msra.mxu0 0.0
    %6388 = vmatprep.subr.mxu0 0.0
    %6389 = vmatpush1.msra.mxu0 0.0
    %6390 = vmatprep.subr.mxu0 0.0
    %6391 = vmatpush1.msra.mxu0 0.0
    %6392 = vmatprep.subr.mxu0 0.0
    %6393 = vmatpush1.msra.mxu0 0.0
    %6394 = vmatprep.subr.mxu0 0.0
    %6395 = vmatpush1.msra.mxu0 0.0
    %6396 = vmatprep.subr.mxu0 0.0
    %6397 = vmatpush1.msra.mxu0 0.0
    %6398 = vmatprep.subr.mxu0 0.0
    %6399 = vmatpush1.msra.mxu0 0.0
    %6400 = vmatprep.subr.mxu0 0.0
    %6401 = vmatpush1.msra.mxu0 0.0
    %6402 = vmatprep.subr.mxu0 0.0
    %6403 = vmatpush1.msra.mxu0 0.0
    %6404 = vmatprep.subr.mxu0 0.0
    %6405 = vmatpush1.msra.mxu0 0.0
    %6406 = vmatprep.subr.mxu0 0.0
    %6407 = vmatpush1.msra.mxu0 0.0
    %6408 = vmatprep.subr.mxu0 0.0
    %6409 = vmatpush1.msra.mxu0 0.0
    %6410 = vmatprep.subr.mxu0 0.0
    %6411 = vmatpush1.msra.mxu0 0.0
    %6412 = vmatprep.subr.mxu0 0.0
    %6413 = vmatpush1.msra.mxu0 0.0
    %6414 = vmatprep.mubr.f32.mxu0 0.0
    %6415 = vmatmul.mubr.f32.gmra.mrb[0].mxu0 %v6348
    %v6416 = vpop.f32.mrb[0].mxu0
    %v6417 = vadd.f32 0.0, %v6416
    %v6418 = vpop.f32.mrb[0].mxu0
    %v6419 = vadd.f32 0.0, %v6418
    %6420 = vdwg.mxu0
    %6421 = vmatprep.subr.mxu0 %v6332
    %6422 = vmatpush1.msra.mxu0 %v6331
    %6423 = vmatprep.subr.mxu0 0.0
    %6424 = vmatpush1.msra.mxu0 0.0
    %6425 = vmatprep.subr.mxu0 0.0
    %6426 = vmatpush1.msra.mxu0 0.0
    %6427 = vmatprep.subr.mxu0 0.0
    %6428 = vmatpush1.msra.mxu0 0.0
    %6429 = vmatprep.subr.mxu0 0.0
    %6430 = vmatpush1.msra.mxu0 0.0
    %6431 = vmatprep.subr.mxu0 0.0
    %6432 = vmatpush1.msra.mxu0 0.0
    %6433 = vmatprep.subr.mxu0 0.0
    %6434 = vmatpush1.msra.mxu0 0.0
    %6435 = vmatprep.subr.mxu0 0.0
    %6436 = vmatpush1.msra.mxu0 0.0
    %6437 = vmatprep.subr.mxu0 0.0
    %6438 = vmatpush1.msra.mxu0 0.0
    %6439 = vmatprep.subr.mxu0 0.0
    %6440 = vmatpush1.msra.mxu0 0.0
    %6441 = vmatprep.subr.mxu0 0.0
    %6442 = vmatpush1.msra.mxu0 0.0
    %6443 = vmatprep.subr.mxu0 0.0
    %6444 = vmatpush1.msra.mxu0 0.0
    %6445 = vmatprep.subr.mxu0 0.0
    %6446 = vmatpush1.msra.mxu0 0.0
    %6447 = vmatprep.subr.mxu0 0.0
    %6448 = vmatpush1.msra.mxu0 0.0
    %6449 = vmatprep.subr.mxu0 0.0
    %6450 = vmatpush1.msra.mxu0 0.0
    %6451 = vmatprep.subr.mxu0 0.0
    %6452 = vmatpush1.msra.mxu0 0.0
    %6453 = vmatprep.subr.mxu0 0.0
    %6454 = vmatpush1.msra.mxu0 0.0
    %6455 = vmatprep.subr.mxu0 0.0
    %6456 = vmatpush1.msra.mxu0 0.0
    %6457 = vmatprep.subr.mxu0 0.0
    %6458 = vmatpush1.msra.mxu0 0.0
    %6459 = vmatprep.subr.mxu0 0.0
    %6460 = vmatpush1.msra.mxu0 0.0
    %6461 = vmatprep.subr.mxu0 0.0
    %6462 = vmatpush1.msra.mxu0 0.0
    %6463 = vmatprep.subr.mxu0 0.0
    %6464 = vmatpush1.msra.mxu0 0.0
    %6465 = vmatprep.subr.mxu0 0.0
    %6466 = vmatpush1.msra.mxu0 0.0
    %6467 = vmatprep.subr.mxu0 0.0
    %6468 = vmatpush1.msra.mxu0 0.0
    %6469 = vmatprep.subr.mxu0 0.0
    %6470 = vmatpush1.msra.mxu0 0.0
    %6471 = vmatprep.subr.mxu0 0.0
    %6472 = vmatpush1.msra.mxu0 0.0
    %6473 = vmatprep.subr.mxu0 0.0
    %6474 = vmatpush1.msra.mxu0 0.0
    %6475 = vmatprep.subr.mxu0 0.0
    %6476 = vmatpush1.msra.mxu0 0.0
    %6477 = vmatprep.subr.mxu0 0.0
    %6478 = vmatpush1.msra.mxu0 0.0
    %6479 = vmatprep.subr.mxu0 0.0
    %6480 = vmatpush1.msra.mxu0 0.0
    %6481 = vmatprep.subr.mxu0 0.0
    %6482 = vmatpush1.msra.mxu0 0.0
    %6483 = vmatprep.subr.mxu0 0.0
    %6484 = vmatpush1.msra.mxu0 0.0
    %6485 = vmatprep.mubr.f32.mxu0 0.0
    %6486 = vmatmul.mubr.f32.gmra.mrb[0].mxu0 %v6348
    %v6487 = vpop.f32.mrb[0].mxu0
    %v6488 = vadd.f32 0.0, %v6487
    %v6489 = vpop.f32.mrb[0].mxu0
    %v6490 = vadd.f32 0.0, %v6489
    %6491 = vdwg.mxu0
    %6492 = vmatprep.subr.mxu0 %v6334
    %6493 = vmatpush1.msra.mxu0 %v6333
    %6494 = vmatprep.subr.mxu0 0.0
    %6495 = vmatpush1.msra.mxu0 0.0
    %6496 = vmatprep.subr.mxu0 0.0
    %6497 = vmatpush1.msra.mxu0 0.0
    %6498 = vmatprep.subr.mxu0 0.0
    %6499 = vmatpush1.msra.mxu0 0.0
    %6500 = vmatprep.subr.mxu0 0.0
    %6501 = vmatpush1.msra.mxu0 0.0
    %6502 = vmatprep.subr.mxu0 0.0
    %6503 = vmatpush1.msra.mxu0 0.0
    %6504 = vmatprep.subr.mxu0 0.0
    %6505 = vmatpush1.msra.mxu0 0.0
    %6506 = vmatprep.subr.mxu0 0.0
    %6507 = vmatpush1.msra.mxu0 0.0
    %6508 = vmatprep.subr.mxu0 0.0
    %6509 = vmatpush1.msra.mxu0 0.0
    %6510 = vmatprep.subr.mxu0 0.0
    %6511 = vmatpush1.msra.mxu0 0.0
    %6512 = vmatprep.subr.mxu0 0.0
    %6513 = vmatpush1.msra.mxu0 0.0
    %6514 = vmatprep.subr.mxu0 0.0
    %6515 = vmatpush1.msra.mxu0 0.0
    %6516 = vmatprep.subr.mxu0 0.0
    %6517 = vmatpush1.msra.mxu0 0.0
    %6518 = vmatprep.subr.mxu0 0.0
    %6519 = vmatpush1.msra.mxu0 0.0
    %6520 = vmatprep.subr.mxu0 0.0
    %6521 = vmatpush1.msra.mxu0 0.0
    %6522 = vmatprep.subr.mxu0 0.0
    %6523 = vmatpush1.msra.mxu0 0.0
    %6524 = vmatprep.subr.mxu0 0.0
    %6525 = vmatpush1.msra.mxu0 0.0
    %6526 = vmatprep.subr.mxu0 0.0
    %6527 = vmatpush1.msra.mxu0 0.0
    %6528 = vmatprep.subr.mxu0 0.0
    %6529 = vmatpush1.msra.mxu0 0.0
    %6530 = vmatprep.subr.mxu0 0.0
    %6531 = vmatpush1.msra.mxu0 0.0
    %6532 = vmatprep.subr.mxu0 0.0
    %6533 = vmatpush1.msra.mxu0 0.0
    %6534 = vmatprep.subr.mxu0 0.0
    %6535 = vmatpush1.msra.mxu0 0.0
    %6536 = vmatprep.subr.mxu0 0.0
    %6537 = vmatpush1.msra.mxu0 0.0
    %6538 = vmatprep.subr.mxu0 0.0
    %6539 = vmatpush1.msra.mxu0 0.0
    %6540 = vmatprep.subr.mxu0 0.0
    %6541 = vmatpush1.msra.mxu0 0.0
    %6542 = vmatprep.subr.mxu0 0.0
    %6543 = vmatpush1.msra.mxu0 0.0
    %6544 = vmatprep.subr.mxu0 0.0
    %6545 = vmatpush1.msra.mxu0 0.0
    %6546 = vmatprep.subr.mxu0 0.0
    %6547 = vmatpush1.msra.mxu0 0.0
    %6548 = vmatprep.subr.mxu0 0.0
    %6549 = vmatpush1.msra.mxu0 0.0
    %6550 = vmatprep.subr.mxu0 0.0
    %6551 = vmatpush1.msra.mxu0 0.0
    %6552 = vmatprep.subr.mxu0 0.0
    %6553 = vmatpush1.msra.mxu0 0.0
    %6554 = vmatprep.subr.mxu0 0.0
    %6555 = vmatpush1.msra.mxu0 0.0
    %6556 = vmatprep.mubr.f32.mxu0 0.0
    %6557 = vmatmul.mubr.f32.gmra.mrb[0].mxu0 %v6348
    %v6558 = vpop.f32.mrb[0].mxu0
    %v6559 = vadd.f32 0.0, %v6558
    %v6560 = vpop.f32.mrb[0].mxu0
    %v6561 = vadd.f32 0.0, %v6560
    %6562 = vdwg.mxu0
    %6563 = vmatprep.subr.mxu0 %v6336
    %6564 = vmatpush1.msra.mxu0 %v6335
    %6565 = vmatprep.subr.mxu0 0.0
    %6566 = vmatpush1.msra.mxu0 0.0
    %6567 = vmatprep.subr.mxu0 0.0
    %6568 = vmatpush1.msra.mxu0 0.0
    %6569 = vmatprep.subr.mxu0 0.0
    %6570 = vmatpush1.msra.mxu0 0.0
    %6571 = vmatprep.subr.mxu0 0.0
    %6572 = vmatpush1.msra.mxu0 0.0
    %6573 = vmatprep.subr.mxu0 0.0
    %6574 = vmatpush1.msra.mxu0 0.0
    %6575 = vmatprep.subr.mxu0 0.0
    %6576 = vmatpush1.msra.mxu0 0.0
    %6577 = vmatprep.subr.mxu0 0.0
    %6578 = vmatpush1.msra.mxu0 0.0
    %6579 = vmatprep.subr.mxu0 0.0
    %6580 = vmatpush1.msra.mxu0 0.0
    %6581 = vmatprep.subr.mxu0 0.0
    %6582 = vmatpush1.msra.mxu0 0.0
    %6583 = vmatprep.subr.mxu0 0.0
    %6584 = vmatpush1.msra.mxu0 0.0
    %6585 = vmatprep.subr.mxu0 0.0
    %6586 = vmatpush1.msra.mxu0 0.0
    %6587 = vmatprep.subr.mxu0 0.0
    %6588 = vmatpush1.msra.mxu0 0.0
    %6589 = vmatprep.subr.mxu0 0.0
    %6590 = vmatpush1.msra.mxu0 0.0
    %6591 = vmatprep.subr.mxu0 0.0
    %6592 = vmatpush1.msra.mxu0 0.0
    %6593 = vmatprep.subr.mxu0 0.0
    %6594 = vmatpush1.msra.mxu0 0.0
    %6595 = vmatprep.subr.mxu0 0.0
    %6596 = vmatpush1.msra.mxu0 0.0
    %6597 = vmatprep.subr.mxu0 0.0
    %6598 = vmatpush1.msra.mxu0 0.0
    %6599 = vmatprep.subr.mxu0 0.0
    %6600 = vmatpush1.msra.mxu0 0.0
    %6601 = vmatprep.subr.mxu0 0.0
    %6602 = vmatpush1.msra.mxu0 0.0
    %6603 = vmatprep.subr.mxu0 0.0
    %6604 = vmatpush1.msra.mxu0 0.0
    %6605 = vmatprep.subr.mxu0 0.0
    %6606 = vmatpush1.msra.mxu0 0.0
    %6607 = vmatprep.subr.mxu0 0.0
    %6608 = vmatpush1.msra.mxu0 0.0
    %6609 = vmatprep.subr.mxu0 0.0
    %6610 = vmatpush1.msra.mxu0 0.0
    %6611 = vmatprep.subr.mxu0 0.0
    %6612 = vmatpush1.msra.mxu0 0.0
    %6613 = vmatprep.subr.mxu0 0.0
    %6614 = vmatpush1.msra.mxu0 0.0
    %6615 = vmatprep.subr.mxu0 0.0
    %6616 = vmatpush1.msra.mxu0 0.0
    %6617 = vmatprep.subr.mxu0 0.0
    %6618 = vmatpush1.msra.mxu0 0.0
    %6619 = vmatprep.subr.mxu0 0.0
    %6620 = vmatpush1.msra.mxu0 0.0
    %6621 = vmatprep.subr.mxu0 0.0
    %6622 = vmatpush1.msra.mxu0 0.0
    %6623 = vmatprep.subr.mxu0 0.0
    %6624 = vmatpush1.msra.mxu0 0.0
    %6625 = vmatprep.subr.mxu0 0.0
    %6626 = vmatpush1.msra.mxu0 0.0
    %6627 = vmatprep.mubr.f32.mxu0 0.0
    %6628 = vmatmul.mubr.f32.gmra.mrb[0].mxu0 %v6348
    %v6629 = vpop.f32.mrb[0].mxu0
    %v6630 = vadd.f32 0.0, %v6629
    %v6631 = vpop.f32.mrb[0].mxu0
    %v6632 = vadd.f32 0.0, %v6631
    %6633 = vdwg.mxu0
    %6634 = vmatprep.subr.mxu0 0.0
    %6635 = vmatpush1.msra.mxu0 %v6337
    %6636 = vmatprep.subr.mxu0 0.0
    %6637 = vmatpush1.msra.mxu0 0.0
    %6638 = vmatprep.subr.mxu0 0.0
    %6639 = vmatpush1.msra.mxu0 0.0
    %6640 = vmatprep.subr.mxu0 0.0
    %6641 = vmatpush1.msra.mxu0 0.0
    %6642 = vmatprep.subr.mxu0 0.0
    %6643 = vmatpush1.msra.mxu0 0.0
    %6644 = vmatprep.subr.mxu0 0.0
    %6645 = vmatpush1.msra.mxu0 0.0
    %6646 = vmatprep.subr.mxu0 0.0
    %6647 = vmatpush1.msra.mxu0 0.0
    %6648 = vmatprep.subr.mxu0 0.0
    %6649 = vmatpush1.msra.mxu0 0.0
    %6650 = vmatprep.subr.mxu0 0.0
    %6651 = vmatpush1.msra.mxu0 0.0
    %6652 = vmatprep.subr.mxu0 0.0
    %6653 = vmatpush1.msra.mxu0 0.0
    %6654 = vmatprep.subr.mxu0 0.0
    %6655 = vmatpush1.msra.mxu0 0.0
    %6656 = vmatprep.subr.mxu0 0.0
    %6657 = vmatpush1.msra.mxu0 0.0
    %6658 = vmatprep.subr.mxu0 0.0
    %6659 = vmatpush1.msra.mxu0 0.0
    %6660 = vmatprep.subr.mxu0 0.0
    %6661 = vmatpush1.msra.mxu0 0.0
    %6662 = vmatprep.subr.mxu0 0.0
    %6663 = vmatpush1.msra.mxu0 0.0
    %6664 = vmatprep.subr.mxu0 0.0
    %6665 = vmatpush1.msra.mxu0 0.0
    %6666 = vmatprep.subr.mxu0 0.0
    %6667 = vmatpush1.msra.mxu0 0.0
    %6668 = vmatprep.subr.mxu0 0.0
    %6669 = vmatpush1.msra.mxu0 0.0
    %6670 = vmatprep.subr.mxu0 0.0
    %6671 = vmatpush1.msra.mxu0 0.0
    %6672 = vmatprep.subr.mxu0 0.0
    %6673 = vmatpush1.msra.mxu0 0.0
    %6674 = vmatprep.subr.mxu0 0.0
    %6675 = vmatpush1.msra.mxu0 0.0
    %6676 = vmatprep.subr.mxu0 0.0
    %6677 = vmatpush1.msra.mxu0 0.0
    %6678 = vmatprep.subr.mxu0 0.0
    %6679 = vmatpush1.msra.mxu0 0.0
    %6680 = vmatprep.subr.mxu0 0.0
    %6681 = vmatpush1.msra.mxu0 0.0
    %6682 = vmatprep.subr.mxu0 0.0
    %6683 = vmatpush1.msra.mxu0 0.0
    %6684 = vmatprep.subr.mxu0 0.0
    %6685 = vmatpush1.msra.mxu0 0.0
    %6686 = vmatprep.subr.mxu0 0.0
    %6687 = vmatpush1.msra.mxu0 0.0
    %6688 = vmatprep.subr.mxu0 0.0
    %6689 = vmatpush1.msra.mxu0 0.0
    %6690 = vmatprep.subr.mxu0 0.0
    %6691 = vmatpush1.msra.mxu0 0.0
    %6692 = vmatprep.subr.mxu0 0.0
    %6693 = vmatpush1.msra.mxu0 0.0
    %6694 = vmatprep.subr.mxu0 0.0
    %6695 = vmatpush1.msra.mxu0 0.0
    %6696 = vmatprep.subr.mxu0 0.0
    %6697 = vmatpush1.msra.mxu0 0.0
    %6698 = vmatprep.mubr.f32.mxu0 0.0
    %6699 = vmatmul.mubr.f32.gmra.mrb[0].mxu0 %v6348
    %v6700 = vpop.f32.mrb[0].mxu0
    %v6701 = vadd.f32 0.0, %v6700
    %v6702 = vpop.f32.mrb[0].mxu0
    %6703 = vdwg.mxu0
    %v6704 = vadd.f32 %v6299, %v6417
    %v6705 = vadd.f32 %v6300, %v6419
    %v6706 = vadd.f32 %v6301, %v6488
    %v6707 = vadd.f32 %v6302, %v6490
    %v6708 = vadd.f32 %v6303, %v6559
    %v6709 = vadd.f32 %v6304, %v6561
    %v6710 = vadd.f32 %v6305, %v6630
    %v6711 = vadd.f32 %v6306, %v6632
    %v6712 = vadd.f32 %v6307, %v6701
    %v6713 = vld [vmem:[%s1 + $0x80] sm:$0xff]
    %6714 = vrot.lane.b32.xlu0 %v3915, 63
    %v6715 = vpop.permute.xlu0 %6714
    %6716 = vrot.lane.b32.xlu0 %v3916, 63
    %v6717 = vpop.permute.xlu0 %6716
    %6718 = vrot.lane.b32.xlu0 %v3917, 63
    %v6719 = vpop.permute.xlu0 %6718
    %6720 = vrot.lane.b32.xlu0 %v3918, 63
    %v6721 = vpop.permute.xlu0 %6720
    %6722 = vrot.lane.b32.xlu0 %v3919, 63
    %v6723 = vpop.permute.xlu0 %6722
    %6724 = vrot.lane.b32.xlu0 %v3920, 63
    %v6725 = vpop.permute.xlu0 %6724
    %6726 = vrot.lane.b32.xlu0 %v3921, 63
    %v6727 = vpop.permute.xlu0 %6726
    %6728 = vrot.lane.b32.xlu0 %v3922, 63
    %v6729 = vpop.permute.xlu0 %6728
    %6730 = vrot.lane.b32.xlu0 %v3923, 63
    %v6731 = vpop.permute.xlu0 %6730
    %6732 = vrot.lane.b32.xlu0 %v3925, 63
    %v6733 = vpop.permute.xlu0 %6732
    %v6734 = vsel %vm2893, %v6715, %v6717
    %v6735 = vsel %vm2893, %v6717, %v6719
    %v6736 = vsel %vm2893, %v6719, %v6721
    %v6737 = vsel %vm2893, %v6721, %v6723
    %v6738 = vsel %vm2893, %v6723, %v6725
    %v6739 = vsel %vm2893, %v6725, %v6727
    %v6740 = vsel %vm2893, %v6727, %v6729
    %v6741 = vsel %vm2893, %v6729, %v6731
    %v6742 = vsel %vm2893, %v6731, %v6733
    %v6753 = vsel %vm83, %v6713, 0
    %6755 = vmatprep.subr.mxu0 %v6735
    %6756 = vmatpush1.msra.mxu0 %v6734
    %6757 = vmatprep.subr.mxu0 0.0
    %6758 = vmatpush1.msra.mxu0 0.0
    %6759 = vmatprep.subr.mxu0 0.0
    %6760 = vmatpush1.msra.mxu0 0.0
    %6761 = vmatprep.subr.mxu0 0.0
    %6762 = vmatpush1.msra.mxu0 0.0
    %6763 = vmatprep.subr.mxu0 0.0
    %6764 = vmatpush1.msra.mxu0 0.0
    %6765 = vmatprep.subr.mxu0 0.0
    %6766 = vmatpush1.msra.mxu0 0.0
    %6767 = vmatprep.subr.mxu0 0.0
    %6768 = vmatpush1.msra.mxu0 0.0
    %6769 = vmatprep.subr.mxu0 0.0
    %6770 = vmatpush1.msra.mxu0 0.0
    %6771 = vmatprep.subr.mxu0 0.0
    %6772 = vmatpush1.msra.mxu0 0.0
    %6773 = vmatprep.subr.mxu0 0.0
    %6774 = vmatpush1.msra.mxu0 0.0
    %6775 = vmatprep.subr.mxu0 0.0
    %6776 = vmatpush1.msra.mxu0 0.0
    %6777 = vmatprep.subr.mxu0 0.0
    %6778 = vmatpush1.msra.mxu0 0.0
    %6779 = vmatprep.subr.mxu0 0.0
    %6780 = vmatpush1.msra.mxu0 0.0
    %6781 = vmatprep.subr.mxu0 0.0
    %6782 = vmatpush1.msra.mxu0 0.0
    %6783 = vmatprep.subr.mxu0 0.0
    %6784 = vmatpush1.msra.mxu0 0.0
    %6785 = vmatprep.subr.mxu0 0.0
    %6786 = vmatpush1.msra.mxu0 0.0
    %6787 = vmatprep.subr.mxu0 0.0
    %6788 = vmatpush1.msra.mxu0 0.0
    %6789 = vmatprep.subr.mxu0 0.0
    %6790 = vmatpush1.msra.mxu0 0.0
    %6791 = vmatprep.subr.mxu0 0.0
    %6792 = vmatpush1.msra.mxu0 0.0
    %6793 = vmatprep.subr.mxu0 0.0
    %6794 = vmatpush1.msra.mxu0 0.0
    %6795 = vmatprep.subr.mxu0 0.0
    %6796 = vmatpush1.msra.mxu0 0.0
    %6797 = vmatprep.subr.mxu0 0.0
    %6798 = vmatpush1.msra.mxu0 0.0
    %6799 = vmatprep.subr.mxu0 0.0
    %6800 = vmatpush1.msra.mxu0 0.0
    %6801 = vmatprep.subr.mxu0 0.0
    %6802 = vmatpush1.msra.mxu0 0.0
    %6803 = vmatprep.subr.mxu0 0.0
    %6804 = vmatpush1.msra.mxu0 0.0
    %6805 = vmatprep.subr.mxu0 0.0
    %6806 = vmatpush1.msra.mxu0 0.0
    %6807 = vmatprep.subr.mxu0 0.0
    %6808 = vmatpush1.msra.mxu0 0.0
    %6809 = vmatprep.subr.mxu0 0.0
    %6810 = vmatpush1.msra.mxu0 0.0
    %6811 = vmatprep.subr.mxu0 0.0
    %6812 = vmatpush1.msra.mxu0 0.0
    %6813 = vmatprep.subr.mxu0 0.0
    %6814 = vmatpush1.msra.mxu0 0.0
    %6815 = vmatprep.subr.mxu0 0.0
    %6816 = vmatpush1.msra.mxu0 0.0
    %6817 = vmatprep.subr.mxu0 0.0
    %6818 = vmatpush1.msra.mxu0 0.0
    %6819 = vmatprep.mubr.f32.mxu0 0.0
    %6820 = vmatmul.mubr.f32.gmra.mrb[0].mxu0 %v6753
    %v6821 = vpop.f32.mrb[0].mxu0
    %v6822 = vadd.f32 0.0, %v6821
    %v6823 = vpop.f32.mrb[0].mxu0
    %v6824 = vadd.f32 0.0, %v6823
    %6825 = vdwg.mxu0
    %6826 = vmatprep.subr.mxu0 %v6737
    %6827 = vmatpush1.msra.mxu0 %v6736
    %6828 = vmatprep.subr.mxu0 0.0
    %6829 = vmatpush1.msra.mxu0 0.0
    %6830 = vmatprep.subr.mxu0 0.0
    %6831 = vmatpush1.msra.mxu0 0.0
    %6832 = vmatprep.subr.mxu0 0.0
    %6833 = vmatpush1.msra.mxu0 0.0
    %6834 = vmatprep.subr.mxu0 0.0
    %6835 = vmatpush1.msra.mxu0 0.0
    %6836 = vmatprep.subr.mxu0 0.0
    %6837 = vmatpush1.msra.mxu0 0.0
    %6838 = vmatprep.subr.mxu0 0.0
    %6839 = vmatpush1.msra.mxu0 0.0
    %6840 = vmatprep.subr.mxu0 0.0
    %6841 = vmatpush1.msra.mxu0 0.0
    %6842 = vmatprep.subr.mxu0 0.0
    %6843 = vmatpush1.msra.mxu0 0.0
    %6844 = vmatprep.subr.mxu0 0.0
    %6845 = vmatpush1.msra.mxu0 0.0
    %6846 = vmatprep.subr.mxu0 0.0
    %6847 = vmatpush1.msra.mxu0 0.0
    %6848 = vmatprep.subr.mxu0 0.0
    %6849 = vmatpush1.msra.mxu0 0.0
    %6850 = vmatprep.subr.mxu0 0.0
    %6851 = vmatpush1.msra.mxu0 0.0
    %6852 = vmatprep.subr.mxu0 0.0
    %6853 = vmatpush1.msra.mxu0 0.0
    %6854 = vmatprep.subr.mxu0 0.0
    %6855 = vmatpush1.msra.mxu0 0.0
    %6856 = vmatprep.subr.mxu0 0.0
    %6857 = vmatpush1.msra.mxu0 0.0
    %6858 = vmatprep.subr.mxu0 0.0
    %6859 = vmatpush1.msra.mxu0 0.0
    %6860 = vmatprep.subr.mxu0 0.0
    %6861 = vmatpush1.msra.mxu0 0.0
    %6862 = vmatprep.subr.mxu0 0.0
    %6863 = vmatpush1.msra.mxu0 0.0
    %6864 = vmatprep.subr.mxu0 0.0
    %6865 = vmatpush1.msra.mxu0 0.0
    %6866 = vmatprep.subr.mxu0 0.0
    %6867 = vmatpush1.msra.mxu0 0.0
    %6868 = vmatprep.subr.mxu0 0.0
    %6869 = vmatpush1.msra.mxu0 0.0
    %6870 = vmatprep.subr.mxu0 0.0
    %6871 = vmatpush1.msra.mxu0 0.0
    %6872 = vmatprep.subr.mxu0 0.0
    %6873 = vmatpush1.msra.mxu0 0.0
    %6874 = vmatprep.subr.mxu0 0.0
    %6875 = vmatpush1.msra.mxu0 0.0
    %6876 = vmatprep.subr.mxu0 0.0
    %6877 = vmatpush1.msra.mxu0 0.0
    %6878 = vmatprep.subr.mxu0 0.0
    %6879 = vmatpush1.msra.mxu0 0.0
    %6880 = vmatprep.subr.mxu0 0.0
    %6881 = vmatpush1.msra.mxu0 0.0
    %6882 = vmatprep.subr.mxu0 0.0
    %6883 = vmatpush1.msra.mxu0 0.0
    %6884 = vmatprep.subr.mxu0 0.0
    %6885 = vmatpush1.msra.mxu0 0.0
    %6886 = vmatprep.subr.mxu0 0.0
    %6887 = vmatpush1.msra.mxu0 0.0
    %6888 = vmatprep.subr.mxu0 0.0
    %6889 = vmatpush1.msra.mxu0 0.0
    %6890 = vmatprep.mubr.f32.mxu0 0.0
    %6891 = vmatmul.mubr.f32.gmra.mrb[0].mxu0 %v6753
    %v6892 = vpop.f32.mrb[0].mxu0
    %v6893 = vadd.f32 0.0, %v6892
    %v6894 = vpop.f32.mrb[0].mxu0
    %v6895 = vadd.f32 0.0, %v6894
    %6896 = vdwg.mxu0
    %6897 = vmatprep.subr.mxu0 %v6739
    %6898 = vmatpush1.msra.mxu0 %v6738
    %6899 = vmatprep.subr.mxu0 0.0
    %6900 = vmatpush1.msra.mxu0 0.0
    %6901 = vmatprep.subr.mxu0 0.0
    %6902 = vmatpush1.msra.mxu0 0.0
    %6903 = vmatprep.subr.mxu0 0.0
    %6904 = vmatpush1.msra.mxu0 0.0
    %6905 = vmatprep.subr.mxu0 0.0
    %6906 = vmatpush1.msra.mxu0 0.0
    %6907 = vmatprep.subr.mxu0 0.0
    %6908 = vmatpush1.msra.mxu0 0.0
    %6909 = vmatprep.subr.mxu0 0.0
    %6910 = vmatpush1.msra.mxu0 0.0
    %6911 = vmatprep.subr.mxu0 0.0
    %6912 = vmatpush1.msra.mxu0 0.0
    %6913 = vmatprep.subr.mxu0 0.0
    %6914 = vmatpush1.msra.mxu0 0.0
    %6915 = vmatprep.subr.mxu0 0.0
    %6916 = vmatpush1.msra.mxu0 0.0
    %6917 = vmatprep.subr.mxu0 0.0
    %6918 = vmatpush1.msra.mxu0 0.0
    %6919 = vmatprep.subr.mxu0 0.0
    %6920 = vmatpush1.msra.mxu0 0.0
    %6921 = vmatprep.subr.mxu0 0.0
    %6922 = vmatpush1.msra.mxu0 0.0
    %6923 = vmatprep.subr.mxu0 0.0
    %6924 = vmatpush1.msra.mxu0 0.0
    %6925 = vmatprep.subr.mxu0 0.0
    %6926 = vmatpush1.msra.mxu0 0.0
    %6927 = vmatprep.subr.mxu0 0.0
    %6928 = vmatpush1.msra.mxu0 0.0
    %6929 = vmatprep.subr.mxu0 0.0
    %6930 = vmatpush1.msra.mxu0 0.0
    %6931 = vmatprep.subr.mxu0 0.0
    %6932 = vmatpush1.msra.mxu0 0.0
    %6933 = vmatprep.subr.mxu0 0.0
    %6934 = vmatpush1.msra.mxu0 0.0
    %6935 = vmatprep.subr.mxu0 0.0
    %6936 = vmatpush1.msra.mxu0 0.0
    %6937 = vmatprep.subr.mxu0 0.0
    %6938 = vmatpush1.msra.mxu0 0.0
    %6939 = vmatprep.subr.mxu0 0.0
    %6940 = vmatpush1.msra.mxu0 0.0
    %6941 = vmatprep.subr.mxu0 0.0
    %6942 = vmatpush1.msra.mxu0 0.0
    %6943 = vmatprep.subr.mxu0 0.0
    %6944 = vmatpush1.msra.mxu0 0.0
    %6945 = vmatprep.subr.mxu0 0.0
    %6946 = vmatpush1.msra.mxu0 0.0
    %6947 = vmatprep.subr.mxu0 0.0
    %6948 = vmatpush1.msra.mxu0 0.0
    %6949 = vmatprep.subr.mxu0 0.0
    %6950 = vmatpush1.msra.mxu0 0.0
    %6951 = vmatprep.subr.mxu0 0.0
    %6952 = vmatpush1.msra.mxu0 0.0
    %6953 = vmatprep.subr.mxu0 0.0
    %6954 = vmatpush1.msra.mxu0 0.0
    %6955 = vmatprep.subr.mxu0 0.0
    %6956 = vmatpush1.msra.mxu0 0.0
    %6957 = vmatprep.subr.mxu0 0.0
    %6958 = vmatpush1.msra.mxu0 0.0
    %6959 = vmatprep.subr.mxu0 0.0
    %6960 = vmatpush1.msra.mxu0 0.0
    %6961 = vmatprep.mubr.f32.mxu0 0.0
    %6962 = vmatmul.mubr.f32.gmra.mrb[0].mxu0 %v6753
    %v6963 = vpop.f32.mrb[0].mxu0
    %v6964 = vadd.f32 0.0, %v6963
    %v6965 = vpop.f32.mrb[0].mxu0
    %v6966 = vadd.f32 0.0, %v6965
    %6967 = vdwg.mxu0
    %6968 = vmatprep.subr.mxu0 %v6741
    %6969 = vmatpush1.msra.mxu0 %v6740
    %6970 = vmatprep.subr.mxu0 0.0
    %6971 = vmatpush1.msra.mxu0 0.0
    %6972 = vmatprep.subr.mxu0 0.0
    %6973 = vmatpush1.msra.mxu0 0.0
    %6974 = vmatprep.subr.mxu0 0.0
    %6975 = vmatpush1.msra.mxu0 0.0
    %6976 = vmatprep.subr.mxu0 0.0
    %6977 = vmatpush1.msra.mxu0 0.0
    %6978 = vmatprep.subr.mxu0 0.0
    %6979 = vmatpush1.msra.mxu0 0.0
    %6980 = vmatprep.subr.mxu0 0.0
    %6981 = vmatpush1.msra.mxu0 0.0
    %6982 = vmatprep.subr.mxu0 0.0
    %6983 = vmatpush1.msra.mxu0 0.0
    %6984 = vmatprep.subr.mxu0 0.0
    %6985 = vmatpush1.msra.mxu0 0.0
    %6986 = vmatprep.subr.mxu0 0.0
    %6987 = vmatpush1.msra.mxu0 0.0
    %6988 = vmatprep.subr.mxu0 0.0
    %6989 = vmatpush1.msra.mxu0 0.0
    %6990 = vmatprep.subr.mxu0 0.0
    %6991 = vmatpush1.msra.mxu0 0.0
    %6992 = vmatprep.subr.mxu0 0.0
    %6993 = vmatpush1.msra.mxu0 0.0
    %6994 = vmatprep.subr.mxu0 0.0
    %6995 = vmatpush1.msra.mxu0 0.0
    %6996 = vmatprep.subr.mxu0 0.0
    %6997 = vmatpush1.msra.mxu0 0.0
    %6998 = vmatprep.subr.mxu0 0.0
    %6999 = vmatpush1.msra.mxu0 0.0
    %7000 = vmatprep.subr.mxu0 0.0
    %7001 = vmatpush1.msra.mxu0 0.0
    %7002 = vmatprep.subr.mxu0 0.0
    %7003 = vmatpush1.msra.mxu0 0.0
    %7004 = vmatprep.subr.mxu0 0.0
    %7005 = vmatpush1.msra.mxu0 0.0
    %7006 = vmatprep.subr.mxu0 0.0
    %7007 = vmatpush1.msra.mxu0 0.0
    %7008 = vmatprep.subr.mxu0 0.0
    %7009 = vmatpush1.msra.mxu0 0.0
    %7010 = vmatprep.subr.mxu0 0.0
    %7011 = vmatpush1.msra.mxu0 0.0
    %7012 = vmatprep.subr.mxu0 0.0
    %7013 = vmatpush1.msra.mxu0 0.0
    %7014 = vmatprep.subr.mxu0 0.0
    %7015 = vmatpush1.msra.mxu0 0.0
    %7016 = vmatprep.subr.mxu0 0.0
    %7017 = vmatpush1.msra.mxu0 0.0
    %7018 = vmatprep.subr.mxu0 0.0
    %7019 = vmatpush1.msra.mxu0 0.0
    %7020 = vmatprep.subr.mxu0 0.0
    %7021 = vmatpush1.msra.mxu0 0.0
    %7022 = vmatprep.subr.mxu0 0.0
    %7023 = vmatpush1.msra.mxu0 0.0
    %7024 = vmatprep.subr.mxu0 0.0
    %7025 = vmatpush1.msra.mxu0 0.0
    %7026 = vmatprep.subr.mxu0 0.0
    %7027 = vmatpush1.msra.mxu0 0.0
    %7028 = vmatprep.subr.mxu0 0.0
    %7029 = vmatpush1.msra.mxu0 0.0
    %7030 = vmatprep.subr.mxu0 0.0
    %7031 = vmatpush1.msra.mxu0 0.0
    %7032 = vmatprep.mubr.f32.mxu0 0.0
    %7033 = vmatmul.mubr.f32.gmra.mrb[0].mxu0 %v6753
    %v7034 = vpop.f32.mrb[0].mxu0
    %v7035 = vadd.f32 0.0, %v7034
    %v7036 = vpop.f32.mrb[0].mxu0
    %v7037 = vadd.f32 0.0, %v7036
    %7038 = vdwg.mxu0
    %7039 = vmatprep.subr.mxu0 0.0
    %7040 = vmatpush1.msra.mxu0 %v6742
    %7041 = vmatprep.subr.mxu0 0.0
    %7042 = vmatpush1.msra.mxu0 0.0
    %7043 = vmatprep.subr.mxu0 0.0
    %7044 = vmatpush1.msra.mxu0 0.0
    %7045 = vmatprep.subr.mxu0 0.0
    %7046 = vmatpush1.msra.mxu0 0.0
    %7047 = vmatprep.subr.mxu0 0.0
    %7048 = vmatpush1.msra.mxu0 0.0
    %7049 = vmatprep.subr.mxu0 0.0
    %7050 = vmatpush1.msra.mxu0 0.0
    %7051 = vmatprep.subr.mxu0 0.0
    %7052 = vmatpush1.msra.mxu0 0.0
    %7053 = vmatprep.subr.mxu0 0.0
    %7054 = vmatpush1.msra.mxu0 0.0
    %7055 = vmatprep.subr.mxu0 0.0
    %7056 = vmatpush1.msra.mxu0 0.0
    %7057 = vmatprep.subr.mxu0 0.0
    %7058 = vmatpush1.msra.mxu0 0.0
    %7059 = vmatprep.subr.mxu0 0.0
    %7060 = vmatpush1.msra.mxu0 0.0
    %7061 = vmatprep.subr.mxu0 0.0
    %7062 = vmatpush1.msra.mxu0 0.0
    %7063 = vmatprep.subr.mxu0 0.0
    %7064 = vmatpush1.msra.mxu0 0.0
    %7065 = vmatprep.subr.mxu0 0.0
    %7066 = vmatpush1.msra.mxu0 0.0
    %7067 = vmatprep.subr.mxu0 0.0
    %7068 = vmatpush1.msra.mxu0 0.0
    %7069 = vmatprep.subr.mxu0 0.0
    %7070 = vmatpush1.msra.mxu0 0.0
    %7071 = vmatprep.subr.mxu0 0.0
    %7072 = vmatpush1.msra.mxu0 0.0
    %7073 = vmatprep.subr.mxu0 0.0
    %7074 = vmatpush1.msra.mxu0 0.0
    %7075 = vmatprep.subr.mxu0 0.0
    %7076 = vmatpush1.msra.mxu0 0.0
    %7077 = vmatprep.subr.mxu0 0.0
    %7078 = vmatpush1.msra.mxu0 0.0
    %7079 = vmatprep.subr.mxu0 0.0
    %7080 = vmatpush1.msra.mxu0 0.0
    %7081 = vmatprep.subr.mxu0 0.0
    %7082 = vmatpush1.msra.mxu0 0.0
    %7083 = vmatprep.subr.mxu0 0.0
    %7084 = vmatpush1.msra.mxu0 0.0
    %7085 = vmatprep.subr.mxu0 0.0
    %7086 = vmatpush1.msra.mxu0 0.0
    %7087 = vmatprep.subr.mxu0 0.0
    %7088 = vmatpush1.msra.mxu0 0.0
    %7089 = vmatprep.subr.mxu0 0.0
    %7090 = vmatpush1.msra.mxu0 0.0
    %7091 = vmatprep.subr.mxu0 0.0
    %7092 = vmatpush1.msra.mxu0 0.0
    %7093 = vmatprep.subr.mxu0 0.0
    %7094 = vmatpush1.msra.mxu0 0.0
    %7095 = vmatprep.subr.mxu0 0.0
    %7096 = vmatpush1.msra.mxu0 0.0
    %7097 = vmatprep.subr.mxu0 0.0
    %7098 = vmatpush1.msra.mxu0 0.0
    %7099 = vmatprep.subr.mxu0 0.0
    %7100 = vmatpush1.msra.mxu0 0.0
    %7101 = vmatprep.subr.mxu0 0.0
    %7102 = vmatpush1.msra.mxu0 0.0
    %7103 = vmatprep.mubr.f32.mxu0 0.0
    %7104 = vmatmul.mubr.f32.gmra.mrb[0].mxu0 %v6753
    %v7105 = vpop.f32.mrb[0].mxu0
    %v7106 = vadd.f32 0.0, %v7105
    %v7107 = vpop.f32.mrb[0].mxu0
    %7108 = vdwg.mxu0
    %v7109 = vadd.f32 %v6704, %v6822
    %v7110 = vadd.f32 %v6705, %v6824
    %v7111 = vadd.f32 %v6706, %v6893
    %v7112 = vadd.f32 %v6707, %v6895
    %v7113 = vadd.f32 %v6708, %v6964
    %v7114 = vadd.f32 %v6709, %v6966
    %v7115 = vadd.f32 %v6710, %v7035
    %v7116 = vadd.f32 %v6711, %v7037
    %v7117 = vadd.f32 %v6712, %v7106
    %v7118 = vld [vmem:[%s1 + $0x88] sm:$0xff]
    %7119 = vrot.lane.b32.xlu0 %v3915, 62
    %v7120 = vpop.permute.xlu0 %7119
    %7121 = vrot.lane.b32.xlu0 %v3916, 62
    %v7122 = vpop.permute.xlu0 %7121
    %7123 = vrot.lane.b32.xlu0 %v3917, 62
    %v7124 = vpop.permute.xlu0 %7123
    %7125 = vrot.lane.b32.xlu0 %v3918, 62
    %v7126 = vpop.permute.xlu0 %7125
    %7127 = vrot.lane.b32.xlu0 %v3919, 62
    %v7128 = vpop.permute.xlu0 %7127
    %7129 = vrot.lane.b32.xlu0 %v3920, 62
    %v7130 = vpop.permute.xlu0 %7129
    %7131 = vrot.lane.b32.xlu0 %v3921, 62
    %v7132 = vpop.permute.xlu0 %7131
    %7133 = vrot.lane.b32.xlu0 %v3922, 62
    %v7134 = vpop.permute.xlu0 %7133
    %7135 = vrot.lane.b32.xlu0 %v3923, 62
    %v7136 = vpop.permute.xlu0 %7135
    %7137 = vrot.lane.b32.xlu0 %v3925, 62
    %v7138 = vpop.permute.xlu0 %7137
    %v7139 = vsel %vm3305, %v7120, %v7122
    %v7140 = vsel %vm3305, %v7122, %v7124
    %v7141 = vsel %vm3305, %v7124, %v7126
    %v7142 = vsel %vm3305, %v7126, %v7128
    %v7143 = vsel %vm3305, %v7128, %v7130
    %v7144 = vsel %vm3305, %v7130, %v7132
    %v7145 = vsel %vm3305, %v7132, %v7134
    %v7146 = vsel %vm3305, %v7134, %v7136
    %v7147 = vsel %vm3305, %v7136, %v7138
    %v7158 = vsel %vm83, %v7118, 0
    %7160 = vmatprep.subr.mxu0 %v7140
    %7161 = vmatpush1.msra.mxu0 %v7139
    %7162 = vmatprep.subr.mxu0 0.0
    %7163 = vmatpush1.msra.mxu0 0.0
    %7164 = vmatprep.subr.mxu0 0.0
    %7165 = vmatpush1.msra.mxu0 0.0
    %7166 = vmatprep.subr.mxu0 0.0
    %7167 = vmatpush1.msra.mxu0 0.0
    %7168 = vmatprep.subr.mxu0 0.0
    %7169 = vmatpush1.msra.mxu0 0.0
    %7170 = vmatprep.subr.mxu0 0.0
    %7171 = vmatpush1.msra.mxu0 0.0
    %7172 = vmatprep.subr.mxu0 0.0
    %7173 = vmatpush1.msra.mxu0 0.0
    %7174 = vmatprep.subr.mxu0 0.0
    %7175 = vmatpush1.msra.mxu0 0.0
    %7176 = vmatprep.subr.mxu0 0.0
    %7177 = vmatpush1.msra.mxu0 0.0
    %7178 = vmatprep.subr.mxu0 0.0
    %7179 = vmatpush1.msra.mxu0 0.0
    %7180 = vmatprep.subr.mxu0 0.0
    %7181 = vmatpush1.msra.mxu0 0.0
    %7182 = vmatprep.subr.mxu0 0.0
    %7183 = vmatpush1.msra.mxu0 0.0
    %7184 = vmatprep.subr.mxu0 0.0
    %7185 = vmatpush1.msra.mxu0 0.0
    %7186 = vmatprep.subr.mxu0 0.0
    %7187 = vmatpush1.msra.mxu0 0.0
    %7188 = vmatprep.subr.mxu0 0.0
    %7189 = vmatpush1.msra.mxu0 0.0
    %7190 = vmatprep.subr.mxu0 0.0
    %7191 = vmatpush1.msra.mxu0 0.0
    %7192 = vmatprep.subr.mxu0 0.0
    %7193 = vmatpush1.msra.mxu0 0.0
    %7194 = vmatprep.subr.mxu0 0.0
    %7195 = vmatpush1.msra.mxu0 0.0
    %7196 = vmatprep.subr.mxu0 0.0
    %7197 = vmatpush1.msra.mxu0 0.0
    %7198 = vmatprep.subr.mxu0 0.0
    %7199 = vmatpush1.msra.mxu0 0.0
    %7200 = vmatprep.subr.mxu0 0.0
    %7201 = vmatpush1.msra.mxu0 0.0
    %7202 = vmatprep.subr.mxu0 0.0
    %7203 = vmatpush1.msra.mxu0 0.0
    %7204 = vmatprep.subr.mxu0 0.0
    %7205 = vmatpush1.msra.mxu0 0.0
    %7206 = vmatprep.subr.mxu0 0.0
    %7207 = vmatpush1.msra.mxu0 0.0
    %7208 = vmatprep.subr.mxu0 0.0
    %7209 = vmatpush1.msra.mxu0 0.0
    %7210 = vmatprep.subr.mxu0 0.0
    %7211 = vmatpush1.msra.mxu0 0.0
    %7212 = vmatprep.subr.mxu0 0.0
    %7213 = vmatpush1.msra.mxu0 0.0
    %7214 = vmatprep.subr.mxu0 0.0
    %7215 = vmatpush1.msra.mxu0 0.0
    %7216 = vmatprep.subr.mxu0 0.0
    %7217 = vmatpush1.msra.mxu0 0.0
    %7218 = vmatprep.subr.mxu0 0.0
    %7219 = vmatpush1.msra.mxu0 0.0
    %7220 = vmatprep.subr.mxu0 0.0
    %7221 = vmatpush1.msra.mxu0 0.0
    %7222 = vmatprep.subr.mxu0 0.0
    %7223 = vmatpush1.msra.mxu0 0.0
    %7224 = vmatprep.mubr.f32.mxu0 0.0
    %7225 = vmatmul.mubr.f32.gmra.mrb[0].mxu0 %v7158
    %v7226 = vpop.f32.mrb[0].mxu0
    %v7227 = vadd.f32 0.0, %v7226
    %v7228 = vpop.f32.mrb[0].mxu0
    %v7229 = vadd.f32 0.0, %v7228
    %7230 = vdwg.mxu0
    %7231 = vmatprep.subr.mxu0 %v7142
    %7232 = vmatpush1.msra.mxu0 %v7141
    %7233 = vmatprep.subr.mxu0 0.0
    %7234 = vmatpush1.msra.mxu0 0.0
    %7235 = vmatprep.subr.mxu0 0.0
    %7236 = vmatpush1.msra.mxu0 0.0
    %7237 = vmatprep.subr.mxu0 0.0
    %7238 = vmatpush1.msra.mxu0 0.0
    %7239 = vmatprep.subr.mxu0 0.0
    %7240 = vmatpush1.msra.mxu0 0.0
    %7241 = vmatprep.subr.mxu0 0.0
    %7242 = vmatpush1.msra.mxu0 0.0
    %7243 = vmatprep.subr.mxu0 0.0
    %7244 = vmatpush1.msra.mxu0 0.0
    %7245 = vmatprep.subr.mxu0 0.0
    %7246 = vmatpush1.msra.mxu0 0.0
    %7247 = vmatprep.subr.mxu0 0.0
    %7248 = vmatpush1.msra.mxu0 0.0
    %7249 = vmatprep.subr.mxu0 0.0
    %7250 = vmatpush1.msra.mxu0 0.0
    %7251 = vmatprep.subr.mxu0 0.0
    %7252 = vmatpush1.msra.mxu0 0.0
    %7253 = vmatprep.subr.mxu0 0.0
    %7254 = vmatpush1.msra.mxu0 0.0
    %7255 = vmatprep.subr.mxu0 0.0
    %7256 = vmatpush1.msra.mxu0 0.0
    %7257 = vmatprep.subr.mxu0 0.0
    %7258 = vmatpush1.msra.mxu0 0.0
    %7259 = vmatprep.subr.mxu0 0.0
    %7260 = vmatpush1.msra.mxu0 0.0
    %7261 = vmatprep.subr.mxu0 0.0
    %7262 = vmatpush1.msra.mxu0 0.0
    %7263 = vmatprep.subr.mxu0 0.0
    %7264 = vmatpush1.msra.mxu0 0.0
    %7265 = vmatprep.subr.mxu0 0.0
    %7266 = vmatpush1.msra.mxu0 0.0
    %7267 = vmatprep.subr.mxu0 0.0
    %7268 = vmatpush1.msra.mxu0 0.0
    %7269 = vmatprep.subr.mxu0 0.0
    %7270 = vmatpush1.msra.mxu0 0.0
    %7271 = vmatprep.subr.mxu0 0.0
    %7272 = vmatpush1.msra.mxu0 0.0
    %7273 = vmatprep.subr.mxu0 0.0
    %7274 = vmatpush1.msra.mxu0 0.0
    %7275 = vmatprep.subr.mxu0 0.0
    %7276 = vmatpush1.msra.mxu0 0.0
    %7277 = vmatprep.subr.mxu0 0.0
    %7278 = vmatpush1.msra.mxu0 0.0
    %7279 = vmatprep.subr.mxu0 0.0
    %7280 = vmatpush1.msra.mxu0 0.0
    %7281 = vmatprep.subr.mxu0 0.0
    %7282 = vmatpush1.msra.mxu0 0.0
    %7283 = vmatprep.subr.mxu0 0.0
    %7284 = vmatpush1.msra.mxu0 0.0
    %7285 = vmatprep.subr.mxu0 0.0
    %7286 = vmatpush1.msra.mxu0 0.0
    %7287 = vmatprep.subr.mxu0 0.0
    %7288 = vmatpush1.msra.mxu0 0.0
    %7289 = vmatprep.subr.mxu0 0.0
    %7290 = vmatpush1.msra.mxu0 0.0
    %7291 = vmatprep.subr.mxu0 0.0
    %7292 = vmatpush1.msra.mxu0 0.0
    %7293 = vmatprep.subr.mxu0 0.0
    %7294 = vmatpush1.msra.mxu0 0.0
    %7295 = vmatprep.mubr.f32.mxu0 0.0
    %7296 = vmatmul.mubr.f32.gmra.mrb[0].mxu0 %v7158
    %v7297 = vpop.f32.mrb[0].mxu0
    %v7298 = vadd.f32 0.0, %v7297
    %v7299 = vpop.f32.mrb[0].mxu0
    %v7300 = vadd.f32 0.0, %v7299
    %7301 = vdwg.mxu0
    %7302 = vmatprep.subr.mxu0 %v7144
    %7303 = vmatpush1.msra.mxu0 %v7143
    %7304 = vmatprep.subr.mxu0 0.0
    %7305 = vmatpush1.msra.mxu0 0.0
    %7306 = vmatprep.subr.mxu0 0.0
    %7307 = vmatpush1.msra.mxu0 0.0
    %7308 = vmatprep.subr.mxu0 0.0
    %7309 = vmatpush1.msra.mxu0 0.0
    %7310 = vmatprep.subr.mxu0 0.0
    %7311 = vmatpush1.msra.mxu0 0.0
    %7312 = vmatprep.subr.mxu0 0.0
    %7313 = vmatpush1.msra.mxu0 0.0
    %7314 = vmatprep.subr.mxu0 0.0
    %7315 = vmatpush1.msra.mxu0 0.0
    %7316 = vmatprep.subr.mxu0 0.0
    %7317 = vmatpush1.msra.mxu0 0.0
    %7318 = vmatprep.subr.mxu0 0.0
    %7319 = vmatpush1.msra.mxu0 0.0
    %7320 = vmatprep.subr.mxu0 0.0
    %7321 = vmatpush1.msra.mxu0 0.0
    %7322 = vmatprep.subr.mxu0 0.0
    %7323 = vmatpush1.msra.mxu0 0.0
    %7324 = vmatprep.subr.mxu0 0.0
    %7325 = vmatpush1.msra.mxu0 0.0
    %7326 = vmatprep.subr.mxu0 0.0
    %7327 = vmatpush1.msra.mxu0 0.0
    %7328 = vmatprep.subr.mxu0 0.0
    %7329 = vmatpush1.msra.mxu0 0.0
    %7330 = vmatprep.subr.mxu0 0.0
    %7331 = vmatpush1.msra.mxu0 0.0
    %7332 = vmatprep.subr.mxu0 0.0
    %7333 = vmatpush1.msra.mxu0 0.0
    %7334 = vmatprep.subr.mxu0 0.0
    %7335 = vmatpush1.msra.mxu0 0.0
    %7336 = vmatprep.subr.mxu0 0.0
    %7337 = vmatpush1.msra.mxu0 0.0
    %7338 = vmatprep.subr.mxu0 0.0
    %7339 = vmatpush1.msra.mxu0 0.0
    %7340 = vmatprep.subr.mxu0 0.0
    %7341 = vmatpush1.msra.mxu0 0.0
    %7342 = vmatprep.subr.mxu0 0.0
    %7343 = vmatpush1.msra.mxu0 0.0
    %7344 = vmatprep.subr.mxu0 0.0
    %7345 = vmatpush1.msra.mxu0 0.0
    %7346 = vmatprep.subr.mxu0 0.0
    %7347 = vmatpush1.msra.mxu0 0.0
    %7348 = vmatprep.subr.mxu0 0.0
    %7349 = vmatpush1.msra.mxu0 0.0
    %7350 = vmatprep.subr.mxu0 0.0
    %7351 = vmatpush1.msra.mxu0 0.0
    %7352 = vmatprep.subr.mxu0 0.0
    %7353 = vmatpush1.msra.mxu0 0.0
    %7354 = vmatprep.subr.mxu0 0.0
    %7355 = vmatpush1.msra.mxu0 0.0
    %7356 = vmatprep.subr.mxu0 0.0
    %7357 = vmatpush1.msra.mxu0 0.0
    %7358 = vmatprep.subr.mxu0 0.0
    %7359 = vmatpush1.msra.mxu0 0.0
    %7360 = vmatprep.subr.mxu0 0.0
    %7361 = vmatpush1.msra.mxu0 0.0
    %7362 = vmatprep.subr.mxu0 0.0
    %7363 = vmatpush1.msra.mxu0 0.0
    %7364 = vmatprep.subr.mxu0 0.0
    %7365 = vmatpush1.msra.mxu0 0.0
    %7366 = vmatprep.mubr.f32.mxu0 0.0
    %7367 = vmatmul.mubr.f32.gmra.mrb[0].mxu0 %v7158
    %v7368 = vpop.f32.mrb[0].mxu0
    %v7369 = vadd.f32 0.0, %v7368
    %v7370 = vpop.f32.mrb[0].mxu0
    %v7371 = vadd.f32 0.0, %v7370
    %7372 = vdwg.mxu0
    %7373 = vmatprep.subr.mxu0 %v7146
    %7374 = vmatpush1.msra.mxu0 %v7145
    %7375 = vmatprep.subr.mxu0 0.0
    %7376 = vmatpush1.msra.mxu0 0.0
    %7377 = vmatprep.subr.mxu0 0.0
    %7378 = vmatpush1.msra.mxu0 0.0
    %7379 = vmatprep.subr.mxu0 0.0
    %7380 = vmatpush1.msra.mxu0 0.0
    %7381 = vmatprep.subr.mxu0 0.0
    %7382 = vmatpush1.msra.mxu0 0.0
    %7383 = vmatprep.subr.mxu0 0.0
    %7384 = vmatpush1.msra.mxu0 0.0
    %7385 = vmatprep.subr.mxu0 0.0
    %7386 = vmatpush1.msra.mxu0 0.0
    %7387 = vmatprep.subr.mxu0 0.0
    %7388 = vmatpush1.msra.mxu0 0.0
    %7389 = vmatprep.subr.mxu0 0.0
    %7390 = vmatpush1.msra.mxu0 0.0
    %7391 = vmatprep.subr.mxu0 0.0
    %7392 = vmatpush1.msra.mxu0 0.0
    %7393 = vmatprep.subr.mxu0 0.0
    %7394 = vmatpush1.msra.mxu0 0.0
    %7395 = vmatprep.subr.mxu0 0.0
    %7396 = vmatpush1.msra.mxu0 0.0
    %7397 = vmatprep.subr.mxu0 0.0
    %7398 = vmatpush1.msra.mxu0 0.0
    %7399 = vmatprep.subr.mxu0 0.0
    %7400 = vmatpush1.msra.mxu0 0.0
    %7401 = vmatprep.subr.mxu0 0.0
    %7402 = vmatpush1.msra.mxu0 0.0
    %7403 = vmatprep.subr.mxu0 0.0
    %7404 = vmatpush1.msra.mxu0 0.0
    %7405 = vmatprep.subr.mxu0 0.0
    %7406 = vmatpush1.msra.mxu0 0.0
    %7407 = vmatprep.subr.mxu0 0.0
    %7408 = vmatpush1.msra.mxu0 0.0
    %7409 = vmatprep.subr.mxu0 0.0
    %7410 = vmatpush1.msra.mxu0 0.0
    %7411 = vmatprep.subr.mxu0 0.0
    %7412 = vmatpush1.msra.mxu0 0.0
    %7413 = vmatprep.subr.mxu0 0.0
    %7414 = vmatpush1.msra.mxu0 0.0
    %7415 = vmatprep.subr.mxu0 0.0
    %7416 = vmatpush1.msra.mxu0 0.0
    %7417 = vmatprep.subr.mxu0 0.0
    %7418 = vmatpush1.msra.mxu0 0.0
    %7419 = vmatprep.subr.mxu0 0.0
    %7420 = vmatpush1.msra.mxu0 0.0
    %7421 = vmatprep.subr.mxu0 0.0
    %7422 = vmatpush1.msra.mxu0 0.0
    %7423 = vmatprep.subr.mxu0 0.0
    %7424 = vmatpush1.msra.mxu0 0.0
    %7425 = vmatprep.subr.mxu0 0.0
    %7426 = vmatpush1.msra.mxu0 0.0
    %7427 = vmatprep.subr.mxu0 0.0
    %7428 = vmatpush1.msra.mxu0 0.0
    %7429 = vmatprep.subr.mxu0 0.0
    %7430 = vmatpush1.msra.mxu0 0.0
    %7431 = vmatprep.subr.mxu0 0.0
    %7432 = vmatpush1.msra.mxu0 0.0
    %7433 = vmatprep.subr.mxu0 0.0
    %7434 = vmatpush1.msra.mxu0 0.0
    %7435 = vmatprep.subr.mxu0 0.0
    %7436 = vmatpush1.msra.mxu0 0.0
    %7437 = vmatprep.mubr.f32.mxu0 0.0
    %7438 = vmatmul.mubr.f32.gmra.mrb[0].mxu0 %v7158
    %v7439 = vpop.f32.mrb[0].mxu0
    %v7440 = vadd.f32 0.0, %v7439
    %v7441 = vpop.f32.mrb[0].mxu0
    %v7442 = vadd.f32 0.0, %v7441
    %7443 = vdwg.mxu0
    %7444 = vmatprep.subr.mxu0 0.0
    %7445 = vmatpush1.msra.mxu0 %v7147
    %7446 = vmatprep.subr.mxu0 0.0
    %7447 = vmatpush1.msra.mxu0 0.0
    %7448 = vmatprep.subr.mxu0 0.0
    %7449 = vmatpush1.msra.mxu0 0.0
    %7450 = vmatprep.subr.mxu0 0.0
    %7451 = vmatpush1.msra.mxu0 0.0
    %7452 = vmatprep.subr.mxu0 0.0
    %7453 = vmatpush1.msra.mxu0 0.0
    %7454 = vmatprep.subr.mxu0 0.0
    %7455 = vmatpush1.msra.mxu0 0.0
    %7456 = vmatprep.subr.mxu0 0.0
    %7457 = vmatpush1.msra.mxu0 0.0
    %7458 = vmatprep.subr.mxu0 0.0
    %7459 = vmatpush1.msra.mxu0 0.0
    %7460 = vmatprep.subr.mxu0 0.0
    %7461 = vmatpush1.msra.mxu0 0.0
    %7462 = vmatprep.subr.mxu0 0.0
    %7463 = vmatpush1.msra.mxu0 0.0
    %7464 = vmatprep.subr.mxu0 0.0
    %7465 = vmatpush1.msra.mxu0 0.0
    %7466 = vmatprep.subr.mxu0 0.0
    %7467 = vmatpush1.msra.mxu0 0.0
    %7468 = vmatprep.subr.mxu0 0.0
    %7469 = vmatpush1.msra.mxu0 0.0
    %7470 = vmatprep.subr.mxu0 0.0
    %7471 = vmatpush1.msra.mxu0 0.0
    %7472 = vmatprep.subr.mxu0 0.0
    %7473 = vmatpush1.msra.mxu0 0.0
    %7474 = vmatprep.subr.mxu0 0.0
    %7475 = vmatpush1.msra.mxu0 0.0
    %7476 = vmatprep.subr.mxu0 0.0
    %7477 = vmatpush1.msra.mxu0 0.0
    %7478 = vmatprep.subr.mxu0 0.0
    %7479 = vmatpush1.msra.mxu0 0.0
    %7480 = vmatprep.subr.mxu0 0.0
    %7481 = vmatpush1.msra.mxu0 0.0
    %7482 = vmatprep.subr.mxu0 0.0
    %7483 = vmatpush1.msra.mxu0 0.0
    %7484 = vmatprep.subr.mxu0 0.0
    %7485 = vmatpush1.msra.mxu0 0.0
    %7486 = vmatprep.subr.mxu0 0.0
    %7487 = vmatpush1.msra.mxu0 0.0
    %7488 = vmatprep.subr.mxu0 0.0
    %7489 = vmatpush1.msra.mxu0 0.0
    %7490 = vmatprep.subr.mxu0 0.0
    %7491 = vmatpush1.msra.mxu0 0.0
    %7492 = vmatprep.subr.mxu0 0.0
    %7493 = vmatpush1.msra.mxu0 0.0
    %7494 = vmatprep.subr.mxu0 0.0
    %7495 = vmatpush1.msra.mxu0 0.0
    %7496 = vmatprep.subr.mxu0 0.0
    %7497 = vmatpush1.msra.mxu0 0.0
    %7498 = vmatprep.subr.mxu0 0.0
    %7499 = vmatpush1.msra.mxu0 0.0
    %7500 = vmatprep.subr.mxu0 0.0
    %7501 = vmatpush1.msra.mxu0 0.0
    %7502 = vmatprep.subr.mxu0 0.0
    %7503 = vmatpush1.msra.mxu0 0.0
    %7504 = vmatprep.subr.mxu0 0.0
    %7505 = vmatpush1.msra.mxu0 0.0
    %7506 = vmatprep.subr.mxu0 0.0
    %7507 = vmatpush1.msra.mxu0 0.0
    %7508 = vmatprep.mubr.f32.mxu0 0.0
    %7509 = vmatmul.mubr.f32.gmra.mrb[0].mxu0 %v7158
    %v7510 = vpop.f32.mrb[0].mxu0
    %v7511 = vadd.f32 0.0, %v7510
    %v7512 = vpop.f32.mrb[0].mxu0
    %7513 = vdwg.mxu0
    %v7514 = vadd.f32 %v7109, %v7227
    %v7515 = vadd.f32 %v7110, %v7229
    %v7516 = vadd.f32 %v7111, %v7298
    %v7517 = vadd.f32 %v7112, %v7300
    %v7518 = vadd.f32 %v7113, %v7369
    %v7519 = vadd.f32 %v7114, %v7371
    %v7520 = vadd.f32 %v7115, %v7440
    %v7521 = vadd.f32 %v7116, %v7442
    %v7522 = vadd.f32 %v7117, %v7511
    %7523 = vrot.lane.b32.xlu0 %v3699, 62
    %v7524 = vpop.permute.xlu0 %7523
    %7525 = vrot.lane.b32.xlu0 %v3703, 62
    %v7526 = vpop.permute.xlu0 %7525
    %7527 = vrot.lane.b32.xlu0 %v3707, 62
    %v7528 = vpop.permute.xlu0 %7527
    %7529 = vrot.lane.b32.xlu0 %v3711, 62
    %v7530 = vpop.permute.xlu0 %7529
    %7531 = vrot.lane.b32.xlu0 %v3715, 62
    %v7532 = vpop.permute.xlu0 %7531
    %7533 = vrot.lane.b32.xlu0 %v3719, 62
    %v7534 = vpop.permute.xlu0 %7533
    %7535 = vrot.lane.b32.xlu0 %v3723, 62
    %v7536 = vpop.permute.xlu0 %7535
    %7537 = vrot.lane.b32.xlu0 %v3727, 62
    %v7538 = vpop.permute.xlu0 %7537
    %7539 = vrot.lane.b32.xlu0 %v3731, 62
    %v7540 = vpop.permute.xlu0 %7539
    %7541 = vrot.lane.b32.xlu0 %v3735, 62
    %v7542 = vpop.permute.xlu0 %7541
    %v7543 = vsel %vm3305, %v7524, %v7526
    %v7544 = vsel %vm3305, %v7526, %v7528
    %v7545 = vsel %vm3305, %v7528, %v7530
    %v7546 = vsel %vm3305, %v7530, %v7532
    %v7547 = vsel %vm3305, %v7532, %v7534
    %v7548 = vsel %vm3305, %v7534, %v7536
    %v7549 = vsel %vm3305, %v7536, %v7538
    %v7550 = vsel %vm3305, %v7538, %v7540
    %v7551 = vsel %vm3305, %v7540, %v7542
    %v7561 = vmul.f32 %v7514, %v7543
    %v7562 = vmul.f32 %v7515, %v7544
    %v7563 = vmul.f32 %v7516, %v7545
    %v7564 = vmul.f32 %v7517, %v7546
    %v7565 = vmul.f32 %v7518, %v7547
    %v7566 = vmul.f32 %v7519, %v7548
    %v7567 = vmul.f32 %v7520, %v7549
    %v7568 = vmul.f32 %v7521, %v7550
    %v7569 = vmul.f32 %v7522, %v7551
    %v7570 = vadd.f32 %v7561, %v7562
    %v7571 = vadd.f32 %v7570, %v7563
    %v7572 = vadd.f32 %v7571, %v7564
    %v7573 = vadd.f32 %v7572, %v7565
    %v7574 = vadd.f32 %v7573, %v7566
    %v7575 = vadd.f32 %v7574, %v7567
    %v7576 = vadd.f32 %v7575, %v7568
    %v7577 = vadd.f32 %v7576, %v7569
    %7578 = vadd.xlane.f32.xlu0 %v7577
    %v7579 = vpop.xlane.xlu0 %7578
    %v7580 = vmul.f32 %v7561, %v7514
    %v7581 = vmul.f32 %v7562, %v7515
    %v7582 = vmul.f32 %v7563, %v7516
    %v7583 = vmul.f32 %v7564, %v7517
    %v7584 = vmul.f32 %v7565, %v7518
    %v7585 = vmul.f32 %v7566, %v7519
    %v7586 = vmul.f32 %v7567, %v7520
    %v7587 = vmul.f32 %v7568, %v7521
    %v7588 = vmul.f32 %v7569, %v7522
    %v7589 = vadd.f32 %v7580, %v7581
    %v7590 = vadd.f32 %v7589, %v7582
    %v7591 = vadd.f32 %v7590, %v7583
    %v7592 = vadd.f32 %v7591, %v7584
    %v7593 = vadd.f32 %v7592, %v7585
    %v7594 = vadd.f32 %v7593, %v7586
    %v7595 = vadd.f32 %v7594, %v7587
    %v7596 = vadd.f32 %v7595, %v7588
    %7597 = vadd.xlane.f32.xlu0 %v7596
    %v7598 = vpop.xlane.xlu0 %7597
    %v7599 = vmul.f32 %v7579, 0.001953125
    %v7600 = vmul.f32 %v7598, 0.001953125
    %v7601 = vmul.f32 %v7599, %v7599
    %v7602 = vsub.f32 %v7600, %v7601
    %v7603 = vld [vmem:[%s2] sm:$0xff]
    %v7604 = vadd.f32 %v7602, 1e-05
    %v7605 = vrsqrt.pop %v7604
    %v7606 = vmul.f32 %v7603, %v7605
    %v7607 = vmul.f32 %v7599, %v7606
    %7609 = vrot.lane.b32.xlu0 %v7607, 1
    %v7610 = vpop.permute.xlu0 %7609
    %v7612 = vsub.f32 %v7603, %v7610
    %7614 = vset.pattern.permute.xlu0 2
    %7615 = vperm.xlu0 %7614, %v7606
    %v7616 = vpop.permute.xlu0 %7615
    %v7618 = vmul.f32 %v7514, %v7616
    %v7619 = vmul.f32 %v7515, %v7616
    %v7620 = vmul.f32 %v7516, %v7616
    %v7621 = vmul.f32 %v7517, %v7616
    %v7622 = vmul.f32 %v7518, %v7616
    %v7623 = vmul.f32 %v7519, %v7616
    %v7624 = vmul.f32 %v7520, %v7616
    %v7625 = vmul.f32 %v7521, %v7616
    %v7626 = vmul.f32 %v7522, %v7616
    %7628 = vset.pattern.permute.xlu0 3
    %7629 = vperm.xlu0 %7628, %v7612
    %v7630 = vpop.permute.xlu0 %7629
    %v7632 = vadd.f32 %v7618, %v7630
    %v7633 = vadd.f32 %v7619, %v7630
    %v7634 = vadd.f32 %v7620, %v7630
    %v7635 = vadd.f32 %v7621, %v7630
    %v7636 = vadd.f32 %v7622, %v7630
    %v7637 = vadd.f32 %v7623, %v7630
    %v7638 = vadd.f32 %v7624, %v7630
    %v7639 = vadd.f32 %v7625, %v7630
    %v7640 = vadd.f32 %v7626, %v7630
    %vm7641 = vcmp.gt.f32.partialorder %v7632, 0.0
    %vm7642 = vcmp.gt.f32.partialorder %v7633, 0.0
    %vm7643 = vcmp.gt.f32.partialorder %v7634, 0.0
    %vm7644 = vcmp.gt.f32.partialorder %v7635, 0.0
    %vm7645 = vcmp.gt.f32.partialorder %v7636, 0.0
    %vm7646 = vcmp.gt.f32.partialorder %v7637, 0.0
    %vm7647 = vcmp.gt.f32.partialorder %v7638, 0.0
    %vm7648 = vcmp.gt.f32.partialorder %v7639, 0.0
    %vm7649 = vcmp.gt.f32.partialorder %v7640, 0.0
    %v7650 = vmul.f32 %v7632, 0.2
    %v7651 = vmul.f32 %v7633, 0.2
    %v7652 = vmul.f32 %v7634, 0.2
    %v7653 = vmul.f32 %v7635, 0.2
    %v7654 = vmul.f32 %v7636, 0.2
    %v7655 = vmul.f32 %v7637, 0.2
    %v7656 = vmul.f32 %v7638, 0.2
    %v7657 = vmul.f32 %v7639, 0.2
    %v7658 = vmul.f32 %v7640, 0.2
    %v7659 = vsel %vm7641, %v7632, %v7650
    %v7660 = vsel %vm7642, %v7633, %v7651
    %v7661 = vsel %vm7643, %v7634, %v7652
    %v7662 = vsel %vm7644, %v7635, %v7653
    %v7663 = vsel %vm7645, %v7636, %v7654
    %v7664 = vsel %vm7646, %v7637, %v7655
    %v7665 = vsel %vm7647, %v7638, %v7656
    %v7666 = vsel %vm7648, %v7639, %v7657
    %v7667 = vsel %vm7649, %v7640, %v7658
    %v7668 = vld [vmem:[%s0] sm:$0xff]
    %v7669 = vld [vmem:[%s0 + $0x8] sm:$0xff]
    %v7670 = vld [vmem:[%s0 + $0x10] sm:$0xff]
    %v7671 = vld [vmem:[%s0 + $0x18] sm:$0xff]
    %v7672 = vld [vmem:[%s0 + $0x20] sm:$0xff]
    %v7673 = vld [vmem:[%s0 + $0x28] sm:$0xff]
    %v7674 = vld [vmem:[%s0 + $0x30] sm:$0xff]
    %v7675 = vld [vmem:[%s0 + $0x38] sm:$0xff]
    %v7676 = vld [vmem:[%s0 + $0x40] sm:$0xff]
    %v7677 = vld [vmem:[%s0 + $0x48] sm:$0xff]
    %7688 = vrot.lane.b32.xlu0 %v7668, 62
    %v7689 = vpop.permute.xlu0 %7688
    %7690 = vrot.lane.b32.xlu0 %v7669, 62
    %v7691 = vpop.permute.xlu0 %7690
    %7692 = vrot.lane.b32.xlu0 %v7670, 62
    %v7693 = vpop.permute.xlu0 %7692
    %7694 = vrot.lane.b32.xlu0 %v7671, 62
    %v7695 = vpop.permute.xlu0 %7694
    %7696 = vrot.lane.b32.xlu0 %v7672, 62
    %v7697 = vpop.permute.xlu0 %7696
    %7698 = vrot.lane.b32.xlu0 %v7673, 62
    %v7699 = vpop.permute.xlu0 %7698
    %7700 = vrot.lane.b32.xlu0 %v7674, 62
    %v7701 = vpop.permute.xlu0 %7700
    %7702 = vrot.lane.b32.xlu0 %v7675, 62
    %v7703 = vpop.permute.xlu0 %7702
    %7704 = vrot.lane.b32.xlu0 %v7676, 62
    %v7705 = vpop.permute.xlu0 %7704
    %7706 = vrot.lane.b32.xlu0 %v7677, 62
    %v7707 = vpop.permute.xlu0 %7706
    %v7708 = vsel %vm3305, %v7689, %v7691
    %v7709 = vsel %vm3305, %v7691, %v7693
    %v7710 = vsel %vm3305, %v7693, %v7695
    %v7711 = vsel %vm3305, %v7695, %v7697
    %v7712 = vsel %vm3305, %v7697, %v7699
    %v7713 = vsel %vm3305, %v7699, %v7701
    %v7714 = vsel %vm3305, %v7701, %v7703
    %v7715 = vsel %vm3305, %v7703, %v7705
    %v7716 = vsel %vm3305, %v7705, %v7707
    %v7726 = vadd.f32 %v7659, %v7708
    %v7727 = vadd.f32 %v7660, %v7709
    %v7728 = vadd.f32 %v7661, %v7710
    %v7729 = vadd.f32 %v7662, %v7711
    %v7730 = vadd.f32 %v7663, %v7712
    %v7731 = vadd.f32 %v7664, %v7713
    %v7732 = vadd.f32 %v7665, %v7714
    %v7733 = vadd.f32 %v7666, %v7715
    %v7734 = vadd.f32 %v7667, %v7716
    %7735 = vst [vmem:[#allocation3] sm:$0xff] %v7726
    %7736 = vst [vmem:[#allocation3 + $0x8] sm:$0xff] %v7727
    %7737 = vst [vmem:[#allocation3 + $0x10] sm:$0xff] %v7728
    %7738 = vst [vmem:[#allocation3 + $0x18] sm:$0xff] %v7729
    %7739 = vst [vmem:[#allocation3 + $0x20] sm:$0xff] %v7730
    %7740 = vst [vmem:[#allocation3 + $0x28] sm:$0xff] %v7731
    %7741 = vst [vmem:[#allocation3 + $0x30] sm:$0xff] %v7732
    %7742 = vst [vmem:[#allocation3 + $0x38] sm:$0xff] %v7733
    %7743 = vst [vmem:[#allocation3 + $0x40] sm:$0xff] %v7734
    // Predicated region
    $region14: #{tpu_custom_call.1} parent=1 // pred_check
      _
    $region15: #{tpu_custom_call.1} parent=1 // pred_check_branch
      %7745 = sbr.rel (0) target = $region17
    $region16: #{tpu_custom_call.1} parent=1 // pred_region
      %s7747 = ssub.s32 1152, 1152
      %7748 = vsyncadd [#allocation4], %s7747
      %s7750 = sshll.u32 [#allocation3], 4
      %s7751 = int_to_ptr.vmem [resolvable:$true] %s7750
      %7753 = dma.vmem_to_hbm [thread:$0]  %s7751, 1152, %s3, [#allocation4]
    $region17: #{tpu_custom_call.1} parent=1 // pred_fallthru
      _
    // Predicated region
    $region18: #{tpu_custom_call.1} parent=1 // pred_check
      _
    $region19: #{tpu_custom_call.1} parent=1 // pred_check_branch
      %7755 = sbr.rel (0) target = $region21
    $region20: #{tpu_custom_call.1} parent=1 // pred_region
      %7756 = dma.done [#allocation4], 1152
    $region21: #{tpu_custom_call.1} parent=1 // pred_fallthru
      _
    %7757 = vsyncpa [#allocation4], 1

</llo_original>
